<compile_context>
chip_gen: v5e
topology: v5e:2x2
jax: 0.10.0
libtpu: 0.0.40
codegen_flags: <defaults>
</compile_context>

<pallas_src>
import functools

import jax
import jax.numpy as jnp
from jax import lax
from jax.experimental import pallas as pl
from jax.experimental.pallas import tpu as pltpu

_NEG = -1e30
_LANES = 128
_SUBLANES = 8


def _round_up(v, mult):
    return ((v + mult - 1) // mult) * mult


def _padded_elems(shape):
    # VMEM buffers tile the last two dims to (8, 128); count padded elements.
    dims = list(shape)
    if len(dims) == 1:
        dims = [1] + dims
    dims[-1] = _round_up(int(dims[-1]), _LANES)
    dims[-2] = _round_up(int(dims[-2]), _SUBLANES)
    n = 1
    for d in dims:
        n *= int(d)
    return n


def _hiernet_kernel(x0_ref, A_ref, B_ref, BT_ref,
                    W0_ref, Wr_ref, bc_ref, wrel_ref, wroot_ref, bs_ref,
                    Wf_ref, bf_ref, W1_ref, b1_ref, W2_ref, b2_ref,
                    W3_ref, b3_ref, Wo_ref, bo_ref, y_ref,
                    out_ref, loss_ref,
                    xbuf_ref, mask_ref, hacc_ref, xw_ref,
                    *, pool_ratio, fast):
    f32 = jnp.float32
    bf16 = jnp.bfloat16
    Np = A_ref.shape[0]
    G = B_ref.shape[0]
    H = wrel_ref.shape[-1]

    layer = pl.program_id(0)
    last = pl.num_programs(0) - 1

    @pl.when(layer == 0)
    def _init():
        # Valid-node mask straight from the (zero-padded) membership columns, so
        # phantom rows introduced by the N->Np lane padding start inactive.
        mask_ref[...] = jnp.sum(BT_ref[...], axis=-1, keepdims=True)
        hacc_ref[...] = jnp.zeros_like(hacc_ref)
        # Layer 0 contracts over the padded input-feature dim only.
        xw_ref[...] = jnp.dot(x0_ref[...], W0_ref[...], preferred_element_type=f32)

    @pl.when(layer > 0)
    def _xw_rest():
        # Layers >= 1 contract over H only (no padded zero weight rows).
        xw_ref[...] = jnp.dot(xbuf_ref[...], Wr_ref[...], preferred_element_type=f32)

    A = A_ref[...]             # [Np, Np] bf16 0/1 (exact)
    m = mask_ref[...]          # [Np, 1]  f32 active-node mask
    xw = xw_ref[...]           # [Np, H]  f32  X @ W

    # ---- GCNConv on the masked subgraph: D^-1/2 (A_act + I_act) D^-1/2 X W + b.
    # Self loops and row/col masks fold into [Np,1] column scalings -> no [Np,Np]
    # f32 temporary.
    # TODO(synk): the suggested fold of this width-1 deg pass into the previous
    # layer's agg matmul is circular (keep <- rank <- score <- agg), so A is
    # still streamed 3x per layer (deg / msg / agg).
    deg = m * jnp.dot(A, m.astype(bf16), preferred_element_type=f32) + m     # [Np,1]
    dinv = jnp.where(deg > 0, lax.rsqrt(deg), 0.0)
    md = m * dinv

    msg = md * jnp.dot(A, (md * xw).astype(bf16), preferred_element_type=f32)
    x1 = msg + (md * dinv) * xw + bc_ref[...]
    x1 = jnp.maximum(x1, 0.0) * m        # ReLU; dropout(p=0.0, eval) = identity

    # ---- SAGPooling score: GraphConv(H, 1) = <A@x1, w_rel> + <x1, w_root> + b.
    agg = jnp.dot(A, x1.astype(bf16), preferred_element_type=f32)            # [Np,H]
    s = jnp.sum(agg * wrel_ref[...] + x1 * wroot_ref[...],
                axis=-1, keepdims=True) + bs_ref[...]                        # [Np,1]

    # ---- per-graph top-k (k = ceil(ratio * n_g)); tanh is monotone so ranking
    # raw scores matches ranking tanh(scores). Tie-break: lower index wins.
    ii = lax.broadcasted_iota(jnp.int32, (Np, 1), 0)
    jj = lax.broadcasted_iota(jnp.int32, (1, Np), 1)
    if fast:
        # Exact relayout of the score column into row form through an
        # (8,128)-aligned transpose (Np is a multiple of 128 in the wrapper).
        s_row = jnp.transpose(jnp.broadcast_to(s, (Np, _LANES)))[0:1, :]
    else:
        s_row = jnp.sum(jnp.where(ii == jj, s, 0.0), axis=0, keepdims=True)
    # beats[i, j] = 1 iff node j outranks node i; exact 0/1 -> bf16 MXU operand.
    beats = ((s_row > s) | ((s_row == s) & (jj < ii))).astype(bf16)          # [Np,Np]
    BT = BT_ref[...]                                                         # [Np,G]
    Bm = BT * m                                                              # active one-hot
    rank = jnp.sum(BT * jnp.dot(beats, Bm.astype(bf16),
                                preferred_element_type=f32),
                   axis=-1, keepdims=True)                                   # [Np,1]
    cnt_row = jnp.sum(Bm, axis=0, keepdims=True)                             # [1,G]
    n_node = jnp.sum(BT * cnt_row, axis=-1, keepdims=True)                   # [Np,1]
    k_node = jnp.ceil(pool_ratio * n_node)
    keep = jnp.where((rank < k_node) & (m > 0), 1.0, 0.0)                    # [Np,1]

    x_new = x1 * jnp.tanh(s) * keep      # x[perm] * tanh(score[perm])
    mask_ref[...] = keep
    xbuf_ref[...] = x_new

    # ---- readout h = [global_max_pool | global_add_pool]; accumulate over layers.
    # Add pool: 0/1 membership and x_new cast to bf16 (f32 accumulation) for a
    # single-pass MXU matmul (rounding affects only the pooled sums).
    gsum = jnp.dot(B_ref[...], x_new.astype(bf16), preferred_element_type=f32)
    gi = lax.broadcasted_iota(jnp.int32, (G, 1), 0)
    gmax = jnp.zeros((G, H), f32)
    for g in range(G):                                   # static unroll, G tiny
        sel = BT[:, g:g + 1] * keep                      # [Np,1] kept nodes of graph g
        mx = jnp.max(jnp.where(sel > 0, x_new, _NEG), axis=0, keepdims=True)
        cnt = jnp.sum(sel, axis=0, keepdims=True)
        mx = jnp.where(cnt > 0, mx, 0.0)                 # guard: graph with no kept nodes
        gmax = gmax + jnp.where(gi == g, mx, 0.0)
    # two dense, lane-aligned accumulator updates (no per-graph single-row RMW).
    hacc_ref[:, 0:H] = hacc_ref[:, 0:H] + gmax
    hacc_ref[:, H:2 * H] = hacc_ref[:, H:2 * H] + gsum

    # ---- head (last layer only): first_MLP + ELU MLP + MSE loss.
    # TODO(synk): JumpingKnowledge('lstm') output is dead code in the reference
    # forward (immediately overwritten by h_list[0]+h_list[1]+h_list[2]), so it
    # is omitted without affecting returned values.
    @pl.when(layer == last)
    def _head():
        def elu(v):
            return jnp.where(v > 0, v, jnp.exp(v) - 1.0)

        hs = hacc_ref[...]
        z = jnp.dot(hs, Wf_ref[...], preferred_element_type=f32) + bf_ref[...]
        a = elu(jnp.dot(z, W1_ref[...], preferred_element_type=f32) + b1_ref[...])
        a = elu(jnp.dot(a, W2_ref[...], preferred_element_type=f32) + b2_ref[...])
        a = elu(jnp.dot(a, W3_ref[...], preferred_element_type=f32) + b3_ref[...])
        out = jnp.dot(a, Wo_ref[...], preferred_element_type=f32) + bo_ref[...]
        out_ref[...] = out

        diff = out - y_ref[...]
        sq = diff * diff
        tot = jnp.sum(jnp.sum(sq, axis=1, keepdims=True), axis=0, keepdims=True)
        loss_ref[...] = tot / float(sq.shape[0] * sq.shape[1])   # MSELoss (mean)


def hiernet_forward(params, data, pool_ratio=0.5):
    f32 = jnp.float32
    x, A, B1h, y = data["x"], data["A"], data["B1h"], data["y"]
    N, F = x.shape
    G = B1h.shape[0]
    H = params["conv_W"][0].shape[1]
    D = params["Wf"].shape[1]
    out_dim = params["Wo"].shape[1]
    L = len(params["conv_W"])                    # 3 (forward sums h_list[0..2])

    # ---- glue: lane padding / stacking / transposes only (no compute).
    Np = _round_up(max(N, _SUBLANES), _LANES)    # node dim -> full (8,128) tiles
    K0 = _round_up(max(F, 1), _LANES)            # layer-0 contraction dim

    x0 = jnp.zeros((Np, K0), f32).at[:N, :F].set(x.astype(f32))
    A_bf = jnp.zeros((Np, Np), jnp.bfloat16).at[:N, :N].set(A.astype(jnp.bfloat16))
    B_bf = jnp.zeros((G, Np), jnp.bfloat16).at[:, :N].set(B1h.astype(jnp.bfloat16))
    BT = jnp.zeros((Np, G), f32).at[:N, :].set(jnp.transpose(B1h).astype(f32))
    y = y.astype(f32)

    W0 = jnp.zeros((K0, H), f32).at[:F, :].set(params["conv_W"][0])     # layer 0 only
    rest = params["conv_W"][1:] if L > 1 else [jnp.zeros((H, H), f32)]
    Wr = jnp.stack(rest)                                                # [L-1, H, H]
    bc = jnp.stack(params["conv_b"])                                    # [L, 1, H]
    wrel = jnp.stack([jnp.transpose(w) for w in params["pool_w_rel"]])  # [L, 1, H]
    wroot = jnp.stack([jnp.transpose(w) for w in params["pool_w_root"]])
    bs = jnp.stack(params["pool_b"])                                    # [L, 1, 1]

    head = [params["Wf"], params["bf"], params["W1"], params["b1"],
            params["W2"], params["b2"], params["W3"], params["b3"],
            params["Wo"], params["bo"]]

    operands = (x0, A_bf, B_bf, BT, W0, Wr, bc, wrel, wroot, bs, *head, y)

    inv_shapes = [(Np, K0), (Np, Np), (G, Np), (Np, G), (K0, H)]
    inv_bytes = [4, 2, 2, 4, 4]
    inv_shapes += [tuple(p.shape) for p in head] + [(G, out_dim)]
    inv_bytes += [4] * (len(head) + 1)

    def build_and_call(fast):
        def inv_spec(shape):
            if fast and hasattr(pl, "Buffered"):
                # grid-invariant block: the second pipeline buffer is pure waste.
                return pl.BlockSpec(shape, lambda l: (0, 0),
                                    pipeline_mode=pl.Buffered(1))
            return pl.BlockSpec(shape, lambda l: (0, 0))

        def per_layer(d1, d2, off=0):
            if off:
                return pl.BlockSpec((None, d1, d2),
                                    lambda l: (jnp.maximum(l - off, 0), 0, 0))
            return pl.BlockSpec((None, d1, d2), lambda l: (l, 0, 0))

        in_specs = (
            [inv_spec(s) for s in inv_shapes[:5]]
            + [per_layer(H, H, off=1),          # conv W for layers >= 1
               per_layer(1, H),                 # conv bias
               per_layer(1, H),                 # pool w_rel (row)
               per_layer(1, H),                 # pool w_root (row)
               per_layer(1, 1)]                 # pool bias
            + [inv_spec(tuple(p.shape)) for p in head]
            + [inv_spec((G, out_dim))])         # y

        out_specs = (pl.BlockSpec((G, out_dim), lambda l: (0, 0)),
                     pl.BlockSpec((1, 1), lambda l: (0, 0)))
        out_shape = (jax.ShapeDtypeStruct((G, out_dim), f32),
                     jax.ShapeDtypeStruct((1, 1), f32))
        scratch = [pltpu.VMEM((Np, H), f32),      # node features across layers
                   pltpu.VMEM((Np, 1), f32),      # active-node mask
                   pltpu.VMEM((G, 2 * H), f32),   # sum of per-layer [max | add]
                   pltpu.VMEM((Np, H), f32)]      # X @ W staging (layer-0 / rest)

        # ---- right-sized scoped-VMEM request (blocks + scratch + temporaries,
        # ~30% headroom) instead of blanket-requesting the whole physical VMEM.
        nbuf = 1 if fast else 2
        need = sum(nbuf * _padded_elems(s) * b for s, b in zip(inv_shapes, inv_bytes))
        need += 2 * 4 * (_padded_elems((H, H)) + 3 * _padded_elems((1, H))
                         + _padded_elems((1, 1)))                              # layer blocks
        need += 2 * 4 * (_padded_elems((G, out_dim)) + _padded_elems((1, 1)))  # outputs
        need += 4 * (2 * _padded_elems((Np, H)) + _padded_elems((Np, 1))
                     + _padded_elems((G, 2 * H)))                              # scratch
        need += 3 * _padded_elems((Np, Np)) + 16 * _padded_elems((Np, H))      # temporaries
        vmem_limit = min(96 * 1024 * 1024, int(need * 1.3) + (4 << 20))

        # rough roofline numbers for the XLA scheduler
        head_flops = 2 * G * sum(int(p.shape[0]) * int(p.shape[1]) for p in head[::2])
        flops = (L * (2 * Np * Np * (2 * H + 1) + 2 * Np * H * H + 2 * Np * Np * G
                      + 2 * G * Np * H + 12 * Np * H)
                 + 2 * Np * K0 * H + head_flops)
        transcend = L * 2 * Np + G * (D // 2 + D // 4 + D // 8)
        bytes_acc = sum(int(o.size) * o.dtype.itemsize for o in operands)
        bytes_acc += 4 * (G * out_dim + 1)

        kernel = functools.partial(_hiernet_kernel, pool_ratio=pool_ratio, fast=fast)
        return pl.pallas_call(
            kernel,
            out_shape=out_shape,
            grid_spec=pltpu.PrefetchScalarGridSpec(
                num_scalar_prefetch=0,
                grid=(L,),
                in_specs=in_specs,
                out_specs=out_specs,
                scratch_shapes=scratch),
            # TODO(synk): on v7x the graph batch (block-diagonal A) could be split
            # across the two TensorCores (core-parallel axis / pl.core_map), and A
            # would need row-block tiling once Np^2 bf16 stops fitting 64 MiB;
            # kept single-core, fully-resident here.
            compiler_params=pltpu.CompilerParams(
                dimension_semantics=("arbitrary",),   # layers carry state sequentially
                vmem_limit_bytes=vmem_limit if fast else None),
            cost_estimate=pl.CostEstimate(flops=int(flops),
                                          transcendentals=int(transcend),
                                          bytes_accessed=int(bytes_acc)),
        )(*operands)

    try:
        out, loss = build_and_call(True)
        jax.block_until_ready((out, loss))
    except Exception:   # conservative fallback if a newer Pallas feature is rejected
        out, loss = build_and_call(False)
        jax.block_until_ready((out, loss))

    out_dict = {"perf": out}
    total_loss = loss[0, 0]
    loss_dict = {"perf": total_loss}
    return out_dict, total_loss, loss_dict


def init_params(key, in_channels, hidden, D, out_dim):
    ks = jax.random.split(key, 32)

    def lin(k, fi, fo):
        return (jax.random.normal(k, (fi, fo), jnp.float32) / jnp.sqrt(float(fi)))

    conv_W, conv_b = [], []
    pool_w_root, pool_w_rel, pool_b = [], [], []
    i = 0
    for layer in range(3):
        fi = in_channels if layer == 0 else hidden
        conv_W.append(lin(ks[i], fi, hidden)); i += 1
        conv_b.append(jnp.zeros((1, hidden), jnp.float32))
        pool_w_root.append(lin(ks[i], hidden, 1)); i += 1
        pool_w_rel.append(lin(ks[i], hidden, 1)); i += 1
        pool_b.append(jnp.zeros((1, 1), jnp.float32))

    d2, d4, d8 = D // 2, D // 4, D // 8          # MLP hidden channels [D/2, D/4, D/8]
    params = {
        "conv_W": conv_W, "conv_b": conv_b,
        "pool_w_root": pool_w_root, "pool_w_rel": pool_w_rel, "pool_b": pool_b,
        "Wf": lin(ks[i], 2 * hidden, D), "bf": jnp.zeros((1, D), jnp.float32),
        "W1": lin(ks[i + 1], D, d2), "b1": jnp.zeros((1, d2), jnp.float32),
        "W2": lin(ks[i + 2], d2, d4), "b2": jnp.zeros((1, d4), jnp.float32),
        "W3": lin(ks[i + 3], d4, d8), "b3": jnp.zeros((1, d8), jnp.float32),
        "Wo": lin(ks[i + 4], d8, out_dim), "bo": jnp.zeros((1, out_dim), jnp.float32),
    }
    return params


if __name__ == "__main__":
    key = jax.random.PRNGKey(0)
    N, G = 16, 2                     # 2 graphs x 8 nodes
    in_channels = 8
    hidden = 128                     # 2*hidden == 256 matches first_MLP = Linear(256, D)
    D, out_dim = 64, 1               # FLAGS.D, FLAGS.out_dim

    k_feat, k_adj, k_y, k_par = jax.random.split(key, 4)
    x = jax.random.normal(k_feat, (N, in_channels), jnp.float32)

    batch = jnp.repeat(jnp.arange(G), N // G)
    B1h = (batch[None, :] == jnp.arange(G)[:, None]).astype(jnp.float32)
    same = jnp.dot(B1h.T, B1h)

    upper = jax.random.bernoulli(k_adj, 0.45, (N, N))
    A = jnp.logical_or(upper, upper.T).astype(jnp.float32)
    A = A * same * (1.0 - jnp.eye(N, dtype=jnp.float32))   # symmetric, intra-graph, no self loops

    y = jax.random.normal(k_y, (G, out_dim), jnp.float32)

    params = init_params(k_par, in_channels, hidden, D, out_dim)
    data = {"x": x, "A": A, "B1h": B1h, "y": y}

    out_dict, total_loss, loss_dict = hiernet_forward(params, data, pool_ratio=0.5)
    jax.block_until_ready((out_dict, total_loss, loss_dict))
    print("KERNEL_OK")
</pallas_src>

<mosaic_0001>
module attributes {stable_mosaic.version = 11 : i64} {
  func.func @_hiernet_kernel(%arg0: i32, %arg1: memref<128x128xf32, #tpu.memory_space<vmem>>, %arg2: memref<128x128xbf16, #tpu.memory_space<vmem>>, %arg3: memref<2x128xbf16, #tpu.memory_space<vmem>>, %arg4: memref<128x2xf32, #tpu.memory_space<vmem>>, %arg5: memref<128x128xf32, #tpu.memory_space<vmem>>, %arg6: memref<1x128x128xf32, #tpu.memory_space<vmem>>, %arg7: memref<1x1x128xf32, #tpu.memory_space<vmem>>, %arg8: memref<1x1x128xf32, #tpu.memory_space<vmem>>, %arg9: memref<1x1x128xf32, #tpu.memory_space<vmem>>, %arg10: memref<1x1x1xf32, #tpu.memory_space<vmem>>, %arg11: memref<256x64xf32, #tpu.memory_space<vmem>>, %arg12: memref<1x64xf32, #tpu.memory_space<vmem>>, %arg13: memref<64x32xf32, #tpu.memory_space<vmem>>, %arg14: memref<1x32xf32, #tpu.memory_space<vmem>>, %arg15: memref<32x16xf32, #tpu.memory_space<vmem>>, %arg16: memref<1x16xf32, #tpu.memory_space<vmem>>, %arg17: memref<16x8xf32, #tpu.memory_space<vmem>>, %arg18: memref<1x8xf32, #tpu.memory_space<vmem>>, %arg19: memref<8x1xf32, #tpu.memory_space<vmem>>, %arg20: memref<1x1xf32, #tpu.memory_space<vmem>>, %arg21: memref<2x1xf32, #tpu.memory_space<vmem>>, %arg22: memref<2x1xf32, #tpu.memory_space<vmem>>, %arg23: memref<1x1xf32, #tpu.memory_space<vmem>>, %arg24: memref<128x128xf32, #tpu.memory_space<vmem>>, %arg25: memref<128x1xf32, #tpu.memory_space<vmem>>, %arg26: memref<2x256xf32, #tpu.memory_space<vmem>>, %arg27: memref<128x128xf32, #tpu.memory_space<vmem>>) attributes {dimension_semantics = [#tpu.dimension_semantics<arbitrary>], iteration_bounds = array<i64: 3>, scalar_prefetch = 0 : i64, scratch_operands = 4 : i64, tpu.core_type = #tpu.core_type<tc>, window_params = [{pipeline_mode = #tpu.pipeline_mode<synchronous>, transform_indices = @transform_0, window_bounds = array<i64: 128, 128>}, {pipeline_mode = #tpu.pipeline_mode<synchronous>, transform_indices = @transform_1, window_bounds = array<i64: 128, 128>}, {pipeline_mode = #tpu.pipeline_mode<synchronous>, transform_indices = @transform_2, window_bounds = array<i64: 2, 128>}, {pipeline_mode = #tpu.pipeline_mode<synchronous>, transform_indices = @transform_3, window_bounds = array<i64: 128, 2>}, {pipeline_mode = #tpu.pipeline_mode<synchronous>, transform_indices = @transform_4, window_bounds = array<i64: 128, 128>}, {transform_indices = @transform_5, window_bounds = array<i64: 1, 128, 128>}, {transform_indices = @transform_6, window_bounds = array<i64: 1, 1, 128>}, {transform_indices = @transform_7, window_bounds = array<i64: 1, 1, 128>}, {transform_indices = @transform_8, window_bounds = array<i64: 1, 1, 128>}, {transform_indices = @transform_9, window_bounds = array<i64: 1, 1, 1>}, {pipeline_mode = #tpu.pipeline_mode<synchronous>, transform_indices = @transform_10, window_bounds = array<i64: 256, 64>}, {pipeline_mode = #tpu.pipeline_mode<synchronous>, transform_indices = @transform_11, window_bounds = array<i64: 1, 64>}, {pipeline_mode = #tpu.pipeline_mode<synchronous>, transform_indices = @transform_12, window_bounds = array<i64: 64, 32>}, {pipeline_mode = #tpu.pipeline_mode<synchronous>, transform_indices = @transform_13, window_bounds = array<i64: 1, 32>}, {pipeline_mode = #tpu.pipeline_mode<synchronous>, transform_indices = @transform_14, window_bounds = array<i64: 32, 16>}, {pipeline_mode = #tpu.pipeline_mode<synchronous>, transform_indices = @transform_15, window_bounds = array<i64: 1, 16>}, {pipeline_mode = #tpu.pipeline_mode<synchronous>, transform_indices = @transform_16, window_bounds = array<i64: 16, 8>}, {pipeline_mode = #tpu.pipeline_mode<synchronous>, transform_indices = @transform_17, window_bounds = array<i64: 1, 8>}, {pipeline_mode = #tpu.pipeline_mode<synchronous>, transform_indices = @transform_18, window_bounds = array<i64: 8, 1>}, {pipeline_mode = #tpu.pipeline_mode<synchronous>, transform_indices = @transform_19, window_bounds = array<i64: 1, 1>}, {pipeline_mode = #tpu.pipeline_mode<synchronous>, transform_indices = @transform_20, window_bounds = array<i64: 2, 1>}, {pipeline_mode = #tpu.pipeline_mode<synchronous>, transform_indices = @transform_21, window_bounds = array<i64: 2, 1>}, {pipeline_mode = #tpu.pipeline_mode<synchronous>, transform_indices = @transform_22, window_bounds = array<i64: 1, 1>}]} {
    %c0_i32 = arith.constant 0 : i32
    %0 = arith.cmpi eq, %arg0, %c0_i32 : i32
    %1 = arith.extui %0 : i1 to i32
    %c0_i32_0 = arith.constant 0 : i32
    %2 = arith.cmpi ne, %1, %c0_i32_0 : i32
    scf.if %2 {
      %c0_67 = arith.constant 0 : index
      %c0_68 = arith.constant 0 : index
      %173 = vector.load %arg4[%c0_67, %c0_68] : memref<128x2xf32, #tpu.memory_space<vmem>>, vector<128x2xf32>
      %cst_69 = arith.constant dense<0.000000e+00> : vector<128xf32>
      %174 = vector.multi_reduction <add>, %173, %cst_69 [1] : vector<128x2xf32> to vector<128xf32>
      %175 = vector.shape_cast %174 : vector<128xf32> to vector<128x1xf32>
      %c0_70 = arith.constant 0 : index
      %c0_71 = arith.constant 0 : index
      %176 = vector.load %arg25[%c0_70, %c0_71] : memref<128x1xf32, #tpu.memory_space<vmem>>, vector<128x1xf32>
      tpu.vector_store %arg25[%c0_70, %c0_71], %175 {strides = array<i32>} : memref<128x1xf32, #tpu.memory_space<vmem>>, vector<128x1xf32>,
      %cst_72 = arith.constant 0.000000e+00 : f32
      %177 = vector.broadcast %cst_72 : f32 to vector<2x256xf32>
      %c0_73 = arith.constant 0 : index
      %c0_74 = arith.constant 0 : index
      %178 = vector.load %arg26[%c0_73, %c0_74] : memref<2x256xf32, #tpu.memory_space<vmem>>, vector<2x256xf32>
      tpu.vector_store %arg26[%c0_73, %c0_74], %177 {strides = array<i32>} : memref<2x256xf32, #tpu.memory_space<vmem>>, vector<2x256xf32>,
      %c0_75 = arith.constant 0 : index
      %c0_76 = arith.constant 0 : index
      %179 = vector.load %arg1[%c0_75, %c0_76] : memref<128x128xf32, #tpu.memory_space<vmem>>, vector<128x128xf32>
      %c0_77 = arith.constant 0 : index
      %c0_78 = arith.constant 0 : index
      %180 = vector.load %arg5[%c0_77, %c0_78] : memref<128x128xf32, #tpu.memory_space<vmem>>, vector<128x128xf32>
      %cst_79 = arith.constant dense<0.000000e+00> : vector<128x128xf32>
      %181 = tpu.matmul %179, %180, %cst_79 {dimension_numbers = #tpu.dot_dimension_numbers<[1], [0], [0], [1], [0, 0, 1, 1], [], []>} : vector<128x128xf32>, vector<128x128xf32>, vector<128x128xf32> -> vector<128x128xf32>
      %c0_80 = arith.constant 0 : index
      %c0_81 = arith.constant 0 : index
      %182 = vector.load %arg27[%c0_80, %c0_81] : memref<128x128xf32, #tpu.memory_space<vmem>>, vector<128x128xf32>
      tpu.vector_store %arg27[%c0_80, %c0_81], %181 {strides = array<i32>} : memref<128x128xf32, #tpu.memory_space<vmem>>, vector<128x128xf32>,
    } else {
    }
    %c0_i32_1 = arith.constant 0 : i32
    %3 = arith.cmpi sgt, %arg0, %c0_i32_1 : i32
    %4 = arith.extui %3 : i1 to i32
    %c0_i32_2 = arith.constant 0 : i32
    %5 = arith.cmpi ne, %4, %c0_i32_2 : i32
    scf.if %5 {
      %c0_67 = arith.constant 0 : index
      %c0_68 = arith.constant 0 : index
      %173 = vector.load %arg24[%c0_67, %c0_68] : memref<128x128xf32, #tpu.memory_space<vmem>>, vector<128x128xf32>
      %c0_69 = arith.constant 0 : index
      %c0_70 = arith.constant 0 : index
      %c0_71 = arith.constant 0 : index
      %174 = vector.load %arg6[%c0_69, %c0_70, %c0_71] : memref<1x128x128xf32, #tpu.memory_space<vmem>>, vector<1x128x128xf32>
      %175 = vector.shape_cast %174 : vector<1x128x128xf32> to vector<128x128xf32>
      %cst_72 = arith.constant dense<0.000000e+00> : vector<128x128xf32>
      %176 = tpu.matmul %173, %175, %cst_72 {dimension_numbers = #tpu.dot_dimension_numbers<[1], [0], [0], [1], [0, 0, 1, 1], [], []>} : vector<128x128xf32>, vector<128x128xf32>, vector<128x128xf32> -> vector<128x128xf32>
      %c0_73 = arith.constant 0 : index
      %c0_74 = arith.constant 0 : index
      %177 = vector.load %arg27[%c0_73, %c0_74] : memref<128x128xf32, #tpu.memory_space<vmem>>, vector<128x128xf32>
      tpu.vector_store %arg27[%c0_73, %c0_74], %176 {strides = array<i32>} : memref<128x128xf32, #tpu.memory_space<vmem>>, vector<128x128xf32>,
    } else {
    }
    %c0 = arith.constant 0 : index
    %c0_3 = arith.constant 0 : index
    %6 = vector.load %arg2[%c0, %c0_3] : memref<128x128xbf16, #tpu.memory_space<vmem>>, vector<128x128xbf16>
    %c0_4 = arith.constant 0 : index
    %c0_5 = arith.constant 0 : index
    %7 = vector.load %arg25[%c0_4, %c0_5] : memref<128x1xf32, #tpu.memory_space<vmem>>, vector<128x1xf32>
    %c0_6 = arith.constant 0 : index
    %c0_7 = arith.constant 0 : index
    %8 = vector.load %arg27[%c0_6, %c0_7] : memref<128x128xf32, #tpu.memory_space<vmem>>, vector<128x128xf32>
    %9 = arith.truncf %7 : vector<128x1xf32> to vector<128x1xbf16>
    %cst = arith.constant dense<0.000000e+00> : vector<128x1xf32>
    %10 = tpu.matmul %6, %9, %cst {dimension_numbers = #tpu.dot_dimension_numbers<[1], [0], [0], [1], [0, 0, 1, 1], [], []>} : vector<128x128xbf16>, vector<128x1xbf16>, vector<128x1xf32> -> vector<128x1xf32>
    %11 = arith.mulf %7, %10 : vector<128x1xf32>
    %12 = arith.addf %11, %7 : vector<128x1xf32>
    %cst_8 = arith.constant 0.000000e+00 : f32
    %13 = vector.broadcast %cst_8 : f32 to vector<128x1xf32>
    %14 = arith.cmpf ogt, %12, %13 : vector<128x1xf32>
    %15 = math.rsqrt %12 : vector<128x1xf32>
    %cst_9 = arith.constant 0.000000e+00 : f32
    %16 = vector.broadcast %cst_9 : f32 to vector<128x1xf32>
    %17 = arith.select %14, %15, %16 : vector<128x1xi1>, vector<128x1xf32>
    %18 = arith.mulf %7, %17 : vector<128x1xf32>
    %19 = vector.broadcast %18 : vector<128x1xf32> to vector<128x128xf32>
    %20 = arith.mulf %19, %8 : vector<128x128xf32>
    %21 = arith.truncf %20 : vector<128x128xf32> to vector<128x128xbf16>
    %cst_10 = arith.constant dense<0.000000e+00> : vector<128x128xf32>
    %22 = tpu.matmul %6, %21, %cst_10 {dimension_numbers = #tpu.dot_dimension_numbers<[1], [0], [0], [1], [0, 0, 1, 1], [], []>} : vector<128x128xbf16>, vector<128x128xbf16>, vector<128x128xf32> -> vector<128x128xf32>
    %23 = vector.broadcast %18 : vector<128x1xf32> to vector<128x128xf32>
    %24 = arith.mulf %23, %22 : vector<128x128xf32>
    %25 = arith.mulf %18, %17 : vector<128x1xf32>
    %26 = vector.broadcast %25 : vector<128x1xf32> to vector<128x128xf32>
    %27 = arith.mulf %26, %8 : vector<128x128xf32>
    %28 = arith.addf %24, %27 : vector<128x128xf32>
    %c0_11 = arith.constant 0 : index
    %c0_12 = arith.constant 0 : index
    %c0_13 = arith.constant 0 : index
    %29 = vector.load %arg7[%c0_11, %c0_12, %c0_13] : memref<1x1x128xf32, #tpu.memory_space<vmem>>, vector<1x1x128xf32>
    %30 = vector.shape_cast %29 : vector<1x1x128xf32> to vector<1x128xf32>
    %31 = vector.broadcast %30 : vector<1x128xf32> to vector<128x128xf32>
    %32 = arith.addf %28, %31 : vector<128x128xf32>
    %cst_14 = arith.constant 0.000000e+00 : f32
    %33 = vector.broadcast %cst_14 : f32 to vector<128x128xf32>
    %34 = arith.maximumf %32, %33 : vector<128x128xf32>
    %35 = vector.broadcast %7 : vector<128x1xf32> to vector<128x128xf32>
    %36 = arith.mulf %34, %35 : vector<128x128xf32>
    %37 = arith.truncf %36 : vector<128x128xf32> to vector<128x128xbf16>
    %cst_15 = arith.constant dense<0.000000e+00> : vector<128x128xf32>
    %38 = tpu.matmul %6, %37, %cst_15 {dimension_numbers = #tpu.dot_dimension_numbers<[1], [0], [0], [1], [0, 0, 1, 1], [], []>} : vector<128x128xbf16>, vector<128x128xbf16>, vector<128x128xf32> -> vector<128x128xf32>
    %c0_16 = arith.constant 0 : index
    %c0_17 = arith.constant 0 : index
    %c0_18 = arith.constant 0 : index
    %39 = vector.load %arg8[%c0_16, %c0_17, %c0_18] : memref<1x1x128xf32, #tpu.memory_space<vmem>>, vector<1x1x128xf32>
    %40 = vector.shape_cast %39 : vector<1x1x128xf32> to vector<1x128xf32>
    %41 = vector.broadcast %40 : vector<1x128xf32> to vector<128x128xf32>
    %42 = arith.mulf %38, %41 : vector<128x128xf32>
    %c0_19 = arith.constant 0 : index
    %c0_20 = arith.constant 0 : index
    %c0_21 = arith.constant 0 : index
    %43 = vector.load %arg9[%c0_19, %c0_20, %c0_21] : memref<1x1x128xf32, #tpu.memory_space<vmem>>, vector<1x1x128xf32>
    %44 = vector.shape_cast %43 : vector<1x1x128xf32> to vector<1x128xf32>
    %45 = vector.broadcast %44 : vector<1x128xf32> to vector<128x128xf32>
    %46 = arith.mulf %36, %45 : vector<128x128xf32>
    %47 = arith.addf %42, %46 : vector<128x128xf32>
    %cst_22 = arith.constant dense<0.000000e+00> : vector<128xf32>
    %48 = vector.multi_reduction <add>, %47, %cst_22 [1] : vector<128x128xf32> to vector<128xf32>
    %49 = vector.shape_cast %48 : vector<128xf32> to vector<128x1xf32>
    %c0_23 = arith.constant 0 : index
    %c0_24 = arith.constant 0 : index
    %c0_25 = arith.constant 0 : index
    %50 = vector.load %arg10[%c0_23, %c0_24, %c0_25] : memref<1x1x1xf32, #tpu.memory_space<vmem>>, vector<1x1x1xf32>
    %51 = vector.shape_cast %50 : vector<1x1x1xf32> to vector<1x1xf32>
    %52 = vector.broadcast %51 : vector<1x1xf32> to vector<128x1xf32>
    %53 = arith.addf %49, %52 : vector<128x1xf32>
    %54 = tpu.iota {dimensions = array<i32: 0>} : vector<128x1xi32>
    %55 = tpu.iota {dimensions = array<i32: 1>} : vector<1x128xi32>
    %56 = vector.shape_cast %53 : vector<128x1xf32> to vector<128x1xf32>
    %57 = vector.broadcast %56 : vector<128x1xf32> to vector<128x128xf32>
    %58 = tpu.transpose %57, [1, 0] : vector<128x128xf32> -> vector<128x128xf32>
    %59 = vector.extract_strided_slice %58 {offsets = [0, 0], sizes = [1, 128], strides = [1, 1]} : vector<128x128xf32> to vector<1x128xf32>
    %60 = vector.broadcast %59 : vector<1x128xf32> to vector<128x128xf32>
    %61 = vector.broadcast %53 : vector<128x1xf32> to vector<128x128xf32>
    %62 = arith.cmpf ogt, %60, %61 : vector<128x128xf32>
    %63 = vector.broadcast %59 : vector<1x128xf32> to vector<128x128xf32>
    %64 = vector.broadcast %53 : vector<128x1xf32> to vector<128x128xf32>
    %65 = arith.cmpf oeq, %63, %64 : vector<128x128xf32>
    %66 = vector.broadcast %55 : vector<1x128xi32> to vector<128x128xi32>
    %67 = vector.broadcast %54 : vector<128x1xi32> to vector<128x128xi32>
    %68 = arith.cmpi slt, %66, %67 : vector<128x128xi32>
    %69 = arith.andi %65, %68 : vector<128x128xi1>
    %70 = arith.ori %62, %69 : vector<128x128xi1>
    %71 = arith.extui %70 : vector<128x128xi1> to vector<128x128xi32>
    %72 = arith.sitofp %71 : vector<128x128xi32> to vector<128x128xf32>
    %73 = arith.truncf %72 : vector<128x128xf32> to vector<128x128xbf16>
    %c0_26 = arith.constant 0 : index
    %c0_27 = arith.constant 0 : index
    %74 = vector.load %arg4[%c0_26, %c0_27] : memref<128x2xf32, #tpu.memory_space<vmem>>, vector<128x2xf32>
    %75 = vector.broadcast %7 : vector<128x1xf32> to vector<128x2xf32>
    %76 = arith.mulf %74, %75 : vector<128x2xf32>
    %77 = arith.truncf %76 : vector<128x2xf32> to vector<128x2xbf16>
    %cst_28 = arith.constant dense<0.000000e+00> : vector<128x2xf32>
    %78 = tpu.matmul %73, %77, %cst_28 {dimension_numbers = #tpu.dot_dimension_numbers<[1], [0], [0], [1], [0, 0, 1, 1], [], []>} : vector<128x128xbf16>, vector<128x2xbf16>, vector<128x2xf32> -> vector<128x2xf32>
    %79 = arith.mulf %74, %78 : vector<128x2xf32>
    %cst_29 = arith.constant dense<0.000000e+00> : vector<128xf32>
    %80 = vector.multi_reduction <add>, %79, %cst_29 [1] : vector<128x2xf32> to vector<128xf32>
    %81 = vector.shape_cast %80 : vector<128xf32> to vector<128x1xf32>
    %cst_30 = arith.constant dense<0.000000e+00> : vector<2xf32>
    %82 = vector.multi_reduction <add>, %76, %cst_30 [0] : vector<128x2xf32> to vector<2xf32>
    %83 = vector.shape_cast %82 : vector<2xf32> to vector<1x2xf32>
    %84 = vector.broadcast %83 : vector<1x2xf32> to vector<128x2xf32>
    %85 = arith.mulf %74, %84 : vector<128x2xf32>
    %cst_31 = arith.constant dense<0.000000e+00> : vector<128xf32>
    %86 = vector.multi_reduction <add>, %85, %cst_31 [1] : vector<128x2xf32> to vector<128xf32>
    %87 = vector.shape_cast %86 : vector<128xf32> to vector<128x1xf32>
    %cst_32 = arith.constant 5.000000e-01 : f32
    %88 = vector.broadcast %cst_32 : f32 to vector<128x1xf32>
    %89 = arith.mulf %88, %87 : vector<128x1xf32>
    %90 = math.ceil %89 : vector<128x1xf32>
    %91 = arith.cmpf olt, %81, %90 : vector<128x1xf32>
    %cst_33 = arith.constant 0.000000e+00 : f32
    %92 = vector.broadcast %cst_33 : f32 to vector<128x1xf32>
    %93 = arith.cmpf ogt, %7, %92 : vector<128x1xf32>
    %94 = arith.andi %91, %93 : vector<128x1xi1>
    %cst_34 = arith.constant 1.000000e+00 : f32
    %cst_35 = arith.constant 0.000000e+00 : f32
    %95 = vector.broadcast %cst_34 : f32 to vector<128x1xf32>
    %96 = vector.broadcast %cst_35 : f32 to vector<128x1xf32>
    %97 = arith.select %94, %95, %96 : vector<128x1xi1>, vector<128x1xf32>
    %98 = math.tanh %53 : vector<128x1xf32>
    %99 = vector.broadcast %98 : vector<128x1xf32> to vector<128x128xf32>
    %100 = arith.mulf %36, %99 : vector<128x128xf32>
    %101 = vector.broadcast %97 : vector<128x1xf32> to vector<128x128xf32>
    %102 = arith.mulf %100, %101 : vector<128x128xf32>
    %c0_36 = arith.constant 0 : index
    %c0_37 = arith.constant 0 : index
    %103 = vector.load %arg25[%c0_36, %c0_37] : memref<128x1xf32, #tpu.memory_space<vmem>>, vector<128x1xf32>
    tpu.vector_store %arg25[%c0_36, %c0_37], %97 {strides = array<i32>} : memref<128x1xf32, #tpu.memory_space<vmem>>, vector<128x1xf32>,
    %c0_38 = arith.constant 0 : index
    %c0_39 = arith.constant 0 : index
    %104 = vector.load %arg24[%c0_38, %c0_39] : memref<128x128xf32, #tpu.memory_space<vmem>>, vector<128x128xf32>
    tpu.vector_store %arg24[%c0_38, %c0_39], %102 {strides = array<i32>} : memref<128x128xf32, #tpu.memory_space<vmem>>, vector<128x128xf32>,
    %c0_40 = arith.constant 0 : index
    %c0_41 = arith.constant 0 : index
    %105 = vector.load %arg3[%c0_40, %c0_41] : memref<2x128xbf16, #tpu.memory_space<vmem>>, vector<2x128xbf16>
    %106 = arith.truncf %102 : vector<128x128xf32> to vector<128x128xbf16>
    %cst_42 = arith.constant dense<0.000000e+00> : vector<2x128xf32>
    %107 = tpu.matmul %105, %106, %cst_42 {dimension_numbers = #tpu.dot_dimension_numbers<[1], [0], [0], [1], [0, 0, 1, 1], [], []>} : vector<2x128xbf16>, vector<128x128xbf16>, vector<2x128xf32> -> vector<2x128xf32>
    %108 = tpu.iota {dimensions = array<i32: 0>} : vector<2x1xi32>
    %cst_43 = arith.constant 0.000000e+00 : f32
    %109 = vector.broadcast %cst_43 : f32 to vector<2x128xf32>
    %110 = vector.extract_strided_slice %74 {offsets = [0, 0], sizes = [128, 1], strides = [1, 1]} : vector<128x2xf32> to vector<128x1xf32>
    %111 = arith.mulf %110, %97 : vector<128x1xf32>
    %cst_44 = arith.constant 0.000000e+00 : f32
    %112 = vector.broadcast %cst_44 : f32 to vector<128x1xf32>
    %113 = arith.cmpf ogt, %111, %112 : vector<128x1xf32>
    %cst_45 = arith.constant -1.000000e+30 : f32
    %114 = vector.shape_cast %113 : vector<128x1xi1> to vector<128x1xi1>
    %115 = vector.broadcast %114 : vector<128x1xi1> to vector<128x128xi1>
    %116 = vector.broadcast %cst_45 : f32 to vector<128x128xf32>
    %117 = arith.select %115, %102, %116 : vector<128x128xi1>, vector<128x128xf32>
    %cst_46 = arith.constant dense<0xFF800000> : vector<128xf32>
    %118 = vector.multi_reduction <maximumf>, %117, %cst_46 [0] : vector<128x128xf32> to vector<128xf32>
    %119 = vector.shape_cast %118 : vector<128xf32> to vector<1x128xf32>
    %cst_47 = arith.constant dense<0.000000e+00> : vector<1xf32>
    %120 = vector.multi_reduction <add>, %111, %cst_47 [0] : vector<128x1xf32> to vector<1xf32>
    %121 = vector.shape_cast %120 : vector<1xf32> to vector<1x1xf32>
    %cst_48 = arith.constant 0.000000e+00 : f32
    %122 = vector.broadcast %cst_48 : f32 to vector<1x1xf32>
    %123 = arith.cmpf ogt, %121, %122 : vector<1x1xf32>
    %cst_49 = arith.constant 0.000000e+00 : f32
    %124 = vector.shape_cast %123 : vector<1x1xi1> to vector<1x1xi1>
    %125 = vector.broadcast %124 : vector<1x1xi1> to vector<1x128xi1>
    %126 = vector.broadcast %cst_49 : f32 to vector<1x128xf32>
    %127 = arith.select %125, %119, %126 : vector<1x128xi1>, vector<1x128xf32>
    %c0_i32_50 = arith.constant 0 : i32
    %128 = vector.broadcast %c0_i32_50 : i32 to vector<2x1xi32>
    %129 = arith.cmpi eq, %108, %128 : vector<2x1xi32>
    %cst_51 = arith.constant 0.000000e+00 : f32
    %130 = vector.shape_cast %129 : vector<2x1xi1> to vector<2x1xi1>
    %131 = vector.broadcast %130 : vector<2x1xi1> to vector<2x128xi1>
    %132 = vector.shape_cast %127 : vector<1x128xf32> to vector<1x128xf32>
    %133 = vector.broadcast %132 : vector<1x128xf32> to vector<2x128xf32>
    %134 = vector.broadcast %cst_51 : f32 to vector<2x128xf32>
    %135 = arith.select %131, %133, %134 : vector<2x128xi1>, vector<2x128xf32>
    %136 = arith.addf %109, %135 : vector<2x128xf32>
    %137 = vector.extract_strided_slice %74 {offsets = [0, 1], sizes = [128, 1], strides = [1, 1]} : vector<128x2xf32> to vector<128x1xf32>
    %138 = arith.mulf %137, %97 : vector<128x1xf32>
    %cst_52 = arith.constant 0.000000e+00 : f32
    %139 = vector.broadcast %cst_52 : f32 to vector<128x1xf32>
    %140 = arith.cmpf ogt, %138, %139 : vector<128x1xf32>
    %cst_53 = arith.constant -1.000000e+30 : f32
    %141 = vector.shape_cast %140 : vector<128x1xi1> to vector<128x1xi1>
    %142 = vector.broadcast %141 : vector<128x1xi1> to vector<128x128xi1>
    %143 = vector.broadcast %cst_53 : f32 to vector<128x128xf32>
    %144 = arith.select %142, %102, %143 : vector<128x128xi1>, vector<128x128xf32>
    %cst_54 = arith.constant dense<0xFF800000> : vector<128xf32>
    %145 = vector.multi_reduction <maximumf>, %144, %cst_54 [0] : vector<128x128xf32> to vector<128xf32>
    %146 = vector.shape_cast %145 : vector<128xf32> to vector<1x128xf32>
    %cst_55 = arith.constant dense<0.000000e+00> : vector<1xf32>
    %147 = vector.multi_reduction <add>, %138, %cst_55 [0] : vector<128x1xf32> to vector<1xf32>
    %148 = vector.shape_cast %147 : vector<1xf32> to vector<1x1xf32>
    %cst_56 = arith.constant 0.000000e+00 : f32
    %149 = vector.broadcast %cst_56 : f32 to vector<1x1xf32>
    %150 = arith.cmpf ogt, %148, %149 : vector<1x1xf32>
    %cst_57 = arith.constant 0.000000e+00 : f32
    %151 = vector.shape_cast %150 : vector<1x1xi1> to vector<1x1xi1>
    %152 = vector.broadcast %151 : vector<1x1xi1> to vector<1x128xi1>
    %153 = vector.broadcast %cst_57 : f32 to vector<1x128xf32>
    %154 = arith.select %152, %146, %153 : vector<1x128xi1>, vector<1x128xf32>
    %c1_i32 = arith.constant 1 : i32
    %155 = vector.broadcast %c1_i32 : i32 to vector<2x1xi32>
    %156 = arith.cmpi eq, %108, %155 : vector<2x1xi32>
    %cst_58 = arith.constant 0.000000e+00 : f32
    %157 = vector.shape_cast %156 : vector<2x1xi1> to vector<2x1xi1>
    %158 = vector.broadcast %157 : vector<2x1xi1> to vector<2x128xi1>
    %159 = vector.shape_cast %154 : vector<1x128xf32> to vector<1x128xf32>
    %160 = vector.broadcast %159 : vector<1x128xf32> to vector<2x128xf32>
    %161 = vector.broadcast %cst_58 : f32 to vector<2x128xf32>
    %162 = arith.select %158, %160, %161 : vector<2x128xi1>, vector<2x128xf32>
    %163 = arith.addf %136, %162 : vector<2x128xf32>
    %c0_59 = arith.constant 0 : index
    %c0_60 = arith.constant 0 : index
    %164 = vector.load %arg26[%c0_59, %c0_60] : memref<2x256xf32, #tpu.memory_space<vmem>>, vector<2x128xf32>
    %165 = arith.addf %164, %163 : vector<2x128xf32>
    %c0_61 = arith.constant 0 : index
    %c0_62 = arith.constant 0 : index
    %166 = vector.load %arg26[%c0_61, %c0_62] : memref<2x256xf32, #tpu.memory_space<vmem>>, vector<2x128xf32>
    tpu.vector_store %arg26[%c0_61, %c0_62], %165 {strides = array<i32>} : memref<2x256xf32, #tpu.memory_space<vmem>>, vector<2x128xf32>,
    %c0_63 = arith.constant 0 : index
    %c128 = arith.constant 128 : index
    %167 = vector.load %arg26[%c0_63, %c128] : memref<2x256xf32, #tpu.memory_space<vmem>>, vector<2x128xf32>
    %168 = arith.addf %167, %107 : vector<2x128xf32>
    %c0_64 = arith.constant 0 : index
    %c128_65 = arith.constant 128 : index
    %169 = vector.load %arg26[%c0_64, %c128_65] : memref<2x256xf32, #tpu.memory_space<vmem>>, vector<2x128xf32>
    tpu.vector_store %arg26[%c0_64, %c128_65], %168 {strides = array<i32>} : memref<2x256xf32, #tpu.memory_space<vmem>>, vector<2x128xf32>,
    %c2_i32 = arith.constant 2 : i32
    %170 = arith.cmpi eq, %arg0, %c2_i32 : i32
    %171 = arith.extui %170 : i1 to i32
    %c0_i32_66 = arith.constant 0 : i32
    %172 = arith.cmpi ne, %171, %c0_i32_66 : i32
    scf.if %172 {
      %c0_67 = arith.constant 0 : index
      %c0_68 = arith.constant 0 : index
      %173 = vector.load %arg26[%c0_67, %c0_68] : memref<2x256xf32, #tpu.memory_space<vmem>>, vector<2x256xf32>
      %c0_69 = arith.constant 0 : index
      %c0_70 = arith.constant 0 : index
      %174 = vector.load %arg11[%c0_69, %c0_70] : memref<256x64xf32, #tpu.memory_space<vmem>>, vector<256x64xf32>
      %cst_71 = arith.constant dense<0.000000e+00> : vector<2x64xf32>
      %175 = tpu.matmul %173, %174, %cst_71 {dimension_numbers = #tpu.dot_dimension_numbers<[1], [0], [0], [1], [0, 0, 1, 1], [], []>} : vector<2x256xf32>, vector<256x64xf32>, vector<2x64xf32> -> vector<2x64xf32>
      %c0_72 = arith.constant 0 : index
      %c0_73 = arith.constant 0 : index
      %176 = vector.load %arg12[%c0_72, %c0_73] : memref<1x64xf32, #tpu.memory_space<vmem>>, vector<1x64xf32>
      %177 = vector.broadcast %176 : vector<1x64xf32> to vector<2x64xf32>
      %178 = arith.addf %175, %177 : vector<2x64xf32>
      %c0_74 = arith.constant 0 : index
      %c0_75 = arith.constant 0 : index
      %179 = vector.load %arg13[%c0_74, %c0_75] : memref<64x32xf32, #tpu.memory_space<vmem>>, vector<64x32xf32>
      %cst_76 = arith.constant dense<0.000000e+00> : vector<2x32xf32>
      %180 = tpu.matmul %178, %179, %cst_76 {dimension_numbers = #tpu.dot_dimension_numbers<[1], [0], [0], [1], [0, 0, 1, 1], [], []>} : vector<2x64xf32>, vector<64x32xf32>, vector<2x32xf32> -> vector<2x32xf32>
      %c0_77 = arith.constant 0 : index
      %c0_78 = arith.constant 0 : index
      %181 = vector.load %arg14[%c0_77, %c0_78] : memref<1x32xf32, #tpu.memory_space<vmem>>, vector<1x32xf32>
      %182 = vector.broadcast %181 : vector<1x32xf32> to vector<2x32xf32>
      %183 = arith.addf %180, %182 : vector<2x32xf32>
      %cst_79 = arith.constant 0.000000e+00 : f32
      %184 = vector.broadcast %cst_79 : f32 to vector<2x32xf32>
      %185 = arith.cmpf ogt, %183, %184 : vector<2x32xf32>
      %186 = math.exp %183 : vector<2x32xf32>
      %cst_80 = arith.constant 1.000000e+00 : f32
      %187 = vector.broadcast %cst_80 : f32 to vector<2x32xf32>
      %188 = arith.subf %186, %187 : vector<2x32xf32>
      %189 = arith.select %185, %183, %188 : vector<2x32xi1>, vector<2x32xf32>
      %c0_81 = arith.constant 0 : index
      %c0_82 = arith.constant 0 : index
      %190 = vector.load %arg15[%c0_81, %c0_82] : memref<32x16xf32, #tpu.memory_space<vmem>>, vector<32x16xf32>
      %cst_83 = arith.constant dense<0.000000e+00> : vector<2x16xf32>
      %191 = tpu.matmul %189, %190, %cst_83 {dimension_numbers = #tpu.dot_dimension_numbers<[1], [0], [0], [1], [0, 0, 1, 1], [], []>} : vector<2x32xf32>, vector<32x16xf32>, vector<2x16xf32> -> vector<2x16xf32>
      %c0_84 = arith.constant 0 : index
      %c0_85 = arith.constant 0 : index
      %192 = vector.load %arg16[%c0_84, %c0_85] : memref<1x16xf32, #tpu.memory_space<vmem>>, vector<1x16xf32>
      %193 = vector.broadcast %192 : vector<1x16xf32> to vector<2x16xf32>
      %194 = arith.addf %191, %193 : vector<2x16xf32>
      %cst_86 = arith.constant 0.000000e+00 : f32
      %195 = vector.broadcast %cst_86 : f32 to vector<2x16xf32>
      %196 = arith.cmpf ogt, %194, %195 : vector<2x16xf32>
      %197 = math.exp %194 : vector<2x16xf32>
      %cst_87 = arith.constant 1.000000e+00 : f32
      %198 = vector.broadcast %cst_87 : f32 to vector<2x16xf32>
      %199 = arith.subf %197, %198 : vector<2x16xf32>
      %200 = arith.select %196, %194, %199 : vector<2x16xi1>, vector<2x16xf32>
      %c0_88 = arith.constant 0 : index
      %c0_89 = arith.constant 0 : index
      %201 = vector.load %arg17[%c0_88, %c0_89] : memref<16x8xf32, #tpu.memory_space<vmem>>, vector<16x8xf32>
      %cst_90 = arith.constant dense<0.000000e+00> : vector<2x8xf32>
      %202 = tpu.matmul %200, %201, %cst_90 {dimension_numbers = #tpu.dot_dimension_numbers<[1], [0], [0], [1], [0, 0, 1, 1], [], []>} : vector<2x16xf32>, vector<16x8xf32>, vector<2x8xf32> -> vector<2x8xf32>
      %c0_91 = arith.constant 0 : index
      %c0_92 = arith.constant 0 : index
      %203 = vector.load %arg18[%c0_91, %c0_92] : memref<1x8xf32, #tpu.memory_space<vmem>>, vector<1x8xf32>
      %204 = vector.broadcast %203 : vector<1x8xf32> to vector<2x8xf32>
      %205 = arith.addf %202, %204 : vector<2x8xf32>
      %cst_93 = arith.constant 0.000000e+00 : f32
      %206 = vector.broadcast %cst_93 : f32 to vector<2x8xf32>
      %207 = arith.cmpf ogt, %205, %206 : vector<2x8xf32>
      %208 = math.exp %205 : vector<2x8xf32>
      %cst_94 = arith.constant 1.000000e+00 : f32
      %209 = vector.broadcast %cst_94 : f32 to vector<2x8xf32>
      %210 = arith.subf %208, %209 : vector<2x8xf32>
      %211 = arith.select %207, %205, %210 : vector<2x8xi1>, vector<2x8xf32>
      %c0_95 = arith.constant 0 : index
      %c0_96 = arith.constant 0 : index
      %212 = vector.load %arg19[%c0_95, %c0_96] : memref<8x1xf32, #tpu.memory_space<vmem>>, vector<8x1xf32>
      %cst_97 = arith.constant dense<0.000000e+00> : vector<2x1xf32>
      %213 = tpu.matmul %211, %212, %cst_97 {dimension_numbers = #tpu.dot_dimension_numbers<[1], [0], [0], [1], [0, 0, 1, 1], [], []>} : vector<2x8xf32>, vector<8x1xf32>, vector<2x1xf32> -> vector<2x1xf32>
      %c0_98 = arith.constant 0 : index
      %c0_99 = arith.constant 0 : index
      %214 = vector.load %arg20[%c0_98, %c0_99] : memref<1x1xf32, #tpu.memory_space<vmem>>, vector<1x1xf32>
      %215 = vector.broadcast %214 : vector<1x1xf32> to vector<2x1xf32>
      %216 = arith.addf %213, %215 : vector<2x1xf32>
      %c0_100 = arith.constant 0 : index
      %c0_101 = arith.constant 0 : index
      %217 = vector.load %arg22[%c0_100, %c0_101] : memref<2x1xf32, #tpu.memory_space<vmem>>, vector<2x1xf32>
      tpu.vector_store %arg22[%c0_100, %c0_101], %216 {strides = array<i32>} : memref<2x1xf32, #tpu.memory_space<vmem>>, vector<2x1xf32>,
      %c0_102 = arith.constant 0 : index
      %c0_103 = arith.constant 0 : index
      %218 = vector.load %arg21[%c0_102, %c0_103] : memref<2x1xf32, #tpu.memory_space<vmem>>, vector<2x1xf32>
      %219 = arith.subf %216, %218 : vector<2x1xf32>
      %220 = arith.mulf %219, %219 : vector<2x1xf32>
      %cst_104 = arith.constant dense<0.000000e+00> : vector<2xf32>
      %221 = vector.multi_reduction <add>, %220, %cst_104 [1] : vector<2x1xf32> to vector<2xf32>
      %222 = vector.shape_cast %221 : vector<2xf32> to vector<2x1xf32>
      %cst_105 = arith.constant dense<0.000000e+00> : vector<1xf32>
      %223 = vector.multi_reduction <add>, %222, %cst_105 [0] : vector<2x1xf32> to vector<1xf32>
      %224 = vector.shape_cast %223 : vector<1xf32> to vector<1x1xf32>
      %cst_106 = arith.constant 2.000000e+00 : f32
      %225 = vector.broadcast %cst_106 : f32 to vector<1x1xf32>
      %226 = arith.divf %224, %225 : vector<1x1xf32>
      %c0_107 = arith.constant 0 : index
      %c0_108 = arith.constant 0 : index
      %227 = vector.load %arg23[%c0_107, %c0_108] : memref<1x1xf32, #tpu.memory_space<vmem>>, vector<1x1xf32>
      tpu.vector_store %arg23[%c0_107, %c0_108], %226 {strides = array<i32>} : memref<1x1xf32, #tpu.memory_space<vmem>>, vector<1x1xf32>,
    } else {
    }
    return
  }
  func.func @transform_0(%arg0: i32) -> (i32, i32) {
    %c0_i32 = arith.constant 0 : i32
    %c0_i32_0 = arith.constant 0 : i32
    %c0_i32_1 = arith.constant 0 : i32
    return %c0_i32, %c0_i32_0 : i32, i32
  }
  func.func @transform_1(%arg0: i32) -> (i32, i32) {
    %c0_i32 = arith.constant 0 : i32
    %c0_i32_0 = arith.constant 0 : i32
    %c0_i32_1 = arith.constant 0 : i32
    return %c0_i32, %c0_i32_0 : i32, i32
  }
  func.func @transform_2(%arg0: i32) -> (i32, i32) {
    %c0_i32 = arith.constant 0 : i32
    %c0_i32_0 = arith.constant 0 : i32
    %c0_i32_1 = arith.constant 0 : i32
    return %c0_i32, %c0_i32_0 : i32, i32
  }
  func.func @transform_3(%arg0: i32) -> (i32, i32) {
    %c0_i32 = arith.constant 0 : i32
    %c0_i32_0 = arith.constant 0 : i32
    %c0_i32_1 = arith.constant 0 : i32
    return %c0_i32, %c0_i32_0 : i32, i32
  }
  func.func @transform_4(%arg0: i32) -> (i32, i32) {
    %c0_i32 = arith.constant 0 : i32
    %c0_i32_0 = arith.constant 0 : i32
    %c0_i32_1 = arith.constant 0 : i32
    return %c0_i32, %c0_i32_0 : i32, i32
  }
  func.func @transform_5(%arg0: i32) -> (i32, i32, i32) {
    %c1_i32 = arith.constant 1 : i32
    %0 = arith.subi %arg0, %c1_i32 : i32
    %c0_i32 = arith.constant 0 : i32
    %1 = arith.maxsi %0, %c0_i32 : i32
    %c0_i32_0 = arith.constant 0 : i32
    %c0_i32_1 = arith.constant 0 : i32
    %c0_i32_2 = arith.constant 0 : i32
    return %1, %c0_i32_0, %c0_i32_1 : i32, i32, i32
  }
  func.func @transform_6(%arg0: i32) -> (i32, i32, i32) {
    %c0_i32 = arith.constant 0 : i32
    %c0_i32_0 = arith.constant 0 : i32
    %c0_i32_1 = arith.constant 0 : i32
    return %arg0, %c0_i32, %c0_i32_0 : i32, i32, i32
  }
  func.func @transform_7(%arg0: i32) -> (i32, i32, i32) {
    %c0_i32 = arith.constant 0 : i32
    %c0_i32_0 = arith.constant 0 : i32
    %c0_i32_1 = arith.constant 0 : i32
    return %arg0, %c0_i32, %c0_i32_0 : i32, i32, i32
  }
  func.func @transform_8(%arg0: i32) -> (i32, i32, i32) {
    %c0_i32 = arith.constant 0 : i32
    %c0_i32_0 = arith.constant 0 : i32
    %c0_i32_1 = arith.constant 0 : i32
    return %arg0, %c0_i32, %c0_i32_0 : i32, i32, i32
  }
  func.func @transform_9(%arg0: i32) -> (i32, i32, i32) {
    %c0_i32 = arith.constant 0 : i32
    %c0_i32_0 = arith.constant 0 : i32
    %c0_i32_1 = arith.constant 0 : i32
    return %arg0, %c0_i32, %c0_i32_0 : i32, i32, i32
  }
  func.func @transform_10(%arg0: i32) -> (i32, i32) {
    %c0_i32 = arith.constant 0 : i32
    %c0_i32_0 = arith.constant 0 : i32
    %c0_i32_1 = arith.constant 0 : i32
    return %c0_i32, %c0_i32_0 : i32, i32
  }
  func.func @transform_11(%arg0: i32) -> (i32, i32) {
    %c0_i32 = arith.constant 0 : i32
    %c0_i32_0 = arith.constant 0 : i32
    %c0_i32_1 = arith.constant 0 : i32
    return %c0_i32, %c0_i32_0 : i32, i32
  }
  func.func @transform_12(%arg0: i32) -> (i32, i32) {
    %c0_i32 = arith.constant 0 : i32
    %c0_i32_0 = arith.constant 0 : i32
    %c0_i32_1 = arith.constant 0 : i32
    return %c0_i32, %c0_i32_0 : i32, i32
  }
  func.func @transform_13(%arg0: i32) -> (i32, i32) {
    %c0_i32 = arith.constant 0 : i32
    %c0_i32_0 = arith.constant 0 : i32
    %c0_i32_1 = arith.constant 0 : i32
    return %c0_i32, %c0_i32_0 : i32, i32
  }
  func.func @transform_14(%arg0: i32) -> (i32, i32) {
    %c0_i32 = arith.constant 0 : i32
    %c0_i32_0 = arith.constant 0 : i32
    %c0_i32_1 = arith.constant 0 : i32
    return %c0_i32, %c0_i32_0 : i32, i32
  }
  func.func @transform_15(%arg0: i32) -> (i32, i32) {
    %c0_i32 = arith.constant 0 : i32
    %c0_i32_0 = arith.constant 0 : i32
    %c0_i32_1 = arith.constant 0 : i32
    return %c0_i32, %c0_i32_0 : i32, i32
  }
  func.func @transform_16(%arg0: i32) -> (i32, i32) {
    %c0_i32 = arith.constant 0 : i32
    %c0_i32_0 = arith.constant 0 : i32
    %c0_i32_1 = arith.constant 0 : i32
    return %c0_i32, %c0_i32_0 : i32, i32
  }
  func.func @transform_17(%arg0: i32) -> (i32, i32) {
    %c0_i32 = arith.constant 0 : i32
    %c0_i32_0 = arith.constant 0 : i32
    %c0_i32_1 = arith.constant 0 : i32
    return %c0_i32, %c0_i32_0 : i32, i32
  }
  func.func @transform_18(%arg0: i32) -> (i32, i32) {
    %c0_i32 = arith.constant 0 : i32
    %c0_i32_0 = arith.constant 0 : i32
    %c0_i32_1 = arith.constant 0 : i32
    return %c0_i32, %c0_i32_0 : i32, i32
  }
  func.func @transform_19(%arg0: i32) -> (i32, i32) {
    %c0_i32 = arith.constant 0 : i32
    %c0_i32_0 = arith.constant 0 : i32
    %c0_i32_1 = arith.constant 0 : i32
    return %c0_i32, %c0_i32_0 : i32, i32
  }
  func.func @transform_20(%arg0: i32) -> (i32, i32) {
    %c0_i32 = arith.constant 0 : i32
    %c0_i32_0 = arith.constant 0 : i32
    %c0_i32_1 = arith.constant 0 : i32
    return %c0_i32, %c0_i32_0 : i32, i32
  }
  func.func @transform_21(%arg0: i32) -> (i32, i32) {
    %c0_i32 = arith.constant 0 : i32
    %c0_i32_0 = arith.constant 0 : i32
    %c0_i32_1 = arith.constant 0 : i32
    return %c0_i32, %c0_i32_0 : i32, i32
  }
  func.func @transform_22(%arg0: i32) -> (i32, i32) {
    %c0_i32 = arith.constant 0 : i32
    %c0_i32_0 = arith.constant 0 : i32
    %c0_i32_1 = arith.constant 0 : i32
    return %c0_i32, %c0_i32_0 : i32, i32
  }
}

module attributes {stable_mosaic.version = 11 : i64} {
  func.func @_hiernet_kernel(%arg0: i32, %arg1: memref<128x128xf32, #tpu.memory_space<vmem>>, %arg2: memref<128x128xbf16, #tpu.memory_space<vmem>>, %arg3: memref<2x128xbf16, #tpu.memory_space<vmem>>, %arg4: memref<128x2xf32, #tpu.memory_space<vmem>>, %arg5: memref<128x128xf32, #tpu.memory_space<vmem>>, %arg6: memref<1x128x128xf32, #tpu.memory_space<vmem>>, %arg7: memref<1x1x128xf32, #tpu.memory_space<vmem>>, %arg8: memref<1x1x128xf32, #tpu.memory_space<vmem>>, %arg9: memref<1x1x128xf32, #tpu.memory_space<vmem>>, %arg10: memref<1x1x1xf32, #tpu.memory_space<vmem>>, %arg11: memref<256x64xf32, #tpu.memory_space<vmem>>, %arg12: memref<1x64xf32, #tpu.memory_space<vmem>>, %arg13: memref<64x32xf32, #tpu.memory_space<vmem>>, %arg14: memref<1x32xf32, #tpu.memory_space<vmem>>, %arg15: memref<32x16xf32, #tpu.memory_space<vmem>>, %arg16: memref<1x16xf32, #tpu.memory_space<vmem>>, %arg17: memref<16x8xf32, #tpu.memory_space<vmem>>, %arg18: memref<1x8xf32, #tpu.memory_space<vmem>>, %arg19: memref<8x1xf32, #tpu.memory_space<vmem>>, %arg20: memref<1x1xf32, #tpu.memory_space<vmem>>, %arg21: memref<2x1xf32, #tpu.memory_space<vmem>>, %arg22: memref<2x1xf32, #tpu.memory_space<vmem>>, %arg23: memref<1x1xf32, #tpu.memory_space<vmem>>, %arg24: memref<128x128xf32, #tpu.memory_space<vmem>>, %arg25: memref<128x1xf32, #tpu.memory_space<vmem>>, %arg26: memref<2x256xf32, #tpu.memory_space<vmem>>, %arg27: memref<128x128xf32, #tpu.memory_space<vmem>>) attributes {dimension_semantics = [#tpu.dimension_semantics<arbitrary>], iteration_bounds = array<i64: 3>, scalar_prefetch = 0 : i64, scratch_operands = 4 : i64, tpu.core_type = #tpu.core_type<tc>, window_params = [{pipeline_mode = #tpu.pipeline_mode<synchronous>, transform_indices = @transform_0, window_bounds = array<i64: 128, 128>}, {pipeline_mode = #tpu.pipeline_mode<synchronous>, transform_indices = @transform_1, window_bounds = array<i64: 128, 128>}, {pipeline_mode = #tpu.pipeline_mode<synchronous>, transform_indices = @transform_2, window_bounds = array<i64: 2, 128>}, {pipeline_mode = #tpu.pipeline_mode<synchronous>, transform_indices = @transform_3, window_bounds = array<i64: 128, 2>}, {pipeline_mode = #tpu.pipeline_mode<synchronous>, transform_indices = @transform_4, window_bounds = array<i64: 128, 128>}, {transform_indices = @transform_5, window_bounds = array<i64: 1, 128, 128>}, {transform_indices = @transform_6, window_bounds = array<i64: 1, 1, 128>}, {transform_indices = @transform_7, window_bounds = array<i64: 1, 1, 128>}, {transform_indices = @transform_8, window_bounds = array<i64: 1, 1, 128>}, {transform_indices = @transform_9, window_bounds = array<i64: 1, 1, 1>}, {pipeline_mode = #tpu.pipeline_mode<synchronous>, transform_indices = @transform_10, window_bounds = array<i64: 256, 64>}, {pipeline_mode = #tpu.pipeline_mode<synchronous>, transform_indices = @transform_11, window_bounds = array<i64: 1, 64>}, {pipeline_mode = #tpu.pipeline_mode<synchronous>, transform_indices = @transform_12, window_bounds = array<i64: 64, 32>}, {pipeline_mode = #tpu.pipeline_mode<synchronous>, transform_indices = @transform_13, window_bounds = array<i64: 1, 32>}, {pipeline_mode = #tpu.pipeline_mode<synchronous>, transform_indices = @transform_14, window_bounds = array<i64: 32, 16>}, {pipeline_mode = #tpu.pipeline_mode<synchronous>, transform_indices = @transform_15, window_bounds = array<i64: 1, 16>}, {pipeline_mode = #tpu.pipeline_mode<synchronous>, transform_indices = @transform_16, window_bounds = array<i64: 16, 8>}, {pipeline_mode = #tpu.pipeline_mode<synchronous>, transform_indices = @transform_17, window_bounds = array<i64: 1, 8>}, {pipeline_mode = #tpu.pipeline_mode<synchronous>, transform_indices = @transform_18, window_bounds = array<i64: 8, 1>}, {pipeline_mode = #tpu.pipeline_mode<synchronous>, transform_indices = @transform_19, window_bounds = array<i64: 1, 1>}, {pipeline_mode = #tpu.pipeline_mode<synchronous>, transform_indices = @transform_20, window_bounds = array<i64: 2, 1>}, {pipeline_mode = #tpu.pipeline_mode<synchronous>, transform_indices = @transform_21, window_bounds = array<i64: 2, 1>}, {pipeline_mode = #tpu.pipeline_mode<synchronous>, transform_indices = @transform_22, window_bounds = array<i64: 1, 1>}]} {
    %c0_i32 = arith.constant 0 : i32
    %0 = arith.cmpi eq, %arg0, %c0_i32 : i32
    %1 = arith.extui %0 : i1 to i32
    %c0_i32_0 = arith.constant 0 : i32
    %2 = arith.cmpi ne, %1, %c0_i32_0 : i32
    scf.if %2 {
      %c0_69 = arith.constant 0 : index
      %c0_70 = arith.constant 0 : index
      %178 = vector.load %arg4[%c0_69, %c0_70] : memref<128x2xf32, #tpu.memory_space<vmem>>, vector<128x2xf32>
      %cst_71 = arith.constant dense<0.000000e+00> : vector<128xf32>
      %179 = vector.multi_reduction <add>, %178, %cst_71 [1] : vector<128x2xf32> to vector<128xf32>
      %180 = vector.shape_cast %179 : vector<128xf32> to vector<128x1xf32>
      %c0_72 = arith.constant 0 : index
      %c0_73 = arith.constant 0 : index
      %181 = vector.load %arg25[%c0_72, %c0_73] : memref<128x1xf32, #tpu.memory_space<vmem>>, vector<128x1xf32>
      tpu.vector_store %arg25[%c0_72, %c0_73], %180 {strides = array<i32>} : memref<128x1xf32, #tpu.memory_space<vmem>>, vector<128x1xf32>,
      %cst_74 = arith.constant 0.000000e+00 : f32
      %182 = vector.broadcast %cst_74 : f32 to vector<2x256xf32>
      %c0_75 = arith.constant 0 : index
      %c0_76 = arith.constant 0 : index
      %183 = vector.load %arg26[%c0_75, %c0_76] : memref<2x256xf32, #tpu.memory_space<vmem>>, vector<2x256xf32>
      tpu.vector_store %arg26[%c0_75, %c0_76], %182 {strides = array<i32>} : memref<2x256xf32, #tpu.memory_space<vmem>>, vector<2x256xf32>,
      %c0_77 = arith.constant 0 : index
      %c0_78 = arith.constant 0 : index
      %184 = vector.load %arg1[%c0_77, %c0_78] : memref<128x128xf32, #tpu.memory_space<vmem>>, vector<128x128xf32>
      %c0_79 = arith.constant 0 : index
      %c0_80 = arith.constant 0 : index
      %185 = vector.load %arg5[%c0_79, %c0_80] : memref<128x128xf32, #tpu.memory_space<vmem>>, vector<128x128xf32>
      %cst_81 = arith.constant dense<0.000000e+00> : vector<128x128xf32>
      %186 = tpu.matmul %184, %185, %cst_81 {dimension_numbers = #tpu.dot_dimension_numbers<[1], [0], [0], [1], [0, 0, 1, 1], [], []>} : vector<128x128xf32>, vector<128x128xf32>, vector<128x128xf32> -> vector<128x128xf32>
      %c0_82 = arith.constant 0 : index
      %c0_83 = arith.constant 0 : index
      %187 = vector.load %arg27[%c0_82, %c0_83] : memref<128x128xf32, #tpu.memory_space<vmem>>, vector<128x128xf32>
      tpu.vector_store %arg27[%c0_82, %c0_83], %186 {strides = array<i32>} : memref<128x128xf32, #tpu.memory_space<vmem>>, vector<128x128xf32>,
    } else {
    }
    %c0_i32_1 = arith.constant 0 : i32
    %3 = arith.cmpi sgt, %arg0, %c0_i32_1 : i32
    %4 = arith.extui %3 : i1 to i32
    %c0_i32_2 = arith.constant 0 : i32
    %5 = arith.cmpi ne, %4, %c0_i32_2 : i32
    scf.if %5 {
      %c0_69 = arith.constant 0 : index
      %c0_70 = arith.constant 0 : index
      %178 = vector.load %arg24[%c0_69, %c0_70] : memref<128x128xf32, #tpu.memory_space<vmem>>, vector<128x128xf32>
      %c0_71 = arith.constant 0 : index
      %c0_72 = arith.constant 0 : index
      %c0_73 = arith.constant 0 : index
      %179 = vector.load %arg6[%c0_71, %c0_72, %c0_73] : memref<1x128x128xf32, #tpu.memory_space<vmem>>, vector<1x128x128xf32>
      %180 = vector.shape_cast %179 : vector<1x128x128xf32> to vector<128x128xf32>
      %cst_74 = arith.constant dense<0.000000e+00> : vector<128x128xf32>
      %181 = tpu.matmul %178, %180, %cst_74 {dimension_numbers = #tpu.dot_dimension_numbers<[1], [0], [0], [1], [0, 0, 1, 1], [], []>} : vector<128x128xf32>, vector<128x128xf32>, vector<128x128xf32> -> vector<128x128xf32>
      %c0_75 = arith.constant 0 : index
      %c0_76 = arith.constant 0 : index
      %182 = vector.load %arg27[%c0_75, %c0_76] : memref<128x128xf32, #tpu.memory_space<vmem>>, vector<128x128xf32>
      tpu.vector_store %arg27[%c0_75, %c0_76], %181 {strides = array<i32>} : memref<128x128xf32, #tpu.memory_space<vmem>>, vector<128x128xf32>,
    } else {
    }
    %c0 = arith.constant 0 : index
    %c0_3 = arith.constant 0 : index
    %6 = vector.load %arg2[%c0, %c0_3] : memref<128x128xbf16, #tpu.memory_space<vmem>>, vector<128x128xbf16>
    %c0_4 = arith.constant 0 : index
    %c0_5 = arith.constant 0 : index
    %7 = vector.load %arg25[%c0_4, %c0_5] : memref<128x1xf32, #tpu.memory_space<vmem>>, vector<128x1xf32>
    %c0_6 = arith.constant 0 : index
    %c0_7 = arith.constant 0 : index
    %8 = vector.load %arg27[%c0_6, %c0_7] : memref<128x128xf32, #tpu.memory_space<vmem>>, vector<128x128xf32>
    %9 = arith.truncf %7 : vector<128x1xf32> to vector<128x1xbf16>
    %cst = arith.constant dense<0.000000e+00> : vector<128x1xf32>
    %10 = tpu.matmul %6, %9, %cst {dimension_numbers = #tpu.dot_dimension_numbers<[1], [0], [0], [1], [0, 0, 1, 1], [], []>} : vector<128x128xbf16>, vector<128x1xbf16>, vector<128x1xf32> -> vector<128x1xf32>
    %11 = arith.mulf %7, %10 : vector<128x1xf32>
    %12 = arith.addf %11, %7 : vector<128x1xf32>
    %cst_8 = arith.constant 0.000000e+00 : f32
    %13 = vector.broadcast %cst_8 : f32 to vector<128x1xf32>
    %14 = arith.cmpf ogt, %12, %13 : vector<128x1xf32>
    %15 = math.rsqrt %12 : vector<128x1xf32>
    %cst_9 = arith.constant 0.000000e+00 : f32
    %16 = vector.broadcast %cst_9 : f32 to vector<128x1xf32>
    %17 = arith.select %14, %15, %16 : vector<128x1xi1>, vector<128x1xf32>
    %18 = arith.mulf %7, %17 : vector<128x1xf32>
    %19 = vector.broadcast %18 : vector<128x1xf32> to vector<128x128xf32>
    %20 = arith.mulf %19, %8 : vector<128x128xf32>
    %21 = arith.truncf %20 : vector<128x128xf32> to vector<128x128xbf16>
    %cst_10 = arith.constant dense<0.000000e+00> : vector<128x128xf32>
    %22 = tpu.matmul %6, %21, %cst_10 {dimension_numbers = #tpu.dot_dimension_numbers<[1], [0], [0], [1], [0, 0, 1, 1], [], []>} : vector<128x128xbf16>, vector<128x128xbf16>, vector<128x128xf32> -> vector<128x128xf32>
    %23 = vector.broadcast %18 : vector<128x1xf32> to vector<128x128xf32>
    %24 = arith.mulf %23, %22 : vector<128x128xf32>
    %25 = arith.mulf %18, %17 : vector<128x1xf32>
    %26 = vector.broadcast %25 : vector<128x1xf32> to vector<128x128xf32>
    %27 = arith.mulf %26, %8 : vector<128x128xf32>
    %28 = arith.addf %24, %27 : vector<128x128xf32>
    %c0_11 = arith.constant 0 : index
    %c0_12 = arith.constant 0 : index
    %c0_13 = arith.constant 0 : index
    %29 = vector.load %arg7[%c0_11, %c0_12, %c0_13] : memref<1x1x128xf32, #tpu.memory_space<vmem>>, vector<1x1x128xf32>
    %30 = vector.shape_cast %29 : vector<1x1x128xf32> to vector<1x128xf32>
    %31 = vector.broadcast %30 : vector<1x128xf32> to vector<128x128xf32>
    %32 = arith.addf %28, %31 : vector<128x128xf32>
    %cst_14 = arith.constant 0.000000e+00 : f32
    %33 = vector.broadcast %cst_14 : f32 to vector<128x128xf32>
    %34 = arith.maximumf %32, %33 : vector<128x128xf32>
    %35 = vector.broadcast %7 : vector<128x1xf32> to vector<128x128xf32>
    %36 = arith.mulf %34, %35 : vector<128x128xf32>
    %37 = arith.truncf %36 : vector<128x128xf32> to vector<128x128xbf16>
    %cst_15 = arith.constant dense<0.000000e+00> : vector<128x128xf32>
    %38 = tpu.matmul %6, %37, %cst_15 {dimension_numbers = #tpu.dot_dimension_numbers<[1], [0], [0], [1], [0, 0, 1, 1], [], []>} : vector<128x128xbf16>, vector<128x128xbf16>, vector<128x128xf32> -> vector<128x128xf32>
    %c0_16 = arith.constant 0 : index
    %c0_17 = arith.constant 0 : index
    %c0_18 = arith.constant 0 : index
    %39 = vector.load %arg8[%c0_16, %c0_17, %c0_18] : memref<1x1x128xf32, #tpu.memory_space<vmem>>, vector<1x1x128xf32>
    %40 = vector.shape_cast %39 : vector<1x1x128xf32> to vector<1x128xf32>
    %41 = vector.broadcast %40 : vector<1x128xf32> to vector<128x128xf32>
    %42 = arith.mulf %38, %41 : vector<128x128xf32>
    %c0_19 = arith.constant 0 : index
    %c0_20 = arith.constant 0 : index
    %c0_21 = arith.constant 0 : index
    %43 = vector.load %arg9[%c0_19, %c0_20, %c0_21] : memref<1x1x128xf32, #tpu.memory_space<vmem>>, vector<1x1x128xf32>
    %44 = vector.shape_cast %43 : vector<1x1x128xf32> to vector<1x128xf32>
    %45 = vector.broadcast %44 : vector<1x128xf32> to vector<128x128xf32>
    %46 = arith.mulf %36, %45 : vector<128x128xf32>
    %47 = arith.addf %42, %46 : vector<128x128xf32>
    %cst_22 = arith.constant dense<0.000000e+00> : vector<128xf32>
    %48 = vector.multi_reduction <add>, %47, %cst_22 [1] : vector<128x128xf32> to vector<128xf32>
    %49 = vector.shape_cast %48 : vector<128xf32> to vector<128x1xf32>
    %c0_23 = arith.constant 0 : index
    %c0_24 = arith.constant 0 : index
    %c0_25 = arith.constant 0 : index
    %50 = vector.load %arg10[%c0_23, %c0_24, %c0_25] : memref<1x1x1xf32, #tpu.memory_space<vmem>>, vector<1x1x1xf32>
    %51 = vector.shape_cast %50 : vector<1x1x1xf32> to vector<1x1xf32>
    %52 = vector.broadcast %51 : vector<1x1xf32> to vector<128x1xf32>
    %53 = arith.addf %49, %52 : vector<128x1xf32>
    %54 = tpu.iota {dimensions = array<i32: 0>} : vector<128x1xi32>
    %55 = tpu.iota {dimensions = array<i32: 1>} : vector<1x128xi32>
    %56 = vector.broadcast %54 : vector<128x1xi32> to vector<128x128xi32>
    %57 = vector.broadcast %55 : vector<1x128xi32> to vector<128x128xi32>
    %58 = arith.cmpi eq, %56, %57 : vector<128x128xi32>
    %cst_26 = arith.constant 0.000000e+00 : f32
    %59 = vector.shape_cast %53 : vector<128x1xf32> to vector<128x1xf32>
    %60 = vector.broadcast %59 : vector<128x1xf32> to vector<128x128xf32>
    %61 = vector.broadcast %cst_26 : f32 to vector<128x128xf32>
    %62 = arith.select %58, %60, %61 : vector<128x128xi1>, vector<128x128xf32>
    %cst_27 = arith.constant dense<0.000000e+00> : vector<128xf32>
    %63 = vector.multi_reduction <add>, %62, %cst_27 [0] : vector<128x128xf32> to vector<128xf32>
    %64 = vector.shape_cast %63 : vector<128xf32> to vector<1x128xf32>
    %65 = vector.broadcast %64 : vector<1x128xf32> to vector<128x128xf32>
    %66 = vector.broadcast %53 : vector<128x1xf32> to vector<128x128xf32>
    %67 = arith.cmpf ogt, %65, %66 : vector<128x128xf32>
    %68 = vector.broadcast %64 : vector<1x128xf32> to vector<128x128xf32>
    %69 = vector.broadcast %53 : vector<128x1xf32> to vector<128x128xf32>
    %70 = arith.cmpf oeq, %68, %69 : vector<128x128xf32>
    %71 = vector.broadcast %55 : vector<1x128xi32> to vector<128x128xi32>
    %72 = vector.broadcast %54 : vector<128x1xi32> to vector<128x128xi32>
    %73 = arith.cmpi slt, %71, %72 : vector<128x128xi32>
    %74 = arith.andi %70, %73 : vector<128x128xi1>
    %75 = arith.ori %67, %74 : vector<128x128xi1>
    %76 = arith.extui %75 : vector<128x128xi1> to vector<128x128xi32>
    %77 = arith.sitofp %76 : vector<128x128xi32> to vector<128x128xf32>
    %78 = arith.truncf %77 : vector<128x128xf32> to vector<128x128xbf16>
    %c0_28 = arith.constant 0 : index
    %c0_29 = arith.constant 0 : index
    %79 = vector.load %arg4[%c0_28, %c0_29] : memref<128x2xf32, #tpu.memory_space<vmem>>, vector<128x2xf32>
    %80 = vector.broadcast %7 : vector<128x1xf32> to vector<128x2xf32>
    %81 = arith.mulf %79, %80 : vector<128x2xf32>
    %82 = arith.truncf %81 : vector<128x2xf32> to vector<128x2xbf16>
    %cst_30 = arith.constant dense<0.000000e+00> : vector<128x2xf32>
    %83 = tpu.matmul %78, %82, %cst_30 {dimension_numbers = #tpu.dot_dimension_numbers<[1], [0], [0], [1], [0, 0, 1, 1], [], []>} : vector<128x128xbf16>, vector<128x2xbf16>, vector<128x2xf32> -> vector<128x2xf32>
    %84 = arith.mulf %79, %83 : vector<128x2xf32>
    %cst_31 = arith.constant dense<0.000000e+00> : vector<128xf32>
    %85 = vector.multi_reduction <add>, %84, %cst_31 [1] : vector<128x2xf32> to vector<128xf32>
    %86 = vector.shape_cast %85 : vector<128xf32> to vector<128x1xf32>
    %cst_32 = arith.constant dense<0.000000e+00> : vector<2xf32>
    %87 = vector.multi_reduction <add>, %81, %cst_32 [0] : vector<128x2xf32> to vector<2xf32>
    %88 = vector.shape_cast %87 : vector<2xf32> to vector<1x2xf32>
    %89 = vector.broadcast %88 : vector<1x2xf32> to vector<128x2xf32>
    %90 = arith.mulf %79, %89 : vector<128x2xf32>
    %cst_33 = arith.constant dense<0.000000e+00> : vector<128xf32>
    %91 = vector.multi_reduction <add>, %90, %cst_33 [1] : vector<128x2xf32> to vector<128xf32>
    %92 = vector.shape_cast %91 : vector<128xf32> to vector<128x1xf32>
    %cst_34 = arith.constant 5.000000e-01 : f32
    %93 = vector.broadcast %cst_34 : f32 to vector<128x1xf32>
    %94 = arith.mulf %93, %92 : vector<128x1xf32>
    %95 = math.ceil %94 : vector<128x1xf32>
    %96 = arith.cmpf olt, %86, %95 : vector<128x1xf32>
    %cst_35 = arith.constant 0.000000e+00 : f32
    %97 = vector.broadcast %cst_35 : f32 to vector<128x1xf32>
    %98 = arith.cmpf ogt, %7, %97 : vector<128x1xf32>
    %99 = arith.andi %96, %98 : vector<128x1xi1>
    %cst_36 = arith.constant 1.000000e+00 : f32
    %cst_37 = arith.constant 0.000000e+00 : f32
    %100 = vector.broadcast %cst_36 : f32 to vector<128x1xf32>
    %101 = vector.broadcast %cst_37 : f32 to vector<128x1xf32>
    %102 = arith.select %99, %100, %101 : vector<128x1xi1>, vector<128x1xf32>
    %103 = math.tanh %53 : vector<128x1xf32>
    %104 = vector.broadcast %103 : vector<128x1xf32> to vector<128x128xf32>
    %105 = arith.mulf %36, %104 : vector<128x128xf32>
    %106 = vector.broadcast %102 : vector<128x1xf32> to vector<128x128xf32>
    %107 = arith.mulf %105, %106 : vector<128x128xf32>
    %c0_38 = arith.constant 0 : index
    %c0_39 = arith.constant 0 : index
    %108 = vector.load %arg25[%c0_38, %c0_39] : memref<128x1xf32, #tpu.memory_space<vmem>>, vector<128x1xf32>
    tpu.vector_store %arg25[%c0_38, %c0_39], %102 {strides = array<i32>} : memref<128x1xf32, #tpu.memory_space<vmem>>, vector<128x1xf32>,
    %c0_40 = arith.constant 0 : index
    %c0_41 = arith.constant 0 : index
    %109 = vector.load %arg24[%c0_40, %c0_41] : memref<128x128xf32, #tpu.memory_space<vmem>>, vector<128x128xf32>
    tpu.vector_store %arg24[%c0_40, %c0_41], %107 {strides = array<i32>} : memref<128x128xf32, #tpu.memory_space<vmem>>, vector<128x128xf32>,
    %c0_42 = arith.constant 0 : index
    %c0_43 = arith.constant 0 : index
    %110 = vector.load %arg3[%c0_42, %c0_43] : memref<2x128xbf16, #tpu.memory_space<vmem>>, vector<2x128xbf16>
    %111 = arith.truncf %107 : vector<128x128xf32> to vector<128x128xbf16>
    %cst_44 = arith.constant dense<0.000000e+00> : vector<2x128xf32>
    %112 = tpu.matmul %110, %111, %cst_44 {dimension_numbers = #tpu.dot_dimension_numbers<[1], [0], [0], [1], [0, 0, 1, 1], [], []>} : vector<2x128xbf16>, vector<128x128xbf16>, vector<2x128xf32> -> vector<2x128xf32>
    %113 = tpu.iota {dimensions = array<i32: 0>} : vector<2x1xi32>
    %cst_45 = arith.constant 0.000000e+00 : f32
    %114 = vector.broadcast %cst_45 : f32 to vector<2x128xf32>
    %115 = vector.extract_strided_slice %79 {offsets = [0, 0], sizes = [128, 1], strides = [1, 1]} : vector<128x2xf32> to vector<128x1xf32>
    %116 = arith.mulf %115, %102 : vector<128x1xf32>
    %cst_46 = arith.constant 0.000000e+00 : f32
    %117 = vector.broadcast %cst_46 : f32 to vector<128x1xf32>
    %118 = arith.cmpf ogt, %116, %117 : vector<128x1xf32>
    %cst_47 = arith.constant -1.000000e+30 : f32
    %119 = vector.shape_cast %118 : vector<128x1xi1> to vector<128x1xi1>
    %120 = vector.broadcast %119 : vector<128x1xi1> to vector<128x128xi1>
    %121 = vector.broadcast %cst_47 : f32 to vector<128x128xf32>
    %122 = arith.select %120, %107, %121 : vector<128x128xi1>, vector<128x128xf32>
    %cst_48 = arith.constant dense<0xFF800000> : vector<128xf32>
    %123 = vector.multi_reduction <maximumf>, %122, %cst_48 [0] : vector<128x128xf32> to vector<128xf32>
    %124 = vector.shape_cast %123 : vector<128xf32> to vector<1x128xf32>
    %cst_49 = arith.constant dense<0.000000e+00> : vector<1xf32>
    %125 = vector.multi_reduction <add>, %116, %cst_49 [0] : vector<128x1xf32> to vector<1xf32>
    %126 = vector.shape_cast %125 : vector<1xf32> to vector<1x1xf32>
    %cst_50 = arith.constant 0.000000e+00 : f32
    %127 = vector.broadcast %cst_50 : f32 to vector<1x1xf32>
    %128 = arith.cmpf ogt, %126, %127 : vector<1x1xf32>
    %cst_51 = arith.constant 0.000000e+00 : f32
    %129 = vector.shape_cast %128 : vector<1x1xi1> to vector<1x1xi1>
    %130 = vector.broadcast %129 : vector<1x1xi1> to vector<1x128xi1>
    %131 = vector.broadcast %cst_51 : f32 to vector<1x128xf32>
    %132 = arith.select %130, %124, %131 : vector<1x128xi1>, vector<1x128xf32>
    %c0_i32_52 = arith.constant 0 : i32
    %133 = vector.broadcast %c0_i32_52 : i32 to vector<2x1xi32>
    %134 = arith.cmpi eq, %113, %133 : vector<2x1xi32>
    %cst_53 = arith.constant 0.000000e+00 : f32
    %135 = vector.shape_cast %134 : vector<2x1xi1> to vector<2x1xi1>
    %136 = vector.broadcast %135 : vector<2x1xi1> to vector<2x128xi1>
    %137 = vector.shape_cast %132 : vector<1x128xf32> to vector<1x128xf32>
    %138 = vector.broadcast %137 : vector<1x128xf32> to vector<2x128xf32>
    %139 = vector.broadcast %cst_53 : f32 to vector<2x128xf32>
    %140 = arith.select %136, %138, %139 : vector<2x128xi1>, vector<2x128xf32>
    %141 = arith.addf %114, %140 : vector<2x128xf32>
    %142 = vector.extract_strided_slice %79 {offsets = [0, 1], sizes = [128, 1], strides = [1, 1]} : vector<128x2xf32> to vector<128x1xf32>
    %143 = arith.mulf %142, %102 : vector<128x1xf32>
    %cst_54 = arith.constant 0.000000e+00 : f32
    %144 = vector.broadcast %cst_54 : f32 to vector<128x1xf32>
    %145 = arith.cmpf ogt, %143, %144 : vector<128x1xf32>
    %cst_55 = arith.constant -1.000000e+30 : f32
    %146 = vector.shape_cast %145 : vector<128x1xi1> to vector<128x1xi1>
    %147 = vector.broadcast %146 : vector<128x1xi1> to vector<128x128xi1>
    %148 = vector.broadcast %cst_55 : f32 to vector<128x128xf32>
    %149 = arith.select %147, %107, %148 : vector<128x128xi1>, vector<128x128xf32>
    %cst_56 = arith.constant dense<0xFF800000> : vector<128xf32>
    %150 = vector.multi_reduction <maximumf>, %149, %cst_56 [0] : vector<128x128xf32> to vector<128xf32>
    %151 = vector.shape_cast %150 : vector<128xf32> to vector<1x128xf32>
    %cst_57 = arith.constant dense<0.000000e+00> : vector<1xf32>
    %152 = vector.multi_reduction <add>, %143, %cst_57 [0] : vector<128x1xf32> to vector<1xf32>
    %153 = vector.shape_cast %152 : vector<1xf32> to vector<1x1xf32>
    %cst_58 = arith.constant 0.000000e+00 : f32
    %154 = vector.broadcast %cst_58 : f32 to vector<1x1xf32>
    %155 = arith.cmpf ogt, %153, %154 : vector<1x1xf32>
    %cst_59 = arith.constant 0.000000e+00 : f32
    %156 = vector.shape_cast %155 : vector<1x1xi1> to vector<1x1xi1>
    %157 = vector.broadcast %156 : vector<1x1xi1> to vector<1x128xi1>
    %158 = vector.broadcast %cst_59 : f32 to vector<1x128xf32>
    %159 = arith.select %157, %151, %158 : vector<1x128xi1>, vector<1x128xf32>
    %c1_i32 = arith.constant 1 : i32
    %160 = vector.broadcast %c1_i32 : i32 to vector<2x1xi32>
    %161 = arith.cmpi eq, %113, %160 : vector<2x1xi32>
    %cst_60 = arith.constant 0.000000e+00 : f32
    %162 = vector.shape_cast %161 : vector<2x1xi1> to vector<2x1xi1>
    %163 = vector.broadcast %162 : vector<2x1xi1> to vector<2x128xi1>
    %164 = vector.shape_cast %159 : vector<1x128xf32> to vector<1x128xf32>
    %165 = vector.broadcast %164 : vector<1x128xf32> to vector<2x128xf32>
    %166 = vector.broadcast %cst_60 : f32 to vector<2x128xf32>
    %167 = arith.select %163, %165, %166 : vector<2x128xi1>, vector<2x128xf32>
    %168 = arith.addf %141, %167 : vector<2x128xf32>
    %c0_61 = arith.constant 0 : index
    %c0_62 = arith.constant 0 : index
    %169 = vector.load %arg26[%c0_61, %c0_62] : memref<2x256xf32, #tpu.memory_space<vmem>>, vector<2x128xf32>
    %170 = arith.addf %169, %168 : vector<2x128xf32>
    %c0_63 = arith.constant 0 : index
    %c0_64 = arith.constant 0 : index
    %171 = vector.load %arg26[%c0_63, %c0_64] : memref<2x256xf32, #tpu.memory_space<vmem>>, vector<2x128xf32>
    tpu.vector_store %arg26[%c0_63, %c0_64], %170 {strides = array<i32>} : memref<2x256xf32, #tpu.memory_space<vmem>>, vector<2x128xf32>,
    %c0_65 = arith.constant 0 : index
    %c128 = arith.constant 128 : index
    %172 = vector.load %arg26[%c0_65, %c128] : memref<2x256xf32, #tpu.memory_space<vmem>>, vector<2x128xf32>
    %173 = arith.addf %172, %112 : vector<2x128xf32>
    %c0_66 = arith.constant 0 : index
    %c128_67 = arith.constant 128 : index
    %174 = vector.load %arg26[%c0_66, %c128_67] : memref<2x256xf32, #tpu.memory_space<vmem>>, vector<2x128xf32>
    tpu.vector_store %arg26[%c0_66, %c128_67], %173 {strides = array<i32>} : memref<2x256xf32, #tpu.memory_space<vmem>>, vector<2x128xf32>,
    %c2_i32 = arith.constant 2 : i32
    %175 = arith.cmpi eq, %arg0, %c2_i32 : i32
    %176 = arith.extui %175 : i1 to i32
    %c0_i32_68 = arith.constant 0 : i32
    %177 = arith.cmpi ne, %176, %c0_i32_68 : i32
    scf.if %177 {
      %c0_69 = arith.constant 0 : index
      %c0_70 = arith.constant 0 : index
      %178 = vector.load %arg26[%c0_69, %c0_70] : memref<2x256xf32, #tpu.memory_space<vmem>>, vector<2x256xf32>
      %c0_71 = arith.constant 0 : index
      %c0_72 = arith.constant 0 : index
      %179 = vector.load %arg11[%c0_71, %c0_72] : memref<256x64xf32, #tpu.memory_space<vmem>>, vector<256x64xf32>
      %cst_73 = arith.constant dense<0.000000e+00> : vector<2x64xf32>
      %180 = tpu.matmul %178, %179, %cst_73 {dimension_numbers = #tpu.dot_dimension_numbers<[1], [0], [0], [1], [0, 0, 1, 1], [], []>} : vector<2x256xf32>, vector<256x64xf32>, vector<2x64xf32> -> vector<2x64xf32>
      %c0_74 = arith.constant 0 : index
      %c0_75 = arith.constant 0 : index
      %181 = vector.load %arg12[%c0_74, %c0_75] : memref<1x64xf32, #tpu.memory_space<vmem>>, vector<1x64xf32>
      %182 = vector.broadcast %181 : vector<1x64xf32> to vector<2x64xf32>
      %183 = arith.addf %180, %182 : vector<2x64xf32>
      %c0_76 = arith.constant 0 : index
      %c0_77 = arith.constant 0 : index
      %184 = vector.load %arg13[%c0_76, %c0_77] : memref<64x32xf32, #tpu.memory_space<vmem>>, vector<64x32xf32>
      %cst_78 = arith.constant dense<0.000000e+00> : vector<2x32xf32>
      %185 = tpu.matmul %183, %184, %cst_78 {dimension_numbers = #tpu.dot_dimension_numbers<[1], [0], [0], [1], [0, 0, 1, 1], [], []>} : vector<2x64xf32>, vector<64x32xf32>, vector<2x32xf32> -> vector<2x32xf32>
      %c0_79 = arith.constant 0 : index
      %c0_80 = arith.constant 0 : index
      %186 = vector.load %arg14[%c0_79, %c0_80] : memref<1x32xf32, #tpu.memory_space<vmem>>, vector<1x32xf32>
      %187 = vector.broadcast %186 : vector<1x32xf32> to vector<2x32xf32>
      %188 = arith.addf %185, %187 : vector<2x32xf32>
      %cst_81 = arith.constant 0.000000e+00 : f32
      %189 = vector.broadcast %cst_81 : f32 to vector<2x32xf32>
      %190 = arith.cmpf ogt, %188, %189 : vector<2x32xf32>
      %191 = math.exp %188 : vector<2x32xf32>
      %cst_82 = arith.constant 1.000000e+00 : f32
      %192 = vector.broadcast %cst_82 : f32 to vector<2x32xf32>
      %193 = arith.subf %191, %192 : vector<2x32xf32>
      %194 = arith.select %190, %188, %193 : vector<2x32xi1>, vector<2x32xf32>
      %c0_83 = arith.constant 0 : index
      %c0_84 = arith.constant 0 : index
      %195 = vector.load %arg15[%c0_83, %c0_84] : memref<32x16xf32, #tpu.memory_space<vmem>>, vector<32x16xf32>
      %cst_85 = arith.constant dense<0.000000e+00> : vector<2x16xf32>
      %196 = tpu.matmul %194, %195, %cst_85 {dimension_numbers = #tpu.dot_dimension_numbers<[1], [0], [0], [1], [0, 0, 1, 1], [], []>} : vector<2x32xf32>, vector<32x16xf32>, vector<2x16xf32> -> vector<2x16xf32>
      %c0_86 = arith.constant 0 : index
      %c0_87 = arith.constant 0 : index
      %197 = vector.load %arg16[%c0_86, %c0_87] : memref<1x16xf32, #tpu.memory_space<vmem>>, vector<1x16xf32>
      %198 = vector.broadcast %197 : vector<1x16xf32> to vector<2x16xf32>
      %199 = arith.addf %196, %198 : vector<2x16xf32>
      %cst_88 = arith.constant 0.000000e+00 : f32
      %200 = vector.broadcast %cst_88 : f32 to vector<2x16xf32>
      %201 = arith.cmpf ogt, %199, %200 : vector<2x16xf32>
      %202 = math.exp %199 : vector<2x16xf32>
      %cst_89 = arith.constant 1.000000e+00 : f32
      %203 = vector.broadcast %cst_89 : f32 to vector<2x16xf32>
      %204 = arith.subf %202, %203 : vector<2x16xf32>
      %205 = arith.select %201, %199, %204 : vector<2x16xi1>, vector<2x16xf32>
      %c0_90 = arith.constant 0 : index
      %c0_91 = arith.constant 0 : index
      %206 = vector.load %arg17[%c0_90, %c0_91] : memref<16x8xf32, #tpu.memory_space<vmem>>, vector<16x8xf32>
      %cst_92 = arith.constant dense<0.000000e+00> : vector<2x8xf32>
      %207 = tpu.matmul %205, %206, %cst_92 {dimension_numbers = #tpu.dot_dimension_numbers<[1], [0], [0], [1], [0, 0, 1, 1], [], []>} : vector<2x16xf32>, vector<16x8xf32>, vector<2x8xf32> -> vector<2x8xf32>
      %c0_93 = arith.constant 0 : index
      %c0_94 = arith.constant 0 : index
      %208 = vector.load %arg18[%c0_93, %c0_94] : memref<1x8xf32, #tpu.memory_space<vmem>>, vector<1x8xf32>
      %209 = vector.broadcast %208 : vector<1x8xf32> to vector<2x8xf32>
      %210 = arith.addf %207, %209 : vector<2x8xf32>
      %cst_95 = arith.constant 0.000000e+00 : f32
      %211 = vector.broadcast %cst_95 : f32 to vector<2x8xf32>
      %212 = arith.cmpf ogt, %210, %211 : vector<2x8xf32>
      %213 = math.exp %210 : vector<2x8xf32>
      %cst_96 = arith.constant 1.000000e+00 : f32
      %214 = vector.broadcast %cst_96 : f32 to vector<2x8xf32>
      %215 = arith.subf %213, %214 : vector<2x8xf32>
      %216 = arith.select %212, %210, %215 : vector<2x8xi1>, vector<2x8xf32>
      %c0_97 = arith.constant 0 : index
      %c0_98 = arith.constant 0 : index
      %217 = vector.load %arg19[%c0_97, %c0_98] : memref<8x1xf32, #tpu.memory_space<vmem>>, vector<8x1xf32>
      %cst_99 = arith.constant dense<0.000000e+00> : vector<2x1xf32>
      %218 = tpu.matmul %216, %217, %cst_99 {dimension_numbers = #tpu.dot_dimension_numbers<[1], [0], [0], [1], [0, 0, 1, 1], [], []>} : vector<2x8xf32>, vector<8x1xf32>, vector<2x1xf32> -> vector<2x1xf32>
      %c0_100 = arith.constant 0 : index
      %c0_101 = arith.constant 0 : index
      %219 = vector.load %arg20[%c0_100, %c0_101] : memref<1x1xf32, #tpu.memory_space<vmem>>, vector<1x1xf32>
      %220 = vector.broadcast %219 : vector<1x1xf32> to vector<2x1xf32>
      %221 = arith.addf %218, %220 : vector<2x1xf32>
      %c0_102 = arith.constant 0 : index
      %c0_103 = arith.constant 0 : index
      %222 = vector.load %arg22[%c0_102, %c0_103] : memref<2x1xf32, #tpu.memory_space<vmem>>, vector<2x1xf32>
      tpu.vector_store %arg22[%c0_102, %c0_103], %221 {strides = array<i32>} : memref<2x1xf32, #tpu.memory_space<vmem>>, vector<2x1xf32>,
      %c0_104 = arith.constant 0 : index
      %c0_105 = arith.constant 0 : index
      %223 = vector.load %arg21[%c0_104, %c0_105] : memref<2x1xf32, #tpu.memory_space<vmem>>, vector<2x1xf32>
      %224 = arith.subf %221, %223 : vector<2x1xf32>
      %225 = arith.mulf %224, %224 : vector<2x1xf32>
      %cst_106 = arith.constant dense<0.000000e+00> : vector<2xf32>
      %226 = vector.multi_reduction <add>, %225, %cst_106 [1] : vector<2x1xf32> to vector<2xf32>
      %227 = vector.shape_cast %226 : vector<2xf32> to vector<2x1xf32>
      %cst_107 = arith.constant dense<0.000000e+00> : vector<1xf32>
      %228 = vector.multi_reduction <add>, %227, %cst_107 [0] : vector<2x1xf32> to vector<1xf32>
      %229 = vector.shape_cast %228 : vector<1xf32> to vector<1x1xf32>
      %cst_108 = arith.constant 2.000000e+00 : f32
      %230 = vector.broadcast %cst_108 : f32 to vector<1x1xf32>
      %231 = arith.divf %229, %230 : vector<1x1xf32>
      %c0_109 = arith.constant 0 : index
      %c0_110 = arith.constant 0 : index
      %232 = vector.load %arg23[%c0_109, %c0_110] : memref<1x1xf32, #tpu.memory_space<vmem>>, vector<1x1xf32>
      tpu.vector_store %arg23[%c0_109, %c0_110], %231 {strides = array<i32>} : memref<1x1xf32, #tpu.memory_space<vmem>>, vector<1x1xf32>,
    } else {
    }
    return
  }
  func.func @transform_0(%arg0: i32) -> (i32, i32) {
    %c0_i32 = arith.constant 0 : i32
    %c0_i32_0 = arith.constant 0 : i32
    %c0_i32_1 = arith.constant 0 : i32
    return %c0_i32, %c0_i32_0 : i32, i32
  }
  func.func @transform_1(%arg0: i32) -> (i32, i32) {
    %c0_i32 = arith.constant 0 : i32
    %c0_i32_0 = arith.constant 0 : i32
    %c0_i32_1 = arith.constant 0 : i32
    return %c0_i32, %c0_i32_0 : i32, i32
  }
  func.func @transform_2(%arg0: i32) -> (i32, i32) {
    %c0_i32 = arith.constant 0 : i32
    %c0_i32_0 = arith.constant 0 : i32
    %c0_i32_1 = arith.constant 0 : i32
    return %c0_i32, %c0_i32_0 : i32, i32
  }
  func.func @transform_3(%arg0: i32) -> (i32, i32) {
    %c0_i32 = arith.constant 0 : i32
    %c0_i32_0 = arith.constant 0 : i32
    %c0_i32_1 = arith.constant 0 : i32
    return %c0_i32, %c0_i32_0 : i32, i32
  }
  func.func @transform_4(%arg0: i32) -> (i32, i32) {
    %c0_i32 = arith.constant 0 : i32
    %c0_i32_0 = arith.constant 0 : i32
    %c0_i32_1 = arith.constant 0 : i32
    return %c0_i32, %c0_i32_0 : i32, i32
  }
  func.func @transform_5(%arg0: i32) -> (i32, i32, i32) {
    %c1_i32 = arith.constant 1 : i32
    %0 = arith.subi %arg0, %c1_i32 : i32
    %c0_i32 = arith.constant 0 : i32
    %1 = arith.maxsi %0, %c0_i32 : i32
    %c0_i32_0 = arith.constant 0 : i32
    %c0_i32_1 = arith.constant 0 : i32
    %c0_i32_2 = arith.constant 0 : i32
    return %1, %c0_i32_0, %c0_i32_1 : i32, i32, i32
  }
  func.func @transform_6(%arg0: i32) -> (i32, i32, i32) {
    %c0_i32 = arith.constant 0 : i32
    %c0_i32_0 = arith.constant 0 : i32
    %c0_i32_1 = arith.constant 0 : i32
    return %arg0, %c0_i32, %c0_i32_0 : i32, i32, i32
  }
  func.func @transform_7(%arg0: i32) -> (i32, i32, i32) {
    %c0_i32 = arith.constant 0 : i32
    %c0_i32_0 = arith.constant 0 : i32
    %c0_i32_1 = arith.constant 0 : i32
    return %arg0, %c0_i32, %c0_i32_0 : i32, i32, i32
  }
  func.func @transform_8(%arg0: i32) -> (i32, i32, i32) {
    %c0_i32 = arith.constant 0 : i32
    %c0_i32_0 = arith.constant 0 : i32
    %c0_i32_1 = arith.constant 0 : i32
    return %arg0, %c0_i32, %c0_i32_0 : i32, i32, i32
  }
  func.func @transform_9(%arg0: i32) -> (i32, i32, i32) {
    %c0_i32 = arith.constant 0 : i32
    %c0_i32_0 = arith.constant 0 : i32
    %c0_i32_1 = arith.constant 0 : i32
    return %arg0, %c0_i32, %c0_i32_0 : i32, i32, i32
  }
  func.func @transform_10(%arg0: i32) -> (i32, i32) {
    %c0_i32 = arith.constant 0 : i32
    %c0_i32_0 = arith.constant 0 : i32
    %c0_i32_1 = arith.constant 0 : i32
    return %c0_i32, %c0_i32_0 : i32, i32
  }
  func.func @transform_11(%arg0: i32) -> (i32, i32) {
    %c0_i32 = arith.constant 0 : i32
    %c0_i32_0 = arith.constant 0 : i32
    %c0_i32_1 = arith.constant 0 : i32
    return %c0_i32, %c0_i32_0 : i32, i32
  }
  func.func @transform_12(%arg0: i32) -> (i32, i32) {
    %c0_i32 = arith.constant 0 : i32
    %c0_i32_0 = arith.constant 0 : i32
    %c0_i32_1 = arith.constant 0 : i32
    return %c0_i32, %c0_i32_0 : i32, i32
  }
  func.func @transform_13(%arg0: i32) -> (i32, i32) {
    %c0_i32 = arith.constant 0 : i32
    %c0_i32_0 = arith.constant 0 : i32
    %c0_i32_1 = arith.constant 0 : i32
    return %c0_i32, %c0_i32_0 : i32, i32
  }
  func.func @transform_14(%arg0: i32) -> (i32, i32) {
    %c0_i32 = arith.constant 0 : i32
    %c0_i32_0 = arith.constant 0 : i32
    %c0_i32_1 = arith.constant 0 : i32
    return %c0_i32, %c0_i32_0 : i32, i32
  }
  func.func @transform_15(%arg0: i32) -> (i32, i32) {
    %c0_i32 = arith.constant 0 : i32
    %c0_i32_0 = arith.constant 0 : i32
    %c0_i32_1 = arith.constant 0 : i32
    return %c0_i32, %c0_i32_0 : i32, i32
  }
  func.func @transform_16(%arg0: i32) -> (i32, i32) {
    %c0_i32 = arith.constant 0 : i32
    %c0_i32_0 = arith.constant 0 : i32
    %c0_i32_1 = arith.constant 0 : i32
    return %c0_i32, %c0_i32_0 : i32, i32
  }
  func.func @transform_17(%arg0: i32) -> (i32, i32) {
    %c0_i32 = arith.constant 0 : i32
    %c0_i32_0 = arith.constant 0 : i32
    %c0_i32_1 = arith.constant 0 : i32
    return %c0_i32, %c0_i32_0 : i32, i32
  }
  func.func @transform_18(%arg0: i32) -> (i32, i32) {
    %c0_i32 = arith.constant 0 : i32
    %c0_i32_0 = arith.constant 0 : i32
    %c0_i32_1 = arith.constant 0 : i32
    return %c0_i32, %c0_i32_0 : i32, i32
  }
  func.func @transform_19(%arg0: i32) -> (i32, i32) {
    %c0_i32 = arith.constant 0 : i32
    %c0_i32_0 = arith.constant 0 : i32
    %c0_i32_1 = arith.constant 0 : i32
    return %c0_i32, %c0_i32_0 : i32, i32
  }
  func.func @transform_20(%arg0: i32) -> (i32, i32) {
    %c0_i32 = arith.constant 0 : i32
    %c0_i32_0 = arith.constant 0 : i32
    %c0_i32_1 = arith.constant 0 : i32
    return %c0_i32, %c0_i32_0 : i32, i32
  }
  func.func @transform_21(%arg0: i32) -> (i32, i32) {
    %c0_i32 = arith.constant 0 : i32
    %c0_i32_0 = arith.constant 0 : i32
    %c0_i32_1 = arith.constant 0 : i32
    return %c0_i32, %c0_i32_0 : i32, i32
  }
  func.func @transform_22(%arg0: i32) -> (i32, i32) {
    %c0_i32 = arith.constant 0 : i32
    %c0_i32_0 = arith.constant 0 : i32
    %c0_i32_1 = arith.constant 0 : i32
    return %c0_i32, %c0_i32_0 : i32, i32
  }
}

</mosaic_0001>

<llo_original>
// kernel: tpu_custom_call.1
$region0: #{tpu_custom_call.1}
  #allocation0 [shape = 'u32[]', space=smem, size = 0x4, offset = 0x4, fixed_abs, tag = 'smem constant byte address 0x4 - core index']
  #allocation1 [shape = 'u32[72,128]{1,0:T(1,128)}', space=vmem, size = 0x9000, scoped, tag = 'internal scratch']
  #allocation2 [shape = 'f32[128,128]{1,0:T(8,128)}', space=vmem, size = 0x10000, scoped, tag = 'scratch operand']
  #allocation3 [shape = 'f32[128,1]{1,0:T(8,128)}', space=vmem, size = 0x10000, scoped, tag = 'scratch operand']
  #allocation4 [shape = 'f32[2,256]{1,0:T(2,128)}', space=vmem, size = 0x800, scoped, tag = 'scratch operand']
  #allocation5 [shape = 'f32[128,128]{1,0:T(8,128)}', space=vmem, size = 0x10000, scoped, tag = 'scratch operand']
  #allocation6 [shape = 'f32[1,1]{1,0:T(1,128)S(1)}', space=vmem, size = 0x200, scoped, tag = 'scoped memory for tpu_custom_call.1']
  %s0 = inlined_call_operand.vmem [shape: f32[128,128], index: 0, kind: input, shape index: {}]
  %s1 = inlined_call_operand.hbm [shape: bf16[128,128], index: 1, kind: input, shape index: {}]
  %s2 = inlined_call_operand.hbm [shape: bf16[2,128], index: 2, kind: input, shape index: {}]
  %s3 = inlined_call_operand.vmem [shape: f32[128,2], index: 3, kind: input, shape index: {}]
  %s4 = inlined_call_operand.vmem [shape: f32[128,128], index: 4, kind: input, shape index: {}]
  %s5 = inlined_call_operand.vmem [shape: f32[2,128,128], index: 5, kind: input, shape index: {}]
  %s6 = inlined_call_operand.vmem [shape: f32[3,1,128], index: 6, kind: input, shape index: {}]
  %s7 = inlined_call_operand.hbm [shape: f32[3,1,128], index: 7, kind: input, shape index: {}]
  %s8 = inlined_call_operand.vmem [shape: f32[3,1,128], index: 8, kind: input, shape index: {}]
  %s9 = inlined_call_operand.vmem [shape: f32[3,1,1], index: 9, kind: input, shape index: {}]
  %s10 = inlined_call_operand.vmem [shape: f32[256,64], index: 10, kind: input, shape index: {}]
  %s11 = inlined_call_operand.vmem [shape: f32[1,64], index: 11, kind: input, shape index: {}]
  %s12 = inlined_call_operand.vmem [shape: f32[64,32], index: 12, kind: input, shape index: {}]
  %s13 = inlined_call_operand.vmem [shape: f32[1,32], index: 13, kind: input, shape index: {}]
  %s14 = inlined_call_operand.vmem [shape: f32[32,16], index: 14, kind: input, shape index: {}]
  %s15 = inlined_call_operand.vmem [shape: f32[1,16], index: 15, kind: input, shape index: {}]
  %s16 = inlined_call_operand.vmem [shape: f32[16,8], index: 16, kind: input, shape index: {}]
  %s17 = inlined_call_operand.vmem [shape: f32[1,8], index: 17, kind: input, shape index: {}]
  %s18 = inlined_call_operand.vmem [shape: f32[8,1], index: 18, kind: input, shape index: {}]
  %s19 = inlined_call_operand.<no memory space> [shape: f32[1,1], index: 19, kind: input, shape index: {}]
  %s20 = inlined_call_operand.vmem [shape: f32[2,1], index: 20, kind: input, shape index: {}]
  %s21 = inlined_call_operand.vmem [shape: f32[2,1], index: 21, kind: output, shape index: {0}]
  %s22 = inlined_call_operand.hbm [shape: f32[1,1], index: 22, kind: output, shape index: {1}]
  %23 = xla_tuple %s21, %s22
  %s24 = sld [smem:[#allocation0]]
  $region149: #{tpu_custom_call.1} parent=0
    _
  %s26 = ssub.s32 1, %s24
  %s27 = scalar_select 0, %s26, %s24
  %v28 = vstv %s19
  %29 = vst [vmem:[#allocation6] sm:$0x1] %v28
  $region1: #{tpu_custom_call.1} parent=0
    #allocation7 [shape = 'u8[32768]{0}', space=vmem, size = 0x8000, scoped, tag = 'input window, operand 1, single buffered']
    #allocation8 [shape = 's32[2]{0}', space=sflag, size = 0x8, scoped, tag = 'scoped memory for tpu_custom_call.1']
    #allocation9 [shape = 's32[2]{0}', space=sflag, size = 0x8, scoped, tag = 'scoped memory for tpu_custom_call.1']
    #allocation10 [shape = 'u8[512]{0}', space=vmem, size = 0x400, scoped, tag = 'input window, operand 2, single buffered']
    #allocation11 [shape = 's32[1]{0}', space=sflag, size = 0x4, scoped, tag = 'scoped memory for tpu_custom_call.1']
    #allocation12 [shape = 'u8[1024]{0}', space=vmem, size = 0x400, scoped, tag = 'input window, operand 7']
    #allocation13 [shape = 'u8[512]{0}', space=vmem, size = 0x400, scoped, tag = 'output window, operand 1, single buffered']
    %30 = vsyncpa [#allocation8], 0
    %31 = vsyncpa [#allocation11], 0
    %32 = vsyncpa [#allocation9], 0
    loop: start=0, step=1, limit=5
    $region2: #{tpu_custom_call.1} parent=1 // loop_pre_header
      _
    $region3: #{tpu_custom_call.1} parent=1 // loop_header
      %s34 = sphi 0, %s38
      %p35 = scmp.ge.s32.totalorder %s34, 5
      %s42 = sphi 0, %s42
      %s44 = sphi 0, %s42
      %s45 = sphi 0, %s44
      %s59 = sphi 0, %s45
      %s63 = sphi 0, %s63
      %s65 = sphi 0, %s63
      %s66 = sphi 0, %s65
      %s80 = sphi 0, %s66
      %s84 = sphi 0, %s84
      %s86 = sphi 0, %s84
      %s87 = sphi 0, %s86
      %s101 = sphi 0, %s87
      %s105 = sphi 0, %s105
      %s107 = sphi 0, %s105
      %s108 = sphi 0, %s107
      %s122 = sphi 0, %s108
      %s126 = sphi 0, %s126
      %s128 = sphi 0, %s126
      %s129 = sphi 0, %s128
      %s143 = sphi 0, %s129
      %s155 = sphi 0, %s157
      %s158 = sphi 0, %s155
      %s159 = sphi 0, %s158
      %s175 = sphi 0, %s159
      %s181 = sphi 0, %s183
      %s184 = sphi 0, %s181
      %s185 = sphi 0, %s184
      %s201 = sphi 0, %s185
      %s207 = sphi 0, %s209
      %s210 = sphi 0, %s207
      %s211 = sphi 0, %s210
      %s227 = sphi 0, %s211
      %s233 = sphi 0, %s235
      %s236 = sphi 0, %s233
      %s237 = sphi 0, %s236
      %s253 = sphi 0, %s237
      %s259 = sphi 0, %s261
      %s262 = sphi 0, %s259
      %s263 = sphi 0, %s262
      %s279 = sphi 0, %s263
      %s283 = sphi 0, %s283
      %s285 = sphi 0, %s283
      %s286 = sphi 0, %s285
      %s300 = sphi 0, %s286
      %s304 = sphi 0, %s304
      %s306 = sphi 0, %s304
      %s307 = sphi 0, %s306
      %s321 = sphi 0, %s307
      %s325 = sphi 0, %s325
      %s327 = sphi 0, %s325
      %s328 = sphi 0, %s327
      %s342 = sphi 0, %s328
      %s346 = sphi 0, %s346
      %s348 = sphi 0, %s346
      %s349 = sphi 0, %s348
      %s363 = sphi 0, %s349
      %s367 = sphi 0, %s367
      %s369 = sphi 0, %s367
      %s370 = sphi 0, %s369
      %s384 = sphi 0, %s370
      %s388 = sphi 0, %s388
      %s390 = sphi 0, %s388
      %s391 = sphi 0, %s390
      %s405 = sphi 0, %s391
      %s409 = sphi 0, %s409
      %s411 = sphi 0, %s409
      %s412 = sphi 0, %s411
      %s426 = sphi 0, %s412
      %s430 = sphi 0, %s430
      %s432 = sphi 0, %s430
      %s433 = sphi 0, %s432
      %s447 = sphi 0, %s433
      %s451 = sphi 0, %s451
      %s453 = sphi 0, %s451
      %s454 = sphi 0, %s453
      %s468 = sphi 0, %s454
      %s472 = sphi 0, %s472
      %s474 = sphi 0, %s472
      %s475 = sphi 0, %s474
      %s489 = sphi 0, %s475
      %s493 = sphi 0, %s493
      %s495 = sphi 0, %s493
      %s496 = sphi 0, %s495
      %s510 = sphi 0, %s496
      %s514 = sphi 0, %s514
      %s516 = sphi 0, %s514
      %s517 = sphi 0, %s516
      %s531 = sphi 0, %s517
      %s535 = sphi 0, %s535
      %s537 = sphi 0, %s535
      %s538 = sphi 0, %s537
      %s552 = sphi 0, %s538
    $region4: #{tpu_custom_call.1} parent=1 // loop_header_branch
      %37 = sbr.rel (%p35) target = $region8
    $region5: #{tpu_custom_call.1} parent=1 // loop_body
      %s39 = ssub.s32 %s34, 1
      %s40 = ssub.s32 %s34, 2
      %s41 = sadd.s32 %s34, 1
      %s43 = sadd.s32 %s42, 1
      %p46 = scmp.eq.s32.totalorder %s34, 2
      %p47 = scmp.ne.s32.totalorder %s42, %s44
      %p48 = scmp.eq.s32.totalorder %s34, 0
      %p49 = por %p47, %p48
      %p50 = scmp.ne.s32.totalorder %s42, %s44
      %p51 = scmp.eq.s32.totalorder %s39, 2
      %p52 = por %p50, %p51
      %p53 = scmp.ne.s32.totalorder %s44, %s45
      %p54 = scmp.eq.s32.totalorder %s39, 0
      %p55 = por %p53, %p54
      %p56 = scmp.ne.s32.totalorder %s44, %s45
      %p57 = scmp.eq.s32.totalorder %s40, 2
      %p58 = por %p56, %p57
      %p60 = scmp.ne.s32.totalorder %s45, %s59
      %p61 = scmp.eq.s32.totalorder %s40, 0
      %p62 = por %p60, %p61
      %s64 = sadd.s32 %s63, 1
      %p67 = scmp.eq.s32.totalorder %s34, 2
      %p68 = scmp.ne.s32.totalorder %s63, %s65
      %p69 = scmp.eq.s32.totalorder %s34, 0
      %p70 = por %p68, %p69
      %p71 = scmp.ne.s32.totalorder %s63, %s65
      %p72 = scmp.eq.s32.totalorder %s39, 2
      %p73 = por %p71, %p72
      %p74 = scmp.ne.s32.totalorder %s65, %s66
      %p75 = scmp.eq.s32.totalorder %s39, 0
      %p76 = por %p74, %p75
      %p77 = scmp.ne.s32.totalorder %s65, %s66
      %p78 = scmp.eq.s32.totalorder %s40, 2
      %p79 = por %p77, %p78
      %p81 = scmp.ne.s32.totalorder %s66, %s80
      %p82 = scmp.eq.s32.totalorder %s40, 0
      %p83 = por %p81, %p82
      %s85 = sadd.s32 %s84, 1
      %p88 = scmp.eq.s32.totalorder %s34, 2
      %p89 = scmp.ne.s32.totalorder %s84, %s86
      %p90 = scmp.eq.s32.totalorder %s34, 0
      %p91 = por %p89, %p90
      %p92 = scmp.ne.s32.totalorder %s84, %s86
      %p93 = scmp.eq.s32.totalorder %s39, 2
      %p94 = por %p92, %p93
      %p95 = scmp.ne.s32.totalorder %s86, %s87
      %p96 = scmp.eq.s32.totalorder %s39, 0
      %p97 = por %p95, %p96
      %p98 = scmp.ne.s32.totalorder %s86, %s87
      %p99 = scmp.eq.s32.totalorder %s40, 2
      %p100 = por %p98, %p99
      %p102 = scmp.ne.s32.totalorder %s87, %s101
      %p103 = scmp.eq.s32.totalorder %s40, 0
      %p104 = por %p102, %p103
      %s106 = sadd.s32 %s105, 1
      %p109 = scmp.eq.s32.totalorder %s34, 2
      %p110 = scmp.ne.s32.totalorder %s105, %s107
      %p111 = scmp.eq.s32.totalorder %s34, 0
      %p112 = por %p110, %p111
      %p113 = scmp.ne.s32.totalorder %s105, %s107
      %p114 = scmp.eq.s32.totalorder %s39, 2
      %p115 = por %p113, %p114
      %p116 = scmp.ne.s32.totalorder %s107, %s108
      %p117 = scmp.eq.s32.totalorder %s39, 0
      %p118 = por %p116, %p117
      %p119 = scmp.ne.s32.totalorder %s107, %s108
      %p120 = scmp.eq.s32.totalorder %s40, 2
      %p121 = por %p119, %p120
      %p123 = scmp.ne.s32.totalorder %s108, %s122
      %p124 = scmp.eq.s32.totalorder %s40, 0
      %p125 = por %p123, %p124
      %s127 = sadd.s32 %s126, 1
      %p130 = scmp.eq.s32.totalorder %s34, 2
      %p131 = scmp.ne.s32.totalorder %s126, %s128
      %p132 = scmp.eq.s32.totalorder %s34, 0
      %p133 = por %p131, %p132
      %p134 = scmp.ne.s32.totalorder %s126, %s128
      %p135 = scmp.eq.s32.totalorder %s39, 2
      %p136 = por %p134, %p135
      %p137 = scmp.ne.s32.totalorder %s128, %s129
      %p138 = scmp.eq.s32.totalorder %s39, 0
      %p139 = por %p137, %p138
      %p140 = scmp.ne.s32.totalorder %s128, %s129
      %p141 = scmp.eq.s32.totalorder %s40, 2
      %p142 = por %p140, %p141
      %p144 = scmp.ne.s32.totalorder %s129, %s143
      %p145 = scmp.eq.s32.totalorder %s40, 0
      %p146 = por %p144, %p145
      %s147 = ssub.s32 %s34, 1
      %p148 = scmp.gt.s32.totalorder %s147, 0
      %s149 = scalar_select %p148, %s147, 0
      %s150 = ssub.s32 %s41, 1
      %p151 = scmp.gt.s32.totalorder %s150, 0
      %s152 = scalar_select %p151, %s150, 0
      %s153 = ssub.s32 %s149, %s152
      %p154 = scmp.eq.s32.totalorder %s153, 0
      %s156 = sadd.s32 %s155, 1
      %s157 = scalar_select %p154, %s155, %s156
      %p160 = pneg %p154
      %p161 = scmp.eq.s32.totalorder %s34, 2
      %p162 = por %p160, %p161
      %p163 = scmp.ne.s32.totalorder %s155, %s158
      %p164 = scmp.eq.s32.totalorder %s34, 0
      %p165 = por %p163, %p164
      %p166 = scmp.ne.s32.totalorder %s155, %s158
      %p167 = scmp.eq.s32.totalorder %s39, 2
      %p168 = por %p166, %p167
      %p169 = scmp.ne.s32.totalorder %s158, %s159
      %p170 = scmp.eq.s32.totalorder %s39, 0
      %p171 = por %p169, %p170
      %p172 = scmp.ne.s32.totalorder %s158, %s159
      %p173 = scmp.eq.s32.totalorder %s40, 2
      %p174 = por %p172, %p173
      %p176 = scmp.ne.s32.totalorder %s159, %s175
      %p177 = scmp.eq.s32.totalorder %s40, 0
      %p178 = por %p176, %p177
      %s179 = ssub.s32 %s34, %s41
      %p180 = scmp.eq.s32.totalorder %s179, 0
      %s182 = sadd.s32 %s181, 1
      %s183 = scalar_select %p180, %s181, %s182
      %p186 = pneg %p180
      %p187 = scmp.eq.s32.totalorder %s34, 2
      %p188 = por %p186, %p187
      %p189 = scmp.ne.s32.totalorder %s181, %s184
      %p190 = scmp.eq.s32.totalorder %s34, 0
      %p191 = por %p189, %p190
      %p192 = scmp.ne.s32.totalorder %s181, %s184
      %p193 = scmp.eq.s32.totalorder %s39, 2
      %p194 = por %p192, %p193
      %p195 = scmp.ne.s32.totalorder %s184, %s185
      %p196 = scmp.eq.s32.totalorder %s39, 0
      %p197 = por %p195, %p196
      %p198 = scmp.ne.s32.totalorder %s184, %s185
      %p199 = scmp.eq.s32.totalorder %s40, 2
      %p200 = por %p198, %p199
      %p202 = scmp.ne.s32.totalorder %s185, %s201
      %p203 = scmp.eq.s32.totalorder %s40, 0
      %p204 = por %p202, %p203
      %s205 = ssub.s32 %s34, %s41
      %p206 = scmp.eq.s32.totalorder %s205, 0
      %s208 = sadd.s32 %s207, 1
      %s209 = scalar_select %p206, %s207, %s208
      %p212 = pneg %p206
      %p213 = scmp.eq.s32.totalorder %s34, 2
      %p214 = por %p212, %p213
      %p215 = scmp.ne.s32.totalorder %s207, %s210
      %p216 = scmp.eq.s32.totalorder %s34, 0
      %p217 = por %p215, %p216
      %p218 = scmp.ne.s32.totalorder %s207, %s210
      %p219 = scmp.eq.s32.totalorder %s39, 2
      %p220 = por %p218, %p219
      %p221 = scmp.ne.s32.totalorder %s210, %s211
      %p222 = scmp.eq.s32.totalorder %s39, 0
      %p223 = por %p221, %p222
      %p224 = scmp.ne.s32.totalorder %s210, %s211
      %p225 = scmp.eq.s32.totalorder %s40, 2
      %p226 = por %p224, %p225
      %p228 = scmp.ne.s32.totalorder %s211, %s227
      %p229 = scmp.eq.s32.totalorder %s40, 0
      %p230 = por %p228, %p229
      %s231 = ssub.s32 %s34, %s41
      %p232 = scmp.eq.s32.totalorder %s231, 0
      %s234 = sadd.s32 %s233, 1
      %s235 = scalar_select %p232, %s233, %s234
      %p238 = pneg %p232
      %p239 = scmp.eq.s32.totalorder %s34, 2
      %p240 = por %p238, %p239
      %p241 = scmp.ne.s32.totalorder %s233, %s236
      %p242 = scmp.eq.s32.totalorder %s34, 0
      %p243 = por %p241, %p242
      %p244 = scmp.ne.s32.totalorder %s233, %s236
      %p245 = scmp.eq.s32.totalorder %s39, 2
      %p246 = por %p244, %p245
      %p247 = scmp.ne.s32.totalorder %s236, %s237
      %p248 = scmp.eq.s32.totalorder %s39, 0
      %p249 = por %p247, %p248
      %p250 = scmp.ne.s32.totalorder %s236, %s237
      %p251 = scmp.eq.s32.totalorder %s40, 2
      %p252 = por %p250, %p251
      %p254 = scmp.ne.s32.totalorder %s237, %s253
      %p255 = scmp.eq.s32.totalorder %s40, 0
      %p256 = por %p254, %p255
      %s257 = ssub.s32 %s34, %s41
      %p258 = scmp.eq.s32.totalorder %s257, 0
      %s260 = sadd.s32 %s259, 1
      %s261 = scalar_select %p258, %s259, %s260
      %p264 = pneg %p258
      %p265 = scmp.eq.s32.totalorder %s34, 2
      %p266 = por %p264, %p265
      %p267 = scmp.ne.s32.totalorder %s259, %s262
      %p268 = scmp.eq.s32.totalorder %s34, 0
      %p269 = por %p267, %p268
      %p270 = scmp.ne.s32.totalorder %s259, %s262
      %p271 = scmp.eq.s32.totalorder %s39, 2
      %p272 = por %p270, %p271
      %p273 = scmp.ne.s32.totalorder %s262, %s263
      %p274 = scmp.eq.s32.totalorder %s39, 0
      %p275 = por %p273, %p274
      %p276 = scmp.ne.s32.totalorder %s262, %s263
      %p277 = scmp.eq.s32.totalorder %s40, 2
      %p278 = por %p276, %p277
      %p280 = scmp.ne.s32.totalorder %s263, %s279
      %p281 = scmp.eq.s32.totalorder %s40, 0
      %p282 = por %p280, %p281
      %s284 = sadd.s32 %s283, 1
      %p287 = scmp.eq.s32.totalorder %s34, 2
      %p288 = scmp.ne.s32.totalorder %s283, %s285
      %p289 = scmp.eq.s32.totalorder %s34, 0
      %p290 = por %p288, %p289
      %p291 = scmp.ne.s32.totalorder %s283, %s285
      %p292 = scmp.eq.s32.totalorder %s39, 2
      %p293 = por %p291, %p292
      %p294 = scmp.ne.s32.totalorder %s285, %s286
      %p295 = scmp.eq.s32.totalorder %s39, 0
      %p296 = por %p294, %p295
      %p297 = scmp.ne.s32.totalorder %s285, %s286
      %p298 = scmp.eq.s32.totalorder %s40, 2
      %p299 = por %p297, %p298
      %p301 = scmp.ne.s32.totalorder %s286, %s300
      %p302 = scmp.eq.s32.totalorder %s40, 0
      %p303 = por %p301, %p302
      %s305 = sadd.s32 %s304, 1
      %p308 = scmp.eq.s32.totalorder %s34, 2
      %p309 = scmp.ne.s32.totalorder %s304, %s306
      %p310 = scmp.eq.s32.totalorder %s34, 0
      %p311 = por %p309, %p310
      %p312 = scmp.ne.s32.totalorder %s304, %s306
      %p313 = scmp.eq.s32.totalorder %s39, 2
      %p314 = por %p312, %p313
      %p315 = scmp.ne.s32.totalorder %s306, %s307
      %p316 = scmp.eq.s32.totalorder %s39, 0
      %p317 = por %p315, %p316
      %p318 = scmp.ne.s32.totalorder %s306, %s307
      %p319 = scmp.eq.s32.totalorder %s40, 2
      %p320 = por %p318, %p319
      %p322 = scmp.ne.s32.totalorder %s307, %s321
      %p323 = scmp.eq.s32.totalorder %s40, 0
      %p324 = por %p322, %p323
      %s326 = sadd.s32 %s325, 1
      %p329 = scmp.eq.s32.totalorder %s34, 2
      %p330 = scmp.ne.s32.totalorder %s325, %s327
      %p331 = scmp.eq.s32.totalorder %s34, 0
      %p332 = por %p330, %p331
      %p333 = scmp.ne.s32.totalorder %s325, %s327
      %p334 = scmp.eq.s32.totalorder %s39, 2
      %p335 = por %p333, %p334
      %p336 = scmp.ne.s32.totalorder %s327, %s328
      %p337 = scmp.eq.s32.totalorder %s39, 0
      %p338 = por %p336, %p337
      %p339 = scmp.ne.s32.totalorder %s327, %s328
      %p340 = scmp.eq.s32.totalorder %s40, 2
      %p341 = por %p339, %p340
      %p343 = scmp.ne.s32.totalorder %s328, %s342
      %p344 = scmp.eq.s32.totalorder %s40, 0
      %p345 = por %p343, %p344
      %s347 = sadd.s32 %s346, 1
      %p350 = scmp.eq.s32.totalorder %s34, 2
      %p351 = scmp.ne.s32.totalorder %s346, %s348
      %p352 = scmp.eq.s32.totalorder %s34, 0
      %p353 = por %p351, %p352
      %p354 = scmp.ne.s32.totalorder %s346, %s348
      %p355 = scmp.eq.s32.totalorder %s39, 2
      %p356 = por %p354, %p355
      %p357 = scmp.ne.s32.totalorder %s348, %s349
      %p358 = scmp.eq.s32.totalorder %s39, 0
      %p359 = por %p357, %p358
      %p360 = scmp.ne.s32.totalorder %s348, %s349
      %p361 = scmp.eq.s32.totalorder %s40, 2
      %p362 = por %p360, %p361
      %p364 = scmp.ne.s32.totalorder %s349, %s363
      %p365 = scmp.eq.s32.totalorder %s40, 0
      %p366 = por %p364, %p365
      %s368 = sadd.s32 %s367, 1
      %p371 = scmp.eq.s32.totalorder %s34, 2
      %p372 = scmp.ne.s32.totalorder %s367, %s369
      %p373 = scmp.eq.s32.totalorder %s34, 0
      %p374 = por %p372, %p373
      %p375 = scmp.ne.s32.totalorder %s367, %s369
      %p376 = scmp.eq.s32.totalorder %s39, 2
      %p377 = por %p375, %p376
      %p378 = scmp.ne.s32.totalorder %s369, %s370
      %p379 = scmp.eq.s32.totalorder %s39, 0
      %p380 = por %p378, %p379
      %p381 = scmp.ne.s32.totalorder %s369, %s370
      %p382 = scmp.eq.s32.totalorder %s40, 2
      %p383 = por %p381, %p382
      %p385 = scmp.ne.s32.totalorder %s370, %s384
      %p386 = scmp.eq.s32.totalorder %s40, 0
      %p387 = por %p385, %p386
      %s389 = sadd.s32 %s388, 1
      %p392 = scmp.eq.s32.totalorder %s34, 2
      %p393 = scmp.ne.s32.totalorder %s388, %s390
      %p394 = scmp.eq.s32.totalorder %s34, 0
      %p395 = por %p393, %p394
      %p396 = scmp.ne.s32.totalorder %s388, %s390
      %p397 = scmp.eq.s32.totalorder %s39, 2
      %p398 = por %p396, %p397
      %p399 = scmp.ne.s32.totalorder %s390, %s391
      %p400 = scmp.eq.s32.totalorder %s39, 0
      %p401 = por %p399, %p400
      %p402 = scmp.ne.s32.totalorder %s390, %s391
      %p403 = scmp.eq.s32.totalorder %s40, 2
      %p404 = por %p402, %p403
      %p406 = scmp.ne.s32.totalorder %s391, %s405
      %p407 = scmp.eq.s32.totalorder %s40, 0
      %p408 = por %p406, %p407
      %s410 = sadd.s32 %s409, 1
      %p413 = scmp.eq.s32.totalorder %s34, 2
      %p414 = scmp.ne.s32.totalorder %s409, %s411
      %p415 = scmp.eq.s32.totalorder %s34, 0
      %p416 = por %p414, %p415
      %p417 = scmp.ne.s32.totalorder %s409, %s411
      %p418 = scmp.eq.s32.totalorder %s39, 2
      %p419 = por %p417, %p418
      %p420 = scmp.ne.s32.totalorder %s411, %s412
      %p421 = scmp.eq.s32.totalorder %s39, 0
      %p422 = por %p420, %p421
      %p423 = scmp.ne.s32.totalorder %s411, %s412
      %p424 = scmp.eq.s32.totalorder %s40, 2
      %p425 = por %p423, %p424
      %p427 = scmp.ne.s32.totalorder %s412, %s426
      %p428 = scmp.eq.s32.totalorder %s40, 0
      %p429 = por %p427, %p428
      %s431 = sadd.s32 %s430, 1
      %p434 = scmp.eq.s32.totalorder %s34, 2
      %p435 = scmp.ne.s32.totalorder %s430, %s432
      %p436 = scmp.eq.s32.totalorder %s34, 0
      %p437 = por %p435, %p436
      %p438 = scmp.ne.s32.totalorder %s430, %s432
      %p439 = scmp.eq.s32.totalorder %s39, 2
      %p440 = por %p438, %p439
      %p441 = scmp.ne.s32.totalorder %s432, %s433
      %p442 = scmp.eq.s32.totalorder %s39, 0
      %p443 = por %p441, %p442
      %p444 = scmp.ne.s32.totalorder %s432, %s433
      %p445 = scmp.eq.s32.totalorder %s40, 2
      %p446 = por %p444, %p445
      %p448 = scmp.ne.s32.totalorder %s433, %s447
      %p449 = scmp.eq.s32.totalorder %s40, 0
      %p450 = por %p448, %p449
      %s452 = sadd.s32 %s451, 1
      %p455 = scmp.eq.s32.totalorder %s34, 2
      %p456 = scmp.ne.s32.totalorder %s451, %s453
      %p457 = scmp.eq.s32.totalorder %s34, 0
      %p458 = por %p456, %p457
      %p459 = scmp.ne.s32.totalorder %s451, %s453
      %p460 = scmp.eq.s32.totalorder %s39, 2
      %p461 = por %p459, %p460
      %p462 = scmp.ne.s32.totalorder %s453, %s454
      %p463 = scmp.eq.s32.totalorder %s39, 0
      %p464 = por %p462, %p463
      %p465 = scmp.ne.s32.totalorder %s453, %s454
      %p466 = scmp.eq.s32.totalorder %s40, 2
      %p467 = por %p465, %p466
      %p469 = scmp.ne.s32.totalorder %s454, %s468
      %p470 = scmp.eq.s32.totalorder %s40, 0
      %p471 = por %p469, %p470
      %s473 = sadd.s32 %s472, 1
      %p476 = scmp.eq.s32.totalorder %s34, 2
      %p477 = scmp.ne.s32.totalorder %s472, %s474
      %p478 = scmp.eq.s32.totalorder %s34, 0
      %p479 = por %p477, %p478
      %p480 = scmp.ne.s32.totalorder %s472, %s474
      %p481 = scmp.eq.s32.totalorder %s39, 2
      %p482 = por %p480, %p481
      %p483 = scmp.ne.s32.totalorder %s474, %s475
      %p484 = scmp.eq.s32.totalorder %s39, 0
      %p485 = por %p483, %p484
      %p486 = scmp.ne.s32.totalorder %s474, %s475
      %p487 = scmp.eq.s32.totalorder %s40, 2
      %p488 = por %p486, %p487
      %p490 = scmp.ne.s32.totalorder %s475, %s489
      %p491 = scmp.eq.s32.totalorder %s40, 0
      %p492 = por %p490, %p491
      %s494 = sadd.s32 %s493, 1
      %p497 = scmp.eq.s32.totalorder %s34, 2
      %p498 = scmp.ne.s32.totalorder %s493, %s495
      %p499 = scmp.eq.s32.totalorder %s34, 0
      %p500 = por %p498, %p499
      %p501 = scmp.ne.s32.totalorder %s493, %s495
      %p502 = scmp.eq.s32.totalorder %s39, 2
      %p503 = por %p501, %p502
      %p504 = scmp.ne.s32.totalorder %s495, %s496
      %p505 = scmp.eq.s32.totalorder %s39, 0
      %p506 = por %p504, %p505
      %p507 = scmp.ne.s32.totalorder %s495, %s496
      %p508 = scmp.eq.s32.totalorder %s40, 2
      %p509 = por %p507, %p508
      %p511 = scmp.ne.s32.totalorder %s496, %s510
      %p512 = scmp.eq.s32.totalorder %s40, 0
      %p513 = por %p511, %p512
      %s515 = sadd.s32 %s514, 1
      %p518 = scmp.eq.s32.totalorder %s34, 2
      %p519 = scmp.ne.s32.totalorder %s514, %s516
      %p520 = scmp.eq.s32.totalorder %s34, 0
      %p521 = por %p519, %p520
      %p522 = scmp.ne.s32.totalorder %s514, %s516
      %p523 = scmp.eq.s32.totalorder %s39, 2
      %p524 = por %p522, %p523
      %p525 = scmp.ne.s32.totalorder %s516, %s517
      %p526 = scmp.eq.s32.totalorder %s39, 0
      %p527 = por %p525, %p526
      %p528 = scmp.ne.s32.totalorder %s516, %s517
      %p529 = scmp.eq.s32.totalorder %s40, 2
      %p530 = por %p528, %p529
      %p532 = scmp.ne.s32.totalorder %s517, %s531
      %p533 = scmp.eq.s32.totalorder %s40, 0
      %p534 = por %p532, %p533
      %s536 = sadd.s32 %s535, 1
      %p539 = scmp.eq.s32.totalorder %s34, 2
      %p540 = scmp.ne.s32.totalorder %s535, %s537
      %p541 = scmp.eq.s32.totalorder %s34, 0
      %p542 = por %p540, %p541
      %p543 = scmp.ne.s32.totalorder %s535, %s537
      %p544 = scmp.eq.s32.totalorder %s39, 2
      %p545 = por %p543, %p544
      %p546 = scmp.ne.s32.totalorder %s537, %s538
      %p547 = scmp.eq.s32.totalorder %s39, 0
      %p548 = por %p546, %p547
      %p549 = scmp.ne.s32.totalorder %s537, %s538
      %p550 = scmp.eq.s32.totalorder %s40, 2
      %p551 = por %p549, %p550
      %p553 = scmp.ne.s32.totalorder %s538, %s552
      %p554 = scmp.eq.s32.totalorder %s40, 0
      %p555 = por %p553, %p554
      %p556 = scmp.le.s32.totalorder 1, %s34
      %p557 = scmp.lt.s32.totalorder %s34, 4
      %p558 = pnand %p556, %p557
      %p559 = pneg %p558
      // Predicated region
      $region9: #{tpu_custom_call.1} parent=5 // pred_check
        _
      $region10: #{tpu_custom_call.1} parent=5 // pred_check_branch
        %561 = sbr.rel (%p558) target = $region12
      $region11: #{tpu_custom_call.1} parent=5 // pred_region
        %s562 = ssub.s32 %s34, 1
        // Predicated region
        $region13: #{tpu_custom_call.1} parent=11 // pred_check
          %p563 = pneg %p55
        $region14: #{tpu_custom_call.1} parent=11 // pred_check_branch
          %565 = sbr.rel (%p563) target = $region16
        $region15: #{tpu_custom_call.1} parent=11 // pred_region
          _
        $region16: #{tpu_custom_call.1} parent=11 // pred_fallthru
          _
        // Predicated region
        $region17: #{tpu_custom_call.1} parent=11 // pred_check
          %p566 = pneg %p76
        $region18: #{tpu_custom_call.1} parent=11 // pred_check_branch
          %568 = sbr.rel (%p566) target = $region20
        $region19: #{tpu_custom_call.1} parent=11 // pred_region
          %570 = vsyncadd [#allocation8], 0
          %s571 = sshll.u32 %s1, 4
          %s572 = int_to_ptr.hbm [resolvable:$true] %s571
          %s573 = sshll.u32 [#allocation7], 4
          %s574 = int_to_ptr.vmem [resolvable:$true] %s573
          %579 = dma.hbm_to_vmem [thread:$0]  %s572, 1024, %s574, [#allocation8], 64, 64, 4
        $region20: #{tpu_custom_call.1} parent=11 // pred_fallthru
          _
        // Predicated region
        $region21: #{tpu_custom_call.1} parent=11 // pred_check
          %p580 = pneg %p97
        $region22: #{tpu_custom_call.1} parent=11 // pred_check_branch
          %582 = sbr.rel (%p580) target = $region24
        $region23: #{tpu_custom_call.1} parent=11 // pred_region
          %584 = vsyncadd [#allocation11], 0
          %s586 = sshll.u32 %s2, 4
          %s587 = int_to_ptr.hbm [resolvable:$true] %s586
          %s588 = sshll.u32 [#allocation10], 4
          %s589 = int_to_ptr.vmem [resolvable:$true] %s588
          %591 = dma.hbm_to_vmem [thread:$0]  %s587, 16, %s589, [#allocation11]
        $region24: #{tpu_custom_call.1} parent=11 // pred_fallthru
          _
        // Predicated region
        $region25: #{tpu_custom_call.1} parent=11 // pred_check
          %p592 = pneg %p118
        $region26: #{tpu_custom_call.1} parent=11 // pred_check_branch
          %594 = sbr.rel (%p592) target = $region28
        $region27: #{tpu_custom_call.1} parent=11 // pred_region
          _
        $region28: #{tpu_custom_call.1} parent=11 // pred_fallthru
          _
        // Predicated region
        $region29: #{tpu_custom_call.1} parent=11 // pred_check
          %p595 = pneg %p139
        $region30: #{tpu_custom_call.1} parent=11 // pred_check_branch
          %597 = sbr.rel (%p595) target = $region32
        $region31: #{tpu_custom_call.1} parent=11 // pred_region
          _
        $region32: #{tpu_custom_call.1} parent=11 // pred_fallthru
          _
        // Predicated region
        $region33: #{tpu_custom_call.1} parent=11 // pred_check
          %p598 = pneg %p296
        $region34: #{tpu_custom_call.1} parent=11 // pred_check_branch
          %600 = sbr.rel (%p598) target = $region36
        $region35: #{tpu_custom_call.1} parent=11 // pred_region
          _
        $region36: #{tpu_custom_call.1} parent=11 // pred_fallthru
          _
        // Predicated region
        $region37: #{tpu_custom_call.1} parent=11 // pred_check
          %p601 = pneg %p317
        $region38: #{tpu_custom_call.1} parent=11 // pred_check_branch
          %603 = sbr.rel (%p601) target = $region40
        $region39: #{tpu_custom_call.1} parent=11 // pred_region
          _
        $region40: #{tpu_custom_call.1} parent=11 // pred_fallthru
          _
        // Predicated region
        $region41: #{tpu_custom_call.1} parent=11 // pred_check
          %p604 = pneg %p338
        $region42: #{tpu_custom_call.1} parent=11 // pred_check_branch
          %606 = sbr.rel (%p604) target = $region44
        $region43: #{tpu_custom_call.1} parent=11 // pred_region
          _
        $region44: #{tpu_custom_call.1} parent=11 // pred_fallthru
          _
        // Predicated region
        $region45: #{tpu_custom_call.1} parent=11 // pred_check
          %p607 = pneg %p359
        $region46: #{tpu_custom_call.1} parent=11 // pred_check_branch
          %609 = sbr.rel (%p607) target = $region48
        $region47: #{tpu_custom_call.1} parent=11 // pred_region
          _
        $region48: #{tpu_custom_call.1} parent=11 // pred_fallthru
          _
        // Predicated region
        $region49: #{tpu_custom_call.1} parent=11 // pred_check
          %p610 = pneg %p380
        $region50: #{tpu_custom_call.1} parent=11 // pred_check_branch
          %612 = sbr.rel (%p610) target = $region52
        $region51: #{tpu_custom_call.1} parent=11 // pred_region
          _
        $region52: #{tpu_custom_call.1} parent=11 // pred_fallthru
          _
        // Predicated region
        $region53: #{tpu_custom_call.1} parent=11 // pred_check
          %p613 = pneg %p401
        $region54: #{tpu_custom_call.1} parent=11 // pred_check_branch
          %615 = sbr.rel (%p613) target = $region56
        $region55: #{tpu_custom_call.1} parent=11 // pred_region
          _
        $region56: #{tpu_custom_call.1} parent=11 // pred_fallthru
          _
        // Predicated region
        $region57: #{tpu_custom_call.1} parent=11 // pred_check
          %p616 = pneg %p422
        $region58: #{tpu_custom_call.1} parent=11 // pred_check_branch
          %618 = sbr.rel (%p616) target = $region60
        $region59: #{tpu_custom_call.1} parent=11 // pred_region
          _
        $region60: #{tpu_custom_call.1} parent=11 // pred_fallthru
          _
        // Predicated region
        $region61: #{tpu_custom_call.1} parent=11 // pred_check
          %p619 = pneg %p443
        $region62: #{tpu_custom_call.1} parent=11 // pred_check_branch
          %621 = sbr.rel (%p619) target = $region64
        $region63: #{tpu_custom_call.1} parent=11 // pred_region
          _
        $region64: #{tpu_custom_call.1} parent=11 // pred_fallthru
          _
        // Predicated region
        $region65: #{tpu_custom_call.1} parent=11 // pred_check
          %p622 = pneg %p464
        $region66: #{tpu_custom_call.1} parent=11 // pred_check_branch
          %624 = sbr.rel (%p622) target = $region68
        $region67: #{tpu_custom_call.1} parent=11 // pred_region
          _
        $region68: #{tpu_custom_call.1} parent=11 // pred_fallthru
          _
        // Predicated region
        $region69: #{tpu_custom_call.1} parent=11 // pred_check
          %p625 = pneg %p485
        $region70: #{tpu_custom_call.1} parent=11 // pred_check_branch
          %627 = sbr.rel (%p625) target = $region72
        $region71: #{tpu_custom_call.1} parent=11 // pred_region
          _
        $region72: #{tpu_custom_call.1} parent=11 // pred_fallthru
          _
        // Predicated region
        $region73: #{tpu_custom_call.1} parent=11 // pred_check
          %p628 = pneg %p506
        $region74: #{tpu_custom_call.1} parent=11 // pred_check_branch
          %630 = sbr.rel (%p628) target = $region76
        $region75: #{tpu_custom_call.1} parent=11 // pred_region
          _
        $region76: #{tpu_custom_call.1} parent=11 // pred_fallthru
          _
      $region12: #{tpu_custom_call.1} parent=5 // pred_fallthru
        _
      %p631 = scmp.lt.s32.totalorder %s34, 3
      // Predicated region
      $region77: #{tpu_custom_call.1} parent=5 // pred_check
        %p632 = pneg %p631
      $region78: #{tpu_custom_call.1} parent=5 // pred_check_branch
        %634 = sbr.rel (%p632) target = $region80
      $region79: #{tpu_custom_call.1} parent=5 // pred_region
        // Predicated region
        $region81: #{tpu_custom_call.1} parent=79 // pred_check
          %p635 = pneg %p165
        $region82: #{tpu_custom_call.1} parent=79 // pred_check_branch
          %637 = sbr.rel (%p635) target = $region84
        $region83: #{tpu_custom_call.1} parent=79 // pred_region
          %s638 = ssub.s32 %s34, 1
          %p639 = scmp.gt.s32.totalorder %s638, 0
          %s640 = scalar_select %p639, %s638, 0
          %p641 = scmp.lt.s32.totalorder %s640, 1
          %s642 = scalar_select %p641, %s640, 1
          %s643 = smul.addr %s642, 16
          %s644 = smul.addr %s643, 8
          %s645 = scalar_lea.vmem %s5, %s644
          %s646 = ssub.s32 %s34, 1
          %p647 = scmp.gt.s32.totalorder %s646, 0
          %s648 = scalar_select %p647, %s646, 0
        $region84: #{tpu_custom_call.1} parent=79 // pred_fallthru
          _
        // Predicated region
        $region85: #{tpu_custom_call.1} parent=79 // pred_check
          %p649 = pneg %p191
        $region86: #{tpu_custom_call.1} parent=79 // pred_check_branch
          %651 = sbr.rel (%p649) target = $region88
        $region87: #{tpu_custom_call.1} parent=79 // pred_region
          %p652 = scmp.lt.s32.totalorder %s34, 2
          %s653 = scalar_select %p652, %s34, 2
          %s654 = scalar_lea.vmem %s6, %s653
        $region88: #{tpu_custom_call.1} parent=79 // pred_fallthru
          _
        // Predicated region
        $region89: #{tpu_custom_call.1} parent=79 // pred_check
          %p655 = pneg %p217
        $region90: #{tpu_custom_call.1} parent=79 // pred_check_branch
          %657 = sbr.rel (%p655) target = $region92
        $region91: #{tpu_custom_call.1} parent=79 // pred_region
          %s658 = sand.u32 %s34, 1
          %s659 = scalar_lea.sflag [#allocation8], %s658
          %s660 = sand.u32 %s207, 1
          %s661 = scalar_lea.vmem [#allocation12], %s660
          %663 = vsyncadd %s659, 0
          %s664 = scalar_lea.hbm %s7, %s34
          %s666 = sshll.u32 %s664, 4
          %s667 = int_to_ptr.hbm [resolvable:$true] %s666
          %s668 = sshll.u32 %s661, 4
          %s669 = int_to_ptr.vmem [resolvable:$true] %s668
          %671 = dma.hbm_to_vmem [thread:$0]  %s667, 16, %s669, %s659
        $region92: #{tpu_custom_call.1} parent=79 // pred_fallthru
          _
        // Predicated region
        $region93: #{tpu_custom_call.1} parent=79 // pred_check
          %p672 = pneg %p243
        $region94: #{tpu_custom_call.1} parent=79 // pred_check_branch
          %674 = sbr.rel (%p672) target = $region96
        $region95: #{tpu_custom_call.1} parent=79 // pred_region
          %p675 = scmp.lt.s32.totalorder %s34, 2
          %s676 = scalar_select %p675, %s34, 2
          %s677 = scalar_lea.vmem %s8, %s676
        $region96: #{tpu_custom_call.1} parent=79 // pred_fallthru
          _
        // Predicated region
        $region97: #{tpu_custom_call.1} parent=79 // pred_check
          %p678 = pneg %p269
        $region98: #{tpu_custom_call.1} parent=79 // pred_check_branch
          %680 = sbr.rel (%p678) target = $region100
        $region99: #{tpu_custom_call.1} parent=79 // pred_region
          %p681 = scmp.lt.s32.totalorder %s34, 2
          %s682 = scalar_select %p681, %s34, 2
          %s683 = scalar_lea.vmem %s9, %s682
        $region100: #{tpu_custom_call.1} parent=79 // pred_fallthru
          _
      $region80: #{tpu_custom_call.1} parent=5 // pred_fallthru
        _
      %p684 = scmp.le.s32.totalorder 1, %s34
      %p685 = scmp.lt.s32.totalorder %s34, 4
      %p686 = pnand %p684, %p685
      %p687 = pneg %p686
      // Predicated region
      $region101: #{tpu_custom_call.1} parent=5 // pred_check
        _
      $region102: #{tpu_custom_call.1} parent=5 // pred_check_branch
        %689 = sbr.rel (%p686) target = $region104
      $region103: #{tpu_custom_call.1} parent=5 // pred_region
        %s690 = ssub.s32 %s34, 1
        // Predicated region
        $region105: #{tpu_custom_call.1} parent=103 // pred_check
          %p691 = pneg %p76
        $region106: #{tpu_custom_call.1} parent=103 // pred_check_branch
          %693 = sbr.rel (%p691) target = $region108
        $region107: #{tpu_custom_call.1} parent=103 // pred_region
          %695 = dma.done [#allocation8], 1024
        $region108: #{tpu_custom_call.1} parent=103 // pred_fallthru
          _
        // Predicated region
        $region109: #{tpu_custom_call.1} parent=103 // pred_check
          %p696 = pneg %p97
        $region110: #{tpu_custom_call.1} parent=103 // pred_check_branch
          %698 = sbr.rel (%p696) target = $region112
        $region111: #{tpu_custom_call.1} parent=103 // pred_region
          %700 = dma.done [#allocation11], 16
        $region112: #{tpu_custom_call.1} parent=103 // pred_fallthru
          _
        %s701 = sand.u32 %s39, 1
        %s702 = scalar_lea.sflag [#allocation8], %s701
        %s703 = sand.u32 %s210, 1
        %s704 = scalar_lea.vmem [#allocation12], %s703
        // Predicated region
        $region113: #{tpu_custom_call.1} parent=103 // pred_check
          %p705 = pneg %p223
        $region114: #{tpu_custom_call.1} parent=103 // pred_check_branch
          %707 = sbr.rel (%p705) target = $region116
        $region115: #{tpu_custom_call.1} parent=103 // pred_region
          %709 = dma.done %s702, 16
        $region116: #{tpu_custom_call.1} parent=103 // pred_fallthru
          _
        %p710 = pneg %p55
        %p711 = pneg %p52
        %p712 = pneg %p76
        %p713 = pneg %p73
        %p714 = pneg %p97
        %p715 = pneg %p94
        %p716 = pneg %p118
        %p717 = pneg %p115
        %p718 = pneg %p139
        %p719 = pneg %p136
        %s720 = ssub.s32 %s39, 1
        %p721 = scmp.gt.s32.totalorder %s720, 0
        %s722 = scalar_select %p721, %s720, 0
        %p723 = scmp.lt.s32.totalorder %s722, 1
        %s724 = scalar_select %p723, %s722, 1
        %s725 = smul.addr %s724, 16
        %s726 = smul.addr %s725, 8
        %s727 = scalar_lea.vmem %s5, %s726
        %p728 = pneg %p171
        %p729 = pneg %p168
        %p730 = scmp.lt.s32.totalorder %s39, 2
        %s731 = scalar_select %p730, %s39, 2
        %s732 = scalar_lea.vmem %s6, %s731
        %p733 = pneg %p197
        %p734 = pneg %p194
        %s735 = sand.u32 %s39, 1
        %s736 = scalar_lea.sflag [#allocation8], %s735
        %s737 = sand.u32 %s210, 1
        %s738 = scalar_lea.vmem [#allocation12], %s737
        %p739 = pneg %p223
        %p740 = pneg %p220
        %p741 = scmp.lt.s32.totalorder %s39, 2
        %s742 = scalar_select %p741, %s39, 2
        %s743 = scalar_lea.vmem %s8, %s742
        %p744 = pneg %p249
        %p745 = pneg %p246
        %p746 = scmp.lt.s32.totalorder %s39, 2
        %s747 = scalar_select %p746, %s39, 2
        %s748 = scalar_lea.vmem %s9, %s747
        %p749 = pneg %p275
        %p750 = pneg %p272
        %p751 = pneg %p296
        %p752 = pneg %p293
        %p753 = pneg %p317
        %p754 = pneg %p314
        %p755 = pneg %p338
        %p756 = pneg %p335
        %p757 = pneg %p359
        %p758 = pneg %p356
        %p759 = pneg %p380
        %p760 = pneg %p377
        %p761 = pneg %p401
        %p762 = pneg %p398
        %p763 = pneg %p422
        %p764 = pneg %p419
        %p765 = pneg %p443
        %p766 = pneg %p440
        %p767 = pneg %p464
        %p768 = pneg %p461
        %p769 = pneg %p485
        %p770 = pneg %p482
        %p771 = pneg %p506
        %p772 = pneg %p503
        %p773 = pneg %p527
        %p774 = pneg %p524
        %p775 = pneg %p548
        %p776 = pneg %p545
        %s777 = ssub.s32 %s39, 1
        %p778 = scmp.gt.s32.totalorder %s777, 0
        %s779 = scalar_select %p778, %s777, 0
        %p780 = scmp.lt.s32.totalorder %s779, 1
        %s781 = scalar_select %p780, %s779, 1
        %s782 = smul.addr %s781, 16
        %s783 = smul.addr %s782, 8
        %s784 = scalar_lea.vmem %s5, %s783
        %s785 = ssub.s32 %s39, 1
        %p786 = scmp.gt.s32.totalorder %s785, 0
        %s787 = scalar_select %p786, %s785, 0
        %p788 = scmp.lt.s32.totalorder %s39, 2
        %s789 = scalar_select %p788, %s39, 2
        %s790 = scalar_lea.vmem %s6, %s789
        %p791 = scmp.lt.s32.totalorder %s39, 2
        %s792 = scalar_select %p791, %s39, 2
        %s793 = scalar_lea.vmem %s8, %s792
        %p794 = scmp.lt.s32.totalorder %s39, 2
        %s795 = scalar_select %p794, %s39, 2
        %s796 = scalar_lea.vmem %s9, %s795
        %p797 = scmp.eq.s32.totalorder %s39, 0
        // Predicated region
        $region117: #{tpu_custom_call.1} parent=103 // pred_check
          %p798 = pneg %p797
        $region118: #{tpu_custom_call.1} parent=103 // pred_check_branch
          %800 = sbr.rel (%p798) target = $region120
        $region119: #{tpu_custom_call.1} parent=103 // pred_region
          %v801 = vld [vmem:[%s3] sm:$0xff]
          %v802 = vld [vmem:[%s3 + $0x8] sm:$0xff]
          %v803 = vld [vmem:[%s3 + $0x10] sm:$0xff]
          %v804 = vld [vmem:[%s3 + $0x18] sm:$0xff]
          %v805 = vld [vmem:[%s3 + $0x20] sm:$0xff]
          %v806 = vld [vmem:[%s3 + $0x28] sm:$0xff]
          %v807 = vld [vmem:[%s3 + $0x30] sm:$0xff]
          %v808 = vld [vmem:[%s3 + $0x38] sm:$0xff]
          %v809 = vld [vmem:[%s3 + $0x40] sm:$0xff]
          %v810 = vld [vmem:[%s3 + $0x48] sm:$0xff]
          %v811 = vld [vmem:[%s3 + $0x50] sm:$0xff]
          %v812 = vld [vmem:[%s3 + $0x58] sm:$0xff]
          %v813 = vld [vmem:[%s3 + $0x60] sm:$0xff]
          %v814 = vld [vmem:[%s3 + $0x68] sm:$0xff]
          %v815 = vld [vmem:[%s3 + $0x70] sm:$0xff]
          %v816 = vld [vmem:[%s3 + $0x78] sm:$0xff]
          %vm817 = vcmask 15360
          %v818 = vsel %vm817, %v801, 0.0
          %819 = vadd.xlane.f32.xlu0 %v818
          %v820 = vpop.xlane.xlu0 %819
          %v821 = vsel %vm817, %v802, 0.0
          %822 = vadd.xlane.f32.xlu0 %v821
          %v823 = vpop.xlane.xlu0 %822
          %v824 = vsel %vm817, %v803, 0.0
          %825 = vadd.xlane.f32.xlu0 %v824
          %v826 = vpop.xlane.xlu0 %825
          %v827 = vsel %vm817, %v804, 0.0
          %828 = vadd.xlane.f32.xlu0 %v827
          %v829 = vpop.xlane.xlu0 %828
          %v830 = vsel %vm817, %v805, 0.0
          %831 = vadd.xlane.f32.xlu0 %v830
          %v832 = vpop.xlane.xlu0 %831
          %v833 = vsel %vm817, %v806, 0.0
          %834 = vadd.xlane.f32.xlu0 %v833
          %v835 = vpop.xlane.xlu0 %834
          %v836 = vsel %vm817, %v807, 0.0
          %837 = vadd.xlane.f32.xlu0 %v836
          %v838 = vpop.xlane.xlu0 %837
          %v839 = vsel %vm817, %v808, 0.0
          %840 = vadd.xlane.f32.xlu0 %v839
          %v841 = vpop.xlane.xlu0 %840
          %v842 = vsel %vm817, %v809, 0.0
          %843 = vadd.xlane.f32.xlu0 %v842
          %v844 = vpop.xlane.xlu0 %843
          %v845 = vsel %vm817, %v810, 0.0
          %846 = vadd.xlane.f32.xlu0 %v845
          %v847 = vpop.xlane.xlu0 %846
          %v848 = vsel %vm817, %v811, 0.0
          %849 = vadd.xlane.f32.xlu0 %v848
          %v850 = vpop.xlane.xlu0 %849
          %v851 = vsel %vm817, %v812, 0.0
          %852 = vadd.xlane.f32.xlu0 %v851
          %v853 = vpop.xlane.xlu0 %852
          %v854 = vsel %vm817, %v813, 0.0
          %855 = vadd.xlane.f32.xlu0 %v854
          %v856 = vpop.xlane.xlu0 %855
          %v857 = vsel %vm817, %v814, 0.0
          %858 = vadd.xlane.f32.xlu0 %v857
          %v859 = vpop.xlane.xlu0 %858
          %v860 = vsel %vm817, %v815, 0.0
          %861 = vadd.xlane.f32.xlu0 %v860
          %v862 = vpop.xlane.xlu0 %861
          %v863 = vsel %vm817, %v816, 0.0
          %864 = vadd.xlane.f32.xlu0 %v863
          %v865 = vpop.xlane.xlu0 %864
          %vm866 = vcmask 7168
          %867 = vst.msk [vmem:[#allocation3] sm:$0xff] %vm866, %v820
          %868 = vst.msk [vmem:[#allocation3 + $0x8] sm:$0xff] %vm866, %v823
          %869 = vst.msk [vmem:[#allocation3 + $0x10] sm:$0xff] %vm866, %v826
          %870 = vst.msk [vmem:[#allocation3 + $0x18] sm:$0xff] %vm866, %v829
          %871 = vst.msk [vmem:[#allocation3 + $0x20] sm:$0xff] %vm866, %v832
          %872 = vst.msk [vmem:[#allocation3 + $0x28] sm:$0xff] %vm866, %v835
          %873 = vst.msk [vmem:[#allocation3 + $0x30] sm:$0xff] %vm866, %v838
          %874 = vst.msk [vmem:[#allocation3 + $0x38] sm:$0xff] %vm866, %v841
          %875 = vst.msk [vmem:[#allocation3 + $0x40] sm:$0xff] %vm866, %v844
          %876 = vst.msk [vmem:[#allocation3 + $0x48] sm:$0xff] %vm866, %v847
          %877 = vst.msk [vmem:[#allocation3 + $0x50] sm:$0xff] %vm866, %v850
          %878 = vst.msk [vmem:[#allocation3 + $0x58] sm:$0xff] %vm866, %v853
          %879 = vst.msk [vmem:[#allocation3 + $0x60] sm:$0xff] %vm866, %v856
          %880 = vst.msk [vmem:[#allocation3 + $0x68] sm:$0xff] %vm866, %v859
          %881 = vst.msk [vmem:[#allocation3 + $0x70] sm:$0xff] %vm866, %v862
          %882 = vst.msk [vmem:[#allocation3 + $0x78] sm:$0xff] %vm866, %v865
          %883 = vst [vmem:[#allocation4] sm:$0xf] 0.0
          %v884 = vld [vmem:[%s0] sm:$0xff]
          %v885 = vld [vmem:[%s0 + $0x8] sm:$0xff]
          %v886 = vld [vmem:[%s0 + $0x10] sm:$0xff]
          %v887 = vld [vmem:[%s0 + $0x18] sm:$0xff]
          %v888 = vld [vmem:[%s0 + $0x20] sm:$0xff]
          %v889 = vld [vmem:[%s0 + $0x28] sm:$0xff]
          %v890 = vld [vmem:[%s0 + $0x30] sm:$0xff]
          %v891 = vld [vmem:[%s0 + $0x38] sm:$0xff]
          %v892 = vld [vmem:[%s0 + $0x40] sm:$0xff]
          %v893 = vld [vmem:[%s0 + $0x48] sm:$0xff]
          %v894 = vld [vmem:[%s0 + $0x50] sm:$0xff]
          %v895 = vld [vmem:[%s0 + $0x58] sm:$0xff]
          %v896 = vld [vmem:[%s0 + $0x60] sm:$0xff]
          %v897 = vld [vmem:[%s0 + $0x68] sm:$0xff]
          %v898 = vld [vmem:[%s0 + $0x70] sm:$0xff]
          %v899 = vld [vmem:[%s0 + $0x78] sm:$0xff]
          %v900 = vld [vmem:[%s4] sm:$0xff]
          %v901 = vld [vmem:[%s4 + $0x8] sm:$0xff]
          %v902 = vld [vmem:[%s4 + $0x10] sm:$0xff]
          %v903 = vld [vmem:[%s4 + $0x18] sm:$0xff]
          %v904 = vld [vmem:[%s4 + $0x20] sm:$0xff]
          %v905 = vld [vmem:[%s4 + $0x28] sm:$0xff]
          %v906 = vld [vmem:[%s4 + $0x30] sm:$0xff]
          %v907 = vld [vmem:[%s4 + $0x38] sm:$0xff]
          %v908 = vld [vmem:[%s4 + $0x40] sm:$0xff]
          %v909 = vld [vmem:[%s4 + $0x48] sm:$0xff]
          %v910 = vld [vmem:[%s4 + $0x50] sm:$0xff]
          %v911 = vld [vmem:[%s4 + $0x58] sm:$0xff]
          %v912 = vld [vmem:[%s4 + $0x60] sm:$0xff]
          %v913 = vld [vmem:[%s4 + $0x68] sm:$0xff]
          %v914 = vld [vmem:[%s4 + $0x70] sm:$0xff]
          %v915 = vld [vmem:[%s4 + $0x78] sm:$0xff]
          %916 = vmatpush.msra.mxu0 %v915
          %917 = vmatpush.msra.mxu0 %v914
          %918 = vmatpush.msra.mxu0 %v913
          %919 = vmatpush.msra.mxu0 %v912
          %920 = vmatpush.msra.mxu0 %v911
          %921 = vmatpush.msra.mxu0 %v910
          %922 = vmatpush.msra.mxu0 %v909
          %923 = vmatpush.msra.mxu0 %v908
          %924 = vmatpush.msra.mxu0 %v907
          %925 = vmatpush.msra.mxu0 %v906
          %926 = vmatpush.msra.mxu0 %v905
          %927 = vmatpush.msra.mxu0 %v904
          %928 = vmatpush.msra.mxu0 %v903
          %929 = vmatpush.msra.mxu0 %v902
          %930 = vmatpush.msra.mxu0 %v901
          %931 = vmatpush.msra.mxu0 %v900
          %932 = vmatmul.f32.gmra.mxu0 %v884
          %v933 = vpop.f32.mrf.mxu0
          %v934 = vadd.f32 0.0, %v933
          %935 = vmatmul.f32.gmra.mxu0 %v885
          %v936 = vpop.f32.mrf.mxu0
          %v937 = vadd.f32 0.0, %v936
          %938 = vmatmul.f32.gmra.mxu0 %v886
          %v939 = vpop.f32.mrf.mxu0
          %v940 = vadd.f32 0.0, %v939
          %941 = vmatmul.f32.gmra.mxu0 %v887
          %v942 = vpop.f32.mrf.mxu0
          %v943 = vadd.f32 0.0, %v942
          %944 = vmatmul.f32.gmra.mxu0 %v888
          %v945 = vpop.f32.mrf.mxu0
          %v946 = vadd.f32 0.0, %v945
          %947 = vmatmul.f32.gmra.mxu0 %v889
          %v948 = vpop.f32.mrf.mxu0
          %v949 = vadd.f32 0.0, %v948
          %950 = vmatmul.f32.gmra.mxu0 %v890
          %v951 = vpop.f32.mrf.mxu0
          %v952 = vadd.f32 0.0, %v951
          %953 = vmatmul.f32.gmra.mxu0 %v891
          %v954 = vpop.f32.mrf.mxu0
          %v955 = vadd.f32 0.0, %v954
          %956 = vmatmul.f32.gmra.mxu0 %v892
          %v957 = vpop.f32.mrf.mxu0
          %v958 = vadd.f32 0.0, %v957
          %959 = vmatmul.f32.gmra.mxu0 %v893
          %v960 = vpop.f32.mrf.mxu0
          %v961 = vadd.f32 0.0, %v960
          %962 = vmatmul.f32.gmra.mxu0 %v894
          %v963 = vpop.f32.mrf.mxu0
          %v964 = vadd.f32 0.0, %v963
          %965 = vmatmul.f32.gmra.mxu0 %v895
          %v966 = vpop.f32.mrf.mxu0
          %v967 = vadd.f32 0.0, %v966
          %968 = vmatmul.f32.gmra.mxu0 %v896
          %v969 = vpop.f32.mrf.mxu0
          %v970 = vadd.f32 0.0, %v969
          %971 = vmatmul.f32.gmra.mxu0 %v897
          %v972 = vpop.f32.mrf.mxu0
          %v973 = vadd.f32 0.0, %v972
          %974 = vmatmul.f32.gmra.mxu0 %v898
          %v975 = vpop.f32.mrf.mxu0
          %v976 = vadd.f32 0.0, %v975
          %977 = vmatmul.f32.gmra.mxu0 %v899
          %v978 = vpop.f32.mrf.mxu0
          %v979 = vadd.f32 0.0, %v978
          %980 = vdwg.mxu0
          %981 = vst [vmem:[#allocation5] sm:$0xff] %v934
          %982 = vst [vmem:[#allocation5 + $0x8] sm:$0xff] %v937
          %983 = vst [vmem:[#allocation5 + $0x10] sm:$0xff] %v940
          %984 = vst [vmem:[#allocation5 + $0x18] sm:$0xff] %v943
          %985 = vst [vmem:[#allocation5 + $0x20] sm:$0xff] %v946
          %986 = vst [vmem:[#allocation5 + $0x28] sm:$0xff] %v949
          %987 = vst [vmem:[#allocation5 + $0x30] sm:$0xff] %v952
          %988 = vst [vmem:[#allocation5 + $0x38] sm:$0xff] %v955
          %989 = vst [vmem:[#allocation5 + $0x40] sm:$0xff] %v958
          %990 = vst [vmem:[#allocation5 + $0x48] sm:$0xff] %v961
          %991 = vst [vmem:[#allocation5 + $0x50] sm:$0xff] %v964
          %992 = vst [vmem:[#allocation5 + $0x58] sm:$0xff] %v967
          %993 = vst [vmem:[#allocation5 + $0x60] sm:$0xff] %v970
          %994 = vst [vmem:[#allocation5 + $0x68] sm:$0xff] %v973
          %995 = vst [vmem:[#allocation5 + $0x70] sm:$0xff] %v976
          %996 = vst [vmem:[#allocation5 + $0x78] sm:$0xff] %v979
        $region120: #{tpu_custom_call.1} parent=103 // pred_fallthru
          _
        %p997 = scmp.gt.s32.totalorder %s39, 0
        // Predicated region
        $region121: #{tpu_custom_call.1} parent=103 // pred_check
          %p998 = pneg %p997
        $region122: #{tpu_custom_call.1} parent=103 // pred_check_branch
          %1000 = sbr.rel (%p998) target = $region124
        $region123: #{tpu_custom_call.1} parent=103 // pred_region
          %v1001 = vld [vmem:[#allocation2] sm:$0xff]
          %v1002 = vld [vmem:[#allocation2 + $0x8] sm:$0xff]
          %v1003 = vld [vmem:[#allocation2 + $0x10] sm:$0xff]
          %v1004 = vld [vmem:[#allocation2 + $0x18] sm:$0xff]
          %v1005 = vld [vmem:[#allocation2 + $0x20] sm:$0xff]
          %v1006 = vld [vmem:[#allocation2 + $0x28] sm:$0xff]
          %v1007 = vld [vmem:[#allocation2 + $0x30] sm:$0xff]
          %v1008 = vld [vmem:[#allocation2 + $0x38] sm:$0xff]
          %v1009 = vld [vmem:[#allocation2 + $0x40] sm:$0xff]
          %v1010 = vld [vmem:[#allocation2 + $0x48] sm:$0xff]
          %v1011 = vld [vmem:[#allocation2 + $0x50] sm:$0xff]
          %v1012 = vld [vmem:[#allocation2 + $0x58] sm:$0xff]
          %v1013 = vld [vmem:[#allocation2 + $0x60] sm:$0xff]
          %v1014 = vld [vmem:[#allocation2 + $0x68] sm:$0xff]
          %v1015 = vld [vmem:[#allocation2 + $0x70] sm:$0xff]
          %v1016 = vld [vmem:[#allocation2 + $0x78] sm:$0xff]
          %v1017 = vld [vmem:[%s784] sm:$0xff]
          %v1018 = vld [vmem:[%s784 + $0x8] sm:$0xff]
          %v1019 = vld [vmem:[%s784 + $0x10] sm:$0xff]
          %v1020 = vld [vmem:[%s784 + $0x18] sm:$0xff]
          %v1021 = vld [vmem:[%s784 + $0x20] sm:$0xff]
          %v1022 = vld [vmem:[%s784 + $0x28] sm:$0xff]
          %v1023 = vld [vmem:[%s784 + $0x30] sm:$0xff]
          %v1024 = vld [vmem:[%s784 + $0x38] sm:$0xff]
          %v1025 = vld [vmem:[%s784 + $0x40] sm:$0xff]
          %v1026 = vld [vmem:[%s784 + $0x48] sm:$0xff]
          %v1027 = vld [vmem:[%s784 + $0x50] sm:$0xff]
          %v1028 = vld [vmem:[%s784 + $0x58] sm:$0xff]
          %v1029 = vld [vmem:[%s784 + $0x60] sm:$0xff]
          %v1030 = vld [vmem:[%s784 + $0x68] sm:$0xff]
          %v1031 = vld [vmem:[%s784 + $0x70] sm:$0xff]
          %v1032 = vld [vmem:[%s784 + $0x78] sm:$0xff]
          %1033 = vmatpush.msra.mxu0 %v1032
          %1034 = vmatpush.msra.mxu0 %v1031
          %1035 = vmatpush.msra.mxu0 %v1030
          %1036 = vmatpush.msra.mxu0 %v1029
          %1037 = vmatpush.msra.mxu0 %v1028
          %1038 = vmatpush.msra.mxu0 %v1027
          %1039 = vmatpush.msra.mxu0 %v1026
          %1040 = vmatpush.msra.mxu0 %v1025
          %1041 = vmatpush.msra.mxu0 %v1024
          %1042 = vmatpush.msra.mxu0 %v1023
          %1043 = vmatpush.msra.mxu0 %v1022
          %1044 = vmatpush.msra.mxu0 %v1021
          %1045 = vmatpush.msra.mxu0 %v1020
          %1046 = vmatpush.msra.mxu0 %v1019
          %1047 = vmatpush.msra.mxu0 %v1018
          %1048 = vmatpush.msra.mxu0 %v1017
          %1049 = vmatmul.f32.gmra.mxu0 %v1001
          %v1050 = vpop.f32.mrf.mxu0
          %v1051 = vadd.f32 0.0, %v1050
          %1052 = vmatmul.f32.gmra.mxu0 %v1002
          %v1053 = vpop.f32.mrf.mxu0
          %v1054 = vadd.f32 0.0, %v1053
          %1055 = vmatmul.f32.gmra.mxu0 %v1003
          %v1056 = vpop.f32.mrf.mxu0
          %v1057 = vadd.f32 0.0, %v1056
          %1058 = vmatmul.f32.gmra.mxu0 %v1004
          %v1059 = vpop.f32.mrf.mxu0
          %v1060 = vadd.f32 0.0, %v1059
          %1061 = vmatmul.f32.gmra.mxu0 %v1005
          %v1062 = vpop.f32.mrf.mxu0
          %v1063 = vadd.f32 0.0, %v1062
          %1064 = vmatmul.f32.gmra.mxu0 %v1006
          %v1065 = vpop.f32.mrf.mxu0
          %v1066 = vadd.f32 0.0, %v1065
          %1067 = vmatmul.f32.gmra.mxu0 %v1007
          %v1068 = vpop.f32.mrf.mxu0
          %v1069 = vadd.f32 0.0, %v1068
          %1070 = vmatmul.f32.gmra.mxu0 %v1008
          %v1071 = vpop.f32.mrf.mxu0
          %v1072 = vadd.f32 0.0, %v1071
          %1073 = vmatmul.f32.gmra.mxu0 %v1009
          %v1074 = vpop.f32.mrf.mxu0
          %v1075 = vadd.f32 0.0, %v1074
          %1076 = vmatmul.f32.gmra.mxu0 %v1010
          %v1077 = vpop.f32.mrf.mxu0
          %v1078 = vadd.f32 0.0, %v1077
          %1079 = vmatmul.f32.gmra.mxu0 %v1011
          %v1080 = vpop.f32.mrf.mxu0
          %v1081 = vadd.f32 0.0, %v1080
          %1082 = vmatmul.f32.gmra.mxu0 %v1012
          %v1083 = vpop.f32.mrf.mxu0
          %v1084 = vadd.f32 0.0, %v1083
          %1085 = vmatmul.f32.gmra.mxu0 %v1013
          %v1086 = vpop.f32.mrf.mxu0
          %v1087 = vadd.f32 0.0, %v1086
          %1088 = vmatmul.f32.gmra.mxu0 %v1014
          %v1089 = vpop.f32.mrf.mxu0
          %v1090 = vadd.f32 0.0, %v1089
          %1091 = vmatmul.f32.gmra.mxu0 %v1015
          %v1092 = vpop.f32.mrf.mxu0
          %v1093 = vadd.f32 0.0, %v1092
          %1094 = vmatmul.f32.gmra.mxu0 %v1016
          %v1095 = vpop.f32.mrf.mxu0
          %v1096 = vadd.f32 0.0, %v1095
          %1097 = vdwg.mxu0
          %1098 = vst [vmem:[#allocation5] sm:$0xff] %v1051
          %1099 = vst [vmem:[#allocation5 + $0x8] sm:$0xff] %v1054
          %1100 = vst [vmem:[#allocation5 + $0x10] sm:$0xff] %v1057
          %1101 = vst [vmem:[#allocation5 + $0x18] sm:$0xff] %v1060
          %1102 = vst [vmem:[#allocation5 + $0x20] sm:$0xff] %v1063
          %1103 = vst [vmem:[#allocation5 + $0x28] sm:$0xff] %v1066
          %1104 = vst [vmem:[#allocation5 + $0x30] sm:$0xff] %v1069
          %1105 = vst [vmem:[#allocation5 + $0x38] sm:$0xff] %v1072
          %1106 = vst [vmem:[#allocation5 + $0x40] sm:$0xff] %v1075
          %1107 = vst [vmem:[#allocation5 + $0x48] sm:$0xff] %v1078
          %1108 = vst [vmem:[#allocation5 + $0x50] sm:$0xff] %v1081
          %1109 = vst [vmem:[#allocation5 + $0x58] sm:$0xff] %v1084
          %1110 = vst [vmem:[#allocation5 + $0x60] sm:$0xff] %v1087
          %1111 = vst [vmem:[#allocation5 + $0x68] sm:$0xff] %v1090
          %1112 = vst [vmem:[#allocation5 + $0x70] sm:$0xff] %v1093
          %1113 = vst [vmem:[#allocation5 + $0x78] sm:$0xff] %v1096
        $region124: #{tpu_custom_call.1} parent=103 // pred_fallthru
          _
        %v1114 = vld [vmem:[#allocation7] sm:$0xf]
        %v1115 = vld [vmem:[#allocation7 + $0x4] sm:$0xf]
        %v1116 = vld [vmem:[#allocation7 + $0x8] sm:$0xf]
        %v1117 = vld [vmem:[#allocation7 + $0xc] sm:$0xf]
        %v1118 = vld [vmem:[#allocation7 + $0x10] sm:$0xf]
        %v1119 = vld [vmem:[#allocation7 + $0x14] sm:$0xf]
        %v1120 = vld [vmem:[#allocation7 + $0x18] sm:$0xf]
        %v1121 = vld [vmem:[#allocation7 + $0x1c] sm:$0xf]
        %v1122 = vld [vmem:[#allocation7 + $0x20] sm:$0xf]
        %v1123 = vld [vmem:[#allocation7 + $0x24] sm:$0xf]
        %v1124 = vld [vmem:[#allocation7 + $0x28] sm:$0xf]
        %v1125 = vld [vmem:[#allocation7 + $0x2c] sm:$0xf]
        %v1126 = vld [vmem:[#allocation7 + $0x30] sm:$0xf]
        %v1127 = vld [vmem:[#allocation7 + $0x34] sm:$0xf]
        %v1128 = vld [vmem:[#allocation7 + $0x38] sm:$0xf]
        %v1129 = vld [vmem:[#allocation7 + $0x3c] sm:$0xf]
        %v1130 = vld [vmem:[#allocation3] sm:$0xff]
        %v1131 = vld [vmem:[#allocation3 + $0x8] sm:$0xff]
        %v1132 = vld [vmem:[#allocation3 + $0x10] sm:$0xff]
        %v1133 = vld [vmem:[#allocation3 + $0x18] sm:$0xff]
        %v1134 = vld [vmem:[#allocation3 + $0x20] sm:$0xff]
        %v1135 = vld [vmem:[#allocation3 + $0x28] sm:$0xff]
        %v1136 = vld [vmem:[#allocation3 + $0x30] sm:$0xff]
        %v1137 = vld [vmem:[#allocation3 + $0x38] sm:$0xff]
        %v1138 = vld [vmem:[#allocation3 + $0x40] sm:$0xff]
        %v1139 = vld [vmem:[#allocation3 + $0x48] sm:$0xff]
        %v1140 = vld [vmem:[#allocation3 + $0x50] sm:$0xff]
        %v1141 = vld [vmem:[#allocation3 + $0x58] sm:$0xff]
        %v1142 = vld [vmem:[#allocation3 + $0x60] sm:$0xff]
        %v1143 = vld [vmem:[#allocation3 + $0x68] sm:$0xff]
        %v1144 = vld [vmem:[#allocation3 + $0x70] sm:$0xff]
        %v1145 = vld [vmem:[#allocation3 + $0x78] sm:$0xff]
        %v1146 = vld [vmem:[#allocation5] sm:$0xff]
        %v1147 = vld [vmem:[#allocation5 + $0x8] sm:$0xff]
        %v1148 = vld [vmem:[#allocation5 + $0x10] sm:$0xff]
        %v1149 = vld [vmem:[#allocation5 + $0x18] sm:$0xff]
        %v1150 = vld [vmem:[#allocation5 + $0x20] sm:$0xff]
        %v1151 = vld [vmem:[#allocation5 + $0x28] sm:$0xff]
        %v1152 = vld [vmem:[#allocation5 + $0x30] sm:$0xff]
        %v1153 = vld [vmem:[#allocation5 + $0x38] sm:$0xff]
        %v1154 = vld [vmem:[#allocation5 + $0x40] sm:$0xff]
        %v1155 = vld [vmem:[#allocation5 + $0x48] sm:$0xff]
        %v1156 = vld [vmem:[#allocation5 + $0x50] sm:$0xff]
        %v1157 = vld [vmem:[#allocation5 + $0x58] sm:$0xff]
        %v1158 = vld [vmem:[#allocation5 + $0x60] sm:$0xff]
        %v1159 = vld [vmem:[#allocation5 + $0x68] sm:$0xff]
        %v1160 = vld [vmem:[#allocation5 + $0x70] sm:$0xff]
        %v1161 = vld [vmem:[#allocation5 + $0x78] sm:$0xff]
        %v1162 = vpack.c.bf16 %v1131, %v1130
        %v1163 = vpack.c.bf16 %v1133, %v1132
        %v1164 = vpack.c.bf16 %v1135, %v1134
        %v1165 = vpack.c.bf16 %v1137, %v1136
        %v1166 = vpack.c.bf16 %v1139, %v1138
        %v1167 = vpack.c.bf16 %v1141, %v1140
        %v1168 = vpack.c.bf16 %v1143, %v1142
        %v1169 = vpack.c.bf16 %v1145, %v1144
        %v1186 = vunpack.c.l.b16 %v1114
        %v1187 = vunpack.c.l.b16 %v1115
        %v1188 = vunpack.c.l.b16 %v1116
        %v1189 = vunpack.c.l.b16 %v1117
        %v1190 = vunpack.c.l.b16 %v1118
        %v1191 = vunpack.c.l.b16 %v1119
        %v1192 = vunpack.c.l.b16 %v1120
        %v1193 = vunpack.c.l.b16 %v1121
        %v1194 = vunpack.c.l.b16 %v1122
        %v1195 = vunpack.c.l.b16 %v1123
        %v1196 = vunpack.c.l.b16 %v1124
        %v1197 = vunpack.c.l.b16 %v1125
        %v1198 = vunpack.c.l.b16 %v1126
        %v1199 = vunpack.c.l.b16 %v1127
        %v1200 = vunpack.c.l.b16 %v1128
        %v1201 = vunpack.c.l.b16 %v1129
        %v1202 = vpack.c.b16 %v1187, %v1186
        %v1203 = vpack.c.b16 %v1189, %v1188
        %v1204 = vpack.c.b16 %v1191, %v1190
        %v1205 = vpack.c.b16 %v1193, %v1192
        %v1206 = vpack.c.b16 %v1195, %v1194
        %v1207 = vpack.c.b16 %v1197, %v1196
        %v1208 = vpack.c.b16 %v1199, %v1198
        %v1209 = vpack.c.b16 %v1201, %v1200
        %1218 = vmatpush.bf16.msra.mxu0 %v1169
        %1219 = vmatpush.bf16.msra.mxu0 %v1168
        %1220 = vmatpush.bf16.msra.mxu0 %v1167
        %1221 = vmatpush.bf16.msra.mxu0 %v1166
        %1222 = vmatpush.bf16.msra.mxu0 %v1165
        %1223 = vmatpush.bf16.msra.mxu0 %v1164
        %1224 = vmatpush.bf16.msra.mxu0 %v1163
        %1225 = vmatpush.bf16.msra.mxu0 %v1162
        %1226 = vmatmul.bf16.gmra.mxu0 %v1202
        %v1227 = vpop.f32.mrf.mxu0
        %v1228 = vadd.f32 0.0, %v1227
        %v1229 = vpop.f32.mrf.mxu0
        %v1230 = vadd.f32 0.0, %v1229
        %1231 = vmatmul.bf16.gmra.mxu0 %v1203
        %v1232 = vpop.f32.mrf.mxu0
        %v1233 = vadd.f32 0.0, %v1232
        %v1234 = vpop.f32.mrf.mxu0
        %v1235 = vadd.f32 0.0, %v1234
        %1236 = vmatmul.bf16.gmra.mxu0 %v1204
        %v1237 = vpop.f32.mrf.mxu0
        %v1238 = vadd.f32 0.0, %v1237
        %v1239 = vpop.f32.mrf.mxu0
        %v1240 = vadd.f32 0.0, %v1239
        %1241 = vmatmul.bf16.gmra.mxu0 %v1205
        %v1242 = vpop.f32.mrf.mxu0
        %v1243 = vadd.f32 0.0, %v1242
        %v1244 = vpop.f32.mrf.mxu0
        %v1245 = vadd.f32 0.0, %v1244
        %1246 = vmatmul.bf16.gmra.mxu0 %v1206
        %v1247 = vpop.f32.mrf.mxu0
        %v1248 = vadd.f32 0.0, %v1247
        %v1249 = vpop.f32.mrf.mxu0
        %v1250 = vadd.f32 0.0, %v1249
        %1251 = vmatmul.bf16.gmra.mxu0 %v1207
        %v1252 = vpop.f32.mrf.mxu0
        %v1253 = vadd.f32 0.0, %v1252
        %v1254 = vpop.f32.mrf.mxu0
        %v1255 = vadd.f32 0.0, %v1254
        %1256 = vmatmul.bf16.gmra.mxu0 %v1208
        %v1257 = vpop.f32.mrf.mxu0
        %v1258 = vadd.f32 0.0, %v1257
        %v1259 = vpop.f32.mrf.mxu0
        %v1260 = vadd.f32 0.0, %v1259
        %1261 = vmatmul.bf16.gmra.mxu0 %v1209
        %v1262 = vpop.f32.mrf.mxu0
        %v1263 = vadd.f32 0.0, %v1262
        %v1264 = vpop.f32.mrf.mxu0
        %v1265 = vadd.f32 0.0, %v1264
        %1266 = vdwg.mxu0
        %v1267 = vmul.f32 %v1130, %v1228
        %v1268 = vmul.f32 %v1131, %v1230
        %v1269 = vmul.f32 %v1132, %v1233
        %v1270 = vmul.f32 %v1133, %v1235
        %v1271 = vmul.f32 %v1134, %v1238
        %v1272 = vmul.f32 %v1135, %v1240
        %v1273 = vmul.f32 %v1136, %v1243
        %v1274 = vmul.f32 %v1137, %v1245
        %v1275 = vmul.f32 %v1138, %v1248
        %v1276 = vmul.f32 %v1139, %v1250
        %v1277 = vmul.f32 %v1140, %v1253
        %v1278 = vmul.f32 %v1141, %v1255
        %v1279 = vmul.f32 %v1142, %v1258
        %v1280 = vmul.f32 %v1143, %v1260
        %v1281 = vmul.f32 %v1144, %v1263
        %v1282 = vmul.f32 %v1145, %v1265
        %v1283 = vadd.f32 %v1267, %v1130
        %v1284 = vadd.f32 %v1268, %v1131
        %v1285 = vadd.f32 %v1269, %v1132
        %v1286 = vadd.f32 %v1270, %v1133
        %v1287 = vadd.f32 %v1271, %v1134
        %v1288 = vadd.f32 %v1272, %v1135
        %v1289 = vadd.f32 %v1273, %v1136
        %v1290 = vadd.f32 %v1274, %v1137
        %v1291 = vadd.f32 %v1275, %v1138
        %v1292 = vadd.f32 %v1276, %v1139
        %v1293 = vadd.f32 %v1277, %v1140
        %v1294 = vadd.f32 %v1278, %v1141
        %v1295 = vadd.f32 %v1279, %v1142
        %v1296 = vadd.f32 %v1280, %v1143
        %v1297 = vadd.f32 %v1281, %v1144
        %v1298 = vadd.f32 %v1282, %v1145
        %vm1299 = vcmp.gt.f32.partialorder %v1283, 0.0
        %vm1300 = vcmp.gt.f32.partialorder %v1284, 0.0
        %vm1301 = vcmp.gt.f32.partialorder %v1285, 0.0
        %vm1302 = vcmp.gt.f32.partialorder %v1286, 0.0
        %vm1303 = vcmp.gt.f32.partialorder %v1287, 0.0
        %vm1304 = vcmp.gt.f32.partialorder %v1288, 0.0
        %vm1305 = vcmp.gt.f32.partialorder %v1289, 0.0
        %vm1306 = vcmp.gt.f32.partialorder %v1290, 0.0
        %vm1307 = vcmp.gt.f32.partialorder %v1291, 0.0
        %vm1308 = vcmp.gt.f32.partialorder %v1292, 0.0
        %vm1309 = vcmp.gt.f32.partialorder %v1293, 0.0
        %vm1310 = vcmp.gt.f32.partialorder %v1294, 0.0
        %vm1311 = vcmp.gt.f32.partialorder %v1295, 0.0
        %vm1312 = vcmp.gt.f32.partialorder %v1296, 0.0
        %vm1313 = vcmp.gt.f32.partialorder %v1297, 0.0
        %vm1314 = vcmp.gt.f32.partialorder %v1298, 0.0
        %v1315 = vrsqrt.pop %v1283
        %v1316 = vmul.f32 %v1315, %v1283
        %v1317 = vmul.f32 %v1316, %v1315
        %v1318 = vmul.f32 0.5, %v1317
        %v1319 = vsub.f32 1.5, %v1318
        %v1320 = vmul.f32 %v1315, %v1319
        %vm1321 = vweird.f32 %v1283
        %vm1322 = vweird.f32 %v1315
        %vm1323 = vmor %vm1321, %vm1322
        %v1324 = vsel %vm1323, %v1315, %v1320
        %v1325 = vrsqrt.pop %v1284
        %v1326 = vmul.f32 %v1325, %v1284
        %v1327 = vmul.f32 %v1326, %v1325
        %v1328 = vmul.f32 0.5, %v1327
        %v1329 = vsub.f32 1.5, %v1328
        %v1330 = vmul.f32 %v1325, %v1329
        %vm1331 = vweird.f32 %v1284
        %vm1332 = vweird.f32 %v1325
        %vm1333 = vmor %vm1331, %vm1332
        %v1334 = vsel %vm1333, %v1325, %v1330
        %v1335 = vrsqrt.pop %v1285
        %v1336 = vmul.f32 %v1335, %v1285
        %v1337 = vmul.f32 %v1336, %v1335
        %v1338 = vmul.f32 0.5, %v1337
        %v1339 = vsub.f32 1.5, %v1338
        %v1340 = vmul.f32 %v1335, %v1339
        %vm1341 = vweird.f32 %v1285
        %vm1342 = vweird.f32 %v1335
        %vm1343 = vmor %vm1341, %vm1342
        %v1344 = vsel %vm1343, %v1335, %v1340
        %v1345 = vrsqrt.pop %v1286
        %v1346 = vmul.f32 %v1345, %v1286
        %v1347 = vmul.f32 %v1346, %v1345
        %v1348 = vmul.f32 0.5, %v1347
        %v1349 = vsub.f32 1.5, %v1348
        %v1350 = vmul.f32 %v1345, %v1349
        %vm1351 = vweird.f32 %v1286
        %vm1352 = vweird.f32 %v1345
        %vm1353 = vmor %vm1351, %vm1352
        %v1354 = vsel %vm1353, %v1345, %v1350
        %v1355 = vrsqrt.pop %v1287
        %v1356 = vmul.f32 %v1355, %v1287
        %v1357 = vmul.f32 %v1356, %v1355
        %v1358 = vmul.f32 0.5, %v1357
        %v1359 = vsub.f32 1.5, %v1358
        %v1360 = vmul.f32 %v1355, %v1359
        %vm1361 = vweird.f32 %v1287
        %vm1362 = vweird.f32 %v1355
        %vm1363 = vmor %vm1361, %vm1362
        %v1364 = vsel %vm1363, %v1355, %v1360
        %v1365 = vrsqrt.pop %v1288
        %v1366 = vmul.f32 %v1365, %v1288
        %v1367 = vmul.f32 %v1366, %v1365
        %v1368 = vmul.f32 0.5, %v1367
        %v1369 = vsub.f32 1.5, %v1368
        %v1370 = vmul.f32 %v1365, %v1369
        %vm1371 = vweird.f32 %v1288
        %vm1372 = vweird.f32 %v1365
        %vm1373 = vmor %vm1371, %vm1372
        %v1374 = vsel %vm1373, %v1365, %v1370
        %v1375 = vrsqrt.pop %v1289
        %v1376 = vmul.f32 %v1375, %v1289
        %v1377 = vmul.f32 %v1376, %v1375
        %v1378 = vmul.f32 0.5, %v1377
        %v1379 = vsub.f32 1.5, %v1378
        %v1380 = vmul.f32 %v1375, %v1379
        %vm1381 = vweird.f32 %v1289
        %vm1382 = vweird.f32 %v1375
        %vm1383 = vmor %vm1381, %vm1382
        %v1384 = vsel %vm1383, %v1375, %v1380
        %v1385 = vrsqrt.pop %v1290
        %v1386 = vmul.f32 %v1385, %v1290
        %v1387 = vmul.f32 %v1386, %v1385
        %v1388 = vmul.f32 0.5, %v1387
        %v1389 = vsub.f32 1.5, %v1388
        %v1390 = vmul.f32 %v1385, %v1389
        %vm1391 = vweird.f32 %v1290
        %vm1392 = vweird.f32 %v1385
        %vm1393 = vmor %vm1391, %vm1392
        %v1394 = vsel %vm1393, %v1385, %v1390
        %v1395 = vrsqrt.pop %v1291
        %v1396 = vmul.f32 %v1395, %v1291
        %v1397 = vmul.f32 %v1396, %v1395
        %v1398 = vmul.f32 0.5, %v1397
        %v1399 = vsub.f32 1.5, %v1398
        %v1400 = vmul.f32 %v1395, %v1399
        %vm1401 = vweird.f32 %v1291
        %vm1402 = vweird.f32 %v1395
        %vm1403 = vmor %vm1401, %vm1402
        %v1404 = vsel %vm1403, %v1395, %v1400
        %v1405 = vrsqrt.pop %v1292
        %v1406 = vmul.f32 %v1405, %v1292
        %v1407 = vmul.f32 %v1406, %v1405
        %v1408 = vmul.f32 0.5, %v1407
        %v1409 = vsub.f32 1.5, %v1408
        %v1410 = vmul.f32 %v1405, %v1409
        %vm1411 = vweird.f32 %v1292
        %vm1412 = vweird.f32 %v1405
        %vm1413 = vmor %vm1411, %vm1412
        %v1414 = vsel %vm1413, %v1405, %v1410
        %v1415 = vrsqrt.pop %v1293
        %v1416 = vmul.f32 %v1415, %v1293
        %v1417 = vmul.f32 %v1416, %v1415
        %v1418 = vmul.f32 0.5, %v1417
        %v1419 = vsub.f32 1.5, %v1418
        %v1420 = vmul.f32 %v1415, %v1419
        %vm1421 = vweird.f32 %v1293
        %vm1422 = vweird.f32 %v1415
        %vm1423 = vmor %vm1421, %vm1422
        %v1424 = vsel %vm1423, %v1415, %v1420
        %v1425 = vrsqrt.pop %v1294
        %v1426 = vmul.f32 %v1425, %v1294
        %v1427 = vmul.f32 %v1426, %v1425
        %v1428 = vmul.f32 0.5, %v1427
        %v1429 = vsub.f32 1.5, %v1428
        %v1430 = vmul.f32 %v1425, %v1429
        %vm1431 = vweird.f32 %v1294
        %vm1432 = vweird.f32 %v1425
        %vm1433 = vmor %vm1431, %vm1432
        %v1434 = vsel %vm1433, %v1425, %v1430
        %v1435 = vrsqrt.pop %v1295
        %v1436 = vmul.f32 %v1435, %v1295
        %v1437 = vmul.f32 %v1436, %v1435
        %v1438 = vmul.f32 0.5, %v1437
        %v1439 = vsub.f32 1.5, %v1438
        %v1440 = vmul.f32 %v1435, %v1439
        %vm1441 = vweird.f32 %v1295
        %vm1442 = vweird.f32 %v1435
        %vm1443 = vmor %vm1441, %vm1442
        %v1444 = vsel %vm1443, %v1435, %v1440
        %v1445 = vrsqrt.pop %v1296
        %v1446 = vmul.f32 %v1445, %v1296
        %v1447 = vmul.f32 %v1446, %v1445
        %v1448 = vmul.f32 0.5, %v1447
        %v1449 = vsub.f32 1.5, %v1448
        %v1450 = vmul.f32 %v1445, %v1449
        %vm1451 = vweird.f32 %v1296
        %vm1452 = vweird.f32 %v1445
        %vm1453 = vmor %vm1451, %vm1452
        %v1454 = vsel %vm1453, %v1445, %v1450
        %v1455 = vrsqrt.pop %v1297
        %v1456 = vmul.f32 %v1455, %v1297
        %v1457 = vmul.f32 %v1456, %v1455
        %v1458 = vmul.f32 0.5, %v1457
        %v1459 = vsub.f32 1.5, %v1458
        %v1460 = vmul.f32 %v1455, %v1459
        %vm1461 = vweird.f32 %v1297
        %vm1462 = vweird.f32 %v1455
        %vm1463 = vmor %vm1461, %vm1462
        %v1464 = vsel %vm1463, %v1455, %v1460
        %v1465 = vrsqrt.pop %v1298
        %v1466 = vmul.f32 %v1465, %v1298
        %v1467 = vmul.f32 %v1466, %v1465
        %v1468 = vmul.f32 0.5, %v1467
        %v1469 = vsub.f32 1.5, %v1468
        %v1470 = vmul.f32 %v1465, %v1469
        %vm1471 = vweird.f32 %v1298
        %vm1472 = vweird.f32 %v1465
        %vm1473 = vmor %vm1471, %vm1472
        %v1474 = vsel %vm1473, %v1465, %v1470
        %v1475 = vsel %vm1299, %v1324, 0.0
        %v1476 = vsel %vm1300, %v1334, 0.0
        %v1477 = vsel %vm1301, %v1344, 0.0
        %v1478 = vsel %vm1302, %v1354, 0.0
        %v1479 = vsel %vm1303, %v1364, 0.0
        %v1480 = vsel %vm1304, %v1374, 0.0
        %v1481 = vsel %vm1305, %v1384, 0.0
        %v1482 = vsel %vm1306, %v1394, 0.0
        %v1483 = vsel %vm1307, %v1404, 0.0
        %v1484 = vsel %vm1308, %v1414, 0.0
        %v1485 = vsel %vm1309, %v1424, 0.0
        %v1486 = vsel %vm1310, %v1434, 0.0
        %v1487 = vsel %vm1311, %v1444, 0.0
        %v1488 = vsel %vm1312, %v1454, 0.0
        %v1489 = vsel %vm1313, %v1464, 0.0
        %v1490 = vsel %vm1314, %v1474, 0.0
        %v1491 = vmul.f32 %v1130, %v1475
        %v1492 = vmul.f32 %v1131, %v1476
        %v1493 = vmul.f32 %v1132, %v1477
        %v1494 = vmul.f32 %v1133, %v1478
        %v1495 = vmul.f32 %v1134, %v1479
        %v1496 = vmul.f32 %v1135, %v1480
        %v1497 = vmul.f32 %v1136, %v1481
        %v1498 = vmul.f32 %v1137, %v1482
        %v1499 = vmul.f32 %v1138, %v1483
        %v1500 = vmul.f32 %v1139, %v1484
        %v1501 = vmul.f32 %v1140, %v1485
        %v1502 = vmul.f32 %v1141, %v1486
        %v1503 = vmul.f32 %v1142, %v1487
        %v1504 = vmul.f32 %v1143, %v1488
        %v1505 = vmul.f32 %v1144, %v1489
        %v1506 = vmul.f32 %v1145, %v1490
        %1508 = vset.pattern.permute.xlu0 0
        %1509 = vperm.xlu0 %1508, %v1491
        %v1510 = vpop.permute.xlu0 %1509
        %1513 = vset.pattern.permute.xlu0 0
        %1514 = vperm.xlu0 %1513, %v1492
        %v1515 = vpop.permute.xlu0 %1514
        %1518 = vset.pattern.permute.xlu0 0
        %1519 = vperm.xlu0 %1518, %v1493
        %v1520 = vpop.permute.xlu0 %1519
        %1523 = vset.pattern.permute.xlu0 0
        %1524 = vperm.xlu0 %1523, %v1494
        %v1525 = vpop.permute.xlu0 %1524
        %1528 = vset.pattern.permute.xlu0 0
        %1529 = vperm.xlu0 %1528, %v1495
        %v1530 = vpop.permute.xlu0 %1529
        %1533 = vset.pattern.permute.xlu0 0
        %1534 = vperm.xlu0 %1533, %v1496
        %v1535 = vpop.permute.xlu0 %1534
        %1538 = vset.pattern.permute.xlu0 0
        %1539 = vperm.xlu0 %1538, %v1497
        %v1540 = vpop.permute.xlu0 %1539
        %1543 = vset.pattern.permute.xlu0 0
        %1544 = vperm.xlu0 %1543, %v1498
        %v1545 = vpop.permute.xlu0 %1544
        %1548 = vset.pattern.permute.xlu0 0
        %1549 = vperm.xlu0 %1548, %v1499
        %v1550 = vpop.permute.xlu0 %1549
        %1553 = vset.pattern.permute.xlu0 0
        %1554 = vperm.xlu0 %1553, %v1500
        %v1555 = vpop.permute.xlu0 %1554
        %1558 = vset.pattern.permute.xlu0 0
        %1559 = vperm.xlu0 %1558, %v1501
        %v1560 = vpop.permute.xlu0 %1559
        %1563 = vset.pattern.permute.xlu0 0
        %1564 = vperm.xlu0 %1563, %v1502
        %v1565 = vpop.permute.xlu0 %1564
        %1568 = vset.pattern.permute.xlu0 0
        %1569 = vperm.xlu0 %1568, %v1503
        %v1570 = vpop.permute.xlu0 %1569
        %1573 = vset.pattern.permute.xlu0 0
        %1574 = vperm.xlu0 %1573, %v1504
        %v1575 = vpop.permute.xlu0 %1574
        %1578 = vset.pattern.permute.xlu0 0
        %1579 = vperm.xlu0 %1578, %v1505
        %v1580 = vpop.permute.xlu0 %1579
        %1583 = vset.pattern.permute.xlu0 0
        %1584 = vperm.xlu0 %1583, %v1506
        %v1585 = vpop.permute.xlu0 %1584
        %v1587 = vmul.f32 %v1510, %v1146
        %v1588 = vmul.f32 %v1515, %v1147
        %v1589 = vmul.f32 %v1520, %v1148
        %v1590 = vmul.f32 %v1525, %v1149
        %v1591 = vmul.f32 %v1530, %v1150
        %v1592 = vmul.f32 %v1535, %v1151
        %v1593 = vmul.f32 %v1540, %v1152
        %v1594 = vmul.f32 %v1545, %v1153
        %v1595 = vmul.f32 %v1550, %v1154
        %v1596 = vmul.f32 %v1555, %v1155
        %v1597 = vmul.f32 %v1560, %v1156
        %v1598 = vmul.f32 %v1565, %v1157
        %v1599 = vmul.f32 %v1570, %v1158
        %v1600 = vmul.f32 %v1575, %v1159
        %v1601 = vmul.f32 %v1580, %v1160
        %v1602 = vmul.f32 %v1585, %v1161
        %v1603 = vpack.c.bf16 %v1588, %v1587
        %v1604 = vpack.c.bf16 %v1590, %v1589
        %v1605 = vpack.c.bf16 %v1592, %v1591
        %v1606 = vpack.c.bf16 %v1594, %v1593
        %v1607 = vpack.c.bf16 %v1596, %v1595
        %v1608 = vpack.c.bf16 %v1598, %v1597
        %v1609 = vpack.c.bf16 %v1600, %v1599
        %v1610 = vpack.c.bf16 %v1602, %v1601
        %1611 = vmatpush.bf16.msra.mxu0 %v1610
        %1612 = vmatpush.bf16.msra.mxu0 %v1609
        %1613 = vmatpush.bf16.msra.mxu0 %v1608
        %1614 = vmatpush.bf16.msra.mxu0 %v1607
        %1615 = vmatpush.bf16.msra.mxu0 %v1606
        %1616 = vmatpush.bf16.msra.mxu0 %v1605
        %1617 = vmatpush.bf16.msra.mxu0 %v1604
        %1618 = vmatpush.bf16.msra.mxu0 %v1603
        %1619 = vmatmul.bf16.gmra.mxu0 %v1202
        %v1620 = vpop.f32.mrf.mxu0
        %v1621 = vadd.f32 0.0, %v1620
        %v1622 = vpop.f32.mrf.mxu0
        %v1623 = vadd.f32 0.0, %v1622
        %1624 = vmatmul.bf16.gmra.mxu0 %v1203
        %v1625 = vpop.f32.mrf.mxu0
        %v1626 = vadd.f32 0.0, %v1625
        %v1627 = vpop.f32.mrf.mxu0
        %v1628 = vadd.f32 0.0, %v1627
        %1629 = vmatmul.bf16.gmra.mxu0 %v1204
        %v1630 = vpop.f32.mrf.mxu0
        %v1631 = vadd.f32 0.0, %v1630
        %v1632 = vpop.f32.mrf.mxu0
        %v1633 = vadd.f32 0.0, %v1632
        %1634 = vmatmul.bf16.gmra.mxu0 %v1205
        %v1635 = vpop.f32.mrf.mxu0
        %v1636 = vadd.f32 0.0, %v1635
        %v1637 = vpop.f32.mrf.mxu0
        %v1638 = vadd.f32 0.0, %v1637
        %1639 = vmatmul.bf16.gmra.mxu0 %v1206
        %v1640 = vpop.f32.mrf.mxu0
        %v1641 = vadd.f32 0.0, %v1640
        %v1642 = vpop.f32.mrf.mxu0
        %v1643 = vadd.f32 0.0, %v1642
        %1644 = vmatmul.bf16.gmra.mxu0 %v1207
        %v1645 = vpop.f32.mrf.mxu0
        %v1646 = vadd.f32 0.0, %v1645
        %v1647 = vpop.f32.mrf.mxu0
        %v1648 = vadd.f32 0.0, %v1647
        %1649 = vmatmul.bf16.gmra.mxu0 %v1208
        %v1650 = vpop.f32.mrf.mxu0
        %v1651 = vadd.f32 0.0, %v1650
        %v1652 = vpop.f32.mrf.mxu0
        %v1653 = vadd.f32 0.0, %v1652
        %1654 = vmatmul.bf16.gmra.mxu0 %v1209
        %v1655 = vpop.f32.mrf.mxu0
        %v1656 = vadd.f32 0.0, %v1655
        %v1657 = vpop.f32.mrf.mxu0
        %v1658 = vadd.f32 0.0, %v1657
        %1659 = vdwg.mxu0
        %v1660 = vmul.f32 %v1510, %v1621
        %v1661 = vmul.f32 %v1515, %v1623
        %v1662 = vmul.f32 %v1520, %v1626
        %v1663 = vmul.f32 %v1525, %v1628
        %v1664 = vmul.f32 %v1530, %v1631
        %v1665 = vmul.f32 %v1535, %v1633
        %v1666 = vmul.f32 %v1540, %v1636
        %v1667 = vmul.f32 %v1545, %v1638
        %v1668 = vmul.f32 %v1550, %v1641
        %v1669 = vmul.f32 %v1555, %v1643
        %v1670 = vmul.f32 %v1560, %v1646
        %v1671 = vmul.f32 %v1565, %v1648
        %v1672 = vmul.f32 %v1570, %v1651
        %v1673 = vmul.f32 %v1575, %v1653
        %v1674 = vmul.f32 %v1580, %v1656
        %v1675 = vmul.f32 %v1585, %v1658
        %v1676 = vmul.f32 %v1491, %v1475
        %v1677 = vmul.f32 %v1492, %v1476
        %v1678 = vmul.f32 %v1493, %v1477
        %v1679 = vmul.f32 %v1494, %v1478
        %v1680 = vmul.f32 %v1495, %v1479
        %v1681 = vmul.f32 %v1496, %v1480
        %v1682 = vmul.f32 %v1497, %v1481
        %v1683 = vmul.f32 %v1498, %v1482
        %v1684 = vmul.f32 %v1499, %v1483
        %v1685 = vmul.f32 %v1500, %v1484
        %v1686 = vmul.f32 %v1501, %v1485
        %v1687 = vmul.f32 %v1502, %v1486
        %v1688 = vmul.f32 %v1503, %v1487
        %v1689 = vmul.f32 %v1504, %v1488
        %v1690 = vmul.f32 %v1505, %v1489
        %v1691 = vmul.f32 %v1506, %v1490
        %1693 = vset.pattern.permute.xlu0 0
        %1694 = vperm.xlu0 %1693, %v1676
        %v1695 = vpop.permute.xlu0 %1694
        %1698 = vset.pattern.permute.xlu0 0
        %1699 = vperm.xlu0 %1698, %v1677
        %v1700 = vpop.permute.xlu0 %1699
        %1703 = vset.pattern.permute.xlu0 0
        %1704 = vperm.xlu0 %1703, %v1678
        %v1705 = vpop.permute.xlu0 %1704
        %1708 = vset.pattern.permute.xlu0 0
        %1709 = vperm.xlu0 %1708, %v1679
        %v1710 = vpop.permute.xlu0 %1709
        %1713 = vset.pattern.permute.xlu0 0
        %1714 = vperm.xlu0 %1713, %v1680
        %v1715 = vpop.permute.xlu0 %1714
        %1718 = vset.pattern.permute.xlu0 0
        %1719 = vperm.xlu0 %1718, %v1681
        %v1720 = vpop.permute.xlu0 %1719
        %1723 = vset.pattern.permute.xlu0 0
        %1724 = vperm.xlu0 %1723, %v1682
        %v1725 = vpop.permute.xlu0 %1724
        %1728 = vset.pattern.permute.xlu0 0
        %1729 = vperm.xlu0 %1728, %v1683
        %v1730 = vpop.permute.xlu0 %1729
        %1733 = vset.pattern.permute.xlu0 0
        %1734 = vperm.xlu0 %1733, %v1684
        %v1735 = vpop.permute.xlu0 %1734
        %1738 = vset.pattern.permute.xlu0 0
        %1739 = vperm.xlu0 %1738, %v1685
        %v1740 = vpop.permute.xlu0 %1739
        %1743 = vset.pattern.permute.xlu0 0
        %1744 = vperm.xlu0 %1743, %v1686
        %v1745 = vpop.permute.xlu0 %1744
        %1748 = vset.pattern.permute.xlu0 0
        %1749 = vperm.xlu0 %1748, %v1687
        %v1750 = vpop.permute.xlu0 %1749
        %1753 = vset.pattern.permute.xlu0 0
        %1754 = vperm.xlu0 %1753, %v1688
        %v1755 = vpop.permute.xlu0 %1754
        %1758 = vset.pattern.permute.xlu0 0
        %1759 = vperm.xlu0 %1758, %v1689
        %v1760 = vpop.permute.xlu0 %1759
        %1763 = vset.pattern.permute.xlu0 0
        %1764 = vperm.xlu0 %1763, %v1690
        %v1765 = vpop.permute.xlu0 %1764
        %1768 = vset.pattern.permute.xlu0 0
        %1769 = vperm.xlu0 %1768, %v1691
        %v1770 = vpop.permute.xlu0 %1769
        %v1772 = vmul.f32 %v1695, %v1146
        %v1773 = vmul.f32 %v1700, %v1147
        %v1774 = vmul.f32 %v1705, %v1148
        %v1775 = vmul.f32 %v1710, %v1149
        %v1776 = vmul.f32 %v1715, %v1150
        %v1777 = vmul.f32 %v1720, %v1151
        %v1778 = vmul.f32 %v1725, %v1152
        %v1779 = vmul.f32 %v1730, %v1153
        %v1780 = vmul.f32 %v1735, %v1154
        %v1781 = vmul.f32 %v1740, %v1155
        %v1782 = vmul.f32 %v1745, %v1156
        %v1783 = vmul.f32 %v1750, %v1157
        %v1784 = vmul.f32 %v1755, %v1158
        %v1785 = vmul.f32 %v1760, %v1159
        %v1786 = vmul.f32 %v1765, %v1160
        %v1787 = vmul.f32 %v1770, %v1161
        %v1788 = vadd.f32 %v1660, %v1772
        %v1789 = vadd.f32 %v1661, %v1773
        %v1790 = vadd.f32 %v1662, %v1774
        %v1791 = vadd.f32 %v1663, %v1775
        %v1792 = vadd.f32 %v1664, %v1776
        %v1793 = vadd.f32 %v1665, %v1777
        %v1794 = vadd.f32 %v1666, %v1778
        %v1795 = vadd.f32 %v1667, %v1779
        %v1796 = vadd.f32 %v1668, %v1780
        %v1797 = vadd.f32 %v1669, %v1781
        %v1798 = vadd.f32 %v1670, %v1782
        %v1799 = vadd.f32 %v1671, %v1783
        %v1800 = vadd.f32 %v1672, %v1784
        %v1801 = vadd.f32 %v1673, %v1785
        %v1802 = vadd.f32 %v1674, %v1786
        %v1803 = vadd.f32 %v1675, %v1787
        %v1804 = vld [vmem:[%s790] sm:$0x1]
        %v1806 = vperm.slane %v1804, 0
        %v1808 = vadd.f32 %v1788, %v1806
        %v1809 = vadd.f32 %v1789, %v1806
        %v1810 = vadd.f32 %v1790, %v1806
        %v1811 = vadd.f32 %v1791, %v1806
        %v1812 = vadd.f32 %v1792, %v1806
        %v1813 = vadd.f32 %v1793, %v1806
        %v1814 = vadd.f32 %v1794, %v1806
        %v1815 = vadd.f32 %v1795, %v1806
        %v1816 = vadd.f32 %v1796, %v1806
        %v1817 = vadd.f32 %v1797, %v1806
        %v1818 = vadd.f32 %v1798, %v1806
        %v1819 = vadd.f32 %v1799, %v1806
        %v1820 = vadd.f32 %v1800, %v1806
        %v1821 = vadd.f32 %v1801, %v1806
        %v1822 = vadd.f32 %v1802, %v1806
        %v1823 = vadd.f32 %v1803, %v1806
        %v1824 = vmax.f32 %v1808, 0.0
        %v1825 = vmax.f32 %v1809, 0.0
        %v1826 = vmax.f32 %v1810, 0.0
        %v1827 = vmax.f32 %v1811, 0.0
        %v1828 = vmax.f32 %v1812, 0.0
        %v1829 = vmax.f32 %v1813, 0.0
        %v1830 = vmax.f32 %v1814, 0.0
        %v1831 = vmax.f32 %v1815, 0.0
        %v1832 = vmax.f32 %v1816, 0.0
        %v1833 = vmax.f32 %v1817, 0.0
        %v1834 = vmax.f32 %v1818, 0.0
        %v1835 = vmax.f32 %v1819, 0.0
        %v1836 = vmax.f32 %v1820, 0.0
        %v1837 = vmax.f32 %v1821, 0.0
        %v1838 = vmax.f32 %v1822, 0.0
        %v1839 = vmax.f32 %v1823, 0.0
        %1841 = vset.pattern.permute.xlu0 0
        %1842 = vperm.xlu0 %1841, %v1130
        %v1843 = vpop.permute.xlu0 %1842
        %1846 = vset.pattern.permute.xlu0 0
        %1847 = vperm.xlu0 %1846, %v1131
        %v1848 = vpop.permute.xlu0 %1847
        %1851 = vset.pattern.permute.xlu0 0
        %1852 = vperm.xlu0 %1851, %v1132
        %v1853 = vpop.permute.xlu0 %1852
        %1856 = vset.pattern.permute.xlu0 0
        %1857 = vperm.xlu0 %1856, %v1133
        %v1858 = vpop.permute.xlu0 %1857
        %1861 = vset.pattern.permute.xlu0 0
        %1862 = vperm.xlu0 %1861, %v1134
        %v1863 = vpop.permute.xlu0 %1862
        %1866 = vset.pattern.permute.xlu0 0
        %1867 = vperm.xlu0 %1866, %v1135
        %v1868 = vpop.permute.xlu0 %1867
        %1871 = vset.pattern.permute.xlu0 0
        %1872 = vperm.xlu0 %1871, %v1136
        %v1873 = vpop.permute.xlu0 %1872
        %1876 = vset.pattern.permute.xlu0 0
        %1877 = vperm.xlu0 %1876, %v1137
        %v1878 = vpop.permute.xlu0 %1877
        %1881 = vset.pattern.permute.xlu0 0
        %1882 = vperm.xlu0 %1881, %v1138
        %v1883 = vpop.permute.xlu0 %1882
        %1886 = vset.pattern.permute.xlu0 0
        %1887 = vperm.xlu0 %1886, %v1139
        %v1888 = vpop.permute.xlu0 %1887
        %1891 = vset.pattern.permute.xlu0 0
        %1892 = vperm.xlu0 %1891, %v1140
        %v1893 = vpop.permute.xlu0 %1892
        %1896 = vset.pattern.permute.xlu0 0
        %1897 = vperm.xlu0 %1896, %v1141
        %v1898 = vpop.permute.xlu0 %1897
        %1901 = vset.pattern.permute.xlu0 0
        %1902 = vperm.xlu0 %1901, %v1142
        %v1903 = vpop.permute.xlu0 %1902
        %1906 = vset.pattern.permute.xlu0 0
        %1907 = vperm.xlu0 %1906, %v1143
        %v1908 = vpop.permute.xlu0 %1907
        %1911 = vset.pattern.permute.xlu0 0
        %1912 = vperm.xlu0 %1911, %v1144
        %v1913 = vpop.permute.xlu0 %1912
        %1916 = vset.pattern.permute.xlu0 0
        %1917 = vperm.xlu0 %1916, %v1145
        %v1918 = vpop.permute.xlu0 %1917
        %v1920 = vmul.f32 %v1824, %v1843
        %v1921 = vmul.f32 %v1825, %v1848
        %v1922 = vmul.f32 %v1826, %v1853
        %v1923 = vmul.f32 %v1827, %v1858
        %v1924 = vmul.f32 %v1828, %v1863
        %v1925 = vmul.f32 %v1829, %v1868
        %v1926 = vmul.f32 %v1830, %v1873
        %v1927 = vmul.f32 %v1831, %v1878
        %v1928 = vmul.f32 %v1832, %v1883
        %v1929 = vmul.f32 %v1833, %v1888
        %v1930 = vmul.f32 %v1834, %v1893
        %v1931 = vmul.f32 %v1835, %v1898
        %v1932 = vmul.f32 %v1836, %v1903
        %v1933 = vmul.f32 %v1837, %v1908
        %v1934 = vmul.f32 %v1838, %v1913
        %v1935 = vmul.f32 %v1839, %v1918
        %v1936 = vpack.c.bf16 %v1921, %v1920
        %v1937 = vpack.c.bf16 %v1923, %v1922
        %v1938 = vpack.c.bf16 %v1925, %v1924
        %v1939 = vpack.c.bf16 %v1927, %v1926
        %v1940 = vpack.c.bf16 %v1929, %v1928
        %v1941 = vpack.c.bf16 %v1931, %v1930
        %v1942 = vpack.c.bf16 %v1933, %v1932
        %v1943 = vpack.c.bf16 %v1935, %v1934
        %1944 = vmatpush.bf16.msra.mxu0 %v1943
        %1945 = vmatpush.bf16.msra.mxu0 %v1942
        %1946 = vmatpush.bf16.msra.mxu0 %v1941
        %1947 = vmatpush.bf16.msra.mxu0 %v1940
        %1948 = vmatpush.bf16.msra.mxu0 %v1939
        %1949 = vmatpush.bf16.msra.mxu0 %v1938
        %1950 = vmatpush.bf16.msra.mxu0 %v1937
        %1951 = vmatpush.bf16.msra.mxu0 %v1936
        %1952 = vmatmul.bf16.gmra.mxu0 %v1202
        %v1953 = vpop.f32.mrf.mxu0
        %v1954 = vadd.f32 0.0, %v1953
        %v1955 = vpop.f32.mrf.mxu0
        %v1956 = vadd.f32 0.0, %v1955
        %1957 = vmatmul.bf16.gmra.mxu0 %v1203
        %v1958 = vpop.f32.mrf.mxu0
        %v1959 = vadd.f32 0.0, %v1958
        %v1960 = vpop.f32.mrf.mxu0
        %v1961 = vadd.f32 0.0, %v1960
        %1962 = vmatmul.bf16.gmra.mxu0 %v1204
        %v1963 = vpop.f32.mrf.mxu0
        %v1964 = vadd.f32 0.0, %v1963
        %v1965 = vpop.f32.mrf.mxu0
        %v1966 = vadd.f32 0.0, %v1965
        %1967 = vmatmul.bf16.gmra.mxu0 %v1205
        %v1968 = vpop.f32.mrf.mxu0
        %v1969 = vadd.f32 0.0, %v1968
        %v1970 = vpop.f32.mrf.mxu0
        %v1971 = vadd.f32 0.0, %v1970
        %1972 = vmatmul.bf16.gmra.mxu0 %v1206
        %v1973 = vpop.f32.mrf.mxu0
        %v1974 = vadd.f32 0.0, %v1973
        %v1975 = vpop.f32.mrf.mxu0
        %v1976 = vadd.f32 0.0, %v1975
        %1977 = vmatmul.bf16.gmra.mxu0 %v1207
        %v1978 = vpop.f32.mrf.mxu0
        %v1979 = vadd.f32 0.0, %v1978
        %v1980 = vpop.f32.mrf.mxu0
        %v1981 = vadd.f32 0.0, %v1980
        %1982 = vmatmul.bf16.gmra.mxu0 %v1208
        %v1983 = vpop.f32.mrf.mxu0
        %v1984 = vadd.f32 0.0, %v1983
        %v1985 = vpop.f32.mrf.mxu0
        %v1986 = vadd.f32 0.0, %v1985
        %1987 = vmatmul.bf16.gmra.mxu0 %v1209
        %v1988 = vpop.f32.mrf.mxu0
        %v1989 = vadd.f32 0.0, %v1988
        %v1990 = vpop.f32.mrf.mxu0
        %v1991 = vadd.f32 0.0, %v1990
        %1992 = vdwg.mxu0
        %v1993 = vld [vmem:[%s704] sm:$0x1]
        %v1995 = vperm.slane %v1993, 0
        %v1997 = vmul.f32 %v1954, %v1995
        %v1998 = vmul.f32 %v1956, %v1995
        %v1999 = vmul.f32 %v1959, %v1995
        %v2000 = vmul.f32 %v1961, %v1995
        %v2001 = vmul.f32 %v1964, %v1995
        %v2002 = vmul.f32 %v1966, %v1995
        %v2003 = vmul.f32 %v1969, %v1995
        %v2004 = vmul.f32 %v1971, %v1995
        %v2005 = vmul.f32 %v1974, %v1995
        %v2006 = vmul.f32 %v1976, %v1995
        %v2007 = vmul.f32 %v1979, %v1995
        %v2008 = vmul.f32 %v1981, %v1995
        %v2009 = vmul.f32 %v1984, %v1995
        %v2010 = vmul.f32 %v1986, %v1995
        %v2011 = vmul.f32 %v1989, %v1995
        %v2012 = vmul.f32 %v1991, %v1995
        %v2013 = vld [vmem:[%s793] sm:$0x1]
        %v2015 = vperm.slane %v2013, 0
        %v2017 = vmul.f32 %v1920, %v2015
        %v2018 = vmul.f32 %v1921, %v2015
        %v2019 = vmul.f32 %v1922, %v2015
        %v2020 = vmul.f32 %v1923, %v2015
        %v2021 = vmul.f32 %v1924, %v2015
        %v2022 = vmul.f32 %v1925, %v2015
        %v2023 = vmul.f32 %v1926, %v2015
        %v2024 = vmul.f32 %v1927, %v2015
        %v2025 = vmul.f32 %v1928, %v2015
        %v2026 = vmul.f32 %v1929, %v2015
        %v2027 = vmul.f32 %v1930, %v2015
        %v2028 = vmul.f32 %v1931, %v2015
        %v2029 = vmul.f32 %v1932, %v2015
        %v2030 = vmul.f32 %v1933, %v2015
        %v2031 = vmul.f32 %v1934, %v2015
        %v2032 = vmul.f32 %v1935, %v2015
        %v2033 = vadd.f32 %v1997, %v2017
        %v2034 = vadd.f32 %v1998, %v2018
        %v2035 = vadd.f32 %v1999, %v2019
        %v2036 = vadd.f32 %v2000, %v2020
        %v2037 = vadd.f32 %v2001, %v2021
        %v2038 = vadd.f32 %v2002, %v2022
        %v2039 = vadd.f32 %v2003, %v2023
        %v2040 = vadd.f32 %v2004, %v2024
        %v2041 = vadd.f32 %v2005, %v2025
        %v2042 = vadd.f32 %v2006, %v2026
        %v2043 = vadd.f32 %v2007, %v2027
        %v2044 = vadd.f32 %v2008, %v2028
        %v2045 = vadd.f32 %v2009, %v2029
        %v2046 = vadd.f32 %v2010, %v2030
        %v2047 = vadd.f32 %v2011, %v2031
        %v2048 = vadd.f32 %v2012, %v2032
        %2049 = vadd.xlane.f32.xlu0 %v2033
        %v2050 = vpop.xlane.xlu0 %2049
        %2051 = vadd.xlane.f32.xlu0 %v2034
        %v2052 = vpop.xlane.xlu0 %2051
        %2053 = vadd.xlane.f32.xlu0 %v2035
        %v2054 = vpop.xlane.xlu0 %2053
        %2055 = vadd.xlane.f32.xlu0 %v2036
        %v2056 = vpop.xlane.xlu0 %2055
        %2057 = vadd.xlane.f32.xlu0 %v2037
        %v2058 = vpop.xlane.xlu0 %2057
        %2059 = vadd.xlane.f32.xlu0 %v2038
        %v2060 = vpop.xlane.xlu0 %2059
        %2061 = vadd.xlane.f32.xlu0 %v2039
        %v2062 = vpop.xlane.xlu0 %2061
        %2063 = vadd.xlane.f32.xlu0 %v2040
        %v2064 = vpop.xlane.xlu0 %2063
        %2065 = vadd.xlane.f32.xlu0 %v2041
        %v2066 = vpop.xlane.xlu0 %2065
        %2067 = vadd.xlane.f32.xlu0 %v2042
        %v2068 = vpop.xlane.xlu0 %2067
        %2069 = vadd.xlane.f32.xlu0 %v2043
        %v2070 = vpop.xlane.xlu0 %2069
        %2071 = vadd.xlane.f32.xlu0 %v2044
        %v2072 = vpop.xlane.xlu0 %2071
        %2073 = vadd.xlane.f32.xlu0 %v2045
        %v2074 = vpop.xlane.xlu0 %2073
        %2075 = vadd.xlane.f32.xlu0 %v2046
        %v2076 = vpop.xlane.xlu0 %2075
        %2077 = vadd.xlane.f32.xlu0 %v2047
        %v2078 = vpop.xlane.xlu0 %2077
        %2079 = vadd.xlane.f32.xlu0 %v2048
        %v2080 = vpop.xlane.xlu0 %2079
        %v2081 = vld [vmem:[%s796] sm:$0x1]
        %v2083 = vperm.slane %v2081, 0
        %v2085 = vadd.f32 %v2050, %v2083
        %v2086 = vadd.f32 %v2052, %v2083
        %v2087 = vadd.f32 %v2054, %v2083
        %v2088 = vadd.f32 %v2056, %v2083
        %v2089 = vadd.f32 %v2058, %v2083
        %v2090 = vadd.f32 %v2060, %v2083
        %v2091 = vadd.f32 %v2062, %v2083
        %v2092 = vadd.f32 %v2064, %v2083
        %v2093 = vadd.f32 %v2066, %v2083
        %v2094 = vadd.f32 %v2068, %v2083
        %v2095 = vadd.f32 %v2070, %v2083
        %v2096 = vadd.f32 %v2072, %v2083
        %v2097 = vadd.f32 %v2074, %v2083
        %v2098 = vadd.f32 %v2076, %v2083
        %v2099 = vadd.f32 %v2078, %v2083
        %v2100 = vadd.f32 %v2080, %v2083
        %v2101 = vlaneseq
        %v2102 = vshrl.u32 %v2101, 7
        %v2103 = vadd.s32 %v2102, 8
        %v2104 = vadd.s32 %v2102, 16
        %v2105 = vadd.s32 %v2102, 24
        %v2106 = vadd.s32 %v2102, 32
        %v2107 = vadd.s32 %v2102, 40
        %v2108 = vadd.s32 %v2102, 48
        %v2109 = vadd.s32 %v2102, 56
        %v2110 = vadd.s32 %v2102, 64
        %v2111 = vadd.s32 %v2102, 72
        %v2112 = vadd.s32 %v2102, 80
        %v2113 = vadd.s32 %v2102, 88
        %v2114 = vadd.s32 %v2102, 96
        %v2115 = vadd.s32 %v2102, 104
        %v2116 = vadd.s32 %v2102, 112
        %v2117 = vadd.s32 %v2102, 120
        %v2118 = vlaneseq
        %v2119 = vand.u32 %v2118, 127
        %2121 = vset.pattern.permute.xlu0 0
        %2122 = vperm.xlu0 %2121, %v2085
        %v2123 = vpop.permute.xlu0 %2122
        %2126 = vset.pattern.permute.xlu0 0
        %2127 = vperm.xlu0 %2126, %v2086
        %v2128 = vpop.permute.xlu0 %2127
        %2131 = vset.pattern.permute.xlu0 0
        %2132 = vperm.xlu0 %2131, %v2087
        %v2133 = vpop.permute.xlu0 %2132
        %2136 = vset.pattern.permute.xlu0 0
        %2137 = vperm.xlu0 %2136, %v2088
        %v2138 = vpop.permute.xlu0 %2137
        %2141 = vset.pattern.permute.xlu0 0
        %2142 = vperm.xlu0 %2141, %v2089
        %v2143 = vpop.permute.xlu0 %2142
        %2146 = vset.pattern.permute.xlu0 0
        %2147 = vperm.xlu0 %2146, %v2090
        %v2148 = vpop.permute.xlu0 %2147
        %2151 = vset.pattern.permute.xlu0 0
        %2152 = vperm.xlu0 %2151, %v2091
        %v2153 = vpop.permute.xlu0 %2152
        %2156 = vset.pattern.permute.xlu0 0
        %2157 = vperm.xlu0 %2156, %v2092
        %v2158 = vpop.permute.xlu0 %2157
        %2161 = vset.pattern.permute.xlu0 0
        %2162 = vperm.xlu0 %2161, %v2093
        %v2163 = vpop.permute.xlu0 %2162
        %2166 = vset.pattern.permute.xlu0 0
        %2167 = vperm.xlu0 %2166, %v2094
        %v2168 = vpop.permute.xlu0 %2167
        %2171 = vset.pattern.permute.xlu0 0
        %2172 = vperm.xlu0 %2171, %v2095
        %v2173 = vpop.permute.xlu0 %2172
        %2176 = vset.pattern.permute.xlu0 0
        %2177 = vperm.xlu0 %2176, %v2096
        %v2178 = vpop.permute.xlu0 %2177
        %2181 = vset.pattern.permute.xlu0 0
        %2182 = vperm.xlu0 %2181, %v2097
        %v2183 = vpop.permute.xlu0 %2182
        %2186 = vset.pattern.permute.xlu0 0
        %2187 = vperm.xlu0 %2186, %v2098
        %v2188 = vpop.permute.xlu0 %2187
        %2191 = vset.pattern.permute.xlu0 0
        %2192 = vperm.xlu0 %2191, %v2099
        %v2193 = vpop.permute.xlu0 %2192
        %2196 = vset.pattern.permute.xlu0 0
        %2197 = vperm.xlu0 %2196, %v2100
        %v2198 = vpop.permute.xlu0 %2197
        %2200 = vxpose.xlu0.b32.start [1/16] %v2123, 128
        %2201 = vxpose.xlu0.b32.cont [2/16] %v2128, 128
        %2202 = vxpose.xlu0.b32.cont [3/16] %v2133, 128
        %2203 = vxpose.xlu0.b32.cont [4/16] %v2138, 128
        %2204 = vxpose.xlu0.b32.cont [5/16] %v2143, 128
        %2205 = vxpose.xlu0.b32.cont [6/16] %v2148, 128
        %2206 = vxpose.xlu0.b32.cont [7/16] %v2153, 128
        %2207 = vxpose.xlu0.b32.cont [8/16] %v2158, 128
        %2208 = vxpose.xlu0.b32.cont [9/16] %v2163, 128
        %2209 = vxpose.xlu0.b32.cont [10/16] %v2168, 128
        %2210 = vxpose.xlu0.b32.cont [11/16] %v2173, 128
        %2211 = vxpose.xlu0.b32.cont [12/16] %v2178, 128
        %2212 = vxpose.xlu0.b32.cont [13/16] %v2183, 128
        %2213 = vxpose.xlu0.b32.cont [14/16] %v2188, 128
        %2214 = vxpose.xlu0.b32.cont [15/16] %v2193, 128
        %2215 = vxpose.xlu0.b32.end [16/16] %v2198, 128
        %v2216 = vpop.trf.xlu0
        %v2217 = vpop.trf.xlu0
        %v2218 = vpop.trf.xlu0
        %v2219 = vpop.trf.xlu0
        %v2220 = vpop.trf.xlu0
        %v2221 = vpop.trf.xlu0
        %v2222 = vpop.trf.xlu0
        %v2223 = vpop.trf.xlu0
        %v2224 = vpop.trf.xlu0
        %v2225 = vpop.trf.xlu0
        %v2226 = vpop.trf.xlu0
        %v2227 = vpop.trf.xlu0
        %v2228 = vpop.trf.xlu0
        %v2229 = vpop.trf.xlu0
        %v2230 = vpop.trf.xlu0
        %v2231 = vpop.trf.xlu0
        %v2232 = vperm.slane %v2216, 0
        %vm2233 = vcmp.gt.f32.partialorder %v2232, %v2123
        %vm2234 = vcmp.gt.f32.partialorder %v2232, %v2128
        %vm2235 = vcmp.gt.f32.partialorder %v2232, %v2133
        %vm2236 = vcmp.gt.f32.partialorder %v2232, %v2138
        %vm2237 = vcmp.gt.f32.partialorder %v2232, %v2143
        %vm2238 = vcmp.gt.f32.partialorder %v2232, %v2148
        %vm2239 = vcmp.gt.f32.partialorder %v2232, %v2153
        %vm2240 = vcmp.gt.f32.partialorder %v2232, %v2158
        %vm2241 = vcmp.gt.f32.partialorder %v2232, %v2163
        %vm2242 = vcmp.gt.f32.partialorder %v2232, %v2168
        %vm2243 = vcmp.gt.f32.partialorder %v2232, %v2173
        %vm2244 = vcmp.gt.f32.partialorder %v2232, %v2178
        %vm2245 = vcmp.gt.f32.partialorder %v2232, %v2183
        %vm2246 = vcmp.gt.f32.partialorder %v2232, %v2188
        %vm2247 = vcmp.gt.f32.partialorder %v2232, %v2193
        %vm2248 = vcmp.gt.f32.partialorder %v2232, %v2198
        %vm2249 = vcmp.eq.f32.partialorder %v2232, %v2123
        %vm2250 = vcmp.eq.f32.partialorder %v2232, %v2128
        %vm2251 = vcmp.eq.f32.partialorder %v2232, %v2133
        %vm2252 = vcmp.eq.f32.partialorder %v2232, %v2138
        %vm2253 = vcmp.eq.f32.partialorder %v2232, %v2143
        %vm2254 = vcmp.eq.f32.partialorder %v2232, %v2148
        %vm2255 = vcmp.eq.f32.partialorder %v2232, %v2153
        %vm2256 = vcmp.eq.f32.partialorder %v2232, %v2158
        %vm2257 = vcmp.eq.f32.partialorder %v2232, %v2163
        %vm2258 = vcmp.eq.f32.partialorder %v2232, %v2168
        %vm2259 = vcmp.eq.f32.partialorder %v2232, %v2173
        %vm2260 = vcmp.eq.f32.partialorder %v2232, %v2178
        %vm2261 = vcmp.eq.f32.partialorder %v2232, %v2183
        %vm2262 = vcmp.eq.f32.partialorder %v2232, %v2188
        %vm2263 = vcmp.eq.f32.partialorder %v2232, %v2193
        %vm2264 = vcmp.eq.f32.partialorder %v2232, %v2198
        %vm2265 = vcmp.lt.s32.totalorder %v2119, %v2102
        %vm2266 = vcmp.lt.s32.totalorder %v2119, %v2103
        %vm2267 = vcmp.lt.s32.totalorder %v2119, %v2104
        %vm2268 = vcmp.lt.s32.totalorder %v2119, %v2105
        %vm2269 = vcmp.lt.s32.totalorder %v2119, %v2106
        %vm2270 = vcmp.lt.s32.totalorder %v2119, %v2107
        %vm2271 = vcmp.lt.s32.totalorder %v2119, %v2108
        %vm2272 = vcmp.lt.s32.totalorder %v2119, %v2109
        %vm2273 = vcmp.lt.s32.totalorder %v2119, %v2110
        %vm2274 = vcmp.lt.s32.totalorder %v2119, %v2111
        %vm2275 = vcmp.lt.s32.totalorder %v2119, %v2112
        %vm2276 = vcmp.lt.s32.totalorder %v2119, %v2113
        %vm2277 = vcmp.lt.s32.totalorder %v2119, %v2114
        %vm2278 = vcmp.lt.s32.totalorder %v2119, %v2115
        %vm2279 = vcmp.lt.s32.totalorder %v2119, %v2116
        %vm2280 = vcmp.lt.s32.totalorder %v2119, %v2117
        %vm2281 = vmand %vm2249, %vm2265
        %vm2282 = vmand %vm2250, %vm2266
        %vm2283 = vmand %vm2251, %vm2267
        %vm2284 = vmand %vm2252, %vm2268
        %vm2285 = vmand %vm2253, %vm2269
        %vm2286 = vmand %vm2254, %vm2270
        %vm2287 = vmand %vm2255, %vm2271
        %vm2288 = vmand %vm2256, %vm2272
        %vm2289 = vmand %vm2257, %vm2273
        %vm2290 = vmand %vm2258, %vm2274
        %vm2291 = vmand %vm2259, %vm2275
        %vm2292 = vmand %vm2260, %vm2276
        %vm2293 = vmand %vm2261, %vm2277
        %vm2294 = vmand %vm2262, %vm2278
        %vm2295 = vmand %vm2263, %vm2279
        %vm2296 = vmand %vm2264, %vm2280
        %vm2297 = vmor %vm2233, %vm2281
        %vm2298 = vmor %vm2234, %vm2282
        %vm2299 = vmor %vm2235, %vm2283
        %vm2300 = vmor %vm2236, %vm2284
        %vm2301 = vmor %vm2237, %vm2285
        %vm2302 = vmor %vm2238, %vm2286
        %vm2303 = vmor %vm2239, %vm2287
        %vm2304 = vmor %vm2240, %vm2288
        %vm2305 = vmor %vm2241, %vm2289
        %vm2306 = vmor %vm2242, %vm2290
        %vm2307 = vmor %vm2243, %vm2291
        %vm2308 = vmor %vm2244, %vm2292
        %vm2309 = vmor %vm2245, %vm2293
        %vm2310 = vmor %vm2246, %vm2294
        %vm2311 = vmor %vm2247, %vm2295
        %vm2312 = vmor %vm2248, %vm2296
        %v2313 = vsel %vm2297, 1, 0
        %v2314 = vsel %vm2298, 1, 0
        %v2315 = vsel %vm2299, 1, 0
        %v2316 = vsel %vm2300, 1, 0
        %v2317 = vsel %vm2301, 1, 0
        %v2318 = vsel %vm2302, 1, 0
        %v2319 = vsel %vm2303, 1, 0
        %v2320 = vsel %vm2304, 1, 0
        %v2321 = vsel %vm2305, 1, 0
        %v2322 = vsel %vm2306, 1, 0
        %v2323 = vsel %vm2307, 1, 0
        %v2324 = vsel %vm2308, 1, 0
        %v2325 = vsel %vm2309, 1, 0
        %v2326 = vsel %vm2310, 1, 0
        %v2327 = vsel %vm2311, 1, 0
        %v2328 = vsel %vm2312, 1, 0
        %v2329 = vcvt.s32.f32 %v2313
        %v2330 = vcvt.s32.f32 %v2314
        %v2331 = vcvt.s32.f32 %v2315
        %v2332 = vcvt.s32.f32 %v2316
        %v2333 = vcvt.s32.f32 %v2317
        %v2334 = vcvt.s32.f32 %v2318
        %v2335 = vcvt.s32.f32 %v2319
        %v2336 = vcvt.s32.f32 %v2320
        %v2337 = vcvt.s32.f32 %v2321
        %v2338 = vcvt.s32.f32 %v2322
        %v2339 = vcvt.s32.f32 %v2323
        %v2340 = vcvt.s32.f32 %v2324
        %v2341 = vcvt.s32.f32 %v2325
        %v2342 = vcvt.s32.f32 %v2326
        %v2343 = vcvt.s32.f32 %v2327
        %v2344 = vcvt.s32.f32 %v2328
        %v2345 = vpack.c.bf16 %v2330, %v2329
        %v2346 = vpack.c.bf16 %v2332, %v2331
        %v2347 = vpack.c.bf16 %v2334, %v2333
        %v2348 = vpack.c.bf16 %v2336, %v2335
        %v2349 = vpack.c.bf16 %v2338, %v2337
        %v2350 = vpack.c.bf16 %v2340, %v2339
        %v2351 = vpack.c.bf16 %v2342, %v2341
        %v2352 = vpack.c.bf16 %v2344, %v2343
        %v2353 = vld [vmem:[%s3] sm:$0xff]
        %v2354 = vld [vmem:[%s3 + $0x8] sm:$0xff]
        %v2355 = vld [vmem:[%s3 + $0x10] sm:$0xff]
        %v2356 = vld [vmem:[%s3 + $0x18] sm:$0xff]
        %v2357 = vld [vmem:[%s3 + $0x20] sm:$0xff]
        %v2358 = vld [vmem:[%s3 + $0x28] sm:$0xff]
        %v2359 = vld [vmem:[%s3 + $0x30] sm:$0xff]
        %v2360 = vld [vmem:[%s3 + $0x38] sm:$0xff]
        %v2361 = vld [vmem:[%s3 + $0x40] sm:$0xff]
        %v2362 = vld [vmem:[%s3 + $0x48] sm:$0xff]
        %v2363 = vld [vmem:[%s3 + $0x50] sm:$0xff]
        %v2364 = vld [vmem:[%s3 + $0x58] sm:$0xff]
        %v2365 = vld [vmem:[%s3 + $0x60] sm:$0xff]
        %v2366 = vld [vmem:[%s3 + $0x68] sm:$0xff]
        %v2367 = vld [vmem:[%s3 + $0x70] sm:$0xff]
        %v2368 = vld [vmem:[%s3 + $0x78] sm:$0xff]
        %v2369 = vmul.f32 %v2353, %v1843
        %v2370 = vmul.f32 %v2354, %v1848
        %v2371 = vmul.f32 %v2355, %v1853
        %v2372 = vmul.f32 %v2356, %v1858
        %v2373 = vmul.f32 %v2357, %v1863
        %v2374 = vmul.f32 %v2358, %v1868
        %v2375 = vmul.f32 %v2359, %v1873
        %v2376 = vmul.f32 %v2360, %v1878
        %v2377 = vmul.f32 %v2361, %v1883
        %v2378 = vmul.f32 %v2362, %v1888
        %v2379 = vmul.f32 %v2363, %v1893
        %v2380 = vmul.f32 %v2364, %v1898
        %v2381 = vmul.f32 %v2365, %v1903
        %v2382 = vmul.f32 %v2366, %v1908
        %v2383 = vmul.f32 %v2367, %v1913
        %v2384 = vmul.f32 %v2368, %v1918
        %v2385 = vpack.c.bf16 %v2370, %v2369
        %v2386 = vpack.c.bf16 %v2372, %v2371
        %v2387 = vpack.c.bf16 %v2374, %v2373
        %v2388 = vpack.c.bf16 %v2376, %v2375
        %v2389 = vpack.c.bf16 %v2378, %v2377
        %v2390 = vpack.c.bf16 %v2380, %v2379
        %v2391 = vpack.c.bf16 %v2382, %v2381
        %v2392 = vpack.c.bf16 %v2384, %v2383
        %2393 = vmatpush.bf16.msra.mxu0 %v2392
        %2394 = vmatpush.bf16.msra.mxu0 %v2391
        %2395 = vmatpush.bf16.msra.mxu0 %v2390
        %2396 = vmatpush.bf16.msra.mxu0 %v2389
        %2397 = vmatpush.bf16.msra.mxu0 %v2388
        %2398 = vmatpush.bf16.msra.mxu0 %v2387
        %2399 = vmatpush.bf16.msra.mxu0 %v2386
        %2400 = vmatpush.bf16.msra.mxu0 %v2385
        %2401 = vmatmul.bf16.gmra.mxu0 %v2345
        %v2402 = vpop.f32.mrf.mxu0
        %v2403 = vadd.f32 0.0, %v2402
        %v2404 = vpop.f32.mrf.mxu0
        %v2405 = vadd.f32 0.0, %v2404
        %2406 = vmatmul.bf16.gmra.mxu0 %v2346
        %v2407 = vpop.f32.mrf.mxu0
        %v2408 = vadd.f32 0.0, %v2407
        %v2409 = vpop.f32.mrf.mxu0
        %v2410 = vadd.f32 0.0, %v2409
        %2411 = vmatmul.bf16.gmra.mxu0 %v2347
        %v2412 = vpop.f32.mrf.mxu0
        %v2413 = vadd.f32 0.0, %v2412
        %v2414 = vpop.f32.mrf.mxu0
        %v2415 = vadd.f32 0.0, %v2414
        %2416 = vmatmul.bf16.gmra.mxu0 %v2348
        %v2417 = vpop.f32.mrf.mxu0
        %v2418 = vadd.f32 0.0, %v2417
        %v2419 = vpop.f32.mrf.mxu0
        %v2420 = vadd.f32 0.0, %v2419
        %2421 = vmatmul.bf16.gmra.mxu0 %v2349
        %v2422 = vpop.f32.mrf.mxu0
        %v2423 = vadd.f32 0.0, %v2422
        %v2424 = vpop.f32.mrf.mxu0
        %v2425 = vadd.f32 0.0, %v2424
        %2426 = vmatmul.bf16.gmra.mxu0 %v2350
        %v2427 = vpop.f32.mrf.mxu0
        %v2428 = vadd.f32 0.0, %v2427
        %v2429 = vpop.f32.mrf.mxu0
        %v2430 = vadd.f32 0.0, %v2429
        %2431 = vmatmul.bf16.gmra.mxu0 %v2351
        %v2432 = vpop.f32.mrf.mxu0
        %v2433 = vadd.f32 0.0, %v2432
        %v2434 = vpop.f32.mrf.mxu0
        %v2435 = vadd.f32 0.0, %v2434
        %2436 = vmatmul.bf16.gmra.mxu0 %v2352
        %v2437 = vpop.f32.mrf.mxu0
        %v2438 = vadd.f32 0.0, %v2437
        %v2439 = vpop.f32.mrf.mxu0
        %v2440 = vadd.f32 0.0, %v2439
        %2441 = vdwg.mxu0
        %v2442 = vmul.f32 %v2353, %v2403
        %v2443 = vmul.f32 %v2354, %v2405
        %v2444 = vmul.f32 %v2355, %v2408
        %v2445 = vmul.f32 %v2356, %v2410
        %v2446 = vmul.f32 %v2357, %v2413
        %v2447 = vmul.f32 %v2358, %v2415
        %v2448 = vmul.f32 %v2359, %v2418
        %v2449 = vmul.f32 %v2360, %v2420
        %v2450 = vmul.f32 %v2361, %v2423
        %v2451 = vmul.f32 %v2362, %v2425
        %v2452 = vmul.f32 %v2363, %v2428
        %v2453 = vmul.f32 %v2364, %v2430
        %v2454 = vmul.f32 %v2365, %v2433
        %v2455 = vmul.f32 %v2366, %v2435
        %v2456 = vmul.f32 %v2367, %v2438
        %v2457 = vmul.f32 %v2368, %v2440
        %vm2458 = vcmask 15360
        %v2459 = vsel %vm2458, %v2442, 0.0
        %2460 = vadd.xlane.f32.xlu0 %v2459
        %v2461 = vpop.xlane.xlu0 %2460
        %v2462 = vsel %vm2458, %v2443, 0.0
        %2463 = vadd.xlane.f32.xlu0 %v2462
        %v2464 = vpop.xlane.xlu0 %2463
        %v2465 = vsel %vm2458, %v2444, 0.0
        %2466 = vadd.xlane.f32.xlu0 %v2465
        %v2467 = vpop.xlane.xlu0 %2466
        %v2468 = vsel %vm2458, %v2445, 0.0
        %2469 = vadd.xlane.f32.xlu0 %v2468
        %v2470 = vpop.xlane.xlu0 %2469
        %v2471 = vsel %vm2458, %v2446, 0.0
        %2472 = vadd.xlane.f32.xlu0 %v2471
        %v2473 = vpop.xlane.xlu0 %2472
        %v2474 = vsel %vm2458, %v2447, 0.0
        %2475 = vadd.xlane.f32.xlu0 %v2474
        %v2476 = vpop.xlane.xlu0 %2475
        %v2477 = vsel %vm2458, %v2448, 0.0
        %2478 = vadd.xlane.f32.xlu0 %v2477
        %v2479 = vpop.xlane.xlu0 %2478
        %v2480 = vsel %vm2458, %v2449, 0.0
        %2481 = vadd.xlane.f32.xlu0 %v2480
        %v2482 = vpop.xlane.xlu0 %2481
        %v2483 = vsel %vm2458, %v2450, 0.0
        %2484 = vadd.xlane.f32.xlu0 %v2483
        %v2485 = vpop.xlane.xlu0 %2484
        %v2486 = vsel %vm2458, %v2451, 0.0
        %2487 = vadd.xlane.f32.xlu0 %v2486
        %v2488 = vpop.xlane.xlu0 %2487
        %v2489 = vsel %vm2458, %v2452, 0.0
        %2490 = vadd.xlane.f32.xlu0 %v2489
        %v2491 = vpop.xlane.xlu0 %2490
        %v2492 = vsel %vm2458, %v2453, 0.0
        %2493 = vadd.xlane.f32.xlu0 %v2492
        %v2494 = vpop.xlane.xlu0 %2493
        %v2495 = vsel %vm2458, %v2454, 0.0
        %2496 = vadd.xlane.f32.xlu0 %v2495
        %v2497 = vpop.xlane.xlu0 %2496
        %v2498 = vsel %vm2458, %v2455, 0.0
        %2499 = vadd.xlane.f32.xlu0 %v2498
        %v2500 = vpop.xlane.xlu0 %2499
        %v2501 = vsel %vm2458, %v2456, 0.0
        %2502 = vadd.xlane.f32.xlu0 %v2501
        %v2503 = vpop.xlane.xlu0 %2502
        %v2504 = vsel %vm2458, %v2457, 0.0
        %2505 = vadd.xlane.f32.xlu0 %v2504
        %v2506 = vpop.xlane.xlu0 %2505
        %v2507 = vsel %vm2458, %v2369, 0.0
        %v2508 = vsel %vm2458, %v2370, 0.0
        %v2509 = vadd.f32 %v2507, %v2508
        %v2510 = vsel %vm2458, %v2371, 0.0
        %v2511 = vadd.f32 %v2509, %v2510
        %v2512 = vsel %vm2458, %v2372, 0.0
        %v2513 = vadd.f32 %v2511, %v2512
        %v2514 = vsel %vm2458, %v2373, 0.0
        %v2515 = vadd.f32 %v2513, %v2514
        %v2516 = vsel %vm2458, %v2374, 0.0
        %v2517 = vadd.f32 %v2515, %v2516
        %v2518 = vsel %vm2458, %v2375, 0.0
        %v2519 = vadd.f32 %v2517, %v2518
        %v2520 = vsel %vm2458, %v2376, 0.0
        %v2521 = vadd.f32 %v2519, %v2520
        %v2522 = vsel %vm2458, %v2377, 0.0
        %v2523 = vadd.f32 %v2521, %v2522
        %v2524 = vsel %vm2458, %v2378, 0.0
        %v2525 = vadd.f32 %v2523, %v2524
        %v2526 = vsel %vm2458, %v2379, 0.0
        %v2527 = vadd.f32 %v2525, %v2526
        %v2528 = vsel %vm2458, %v2380, 0.0
        %v2529 = vadd.f32 %v2527, %v2528
        %v2530 = vsel %vm2458, %v2381, 0.0
        %v2531 = vadd.f32 %v2529, %v2530
        %v2532 = vsel %vm2458, %v2382, 0.0
        %v2533 = vadd.f32 %v2531, %v2532
        %v2534 = vsel %vm2458, %v2383, 0.0
        %v2535 = vadd.f32 %v2533, %v2534
        %v2536 = vsel %vm2458, %v2384, 0.0
        %v2537 = vadd.f32 %v2535, %v2536
        %v2538 = vrot.slane %v2537, 4
        %v2539 = vadd.f32 %v2537, %v2538
        %v2540 = vrot.slane %v2539, 2
        %v2541 = vadd.f32 %v2539, %v2540
        %v2542 = vrot.slane %v2541, 1
        %v2543 = vadd.f32 %v2541, %v2542
        %v2544 = vmul.f32 %v2353, %v2543
        %v2545 = vmul.f32 %v2354, %v2543
        %v2546 = vmul.f32 %v2355, %v2543
        %v2547 = vmul.f32 %v2356, %v2543
        %v2548 = vmul.f32 %v2357, %v2543
        %v2549 = vmul.f32 %v2358, %v2543
        %v2550 = vmul.f32 %v2359, %v2543
        %v2551 = vmul.f32 %v2360, %v2543
        %v2552 = vmul.f32 %v2361, %v2543
        %v2553 = vmul.f32 %v2362, %v2543
        %v2554 = vmul.f32 %v2363, %v2543
        %v2555 = vmul.f32 %v2364, %v2543
        %v2556 = vmul.f32 %v2365, %v2543
        %v2557 = vmul.f32 %v2366, %v2543
        %v2558 = vmul.f32 %v2367, %v2543
        %v2559 = vmul.f32 %v2368, %v2543
        %v2560 = vsel %vm2458, %v2544, 0.0
        %2561 = vadd.xlane.f32.xlu0 %v2560
        %v2562 = vpop.xlane.xlu0 %2561
        %v2563 = vsel %vm2458, %v2545, 0.0
        %2564 = vadd.xlane.f32.xlu0 %v2563
        %v2565 = vpop.xlane.xlu0 %2564
        %v2566 = vsel %vm2458, %v2546, 0.0
        %2567 = vadd.xlane.f32.xlu0 %v2566
        %v2568 = vpop.xlane.xlu0 %2567
        %v2569 = vsel %vm2458, %v2547, 0.0
        %2570 = vadd.xlane.f32.xlu0 %v2569
        %v2571 = vpop.xlane.xlu0 %2570
        %v2572 = vsel %vm2458, %v2548, 0.0
        %2573 = vadd.xlane.f32.xlu0 %v2572
        %v2574 = vpop.xlane.xlu0 %2573
        %v2575 = vsel %vm2458, %v2549, 0.0
        %2576 = vadd.xlane.f32.xlu0 %v2575
        %v2577 = vpop.xlane.xlu0 %2576
        %v2578 = vsel %vm2458, %v2550, 0.0
        %2579 = vadd.xlane.f32.xlu0 %v2578
        %v2580 = vpop.xlane.xlu0 %2579
        %v2581 = vsel %vm2458, %v2551, 0.0
        %2582 = vadd.xlane.f32.xlu0 %v2581
        %v2583 = vpop.xlane.xlu0 %2582
        %v2584 = vsel %vm2458, %v2552, 0.0
        %2585 = vadd.xlane.f32.xlu0 %v2584
        %v2586 = vpop.xlane.xlu0 %2585
        %v2587 = vsel %vm2458, %v2553, 0.0
        %2588 = vadd.xlane.f32.xlu0 %v2587
        %v2589 = vpop.xlane.xlu0 %2588
        %v2590 = vsel %vm2458, %v2554, 0.0
        %2591 = vadd.xlane.f32.xlu0 %v2590
        %v2592 = vpop.xlane.xlu0 %2591
        %v2593 = vsel %vm2458, %v2555, 0.0
        %2594 = vadd.xlane.f32.xlu0 %v2593
        %v2595 = vpop.xlane.xlu0 %2594
        %v2596 = vsel %vm2458, %v2556, 0.0
        %2597 = vadd.xlane.f32.xlu0 %v2596
        %v2598 = vpop.xlane.xlu0 %2597
        %v2599 = vsel %vm2458, %v2557, 0.0
        %2600 = vadd.xlane.f32.xlu0 %v2599
        %v2601 = vpop.xlane.xlu0 %2600
        %v2602 = vsel %vm2458, %v2558, 0.0
        %2603 = vadd.xlane.f32.xlu0 %v2602
        %v2604 = vpop.xlane.xlu0 %2603
        %v2605 = vsel %vm2458, %v2559, 0.0
        %2606 = vadd.xlane.f32.xlu0 %v2605
        %v2607 = vpop.xlane.xlu0 %2606
        %v2608 = vmul.f32 %v2562, 0.5
        %v2609 = vmul.f32 %v2565, 0.5
        %v2610 = vmul.f32 %v2568, 0.5
        %v2611 = vmul.f32 %v2571, 0.5
        %v2612 = vmul.f32 %v2574, 0.5
        %v2613 = vmul.f32 %v2577, 0.5
        %v2614 = vmul.f32 %v2580, 0.5
        %v2615 = vmul.f32 %v2583, 0.5
        %v2616 = vmul.f32 %v2586, 0.5
        %v2617 = vmul.f32 %v2589, 0.5
        %v2618 = vmul.f32 %v2592, 0.5
        %v2619 = vmul.f32 %v2595, 0.5
        %v2620 = vmul.f32 %v2598, 0.5
        %v2621 = vmul.f32 %v2601, 0.5
        %v2622 = vmul.f32 %v2604, 0.5
        %v2623 = vmul.f32 %v2607, 0.5
        %v2624 = vceil.f32 %v2608
        %v2625 = vceil.f32 %v2609
        %v2626 = vceil.f32 %v2610
        %v2627 = vceil.f32 %v2611
        %v2628 = vceil.f32 %v2612
        %v2629 = vceil.f32 %v2613
        %v2630 = vceil.f32 %v2614
        %v2631 = vceil.f32 %v2615
        %v2632 = vceil.f32 %v2616
        %v2633 = vceil.f32 %v2617
        %v2634 = vceil.f32 %v2618
        %v2635 = vceil.f32 %v2619
        %v2636 = vceil.f32 %v2620
        %v2637 = vceil.f32 %v2621
        %v2638 = vceil.f32 %v2622
        %v2639 = vceil.f32 %v2623
        %vm2640 = vcmp.lt.f32.partialorder %v2461, %v2624
        %vm2641 = vcmp.lt.f32.partialorder %v2464, %v2625
        %vm2642 = vcmp.lt.f32.partialorder %v2467, %v2626
        %vm2643 = vcmp.lt.f32.partialorder %v2470, %v2627
        %vm2644 = vcmp.lt.f32.partialorder %v2473, %v2628
        %vm2645 = vcmp.lt.f32.partialorder %v2476, %v2629
        %vm2646 = vcmp.lt.f32.partialorder %v2479, %v2630
        %vm2647 = vcmp.lt.f32.partialorder %v2482, %v2631
        %vm2648 = vcmp.lt.f32.partialorder %v2485, %v2632
        %vm2649 = vcmp.lt.f32.partialorder %v2488, %v2633
        %vm2650 = vcmp.lt.f32.partialorder %v2491, %v2634
        %vm2651 = vcmp.lt.f32.partialorder %v2494, %v2635
        %vm2652 = vcmp.lt.f32.partialorder %v2497, %v2636
        %vm2653 = vcmp.lt.f32.partialorder %v2500, %v2637
        %vm2654 = vcmp.lt.f32.partialorder %v2503, %v2638
        %vm2655 = vcmp.lt.f32.partialorder %v2506, %v2639
        %vm2656 = vcmp.gt.f32.partialorder %v1130, 0.0
        %vm2657 = vcmp.gt.f32.partialorder %v1131, 0.0
        %vm2658 = vcmp.gt.f32.partialorder %v1132, 0.0
        %vm2659 = vcmp.gt.f32.partialorder %v1133, 0.0
        %vm2660 = vcmp.gt.f32.partialorder %v1134, 0.0
        %vm2661 = vcmp.gt.f32.partialorder %v1135, 0.0
        %vm2662 = vcmp.gt.f32.partialorder %v1136, 0.0
        %vm2663 = vcmp.gt.f32.partialorder %v1137, 0.0
        %vm2664 = vcmp.gt.f32.partialorder %v1138, 0.0
        %vm2665 = vcmp.gt.f32.partialorder %v1139, 0.0
        %vm2666 = vcmp.gt.f32.partialorder %v1140, 0.0
        %vm2667 = vcmp.gt.f32.partialorder %v1141, 0.0
        %vm2668 = vcmp.gt.f32.partialorder %v1142, 0.0
        %vm2669 = vcmp.gt.f32.partialorder %v1143, 0.0
        %vm2670 = vcmp.gt.f32.partialorder %v1144, 0.0
        %vm2671 = vcmp.gt.f32.partialorder %v1145, 0.0
        %vm2672 = vmand %vm2640, %vm2656
        %vm2673 = vmand %vm2641, %vm2657
        %vm2674 = vmand %vm2642, %vm2658
        %vm2675 = vmand %vm2643, %vm2659
        %vm2676 = vmand %vm2644, %vm2660
        %vm2677 = vmand %vm2645, %vm2661
        %vm2678 = vmand %vm2646, %vm2662
        %vm2679 = vmand %vm2647, %vm2663
        %vm2680 = vmand %vm2648, %vm2664
        %vm2681 = vmand %vm2649, %vm2665
        %vm2682 = vmand %vm2650, %vm2666
        %vm2683 = vmand %vm2651, %vm2667
        %vm2684 = vmand %vm2652, %vm2668
        %vm2685 = vmand %vm2653, %vm2669
        %vm2686 = vmand %vm2654, %vm2670
        %vm2687 = vmand %vm2655, %vm2671
        %v2688 = vsel %vm2672, 1.0, 0.0
        %v2689 = vsel %vm2673, 1.0, 0.0
        %v2690 = vsel %vm2674, 1.0, 0.0
        %v2691 = vsel %vm2675, 1.0, 0.0
        %v2692 = vsel %vm2676, 1.0, 0.0
        %v2693 = vsel %vm2677, 1.0, 0.0
        %v2694 = vsel %vm2678, 1.0, 0.0
        %v2695 = vsel %vm2679, 1.0, 0.0
        %v2696 = vsel %vm2680, 1.0, 0.0
        %v2697 = vsel %vm2681, 1.0, 0.0
        %v2698 = vsel %vm2682, 1.0, 0.0
        %v2699 = vsel %vm2683, 1.0, 0.0
        %v2700 = vsel %vm2684, 1.0, 0.0
        %v2701 = vsel %vm2685, 1.0, 0.0
        %v2702 = vsel %vm2686, 1.0, 0.0
        %v2703 = vsel %vm2687, 1.0, 0.0
        %v2704 = vtanh.pop %v2085
        %v2705 = vtanh.pop %v2086
        %v2706 = vtanh.pop %v2087
        %v2707 = vtanh.pop %v2088
        %v2708 = vtanh.pop %v2089
        %v2709 = vtanh.pop %v2090
        %v2710 = vtanh.pop %v2091
        %v2711 = vtanh.pop %v2092
        %v2712 = vtanh.pop %v2093
        %v2713 = vtanh.pop %v2094
        %v2714 = vtanh.pop %v2095
        %v2715 = vtanh.pop %v2096
        %v2716 = vtanh.pop %v2097
        %v2717 = vtanh.pop %v2098
        %v2718 = vtanh.pop %v2099
        %v2719 = vtanh.pop %v2100
        %2721 = vset.pattern.permute.xlu0 0
        %2722 = vperm.xlu0 %2721, %v2704
        %v2723 = vpop.permute.xlu0 %2722
        %2726 = vset.pattern.permute.xlu0 0
        %2727 = vperm.xlu0 %2726, %v2705
        %v2728 = vpop.permute.xlu0 %2727
        %2731 = vset.pattern.permute.xlu0 0
        %2732 = vperm.xlu0 %2731, %v2706
        %v2733 = vpop.permute.xlu0 %2732
        %2736 = vset.pattern.permute.xlu0 0
        %2737 = vperm.xlu0 %2736, %v2707
        %v2738 = vpop.permute.xlu0 %2737
        %2741 = vset.pattern.permute.xlu0 0
        %2742 = vperm.xlu0 %2741, %v2708
        %v2743 = vpop.permute.xlu0 %2742
        %2746 = vset.pattern.permute.xlu0 0
        %2747 = vperm.xlu0 %2746, %v2709
        %v2748 = vpop.permute.xlu0 %2747
        %2751 = vset.pattern.permute.xlu0 0
        %2752 = vperm.xlu0 %2751, %v2710
        %v2753 = vpop.permute.xlu0 %2752
        %2756 = vset.pattern.permute.xlu0 0
        %2757 = vperm.xlu0 %2756, %v2711
        %v2758 = vpop.permute.xlu0 %2757
        %2761 = vset.pattern.permute.xlu0 0
        %2762 = vperm.xlu0 %2761, %v2712
        %v2763 = vpop.permute.xlu0 %2762
        %2766 = vset.pattern.permute.xlu0 0
        %2767 = vperm.xlu0 %2766, %v2713
        %v2768 = vpop.permute.xlu0 %2767
        %2771 = vset.pattern.permute.xlu0 0
        %2772 = vperm.xlu0 %2771, %v2714
        %v2773 = vpop.permute.xlu0 %2772
        %2776 = vset.pattern.permute.xlu0 0
        %2777 = vperm.xlu0 %2776, %v2715
        %v2778 = vpop.permute.xlu0 %2777
        %2781 = vset.pattern.permute.xlu0 0
        %2782 = vperm.xlu0 %2781, %v2716
        %v2783 = vpop.permute.xlu0 %2782
        %2786 = vset.pattern.permute.xlu0 0
        %2787 = vperm.xlu0 %2786, %v2717
        %v2788 = vpop.permute.xlu0 %2787
        %2791 = vset.pattern.permute.xlu0 0
        %2792 = vperm.xlu0 %2791, %v2718
        %v2793 = vpop.permute.xlu0 %2792
        %2796 = vset.pattern.permute.xlu0 0
        %2797 = vperm.xlu0 %2796, %v2719
        %v2798 = vpop.permute.xlu0 %2797
        %v2800 = vmul.f32 %v1920, %v2723
        %v2801 = vmul.f32 %v1921, %v2728
        %v2802 = vmul.f32 %v1922, %v2733
        %v2803 = vmul.f32 %v1923, %v2738
        %v2804 = vmul.f32 %v1924, %v2743
        %v2805 = vmul.f32 %v1925, %v2748
        %v2806 = vmul.f32 %v1926, %v2753
        %v2807 = vmul.f32 %v1927, %v2758
        %v2808 = vmul.f32 %v1928, %v2763
        %v2809 = vmul.f32 %v1929, %v2768
        %v2810 = vmul.f32 %v1930, %v2773
        %v2811 = vmul.f32 %v1931, %v2778
        %v2812 = vmul.f32 %v1932, %v2783
        %v2813 = vmul.f32 %v1933, %v2788
        %v2814 = vmul.f32 %v1934, %v2793
        %v2815 = vmul.f32 %v1935, %v2798
        %2817 = vset.pattern.permute.xlu0 0
        %2818 = vperm.xlu0 %2817, %v2688
        %v2819 = vpop.permute.xlu0 %2818
        %2822 = vset.pattern.permute.xlu0 0
        %2823 = vperm.xlu0 %2822, %v2689
        %v2824 = vpop.permute.xlu0 %2823
        %2827 = vset.pattern.permute.xlu0 0
        %2828 = vperm.xlu0 %2827, %v2690
        %v2829 = vpop.permute.xlu0 %2828
        %2832 = vset.pattern.permute.xlu0 0
        %2833 = vperm.xlu0 %2832, %v2691
        %v2834 = vpop.permute.xlu0 %2833
        %2837 = vset.pattern.permute.xlu0 0
        %2838 = vperm.xlu0 %2837, %v2692
        %v2839 = vpop.permute.xlu0 %2838
        %2842 = vset.pattern.permute.xlu0 0
        %2843 = vperm.xlu0 %2842, %v2693
        %v2844 = vpop.permute.xlu0 %2843
        %2847 = vset.pattern.permute.xlu0 0
        %2848 = vperm.xlu0 %2847, %v2694
        %v2849 = vpop.permute.xlu0 %2848
        %2852 = vset.pattern.permute.xlu0 0
        %2853 = vperm.xlu0 %2852, %v2695
        %v2854 = vpop.permute.xlu0 %2853
        %2857 = vset.pattern.permute.xlu0 0
        %2858 = vperm.xlu0 %2857, %v2696
        %v2859 = vpop.permute.xlu0 %2858
        %2862 = vset.pattern.permute.xlu0 0
        %2863 = vperm.xlu0 %2862, %v2697
        %v2864 = vpop.permute.xlu0 %2863
        %2867 = vset.pattern.permute.xlu0 0
        %2868 = vperm.xlu0 %2867, %v2698
        %v2869 = vpop.permute.xlu0 %2868
        %2872 = vset.pattern.permute.xlu0 0
        %2873 = vperm.xlu0 %2872, %v2699
        %v2874 = vpop.permute.xlu0 %2873
        %2877 = vset.pattern.permute.xlu0 0
        %2878 = vperm.xlu0 %2877, %v2700
        %v2879 = vpop.permute.xlu0 %2878
        %2882 = vset.pattern.permute.xlu0 0
        %2883 = vperm.xlu0 %2882, %v2701
        %v2884 = vpop.permute.xlu0 %2883
        %2887 = vset.pattern.permute.xlu0 0
        %2888 = vperm.xlu0 %2887, %v2702
        %v2889 = vpop.permute.xlu0 %2888
        %2892 = vset.pattern.permute.xlu0 0
        %2893 = vperm.xlu0 %2892, %v2703
        %v2894 = vpop.permute.xlu0 %2893
        %v2896 = vmul.f32 %v2800, %v2819
        %v2897 = vmul.f32 %v2801, %v2824
        %v2898 = vmul.f32 %v2802, %v2829
        %v2899 = vmul.f32 %v2803, %v2834
        %v2900 = vmul.f32 %v2804, %v2839
        %v2901 = vmul.f32 %v2805, %v2844
        %v2902 = vmul.f32 %v2806, %v2849
        %v2903 = vmul.f32 %v2807, %v2854
        %v2904 = vmul.f32 %v2808, %v2859
        %v2905 = vmul.f32 %v2809, %v2864
        %v2906 = vmul.f32 %v2810, %v2869
        %v2907 = vmul.f32 %v2811, %v2874
        %v2908 = vmul.f32 %v2812, %v2879
        %v2909 = vmul.f32 %v2813, %v2884
        %v2910 = vmul.f32 %v2814, %v2889
        %v2911 = vmul.f32 %v2815, %v2894
        %vm2912 = vcmask 7168
        %2913 = vst.msk [vmem:[#allocation3] sm:$0xff] %vm2912, %v2688
        %2914 = vst.msk [vmem:[#allocation3 + $0x8] sm:$0xff] %vm2912, %v2689
        %2915 = vst.msk [vmem:[#allocation3 + $0x10] sm:$0xff] %vm2912, %v2690
        %2916 = vst.msk [vmem:[#allocation3 + $0x18] sm:$0xff] %vm2912, %v2691
        %2917 = vst.msk [vmem:[#allocation3 + $0x20] sm:$0xff] %vm2912, %v2692
        %2918 = vst.msk [vmem:[#allocation3 + $0x28] sm:$0xff] %vm2912, %v2693
        %2919 = vst.msk [vmem:[#allocation3 + $0x30] sm:$0xff] %vm2912, %v2694
        %2920 = vst.msk [vmem:[#allocation3 + $0x38] sm:$0xff] %vm2912, %v2695
        %2921 = vst.msk [vmem:[#allocation3 + $0x40] sm:$0xff] %vm2912, %v2696
        %2922 = vst.msk [vmem:[#allocation3 + $0x48] sm:$0xff] %vm2912, %v2697
        %2923 = vst.msk [vmem:[#allocation3 + $0x50] sm:$0xff] %vm2912, %v2698
        %2924 = vst.msk [vmem:[#allocation3 + $0x58] sm:$0xff] %vm2912, %v2699
        %2925 = vst.msk [vmem:[#allocation3 + $0x60] sm:$0xff] %vm2912, %v2700
        %2926 = vst.msk [vmem:[#allocation3 + $0x68] sm:$0xff] %vm2912, %v2701
        %2927 = vst.msk [vmem:[#allocation3 + $0x70] sm:$0xff] %vm2912, %v2702
        %2928 = vst.msk [vmem:[#allocation3 + $0x78] sm:$0xff] %vm2912, %v2703
        %2929 = vst [vmem:[#allocation2] sm:$0xff] %v2896
        %2930 = vst [vmem:[#allocation2 + $0x8] sm:$0xff] %v2897
        %2931 = vst [vmem:[#allocation2 + $0x10] sm:$0xff] %v2898
        %2932 = vst [vmem:[#allocation2 + $0x18] sm:$0xff] %v2899
        %2933 = vst [vmem:[#allocation2 + $0x20] sm:$0xff] %v2900
        %2934 = vst [vmem:[#allocation2 + $0x28] sm:$0xff] %v2901
        %2935 = vst [vmem:[#allocation2 + $0x30] sm:$0xff] %v2902
        %2936 = vst [vmem:[#allocation2 + $0x38] sm:$0xff] %v2903
        %2937 = vst [vmem:[#allocation2 + $0x40] sm:$0xff] %v2904
        %2938 = vst [vmem:[#allocation2 + $0x48] sm:$0xff] %v2905
        %2939 = vst [vmem:[#allocation2 + $0x50] sm:$0xff] %v2906
        %2940 = vst [vmem:[#allocation2 + $0x58] sm:$0xff] %v2907
        %2941 = vst [vmem:[#allocation2 + $0x60] sm:$0xff] %v2908
        %2942 = vst [vmem:[#allocation2 + $0x68] sm:$0xff] %v2909
        %2943 = vst [vmem:[#allocation2 + $0x70] sm:$0xff] %v2910
        %2944 = vst [vmem:[#allocation2 + $0x78] sm:$0xff] %v2911
        %v2945 = vld [vmem:[#allocation10] sm:$0x1]
        %v2946 = vpack.c.bf16 %v2897, %v2896
        %v2947 = vpack.c.bf16 %v2899, %v2898
        %v2948 = vpack.c.bf16 %v2901, %v2900
        %v2949 = vpack.c.bf16 %v2903, %v2902
        %v2950 = vpack.c.bf16 %v2905, %v2904
        %v2951 = vpack.c.bf16 %v2907, %v2906
        %v2952 = vpack.c.bf16 %v2909, %v2908
        %v2953 = vpack.c.bf16 %v2911, %v2910
        %2954 = vmatpush.bf16.msra.mxu0 %v2953
        %2955 = vmatpush.bf16.msra.mxu0 %v2952
        %2956 = vmatpush.bf16.msra.mxu0 %v2951
        %2957 = vmatpush.bf16.msra.mxu0 %v2950
        %2958 = vmatpush.bf16.msra.mxu0 %v2949
        %2959 = vmatpush.bf16.msra.mxu0 %v2948
        %2960 = vmatpush.bf16.msra.mxu0 %v2947
        %2961 = vmatpush.bf16.msra.mxu0 %v2946
        %2962 = vmatmul.bf16.gmra.mxu0 %v2945
        %v2963 = vpop.f32.mrf.mxu0
        %v2964 = vadd.f32 0.0, %v2963
        %v2965 = vpop.f32.mrf.mxu0
        %2966 = vdwg.mxu0
        %v2967 = vmul.f32 %v2353, %v2688
        %v2968 = vmul.f32 %v2354, %v2689
        %v2969 = vmul.f32 %v2355, %v2690
        %v2970 = vmul.f32 %v2356, %v2691
        %v2971 = vmul.f32 %v2357, %v2692
        %v2972 = vmul.f32 %v2358, %v2693
        %v2973 = vmul.f32 %v2359, %v2694
        %v2974 = vmul.f32 %v2360, %v2695
        %v2975 = vmul.f32 %v2361, %v2696
        %v2976 = vmul.f32 %v2362, %v2697
        %v2977 = vmul.f32 %v2363, %v2698
        %v2978 = vmul.f32 %v2364, %v2699
        %v2979 = vmul.f32 %v2365, %v2700
        %v2980 = vmul.f32 %v2366, %v2701
        %v2981 = vmul.f32 %v2367, %v2702
        %v2982 = vmul.f32 %v2368, %v2703
        %vm2983 = vcmp.gt.f32.partialorder %v2967, 0.0
        %vm2984 = vcmp.gt.f32.partialorder %v2968, 0.0
        %vm2985 = vcmp.gt.f32.partialorder %v2969, 0.0
        %vm2986 = vcmp.gt.f32.partialorder %v2970, 0.0
        %vm2987 = vcmp.gt.f32.partialorder %v2971, 0.0
        %vm2988 = vcmp.gt.f32.partialorder %v2972, 0.0
        %vm2989 = vcmp.gt.f32.partialorder %v2973, 0.0
        %vm2990 = vcmp.gt.f32.partialorder %v2974, 0.0
        %vm2991 = vcmp.gt.f32.partialorder %v2975, 0.0
        %vm2992 = vcmp.gt.f32.partialorder %v2976, 0.0
        %vm2993 = vcmp.gt.f32.partialorder %v2977, 0.0
        %vm2994 = vcmp.gt.f32.partialorder %v2978, 0.0
        %vm2995 = vcmp.gt.f32.partialorder %v2979, 0.0
        %vm2996 = vcmp.gt.f32.partialorder %v2980, 0.0
        %vm2997 = vcmp.gt.f32.partialorder %v2981, 0.0
        %vm2998 = vcmp.gt.f32.partialorder %v2982, 0.0
        %v2999 = vsel %vm2983, 1, 0
        %v3000 = vsel %vm2984, 1, 0
        %v3001 = vsel %vm2985, 1, 0
        %v3002 = vsel %vm2986, 1, 0
        %v3003 = vsel %vm2987, 1, 0
        %v3004 = vsel %vm2988, 1, 0
        %v3005 = vsel %vm2989, 1, 0
        %v3006 = vsel %vm2990, 1, 0
        %v3007 = vsel %vm2991, 1, 0
        %v3008 = vsel %vm2992, 1, 0
        %v3009 = vsel %vm2993, 1, 0
        %v3010 = vsel %vm2994, 1, 0
        %v3011 = vsel %vm2995, 1, 0
        %v3012 = vsel %vm2996, 1, 0
        %v3013 = vsel %vm2997, 1, 0
        %v3014 = vsel %vm2998, 1, 0
        %3015 = vset.pattern.permute.xlu0 0
        %3016 = vperm.xlu0 %3015, %v2999
        %v3017 = vpop.permute.xlu0 %3016
        %3018 = vset.pattern.permute.xlu0 0
        %3019 = vperm.xlu0 %3018, %v3000
        %v3020 = vpop.permute.xlu0 %3019
        %3021 = vset.pattern.permute.xlu0 0
        %3022 = vperm.xlu0 %3021, %v3001
        %v3023 = vpop.permute.xlu0 %3022
        %3024 = vset.pattern.permute.xlu0 0
        %3025 = vperm.xlu0 %3024, %v3002
        %v3026 = vpop.permute.xlu0 %3025
        %3027 = vset.pattern.permute.xlu0 0
        %3028 = vperm.xlu0 %3027, %v3003
        %v3029 = vpop.permute.xlu0 %3028
        %3030 = vset.pattern.permute.xlu0 0
        %3031 = vperm.xlu0 %3030, %v3004
        %v3032 = vpop.permute.xlu0 %3031
        %3033 = vset.pattern.permute.xlu0 0
        %3034 = vperm.xlu0 %3033, %v3005
        %v3035 = vpop.permute.xlu0 %3034
        %3036 = vset.pattern.permute.xlu0 0
        %3037 = vperm.xlu0 %3036, %v3006
        %v3038 = vpop.permute.xlu0 %3037
        %3039 = vset.pattern.permute.xlu0 0
        %3040 = vperm.xlu0 %3039, %v3007
        %v3041 = vpop.permute.xlu0 %3040
        %3042 = vset.pattern.permute.xlu0 0
        %3043 = vperm.xlu0 %3042, %v3008
        %v3044 = vpop.permute.xlu0 %3043
        %3045 = vset.pattern.permute.xlu0 0
        %3046 = vperm.xlu0 %3045, %v3009
        %v3047 = vpop.permute.xlu0 %3046
        %3048 = vset.pattern.permute.xlu0 0
        %3049 = vperm.xlu0 %3048, %v3010
        %v3050 = vpop.permute.xlu0 %3049
        %3051 = vset.pattern.permute.xlu0 0
        %3052 = vperm.xlu0 %3051, %v3011
        %v3053 = vpop.permute.xlu0 %3052
        %3054 = vset.pattern.permute.xlu0 0
        %3055 = vperm.xlu0 %3054, %v3012
        %v3056 = vpop.permute.xlu0 %3055
        %3057 = vset.pattern.permute.xlu0 0
        %3058 = vperm.xlu0 %3057, %v3013
        %v3059 = vpop.permute.xlu0 %3058
        %3060 = vset.pattern.permute.xlu0 0
        %3061 = vperm.xlu0 %3060, %v3014
        %v3062 = vpop.permute.xlu0 %3061
        %vm3063 = vcmp.eq.s32.totalorder %v3017, 1
        %vm3064 = vcmp.eq.s32.totalorder %v3020, 1
        %vm3065 = vcmp.eq.s32.totalorder %v3023, 1
        %vm3066 = vcmp.eq.s32.totalorder %v3026, 1
        %vm3067 = vcmp.eq.s32.totalorder %v3029, 1
        %vm3068 = vcmp.eq.s32.totalorder %v3032, 1
        %vm3069 = vcmp.eq.s32.totalorder %v3035, 1
        %vm3070 = vcmp.eq.s32.totalorder %v3038, 1
        %vm3071 = vcmp.eq.s32.totalorder %v3041, 1
        %vm3072 = vcmp.eq.s32.totalorder %v3044, 1
        %vm3073 = vcmp.eq.s32.totalorder %v3047, 1
        %vm3074 = vcmp.eq.s32.totalorder %v3050, 1
        %vm3075 = vcmp.eq.s32.totalorder %v3053, 1
        %vm3076 = vcmp.eq.s32.totalorder %v3056, 1
        %vm3077 = vcmp.eq.s32.totalorder %v3059, 1
        %vm3078 = vcmp.eq.s32.totalorder %v3062, 1
        %v3079 = vsel %vm3063, %v2896, -1e+30
        %v3080 = vsel %vm3064, %v2897, -1e+30
        %v3081 = vsel %vm3065, %v2898, -1e+30
        %v3082 = vsel %vm3066, %v2899, -1e+30
        %v3083 = vsel %vm3067, %v2900, -1e+30
        %v3084 = vsel %vm3068, %v2901, -1e+30
        %v3085 = vsel %vm3069, %v2902, -1e+30
        %v3086 = vsel %vm3070, %v2903, -1e+30
        %v3087 = vsel %vm3071, %v2904, -1e+30
        %v3088 = vsel %vm3072, %v2905, -1e+30
        %v3089 = vsel %vm3073, %v2906, -1e+30
        %v3090 = vsel %vm3074, %v2907, -1e+30
        %v3091 = vsel %vm3075, %v2908, -1e+30
        %v3092 = vsel %vm3076, %v2909, -1e+30
        %v3093 = vsel %vm3077, %v2910, -1e+30
        %v3094 = vsel %vm3078, %v2911, -1e+30
        %v3095 = vmax.f32 %v3079, %v3083
        %v3096 = vmax.f32 %v3080, %v3084
        %v3097 = vmax.f32 %v3081, %v3085
        %v3098 = vmax.f32 %v3082, %v3086
        %v3099 = vmax.f32 %v3095, %v3087
        %v3100 = vmax.f32 %v3096, %v3088
        %v3101 = vmax.f32 %v3097, %v3089
        %v3102 = vmax.f32 %v3098, %v3090
        %v3103 = vmax.f32 %v3099, %v3091
        %v3104 = vmax.f32 %v3100, %v3092
        %v3105 = vmax.f32 %v3101, %v3093
        %v3106 = vmax.f32 %v3102, %v3094
        %v3107 = vmax.f32 %v3103, %v3104
        %v3108 = vmax.f32 %v3105, %v3106
        %v3109 = vmax.f32 %v3107, %v3108
        %v3110 = vrot.slane %v3109, 4
        %v3111 = vmax.f32 %v3109, %v3110
        %v3112 = vrot.slane %v3111, 2
        %v3113 = vmax.f32 %v3111, %v3112
        %v3114 = vrot.slane %v3113, 1
        %v3115 = vmax.f32 %v3113, %v3114
        %v3116 = vsel %vm2912, %v2967, 0.0
        %v3117 = vsel %vm2912, %v2968, 0.0
        %v3118 = vadd.f32 %v3116, %v3117
        %v3119 = vsel %vm2912, %v2969, 0.0
        %v3120 = vadd.f32 %v3118, %v3119
        %v3121 = vsel %vm2912, %v2970, 0.0
        %v3122 = vadd.f32 %v3120, %v3121
        %v3123 = vsel %vm2912, %v2971, 0.0
        %v3124 = vadd.f32 %v3122, %v3123
        %v3125 = vsel %vm2912, %v2972, 0.0
        %v3126 = vadd.f32 %v3124, %v3125
        %v3127 = vsel %vm2912, %v2973, 0.0
        %v3128 = vadd.f32 %v3126, %v3127
        %v3129 = vsel %vm2912, %v2974, 0.0
        %v3130 = vadd.f32 %v3128, %v3129
        %v3131 = vsel %vm2912, %v2975, 0.0
        %v3132 = vadd.f32 %v3130, %v3131
        %v3133 = vsel %vm2912, %v2976, 0.0
        %v3134 = vadd.f32 %v3132, %v3133
        %v3135 = vsel %vm2912, %v2977, 0.0
        %v3136 = vadd.f32 %v3134, %v3135
        %v3137 = vsel %vm2912, %v2978, 0.0
        %v3138 = vadd.f32 %v3136, %v3137
        %v3139 = vsel %vm2912, %v2979, 0.0
        %v3140 = vadd.f32 %v3138, %v3139
        %v3141 = vsel %vm2912, %v2980, 0.0
        %v3142 = vadd.f32 %v3140, %v3141
        %v3143 = vsel %vm2912, %v2981, 0.0
        %v3144 = vadd.f32 %v3142, %v3143
        %v3145 = vsel %vm2912, %v2982, 0.0
        %v3146 = vadd.f32 %v3144, %v3145
        %v3147 = vrot.slane %v3146, 4
        %v3148 = vadd.f32 %v3146, %v3147
        %v3149 = vrot.slane %v3148, 2
        %v3150 = vadd.f32 %v3148, %v3149
        %v3151 = vrot.slane %v3150, 1
        %v3152 = vadd.f32 %v3150, %v3151
        %vm3153 = vcmp.gt.f32.partialorder %v3152, 0.0
        %v3154 = vsel %vm3153, 1, 0
        %3155 = vset.pattern.permute.xlu0 0
        %3156 = vperm.xlu0 %3155, %v3154
        %v3157 = vpop.permute.xlu0 %3156
        %vm3158 = vcmp.eq.s32.totalorder %v3157, 1
        %v3159 = vsel %vm3158, %v3115, 0.0
        %vm3160 = vcmp.eq.s32.totalorder %v2102, 0
        %v3161 = vsel %vm3160, 1, 0
        %vm3162 = vcmp.eq.s32.totalorder %v3161, 1
        %v3163 = vsel %vm3162, %v3159, 0.0
        %v3164 = vadd.f32 %v3163, 0.0
        %3165 = vrot.lane.b32.xlu0 %v2688, 1
        %v3166 = vpop.permute.xlu0 %3165
        %3167 = vrot.lane.b32.xlu0 %v2689, 1
        %v3168 = vpop.permute.xlu0 %3167
        %3169 = vrot.lane.b32.xlu0 %v2690, 1
        %v3170 = vpop.permute.xlu0 %3169
        %3171 = vrot.lane.b32.xlu0 %v2691, 1
        %v3172 = vpop.permute.xlu0 %3171
        %3173 = vrot.lane.b32.xlu0 %v2692, 1
        %v3174 = vpop.permute.xlu0 %3173
        %3175 = vrot.lane.b32.xlu0 %v2693, 1
        %v3176 = vpop.permute.xlu0 %3175
        %3177 = vrot.lane.b32.xlu0 %v2694, 1
        %v3178 = vpop.permute.xlu0 %3177
        %3179 = vrot.lane.b32.xlu0 %v2695, 1
        %v3180 = vpop.permute.xlu0 %3179
        %3181 = vrot.lane.b32.xlu0 %v2696, 1
        %v3182 = vpop.permute.xlu0 %3181
        %3183 = vrot.lane.b32.xlu0 %v2697, 1
        %v3184 = vpop.permute.xlu0 %3183
        %3185 = vrot.lane.b32.xlu0 %v2698, 1
        %v3186 = vpop.permute.xlu0 %3185
        %3187 = vrot.lane.b32.xlu0 %v2699, 1
        %v3188 = vpop.permute.xlu0 %3187
        %3189 = vrot.lane.b32.xlu0 %v2700, 1
        %v3190 = vpop.permute.xlu0 %3189
        %3191 = vrot.lane.b32.xlu0 %v2701, 1
        %v3192 = vpop.permute.xlu0 %3191
        %3193 = vrot.lane.b32.xlu0 %v2702, 1
        %v3194 = vpop.permute.xlu0 %3193
        %3195 = vrot.lane.b32.xlu0 %v2703, 1
        %v3196 = vpop.permute.xlu0 %3195
        %v3213 = vmul.f32 %v2353, %v3166
        %v3214 = vmul.f32 %v2354, %v3168
        %v3215 = vmul.f32 %v2355, %v3170
        %v3216 = vmul.f32 %v2356, %v3172
        %v3217 = vmul.f32 %v2357, %v3174
        %v3218 = vmul.f32 %v2358, %v3176
        %v3219 = vmul.f32 %v2359, %v3178
        %v3220 = vmul.f32 %v2360, %v3180
        %v3221 = vmul.f32 %v2361, %v3182
        %v3222 = vmul.f32 %v2362, %v3184
        %v3223 = vmul.f32 %v2363, %v3186
        %v3224 = vmul.f32 %v2364, %v3188
        %v3225 = vmul.f32 %v2365, %v3190
        %v3226 = vmul.f32 %v2366, %v3192
        %v3227 = vmul.f32 %v2367, %v3194
        %v3228 = vmul.f32 %v2368, %v3196
        %vm3229 = vcmp.gt.f32.partialorder %v3213, 0.0
        %vm3230 = vcmp.gt.f32.partialorder %v3214, 0.0
        %vm3231 = vcmp.gt.f32.partialorder %v3215, 0.0
        %vm3232 = vcmp.gt.f32.partialorder %v3216, 0.0
        %vm3233 = vcmp.gt.f32.partialorder %v3217, 0.0
        %vm3234 = vcmp.gt.f32.partialorder %v3218, 0.0
        %vm3235 = vcmp.gt.f32.partialorder %v3219, 0.0
        %vm3236 = vcmp.gt.f32.partialorder %v3220, 0.0
        %vm3237 = vcmp.gt.f32.partialorder %v3221, 0.0
        %vm3238 = vcmp.gt.f32.partialorder %v3222, 0.0
        %vm3239 = vcmp.gt.f32.partialorder %v3223, 0.0
        %vm3240 = vcmp.gt.f32.partialorder %v3224, 0.0
        %vm3241 = vcmp.gt.f32.partialorder %v3225, 0.0
        %vm3242 = vcmp.gt.f32.partialorder %v3226, 0.0
        %vm3243 = vcmp.gt.f32.partialorder %v3227, 0.0
        %vm3244 = vcmp.gt.f32.partialorder %v3228, 0.0
        %v3245 = vsel %vm3229, 1, 0
        %v3246 = vsel %vm3230, 1, 0
        %v3247 = vsel %vm3231, 1, 0
        %v3248 = vsel %vm3232, 1, 0
        %v3249 = vsel %vm3233, 1, 0
        %v3250 = vsel %vm3234, 1, 0
        %v3251 = vsel %vm3235, 1, 0
        %v3252 = vsel %vm3236, 1, 0
        %v3253 = vsel %vm3237, 1, 0
        %v3254 = vsel %vm3238, 1, 0
        %v3255 = vsel %vm3239, 1, 0
        %v3256 = vsel %vm3240, 1, 0
        %v3257 = vsel %vm3241, 1, 0
        %v3258 = vsel %vm3242, 1, 0
        %v3259 = vsel %vm3243, 1, 0
        %v3260 = vsel %vm3244, 1, 0
        %3261 = vset.pattern.permute.xlu0 1
        %3262 = vperm.xlu0 %3261, %v3245
        %v3263 = vpop.permute.xlu0 %3262
        %3264 = vset.pattern.permute.xlu0 1
        %3265 = vperm.xlu0 %3264, %v3246
        %v3266 = vpop.permute.xlu0 %3265
        %3267 = vset.pattern.permute.xlu0 1
        %3268 = vperm.xlu0 %3267, %v3247
        %v3269 = vpop.permute.xlu0 %3268
        %3270 = vset.pattern.permute.xlu0 1
        %3271 = vperm.xlu0 %3270, %v3248
        %v3272 = vpop.permute.xlu0 %3271
        %3273 = vset.pattern.permute.xlu0 1
        %3274 = vperm.xlu0 %3273, %v3249
        %v3275 = vpop.permute.xlu0 %3274
        %3276 = vset.pattern.permute.xlu0 1
        %3277 = vperm.xlu0 %3276, %v3250
        %v3278 = vpop.permute.xlu0 %3277
        %3279 = vset.pattern.permute.xlu0 1
        %3280 = vperm.xlu0 %3279, %v3251
        %v3281 = vpop.permute.xlu0 %3280
        %3282 = vset.pattern.permute.xlu0 1
        %3283 = vperm.xlu0 %3282, %v3252
        %v3284 = vpop.permute.xlu0 %3283
        %3285 = vset.pattern.permute.xlu0 1
        %3286 = vperm.xlu0 %3285, %v3253
        %v3287 = vpop.permute.xlu0 %3286
        %3288 = vset.pattern.permute.xlu0 1
        %3289 = vperm.xlu0 %3288, %v3254
        %v3290 = vpop.permute.xlu0 %3289
        %3291 = vset.pattern.permute.xlu0 1
        %3292 = vperm.xlu0 %3291, %v3255
        %v3293 = vpop.permute.xlu0 %3292
        %3294 = vset.pattern.permute.xlu0 1
        %3295 = vperm.xlu0 %3294, %v3256
        %v3296 = vpop.permute.xlu0 %3295
        %3297 = vset.pattern.permute.xlu0 1
        %3298 = vperm.xlu0 %3297, %v3257
        %v3299 = vpop.permute.xlu0 %3298
        %3300 = vset.pattern.permute.xlu0 1
        %3301 = vperm.xlu0 %3300, %v3258
        %v3302 = vpop.permute.xlu0 %3301
        %3303 = vset.pattern.permute.xlu0 1
        %3304 = vperm.xlu0 %3303, %v3259
        %v3305 = vpop.permute.xlu0 %3304
        %3306 = vset.pattern.permute.xlu0 1
        %3307 = vperm.xlu0 %3306, %v3260
        %v3308 = vpop.permute.xlu0 %3307
        %vm3309 = vcmp.eq.s32.totalorder %v3263, 1
        %vm3310 = vcmp.eq.s32.totalorder %v3266, 1
        %vm3311 = vcmp.eq.s32.totalorder %v3269, 1
        %vm3312 = vcmp.eq.s32.totalorder %v3272, 1
        %vm3313 = vcmp.eq.s32.totalorder %v3275, 1
        %vm3314 = vcmp.eq.s32.totalorder %v3278, 1
        %vm3315 = vcmp.eq.s32.totalorder %v3281, 1
        %vm3316 = vcmp.eq.s32.totalorder %v3284, 1
        %vm3317 = vcmp.eq.s32.totalorder %v3287, 1
        %vm3318 = vcmp.eq.s32.totalorder %v3290, 1
        %vm3319 = vcmp.eq.s32.totalorder %v3293, 1
        %vm3320 = vcmp.eq.s32.totalorder %v3296, 1
        %vm3321 = vcmp.eq.s32.totalorder %v3299, 1
        %vm3322 = vcmp.eq.s32.totalorder %v3302, 1
        %vm3323 = vcmp.eq.s32.totalorder %v3305, 1
        %vm3324 = vcmp.eq.s32.totalorder %v3308, 1
        %v3325 = vsel %vm3309, %v2896, -1e+30
        %v3326 = vsel %vm3310, %v2897, -1e+30
        %v3327 = vsel %vm3311, %v2898, -1e+30
        %v3328 = vsel %vm3312, %v2899, -1e+30
        %v3329 = vsel %vm3313, %v2900, -1e+30
        %v3330 = vsel %vm3314, %v2901, -1e+30
        %v3331 = vsel %vm3315, %v2902, -1e+30
        %v3332 = vsel %vm3316, %v2903, -1e+30
        %v3333 = vsel %vm3317, %v2904, -1e+30
        %v3334 = vsel %vm3318, %v2905, -1e+30
        %v3335 = vsel %vm3319, %v2906, -1e+30
        %v3336 = vsel %vm3320, %v2907, -1e+30
        %v3337 = vsel %vm3321, %v2908, -1e+30
        %v3338 = vsel %vm3322, %v2909, -1e+30
        %v3339 = vsel %vm3323, %v2910, -1e+30
        %v3340 = vsel %vm3324, %v2911, -1e+30
        %v3341 = vmax.f32 %v3325, %v3329
        %v3342 = vmax.f32 %v3326, %v3330
        %v3343 = vmax.f32 %v3327, %v3331
        %v3344 = vmax.f32 %v3328, %v3332
        %v3345 = vmax.f32 %v3341, %v3333
        %v3346 = vmax.f32 %v3342, %v3334
        %v3347 = vmax.f32 %v3343, %v3335
        %v3348 = vmax.f32 %v3344, %v3336
        %v3349 = vmax.f32 %v3345, %v3337
        %v3350 = vmax.f32 %v3346, %v3338
        %v3351 = vmax.f32 %v3347, %v3339
        %v3352 = vmax.f32 %v3348, %v3340
        %v3353 = vmax.f32 %v3349, %v3350
        %v3354 = vmax.f32 %v3351, %v3352
        %v3355 = vmax.f32 %v3353, %v3354
        %v3356 = vrot.slane %v3355, 4
        %v3357 = vmax.f32 %v3355, %v3356
        %v3358 = vrot.slane %v3357, 2
        %v3359 = vmax.f32 %v3357, %v3358
        %v3360 = vrot.slane %v3359, 1
        %v3361 = vmax.f32 %v3359, %v3360
        %vm3362 = vcmask 15368
        %v3363 = vsel %vm3362, %v3213, 0.0
        %v3364 = vsel %vm3362, %v3214, 0.0
        %v3365 = vadd.f32 %v3363, %v3364
        %v3366 = vsel %vm3362, %v3215, 0.0
        %v3367 = vadd.f32 %v3365, %v3366
        %v3368 = vsel %vm3362, %v3216, 0.0
        %v3369 = vadd.f32 %v3367, %v3368
        %v3370 = vsel %vm3362, %v3217, 0.0
        %v3371 = vadd.f32 %v3369, %v3370
        %v3372 = vsel %vm3362, %v3218, 0.0
        %v3373 = vadd.f32 %v3371, %v3372
        %v3374 = vsel %vm3362, %v3219, 0.0
        %v3375 = vadd.f32 %v3373, %v3374
        %v3376 = vsel %vm3362, %v3220, 0.0
        %v3377 = vadd.f32 %v3375, %v3376
        %v3378 = vsel %vm3362, %v3221, 0.0
        %v3379 = vadd.f32 %v3377, %v3378
        %v3380 = vsel %vm3362, %v3222, 0.0
        %v3381 = vadd.f32 %v3379, %v3380
        %v3382 = vsel %vm3362, %v3223, 0.0
        %v3383 = vadd.f32 %v3381, %v3382
        %v3384 = vsel %vm3362, %v3224, 0.0
        %v3385 = vadd.f32 %v3383, %v3384
        %v3386 = vsel %vm3362, %v3225, 0.0
        %v3387 = vadd.f32 %v3385, %v3386
        %v3388 = vsel %vm3362, %v3226, 0.0
        %v3389 = vadd.f32 %v3387, %v3388
        %v3390 = vsel %vm3362, %v3227, 0.0
        %v3391 = vadd.f32 %v3389, %v3390
        %v3392 = vsel %vm3362, %v3228, 0.0
        %v3393 = vadd.f32 %v3391, %v3392
        %v3394 = vrot.slane %v3393, 4
        %v3395 = vadd.f32 %v3393, %v3394
        %v3396 = vrot.slane %v3395, 2
        %v3397 = vadd.f32 %v3395, %v3396
        %v3398 = vrot.slane %v3397, 1
        %v3399 = vadd.f32 %v3397, %v3398
        %vm3400 = vcmp.gt.f32.partialorder %v3399, 0.0
        %v3401 = vsel %vm3400, 1, 0
        %3402 = vset.pattern.permute.xlu0 1
        %3403 = vperm.xlu0 %3402, %v3401
        %v3404 = vpop.permute.xlu0 %3403
        %vm3405 = vcmp.eq.s32.totalorder %v3404, 1
        %v3406 = vsel %vm3405, %v3361, 0.0
        %vm3407 = vcmp.eq.s32.totalorder %v2102, 1
        %v3408 = vsel %vm3407, 1, 0
        %vm3409 = vcmp.eq.s32.totalorder %v3408, 1
        %v3410 = vsel %vm3409, %v3406, 0.0
        %v3411 = vadd.f32 %v3164, %v3410
        %v3412 = vld [vmem:[#allocation4] sm:$0x3]
        %v3413 = vadd.f32 %v3412, %v3411
        %3414 = vst [vmem:[#allocation4] sm:$0x3] %v3413
        %v3415 = vld [vmem:[#allocation4 + $0x2] sm:$0x3]
        %v3416 = vadd.f32 %v3415, %v2964
        %3417 = vst [vmem:[#allocation4 + $0x2] sm:$0x3] %v3416
        %p3418 = scmp.eq.s32.totalorder %s39, 2
        // Predicated region
        $region125: #{tpu_custom_call.1} parent=103 // pred_check
          %p3419 = pneg %p3418
        $region126: #{tpu_custom_call.1} parent=103 // pred_check_branch
          %3421 = sbr.rel (%p3419) target = $region128
        $region127: #{tpu_custom_call.1} parent=103 // pred_region
          %v3422 = vld [vmem:[#allocation4] sm:$0xf]
          %v3423 = vld [vmem:[%s10] sm:$0xff]
          %v3424 = vld [vmem:[%s10 + $0x8] sm:$0xff]
          %v3425 = vld [vmem:[%s10 + $0x10] sm:$0xff]
          %v3426 = vld [vmem:[%s10 + $0x18] sm:$0xff]
          %v3427 = vld [vmem:[%s10 + $0x20] sm:$0xff]
          %v3428 = vld [vmem:[%s10 + $0x28] sm:$0xff]
          %v3429 = vld [vmem:[%s10 + $0x30] sm:$0xff]
          %v3430 = vld [vmem:[%s10 + $0x38] sm:$0xff]
          %v3431 = vld [vmem:[%s10 + $0x40] sm:$0xff]
          %v3432 = vld [vmem:[%s10 + $0x48] sm:$0xff]
          %v3433 = vld [vmem:[%s10 + $0x50] sm:$0xff]
          %v3434 = vld [vmem:[%s10 + $0x58] sm:$0xff]
          %v3435 = vld [vmem:[%s10 + $0x60] sm:$0xff]
          %v3436 = vld [vmem:[%s10 + $0x68] sm:$0xff]
          %v3437 = vld [vmem:[%s10 + $0x70] sm:$0xff]
          %v3438 = vld [vmem:[%s10 + $0x78] sm:$0xff]
          %v3439 = vld [vmem:[%s10 + $0x80] sm:$0xff]
          %v3440 = vld [vmem:[%s10 + $0x88] sm:$0xff]
          %v3441 = vld [vmem:[%s10 + $0x90] sm:$0xff]
          %v3442 = vld [vmem:[%s10 + $0x98] sm:$0xff]
          %v3443 = vld [vmem:[%s10 + $0xa0] sm:$0xff]
          %v3444 = vld [vmem:[%s10 + $0xa8] sm:$0xff]
          %v3445 = vld [vmem:[%s10 + $0xb0] sm:$0xff]
          %v3446 = vld [vmem:[%s10 + $0xb8] sm:$0xff]
          %v3447 = vld [vmem:[%s10 + $0xc0] sm:$0xff]
          %v3448 = vld [vmem:[%s10 + $0xc8] sm:$0xff]
          %v3449 = vld [vmem:[%s10 + $0xd0] sm:$0xff]
          %v3450 = vld [vmem:[%s10 + $0xd8] sm:$0xff]
          %v3451 = vld [vmem:[%s10 + $0xe0] sm:$0xff]
          %v3452 = vld [vmem:[%s10 + $0xe8] sm:$0xff]
          %v3453 = vld [vmem:[%s10 + $0xf0] sm:$0xff]
          %v3454 = vld [vmem:[%s10 + $0xf8] sm:$0xff]
          %v3455 = vld [vmem:[%s11] sm:$0x1]
          %v3457 = vperm.slane %v3455, 0
          %3460 = vst [vmem:[#allocation1] ss:$4 sm:$0xff] %v3422
          %v3461 = vld.sshfl [vmem:[#allocation1] sm:$0xff pattern:$0x73625140]
          %v3462 = vld.sshfl [vmem:[#allocation1 + $0x8] sm:$0xff pattern:$0x73625140]
          %3465 = vmatpush.msra.mxu0 %v3438
          %3466 = vmatpush.msra.mxu0 %v3437
          %3467 = vmatpush.msra.mxu0 %v3436
          %3468 = vmatpush.msra.mxu0 %v3435
          %3469 = vmatpush.msra.mxu0 %v3434
          %3470 = vmatpush.msra.mxu0 %v3433
          %3471 = vmatpush.msra.mxu0 %v3432
          %3472 = vmatpush.msra.mxu0 %v3431
          %3473 = vmatpush.msra.mxu0 %v3430
          %3474 = vmatpush.msra.mxu0 %v3429
          %3475 = vmatpush.msra.mxu0 %v3428
          %3476 = vmatpush.msra.mxu0 %v3427
          %3477 = vmatpush.msra.mxu0 %v3426
          %3478 = vmatpush.msra.mxu0 %v3425
          %3479 = vmatpush.msra.mxu0 %v3424
          %3480 = vmatpush.msra.mxu0 %v3423
          %3481 = vmatmul.f32.gmra.mxu0 %v3461
          %v3482 = vpop.f32.mrf.mxu0
          %v3483 = vadd.f32 %v3457, %v3482
          %3484 = vdwg.mxu0
          %3485 = vmatpush.msra.mxu0 %v3454
          %3486 = vmatpush.msra.mxu0 %v3453
          %3487 = vmatpush.msra.mxu0 %v3452
          %3488 = vmatpush.msra.mxu0 %v3451
          %3489 = vmatpush.msra.mxu0 %v3450
          %3490 = vmatpush.msra.mxu0 %v3449
          %3491 = vmatpush.msra.mxu0 %v3448
          %3492 = vmatpush.msra.mxu0 %v3447
          %3493 = vmatpush.msra.mxu0 %v3446
          %3494 = vmatpush.msra.mxu0 %v3445
          %3495 = vmatpush.msra.mxu0 %v3444
          %3496 = vmatpush.msra.mxu0 %v3443
          %3497 = vmatpush.msra.mxu0 %v3442
          %3498 = vmatpush.msra.mxu0 %v3441
          %3499 = vmatpush.msra.mxu0 %v3440
          %3500 = vmatpush.msra.mxu0 %v3439
          %3501 = vmatmul.f32.gmra.mxu0 %v3462
          %v3502 = vpop.f32.mrf.mxu0
          %v3503 = vadd.f32 %v3483, %v3502
          %3504 = vdwg.mxu0
          %v3505 = vld [vmem:[%s12] sm:$0xff]
          %v3506 = vld [vmem:[%s12 + $0x8] sm:$0xff]
          %v3507 = vld [vmem:[%s12 + $0x10] sm:$0xff]
          %v3508 = vld [vmem:[%s12 + $0x18] sm:$0xff]
          %v3509 = vld [vmem:[%s12 + $0x20] sm:$0xff]
          %v3510 = vld [vmem:[%s12 + $0x28] sm:$0xff]
          %v3511 = vld [vmem:[%s12 + $0x30] sm:$0xff]
          %v3512 = vld [vmem:[%s12 + $0x38] sm:$0xff]
          %v3513 = vld [vmem:[%s13] sm:$0x1]
          %v3515 = vperm.slane %v3513, 0
          %vm3517 = vcmask 523264
          %v3519 = vsel %vm3517, %v3503, 0
          %3521 = vmatpush.msra.mxu0 0.0
          %3522 = vmatpush.msra.mxu0 0.0
          %3523 = vmatpush.msra.mxu0 0.0
          %3524 = vmatpush.msra.mxu0 0.0
          %3525 = vmatpush.msra.mxu0 0.0
          %3526 = vmatpush.msra.mxu0 0.0
          %3527 = vmatpush.msra.mxu0 0.0
          %3528 = vmatpush.msra.mxu0 0.0
          %3529 = vmatpush.msra.mxu0 %v3512
          %3530 = vmatpush.msra.mxu0 %v3511
          %3531 = vmatpush.msra.mxu0 %v3510
          %3532 = vmatpush.msra.mxu0 %v3509
          %3533 = vmatpush.msra.mxu0 %v3508
          %3534 = vmatpush.msra.mxu0 %v3507
          %3535 = vmatpush.msra.mxu0 %v3506
          %3536 = vmatpush.msra.mxu0 %v3505
          %3537 = vmatmul.f32.gmra.mxu0 %v3519
          %v3538 = vpop.f32.mrf.mxu0
          %v3539 = vadd.f32 %v3515, %v3538
          %3540 = vdwg.mxu0
          %vm3541 = vcmp.gt.f32.partialorder %v3539, 0.0
          %v3542 = vmul.f32 %v3539, 1.442695
          %v3543 = vpow.pop %v3542
          %v3544 = vsub.f32 %v3543, 1.0
          %v3545 = vsel %vm3541, %v3539, %v3544
          %v3546 = vld [vmem:[%s14] sm:$0xff]
          %v3547 = vld [vmem:[%s14 + $0x8] sm:$0xff]
          %v3548 = vld [vmem:[%s14 + $0x10] sm:$0xff]
          %v3549 = vld [vmem:[%s14 + $0x18] sm:$0xff]
          %v3550 = vld [vmem:[%s15] sm:$0x1]
          %v3552 = vperm.slane %v3550, 0
          %vm3554 = vcmask 261120
          %v3556 = vsel %vm3554, %v3545, 0
          %3558 = vmatpush.msra.mxu0 0.0
          %3559 = vmatpush.msra.mxu0 0.0
          %3560 = vmatpush.msra.mxu0 0.0
          %3561 = vmatpush.msra.mxu0 0.0
          %3562 = vmatpush.msra.mxu0 0.0
          %3563 = vmatpush.msra.mxu0 0.0
          %3564 = vmatpush.msra.mxu0 0.0
          %3565 = vmatpush.msra.mxu0 0.0
          %3566 = vmatpush.msra.mxu0 0.0
          %3567 = vmatpush.msra.mxu0 0.0
          %3568 = vmatpush.msra.mxu0 0.0
          %3569 = vmatpush.msra.mxu0 0.0
          %3570 = vmatpush.msra.mxu0 %v3549
          %3571 = vmatpush.msra.mxu0 %v3548
          %3572 = vmatpush.msra.mxu0 %v3547
          %3573 = vmatpush.msra.mxu0 %v3546
          %3574 = vmatmul.f32.gmra.mxu0 %v3556
          %v3575 = vpop.f32.mrf.mxu0
          %v3576 = vadd.f32 %v3552, %v3575
          %3577 = vdwg.mxu0
          %vm3578 = vcmp.gt.f32.partialorder %v3576, 0.0
          %v3579 = vmul.f32 %v3576, 1.442695
          %v3580 = vpow.pop %v3579
          %v3581 = vsub.f32 %v3580, 1.0
          %v3582 = vsel %vm3578, %v3576, %v3581
          %v3583 = vld [vmem:[%s16] sm:$0xff]
          %v3584 = vld [vmem:[%s16 + $0x8] sm:$0xff]
          %v3585 = vld [vmem:[%s17] sm:$0x1]
          %v3587 = vperm.slane %v3585, 0
          %vm3589 = vcmask 130048
          %v3591 = vsel %vm3589, %v3582, 0
          %3593 = vmatpush.msra.mxu0 0.0
          %3594 = vmatpush.msra.mxu0 0.0
          %3595 = vmatpush.msra.mxu0 0.0
          %3596 = vmatpush.msra.mxu0 0.0
          %3597 = vmatpush.msra.mxu0 0.0
          %3598 = vmatpush.msra.mxu0 0.0
          %3599 = vmatpush.msra.mxu0 0.0
          %3600 = vmatpush.msra.mxu0 0.0
          %3601 = vmatpush.msra.mxu0 0.0
          %3602 = vmatpush.msra.mxu0 0.0
          %3603 = vmatpush.msra.mxu0 0.0
          %3604 = vmatpush.msra.mxu0 0.0
          %3605 = vmatpush.msra.mxu0 0.0
          %3606 = vmatpush.msra.mxu0 0.0
          %3607 = vmatpush.msra.mxu0 %v3584
          %3608 = vmatpush.msra.mxu0 %v3583
          %3609 = vmatmul.f32.gmra.mxu0 %v3591
          %v3610 = vpop.f32.mrf.mxu0
          %v3611 = vadd.f32 %v3587, %v3610
          %3612 = vdwg.mxu0
          %vm3613 = vcmp.gt.f32.partialorder %v3611, 0.0
          %v3614 = vmul.f32 %v3611, 1.442695
          %v3615 = vpow.pop %v3614
          %v3616 = vsub.f32 %v3615, 1.0
          %v3617 = vsel %vm3613, %v3611, %v3616
          %v3618 = vld [vmem:[%s18] sm:$0xff]
          %v3619 = vld [vmem:[#allocation6] sm:$0x1]
          %v3621 = vperm.slane %v3619, 0
          %vm3623 = vcmask 64512
          %v3625 = vsel %vm3623, %v3617, 0
          %3627 = vmatpush.msra.mxu0 0.0
          %3628 = vmatpush.msra.mxu0 0.0
          %3629 = vmatpush.msra.mxu0 0.0
          %3630 = vmatpush.msra.mxu0 0.0
          %3631 = vmatpush.msra.mxu0 0.0
          %3632 = vmatpush.msra.mxu0 0.0
          %3633 = vmatpush.msra.mxu0 0.0
          %3634 = vmatpush.msra.mxu0 0.0
          %3635 = vmatpush.msra.mxu0 0.0
          %3636 = vmatpush.msra.mxu0 0.0
          %3637 = vmatpush.msra.mxu0 0.0
          %3638 = vmatpush.msra.mxu0 0.0
          %3639 = vmatpush.msra.mxu0 0.0
          %3640 = vmatpush.msra.mxu0 0.0
          %3641 = vmatpush.msra.mxu0 0.0
          %3642 = vmatpush.msra.mxu0 %v3618
          %3643 = vmatmul.f32.gmra.mxu0 %v3625
          %v3644 = vpop.f32.mrf.mxu0
          %v3645 = vadd.f32 %v3621, %v3644
          %3646 = vdwg.mxu0
          %vm3647 = vcmask 1024
          %3648 = vst.msk [vmem:[%s21] sm:$0x3] %vm3647, %v3645
          %v3649 = vld [vmem:[%s20] sm:$0x3]
          %v3650 = vsub.f32 %v3645, %v3649
          %v3651 = vmul.f32 %v3650, %v3650
          %v3652 = vadd.f32 %v3651, 0.0
          %v3653 = vsel %vm3647, %v3652, 0.0
          %v3654 = vrot.slane %v3653, 4
          %v3655 = vadd.f32 %v3653, %v3654
          %v3656 = vrot.slane %v3655, 2
          %v3657 = vadd.f32 %v3655, %v3656
          %v3658 = vrot.slane %v3657, 1
          %v3659 = vadd.f32 %v3657, %v3658
          %v3660 = vrcp.pop 2.0
          %v3661 = vmul.f32 2.0, %v3660
          %v3662 = vsub.f32 1.0, %v3661
          %v3663 = vmul.f32 %v3660, %v3662
          %v3664 = vadd.f32 %v3660, %v3663
          %vm3665 = vweird.f32 %v3660
          %v3666 = vsel %vm3665, %v3660, %v3664
          %v3667 = vmul.f32 %v3659, %v3666
          %vm3668 = vcmask 0
          %3669 = vst.msk [vmem:[#allocation13] sm:$0x1] %vm3668, %v3667
        $region128: #{tpu_custom_call.1} parent=103 // pred_fallthru
          _
        // Predicated region
        $region129: #{tpu_custom_call.1} parent=103 // pred_check
          %p3670 = pneg %p524
        $region130: #{tpu_custom_call.1} parent=103 // pred_check_branch
          %3672 = sbr.rel (%p3670) target = $region132
        $region131: #{tpu_custom_call.1} parent=103 // pred_region
          _
        $region132: #{tpu_custom_call.1} parent=103 // pred_fallthru
          _
        // Predicated region
        $region133: #{tpu_custom_call.1} parent=103 // pred_check
          %p3673 = pneg %p545
        $region134: #{tpu_custom_call.1} parent=103 // pred_check_branch
          %3675 = sbr.rel (%p3673) target = $region136
        $region135: #{tpu_custom_call.1} parent=103 // pred_region
          %3677 = vsyncadd [#allocation9], 0
          %s3679 = sshll.u32 [#allocation13], 4
          %s3680 = int_to_ptr.vmem [resolvable:$true] %s3679
          %s3681 = sshll.u32 %s22, 4
          %s3682 = int_to_ptr.hbm [resolvable:$true] %s3681
          %3684 = dma.vmem_to_hbm [thread:$0]  %s3680, 16, %s3682, [#allocation9]
        $region136: #{tpu_custom_call.1} parent=103 // pred_fallthru
          _
        // Predicated region
        $region137: #{tpu_custom_call.1} parent=103 // pred_check
          %p3685 = pneg %p524
        $region138: #{tpu_custom_call.1} parent=103 // pred_check_branch
          %3687 = sbr.rel (%p3685) target = $region140
        $region139: #{tpu_custom_call.1} parent=103 // pred_region
          _
        $region140: #{tpu_custom_call.1} parent=103 // pred_fallthru
          _
        // Predicated region
        $region141: #{tpu_custom_call.1} parent=103 // pred_check
          %p3688 = pneg %p545
        $region142: #{tpu_custom_call.1} parent=103 // pred_check_branch
          %3690 = sbr.rel (%p3688) target = $region144
        $region143: #{tpu_custom_call.1} parent=103 // pred_region
          %3692 = dma.done [#allocation9], 16
        $region144: #{tpu_custom_call.1} parent=103 // pred_fallthru
          _
      $region104: #{tpu_custom_call.1} parent=5 // pred_fallthru
        _
      %p3693 = scmp.le.s32.totalorder 2, %s34
      // Predicated region
      $region145: #{tpu_custom_call.1} parent=5 // pred_check
        %p3694 = pneg %p3693
      $region146: #{tpu_custom_call.1} parent=5 // pred_check_branch
        %3696 = sbr.rel (%p3694) target = $region148
      $region147: #{tpu_custom_call.1} parent=5 // pred_region
        %s3697 = ssub.s32 %s34, 2
      $region148: #{tpu_custom_call.1} parent=5 // pred_fallthru
        _
    $region6: #{tpu_custom_call.1} parent=1 // loop_footer
      %s38 = sadd.s32 1, %s34
    $region7: #{tpu_custom_call.1} parent=1 // loop_footer_branch
      %33 = sbr.rel target = $region3
    $region8: #{tpu_custom_call.1} parent=1 // loop_exit
      _
    %3698 = vsyncpa [#allocation8], 1
    %s3699 = scalar_lea.sflag [#allocation8], 1
    %3700 = vsyncpa %s3699, 1
    %3701 = vsyncpa [#allocation11], 1
    %3702 = vsyncpa [#allocation9], 1
    %s3703 = scalar_lea.sflag [#allocation9], 1
    %3704 = vsyncpa %s3703, 1

// kernel: tpu_custom_call.1
$region0: #{tpu_custom_call.1}
  #allocation0 [shape = 'u32[]', space=smem, size = 0x4, offset = 0x4, fixed_abs, tag = 'smem constant byte address 0x4 - core index']
  #allocation1 [shape = 'u32[72,128]{1,0:T(1,128)}', space=vmem, size = 0x9000, scoped, tag = 'internal scratch']
  #allocation2 [shape = 'f32[128,128]{1,0:T(8,128)}', space=vmem, size = 0x10000, scoped, tag = 'scratch operand']
  #allocation3 [shape = 'f32[128,1]{1,0:T(8,128)}', space=vmem, size = 0x10000, scoped, tag = 'scratch operand']
  #allocation4 [shape = 'f32[2,256]{1,0:T(2,128)}', space=vmem, size = 0x800, scoped, tag = 'scratch operand']
  #allocation5 [shape = 'f32[128,128]{1,0:T(8,128)}', space=vmem, size = 0x10000, scoped, tag = 'scratch operand']
  #allocation6 [shape = 'f32[1,1]{1,0:T(1,128)S(1)}', space=vmem, size = 0x200, scoped, tag = 'scoped memory for tpu_custom_call.1']
  %s0 = inlined_call_operand.vmem [shape: f32[128,128], index: 0, kind: input, shape index: {}]
  %s1 = inlined_call_operand.hbm [shape: bf16[128,128], index: 1, kind: input, shape index: {}]
  %s2 = inlined_call_operand.hbm [shape: bf16[2,128], index: 2, kind: input, shape index: {}]
  %s3 = inlined_call_operand.vmem [shape: f32[128,2], index: 3, kind: input, shape index: {}]
  %s4 = inlined_call_operand.vmem [shape: f32[128,128], index: 4, kind: input, shape index: {}]
  %s5 = inlined_call_operand.vmem [shape: f32[2,128,128], index: 5, kind: input, shape index: {}]
  %s6 = inlined_call_operand.vmem [shape: f32[3,1,128], index: 6, kind: input, shape index: {}]
  %s7 = inlined_call_operand.hbm [shape: f32[3,1,128], index: 7, kind: input, shape index: {}]
  %s8 = inlined_call_operand.vmem [shape: f32[3,1,128], index: 8, kind: input, shape index: {}]
  %s9 = inlined_call_operand.vmem [shape: f32[3,1,1], index: 9, kind: input, shape index: {}]
  %s10 = inlined_call_operand.vmem [shape: f32[256,64], index: 10, kind: input, shape index: {}]
  %s11 = inlined_call_operand.vmem [shape: f32[1,64], index: 11, kind: input, shape index: {}]
  %s12 = inlined_call_operand.vmem [shape: f32[64,32], index: 12, kind: input, shape index: {}]
  %s13 = inlined_call_operand.vmem [shape: f32[1,32], index: 13, kind: input, shape index: {}]
  %s14 = inlined_call_operand.vmem [shape: f32[32,16], index: 14, kind: input, shape index: {}]
  %s15 = inlined_call_operand.vmem [shape: f32[1,16], index: 15, kind: input, shape index: {}]
  %s16 = inlined_call_operand.vmem [shape: f32[16,8], index: 16, kind: input, shape index: {}]
  %s17 = inlined_call_operand.vmem [shape: f32[1,8], index: 17, kind: input, shape index: {}]
  %s18 = inlined_call_operand.vmem [shape: f32[8,1], index: 18, kind: input, shape index: {}]
  %s19 = inlined_call_operand.<no memory space> [shape: f32[1,1], index: 19, kind: input, shape index: {}]
  %s20 = inlined_call_operand.vmem [shape: f32[2,1], index: 20, kind: input, shape index: {}]
  %s21 = inlined_call_operand.vmem [shape: f32[2,1], index: 21, kind: output, shape index: {0}]
  %s22 = inlined_call_operand.hbm [shape: f32[1,1], index: 22, kind: output, shape index: {1}]
  %23 = xla_tuple %s21, %s22
  %s24 = sld [smem:[#allocation0]]
  $region149: #{tpu_custom_call.1} parent=0
    _
  %s26 = ssub.s32 1, %s24
  %s27 = scalar_select 0, %s26, %s24
  %v28 = vstv %s19
  %29 = vst [vmem:[#allocation6] sm:$0x1] %v28
  $region1: #{tpu_custom_call.1} parent=0
    #allocation7 [shape = 'u8[32768]{0}', space=vmem, size = 0x8000, scoped, tag = 'input window, operand 1, single buffered']
    #allocation8 [shape = 's32[2]{0}', space=sflag, size = 0x8, scoped, tag = 'scoped memory for tpu_custom_call.1']
    #allocation9 [shape = 's32[2]{0}', space=sflag, size = 0x8, scoped, tag = 'scoped memory for tpu_custom_call.1']
    #allocation10 [shape = 'u8[512]{0}', space=vmem, size = 0x400, scoped, tag = 'input window, operand 2, single buffered']
    #allocation11 [shape = 's32[1]{0}', space=sflag, size = 0x4, scoped, tag = 'scoped memory for tpu_custom_call.1']
    #allocation12 [shape = 'u8[1024]{0}', space=vmem, size = 0x400, scoped, tag = 'input window, operand 7']
    #allocation13 [shape = 'u8[512]{0}', space=vmem, size = 0x400, scoped, tag = 'output window, operand 1, single buffered']
    %30 = vsyncpa [#allocation8], 0
    %31 = vsyncpa [#allocation11], 0
    %32 = vsyncpa [#allocation9], 0
    loop: start=0, step=1, limit=5
    $region2: #{tpu_custom_call.1} parent=1 // loop_pre_header
      _
    $region3: #{tpu_custom_call.1} parent=1 // loop_header
      %s34 = sphi 0, %s38
      %p35 = scmp.ge.s32.totalorder %s34, 5
      %s42 = sphi 0, %s42
      %s44 = sphi 0, %s42
      %s45 = sphi 0, %s44
      %s59 = sphi 0, %s45
      %s63 = sphi 0, %s63
      %s65 = sphi 0, %s63
      %s66 = sphi 0, %s65
      %s80 = sphi 0, %s66
      %s84 = sphi 0, %s84
      %s86 = sphi 0, %s84
      %s87 = sphi 0, %s86
      %s101 = sphi 0, %s87
      %s105 = sphi 0, %s105
      %s107 = sphi 0, %s105
      %s108 = sphi 0, %s107
      %s122 = sphi 0, %s108
      %s126 = sphi 0, %s126
      %s128 = sphi 0, %s126
      %s129 = sphi 0, %s128
      %s143 = sphi 0, %s129
      %s155 = sphi 0, %s157
      %s158 = sphi 0, %s155
      %s159 = sphi 0, %s158
      %s175 = sphi 0, %s159
      %s181 = sphi 0, %s183
      %s184 = sphi 0, %s181
      %s185 = sphi 0, %s184
      %s201 = sphi 0, %s185
      %s207 = sphi 0, %s209
      %s210 = sphi 0, %s207
      %s211 = sphi 0, %s210
      %s227 = sphi 0, %s211
      %s233 = sphi 0, %s235
      %s236 = sphi 0, %s233
      %s237 = sphi 0, %s236
      %s253 = sphi 0, %s237
      %s259 = sphi 0, %s261
      %s262 = sphi 0, %s259
      %s263 = sphi 0, %s262
      %s279 = sphi 0, %s263
      %s283 = sphi 0, %s283
      %s285 = sphi 0, %s283
      %s286 = sphi 0, %s285
      %s300 = sphi 0, %s286
      %s304 = sphi 0, %s304
      %s306 = sphi 0, %s304
      %s307 = sphi 0, %s306
      %s321 = sphi 0, %s307
      %s325 = sphi 0, %s325
      %s327 = sphi 0, %s325
      %s328 = sphi 0, %s327
      %s342 = sphi 0, %s328
      %s346 = sphi 0, %s346
      %s348 = sphi 0, %s346
      %s349 = sphi 0, %s348
      %s363 = sphi 0, %s349
      %s367 = sphi 0, %s367
      %s369 = sphi 0, %s367
      %s370 = sphi 0, %s369
      %s384 = sphi 0, %s370
      %s388 = sphi 0, %s388
      %s390 = sphi 0, %s388
      %s391 = sphi 0, %s390
      %s405 = sphi 0, %s391
      %s409 = sphi 0, %s409
      %s411 = sphi 0, %s409
      %s412 = sphi 0, %s411
      %s426 = sphi 0, %s412
      %s430 = sphi 0, %s430
      %s432 = sphi 0, %s430
      %s433 = sphi 0, %s432
      %s447 = sphi 0, %s433
      %s451 = sphi 0, %s451
      %s453 = sphi 0, %s451
      %s454 = sphi 0, %s453
      %s468 = sphi 0, %s454
      %s472 = sphi 0, %s472
      %s474 = sphi 0, %s472
      %s475 = sphi 0, %s474
      %s489 = sphi 0, %s475
      %s493 = sphi 0, %s493
      %s495 = sphi 0, %s493
      %s496 = sphi 0, %s495
      %s510 = sphi 0, %s496
      %s514 = sphi 0, %s514
      %s516 = sphi 0, %s514
      %s517 = sphi 0, %s516
      %s531 = sphi 0, %s517
      %s535 = sphi 0, %s535
      %s537 = sphi 0, %s535
      %s538 = sphi 0, %s537
      %s552 = sphi 0, %s538
    $region4: #{tpu_custom_call.1} parent=1 // loop_header_branch
      %37 = sbr.rel (%p35) target = $region8
    $region5: #{tpu_custom_call.1} parent=1 // loop_body
      %s39 = ssub.s32 %s34, 1
      %s40 = ssub.s32 %s34, 2
      %s41 = sadd.s32 %s34, 1
      %s43 = sadd.s32 %s42, 1
      %p46 = scmp.eq.s32.totalorder %s34, 2
      %p47 = scmp.ne.s32.totalorder %s42, %s44
      %p48 = scmp.eq.s32.totalorder %s34, 0
      %p49 = por %p47, %p48
      %p50 = scmp.ne.s32.totalorder %s42, %s44
      %p51 = scmp.eq.s32.totalorder %s39, 2
      %p52 = por %p50, %p51
      %p53 = scmp.ne.s32.totalorder %s44, %s45
      %p54 = scmp.eq.s32.totalorder %s39, 0
      %p55 = por %p53, %p54
      %p56 = scmp.ne.s32.totalorder %s44, %s45
      %p57 = scmp.eq.s32.totalorder %s40, 2
      %p58 = por %p56, %p57
      %p60 = scmp.ne.s32.totalorder %s45, %s59
      %p61 = scmp.eq.s32.totalorder %s40, 0
      %p62 = por %p60, %p61
      %s64 = sadd.s32 %s63, 1
      %p67 = scmp.eq.s32.totalorder %s34, 2
      %p68 = scmp.ne.s32.totalorder %s63, %s65
      %p69 = scmp.eq.s32.totalorder %s34, 0
      %p70 = por %p68, %p69
      %p71 = scmp.ne.s32.totalorder %s63, %s65
      %p72 = scmp.eq.s32.totalorder %s39, 2
      %p73 = por %p71, %p72
      %p74 = scmp.ne.s32.totalorder %s65, %s66
      %p75 = scmp.eq.s32.totalorder %s39, 0
      %p76 = por %p74, %p75
      %p77 = scmp.ne.s32.totalorder %s65, %s66
      %p78 = scmp.eq.s32.totalorder %s40, 2
      %p79 = por %p77, %p78
      %p81 = scmp.ne.s32.totalorder %s66, %s80
      %p82 = scmp.eq.s32.totalorder %s40, 0
      %p83 = por %p81, %p82
      %s85 = sadd.s32 %s84, 1
      %p88 = scmp.eq.s32.totalorder %s34, 2
      %p89 = scmp.ne.s32.totalorder %s84, %s86
      %p90 = scmp.eq.s32.totalorder %s34, 0
      %p91 = por %p89, %p90
      %p92 = scmp.ne.s32.totalorder %s84, %s86
      %p93 = scmp.eq.s32.totalorder %s39, 2
      %p94 = por %p92, %p93
      %p95 = scmp.ne.s32.totalorder %s86, %s87
      %p96 = scmp.eq.s32.totalorder %s39, 0
      %p97 = por %p95, %p96
      %p98 = scmp.ne.s32.totalorder %s86, %s87
      %p99 = scmp.eq.s32.totalorder %s40, 2
      %p100 = por %p98, %p99
      %p102 = scmp.ne.s32.totalorder %s87, %s101
      %p103 = scmp.eq.s32.totalorder %s40, 0
      %p104 = por %p102, %p103
      %s106 = sadd.s32 %s105, 1
      %p109 = scmp.eq.s32.totalorder %s34, 2
      %p110 = scmp.ne.s32.totalorder %s105, %s107
      %p111 = scmp.eq.s32.totalorder %s34, 0
      %p112 = por %p110, %p111
      %p113 = scmp.ne.s32.totalorder %s105, %s107
      %p114 = scmp.eq.s32.totalorder %s39, 2
      %p115 = por %p113, %p114
      %p116 = scmp.ne.s32.totalorder %s107, %s108
      %p117 = scmp.eq.s32.totalorder %s39, 0
      %p118 = por %p116, %p117
      %p119 = scmp.ne.s32.totalorder %s107, %s108
      %p120 = scmp.eq.s32.totalorder %s40, 2
      %p121 = por %p119, %p120
      %p123 = scmp.ne.s32.totalorder %s108, %s122
      %p124 = scmp.eq.s32.totalorder %s40, 0
      %p125 = por %p123, %p124
      %s127 = sadd.s32 %s126, 1
      %p130 = scmp.eq.s32.totalorder %s34, 2
      %p131 = scmp.ne.s32.totalorder %s126, %s128
      %p132 = scmp.eq.s32.totalorder %s34, 0
      %p133 = por %p131, %p132
      %p134 = scmp.ne.s32.totalorder %s126, %s128
      %p135 = scmp.eq.s32.totalorder %s39, 2
      %p136 = por %p134, %p135
      %p137 = scmp.ne.s32.totalorder %s128, %s129
      %p138 = scmp.eq.s32.totalorder %s39, 0
      %p139 = por %p137, %p138
      %p140 = scmp.ne.s32.totalorder %s128, %s129
      %p141 = scmp.eq.s32.totalorder %s40, 2
      %p142 = por %p140, %p141
      %p144 = scmp.ne.s32.totalorder %s129, %s143
      %p145 = scmp.eq.s32.totalorder %s40, 0
      %p146 = por %p144, %p145
      %s147 = ssub.s32 %s34, 1
      %p148 = scmp.gt.s32.totalorder %s147, 0
      %s149 = scalar_select %p148, %s147, 0
      %s150 = ssub.s32 %s41, 1
      %p151 = scmp.gt.s32.totalorder %s150, 0
      %s152 = scalar_select %p151, %s150, 0
      %s153 = ssub.s32 %s149, %s152
      %p154 = scmp.eq.s32.totalorder %s153, 0
      %s156 = sadd.s32 %s155, 1
      %s157 = scalar_select %p154, %s155, %s156
      %p160 = pneg %p154
      %p161 = scmp.eq.s32.totalorder %s34, 2
      %p162 = por %p160, %p161
      %p163 = scmp.ne.s32.totalorder %s155, %s158
      %p164 = scmp.eq.s32.totalorder %s34, 0
      %p165 = por %p163, %p164
      %p166 = scmp.ne.s32.totalorder %s155, %s158
      %p167 = scmp.eq.s32.totalorder %s39, 2
      %p168 = por %p166, %p167
      %p169 = scmp.ne.s32.totalorder %s158, %s159
      %p170 = scmp.eq.s32.totalorder %s39, 0
      %p171 = por %p169, %p170
      %p172 = scmp.ne.s32.totalorder %s158, %s159
      %p173 = scmp.eq.s32.totalorder %s40, 2
      %p174 = por %p172, %p173
      %p176 = scmp.ne.s32.totalorder %s159, %s175
      %p177 = scmp.eq.s32.totalorder %s40, 0
      %p178 = por %p176, %p177
      %s179 = ssub.s32 %s34, %s41
      %p180 = scmp.eq.s32.totalorder %s179, 0
      %s182 = sadd.s32 %s181, 1
      %s183 = scalar_select %p180, %s181, %s182
      %p186 = pneg %p180
      %p187 = scmp.eq.s32.totalorder %s34, 2
      %p188 = por %p186, %p187
      %p189 = scmp.ne.s32.totalorder %s181, %s184
      %p190 = scmp.eq.s32.totalorder %s34, 0
      %p191 = por %p189, %p190
      %p192 = scmp.ne.s32.totalorder %s181, %s184
      %p193 = scmp.eq.s32.totalorder %s39, 2
      %p194 = por %p192, %p193
      %p195 = scmp.ne.s32.totalorder %s184, %s185
      %p196 = scmp.eq.s32.totalorder %s39, 0
      %p197 = por %p195, %p196
      %p198 = scmp.ne.s32.totalorder %s184, %s185
      %p199 = scmp.eq.s32.totalorder %s40, 2
      %p200 = por %p198, %p199
      %p202 = scmp.ne.s32.totalorder %s185, %s201
      %p203 = scmp.eq.s32.totalorder %s40, 0
      %p204 = por %p202, %p203
      %s205 = ssub.s32 %s34, %s41
      %p206 = scmp.eq.s32.totalorder %s205, 0
      %s208 = sadd.s32 %s207, 1
      %s209 = scalar_select %p206, %s207, %s208
      %p212 = pneg %p206
      %p213 = scmp.eq.s32.totalorder %s34, 2
      %p214 = por %p212, %p213
      %p215 = scmp.ne.s32.totalorder %s207, %s210
      %p216 = scmp.eq.s32.totalorder %s34, 0
      %p217 = por %p215, %p216
      %p218 = scmp.ne.s32.totalorder %s207, %s210
      %p219 = scmp.eq.s32.totalorder %s39, 2
      %p220 = por %p218, %p219
      %p221 = scmp.ne.s32.totalorder %s210, %s211
      %p222 = scmp.eq.s32.totalorder %s39, 0
      %p223 = por %p221, %p222
      %p224 = scmp.ne.s32.totalorder %s210, %s211
      %p225 = scmp.eq.s32.totalorder %s40, 2
      %p226 = por %p224, %p225
      %p228 = scmp.ne.s32.totalorder %s211, %s227
      %p229 = scmp.eq.s32.totalorder %s40, 0
      %p230 = por %p228, %p229
      %s231 = ssub.s32 %s34, %s41
      %p232 = scmp.eq.s32.totalorder %s231, 0
      %s234 = sadd.s32 %s233, 1
      %s235 = scalar_select %p232, %s233, %s234
      %p238 = pneg %p232
      %p239 = scmp.eq.s32.totalorder %s34, 2
      %p240 = por %p238, %p239
      %p241 = scmp.ne.s32.totalorder %s233, %s236
      %p242 = scmp.eq.s32.totalorder %s34, 0
      %p243 = por %p241, %p242
      %p244 = scmp.ne.s32.totalorder %s233, %s236
      %p245 = scmp.eq.s32.totalorder %s39, 2
      %p246 = por %p244, %p245
      %p247 = scmp.ne.s32.totalorder %s236, %s237
      %p248 = scmp.eq.s32.totalorder %s39, 0
      %p249 = por %p247, %p248
      %p250 = scmp.ne.s32.totalorder %s236, %s237
      %p251 = scmp.eq.s32.totalorder %s40, 2
      %p252 = por %p250, %p251
      %p254 = scmp.ne.s32.totalorder %s237, %s253
      %p255 = scmp.eq.s32.totalorder %s40, 0
      %p256 = por %p254, %p255
      %s257 = ssub.s32 %s34, %s41
      %p258 = scmp.eq.s32.totalorder %s257, 0
      %s260 = sadd.s32 %s259, 1
      %s261 = scalar_select %p258, %s259, %s260
      %p264 = pneg %p258
      %p265 = scmp.eq.s32.totalorder %s34, 2
      %p266 = por %p264, %p265
      %p267 = scmp.ne.s32.totalorder %s259, %s262
      %p268 = scmp.eq.s32.totalorder %s34, 0
      %p269 = por %p267, %p268
      %p270 = scmp.ne.s32.totalorder %s259, %s262
      %p271 = scmp.eq.s32.totalorder %s39, 2
      %p272 = por %p270, %p271
      %p273 = scmp.ne.s32.totalorder %s262, %s263
      %p274 = scmp.eq.s32.totalorder %s39, 0
      %p275 = por %p273, %p274
      %p276 = scmp.ne.s32.totalorder %s262, %s263
      %p277 = scmp.eq.s32.totalorder %s40, 2
      %p278 = por %p276, %p277
      %p280 = scmp.ne.s32.totalorder %s263, %s279
      %p281 = scmp.eq.s32.totalorder %s40, 0
      %p282 = por %p280, %p281
      %s284 = sadd.s32 %s283, 1
      %p287 = scmp.eq.s32.totalorder %s34, 2
      %p288 = scmp.ne.s32.totalorder %s283, %s285
      %p289 = scmp.eq.s32.totalorder %s34, 0
      %p290 = por %p288, %p289
      %p291 = scmp.ne.s32.totalorder %s283, %s285
      %p292 = scmp.eq.s32.totalorder %s39, 2
      %p293 = por %p291, %p292
      %p294 = scmp.ne.s32.totalorder %s285, %s286
      %p295 = scmp.eq.s32.totalorder %s39, 0
      %p296 = por %p294, %p295
      %p297 = scmp.ne.s32.totalorder %s285, %s286
      %p298 = scmp.eq.s32.totalorder %s40, 2
      %p299 = por %p297, %p298
      %p301 = scmp.ne.s32.totalorder %s286, %s300
      %p302 = scmp.eq.s32.totalorder %s40, 0
      %p303 = por %p301, %p302
      %s305 = sadd.s32 %s304, 1
      %p308 = scmp.eq.s32.totalorder %s34, 2
      %p309 = scmp.ne.s32.totalorder %s304, %s306
      %p310 = scmp.eq.s32.totalorder %s34, 0
      %p311 = por %p309, %p310
      %p312 = scmp.ne.s32.totalorder %s304, %s306
      %p313 = scmp.eq.s32.totalorder %s39, 2
      %p314 = por %p312, %p313
      %p315 = scmp.ne.s32.totalorder %s306, %s307
      %p316 = scmp.eq.s32.totalorder %s39, 0
      %p317 = por %p315, %p316
      %p318 = scmp.ne.s32.totalorder %s306, %s307
      %p319 = scmp.eq.s32.totalorder %s40, 2
      %p320 = por %p318, %p319
      %p322 = scmp.ne.s32.totalorder %s307, %s321
      %p323 = scmp.eq.s32.totalorder %s40, 0
      %p324 = por %p322, %p323
      %s326 = sadd.s32 %s325, 1
      %p329 = scmp.eq.s32.totalorder %s34, 2
      %p330 = scmp.ne.s32.totalorder %s325, %s327
      %p331 = scmp.eq.s32.totalorder %s34, 0
      %p332 = por %p330, %p331
      %p333 = scmp.ne.s32.totalorder %s325, %s327
      %p334 = scmp.eq.s32.totalorder %s39, 2
      %p335 = por %p333, %p334
      %p336 = scmp.ne.s32.totalorder %s327, %s328
      %p337 = scmp.eq.s32.totalorder %s39, 0
      %p338 = por %p336, %p337
      %p339 = scmp.ne.s32.totalorder %s327, %s328
      %p340 = scmp.eq.s32.totalorder %s40, 2
      %p341 = por %p339, %p340
      %p343 = scmp.ne.s32.totalorder %s328, %s342
      %p344 = scmp.eq.s32.totalorder %s40, 0
      %p345 = por %p343, %p344
      %s347 = sadd.s32 %s346, 1
      %p350 = scmp.eq.s32.totalorder %s34, 2
      %p351 = scmp.ne.s32.totalorder %s346, %s348
      %p352 = scmp.eq.s32.totalorder %s34, 0
      %p353 = por %p351, %p352
      %p354 = scmp.ne.s32.totalorder %s346, %s348
      %p355 = scmp.eq.s32.totalorder %s39, 2
      %p356 = por %p354, %p355
      %p357 = scmp.ne.s32.totalorder %s348, %s349
      %p358 = scmp.eq.s32.totalorder %s39, 0
      %p359 = por %p357, %p358
      %p360 = scmp.ne.s32.totalorder %s348, %s349
      %p361 = scmp.eq.s32.totalorder %s40, 2
      %p362 = por %p360, %p361
      %p364 = scmp.ne.s32.totalorder %s349, %s363
      %p365 = scmp.eq.s32.totalorder %s40, 0
      %p366 = por %p364, %p365
      %s368 = sadd.s32 %s367, 1
      %p371 = scmp.eq.s32.totalorder %s34, 2
      %p372 = scmp.ne.s32.totalorder %s367, %s369
      %p373 = scmp.eq.s32.totalorder %s34, 0
      %p374 = por %p372, %p373
      %p375 = scmp.ne.s32.totalorder %s367, %s369
      %p376 = scmp.eq.s32.totalorder %s39, 2
      %p377 = por %p375, %p376
      %p378 = scmp.ne.s32.totalorder %s369, %s370
      %p379 = scmp.eq.s32.totalorder %s39, 0
      %p380 = por %p378, %p379
      %p381 = scmp.ne.s32.totalorder %s369, %s370
      %p382 = scmp.eq.s32.totalorder %s40, 2
      %p383 = por %p381, %p382
      %p385 = scmp.ne.s32.totalorder %s370, %s384
      %p386 = scmp.eq.s32.totalorder %s40, 0
      %p387 = por %p385, %p386
      %s389 = sadd.s32 %s388, 1
      %p392 = scmp.eq.s32.totalorder %s34, 2
      %p393 = scmp.ne.s32.totalorder %s388, %s390
      %p394 = scmp.eq.s32.totalorder %s34, 0
      %p395 = por %p393, %p394
      %p396 = scmp.ne.s32.totalorder %s388, %s390
      %p397 = scmp.eq.s32.totalorder %s39, 2
      %p398 = por %p396, %p397
      %p399 = scmp.ne.s32.totalorder %s390, %s391
      %p400 = scmp.eq.s32.totalorder %s39, 0
      %p401 = por %p399, %p400
      %p402 = scmp.ne.s32.totalorder %s390, %s391
      %p403 = scmp.eq.s32.totalorder %s40, 2
      %p404 = por %p402, %p403
      %p406 = scmp.ne.s32.totalorder %s391, %s405
      %p407 = scmp.eq.s32.totalorder %s40, 0
      %p408 = por %p406, %p407
      %s410 = sadd.s32 %s409, 1
      %p413 = scmp.eq.s32.totalorder %s34, 2
      %p414 = scmp.ne.s32.totalorder %s409, %s411
      %p415 = scmp.eq.s32.totalorder %s34, 0
      %p416 = por %p414, %p415
      %p417 = scmp.ne.s32.totalorder %s409, %s411
      %p418 = scmp.eq.s32.totalorder %s39, 2
      %p419 = por %p417, %p418
      %p420 = scmp.ne.s32.totalorder %s411, %s412
      %p421 = scmp.eq.s32.totalorder %s39, 0
      %p422 = por %p420, %p421
      %p423 = scmp.ne.s32.totalorder %s411, %s412
      %p424 = scmp.eq.s32.totalorder %s40, 2
      %p425 = por %p423, %p424
      %p427 = scmp.ne.s32.totalorder %s412, %s426
      %p428 = scmp.eq.s32.totalorder %s40, 0
      %p429 = por %p427, %p428
      %s431 = sadd.s32 %s430, 1
      %p434 = scmp.eq.s32.totalorder %s34, 2
      %p435 = scmp.ne.s32.totalorder %s430, %s432
      %p436 = scmp.eq.s32.totalorder %s34, 0
      %p437 = por %p435, %p436
      %p438 = scmp.ne.s32.totalorder %s430, %s432
      %p439 = scmp.eq.s32.totalorder %s39, 2
      %p440 = por %p438, %p439
      %p441 = scmp.ne.s32.totalorder %s432, %s433
      %p442 = scmp.eq.s32.totalorder %s39, 0
      %p443 = por %p441, %p442
      %p444 = scmp.ne.s32.totalorder %s432, %s433
      %p445 = scmp.eq.s32.totalorder %s40, 2
      %p446 = por %p444, %p445
      %p448 = scmp.ne.s32.totalorder %s433, %s447
      %p449 = scmp.eq.s32.totalorder %s40, 0
      %p450 = por %p448, %p449
      %s452 = sadd.s32 %s451, 1
      %p455 = scmp.eq.s32.totalorder %s34, 2
      %p456 = scmp.ne.s32.totalorder %s451, %s453
      %p457 = scmp.eq.s32.totalorder %s34, 0
      %p458 = por %p456, %p457
      %p459 = scmp.ne.s32.totalorder %s451, %s453
      %p460 = scmp.eq.s32.totalorder %s39, 2
      %p461 = por %p459, %p460
      %p462 = scmp.ne.s32.totalorder %s453, %s454
      %p463 = scmp.eq.s32.totalorder %s39, 0
      %p464 = por %p462, %p463
      %p465 = scmp.ne.s32.totalorder %s453, %s454
      %p466 = scmp.eq.s32.totalorder %s40, 2
      %p467 = por %p465, %p466
      %p469 = scmp.ne.s32.totalorder %s454, %s468
      %p470 = scmp.eq.s32.totalorder %s40, 0
      %p471 = por %p469, %p470
      %s473 = sadd.s32 %s472, 1
      %p476 = scmp.eq.s32.totalorder %s34, 2
      %p477 = scmp.ne.s32.totalorder %s472, %s474
      %p478 = scmp.eq.s32.totalorder %s34, 0
      %p479 = por %p477, %p478
      %p480 = scmp.ne.s32.totalorder %s472, %s474
      %p481 = scmp.eq.s32.totalorder %s39, 2
      %p482 = por %p480, %p481
      %p483 = scmp.ne.s32.totalorder %s474, %s475
      %p484 = scmp.eq.s32.totalorder %s39, 0
      %p485 = por %p483, %p484
      %p486 = scmp.ne.s32.totalorder %s474, %s475
      %p487 = scmp.eq.s32.totalorder %s40, 2
      %p488 = por %p486, %p487
      %p490 = scmp.ne.s32.totalorder %s475, %s489
      %p491 = scmp.eq.s32.totalorder %s40, 0
      %p492 = por %p490, %p491
      %s494 = sadd.s32 %s493, 1
      %p497 = scmp.eq.s32.totalorder %s34, 2
      %p498 = scmp.ne.s32.totalorder %s493, %s495
      %p499 = scmp.eq.s32.totalorder %s34, 0
      %p500 = por %p498, %p499
      %p501 = scmp.ne.s32.totalorder %s493, %s495
      %p502 = scmp.eq.s32.totalorder %s39, 2
      %p503 = por %p501, %p502
      %p504 = scmp.ne.s32.totalorder %s495, %s496
      %p505 = scmp.eq.s32.totalorder %s39, 0
      %p506 = por %p504, %p505
      %p507 = scmp.ne.s32.totalorder %s495, %s496
      %p508 = scmp.eq.s32.totalorder %s40, 2
      %p509 = por %p507, %p508
      %p511 = scmp.ne.s32.totalorder %s496, %s510
      %p512 = scmp.eq.s32.totalorder %s40, 0
      %p513 = por %p511, %p512
      %s515 = sadd.s32 %s514, 1
      %p518 = scmp.eq.s32.totalorder %s34, 2
      %p519 = scmp.ne.s32.totalorder %s514, %s516
      %p520 = scmp.eq.s32.totalorder %s34, 0
      %p521 = por %p519, %p520
      %p522 = scmp.ne.s32.totalorder %s514, %s516
      %p523 = scmp.eq.s32.totalorder %s39, 2
      %p524 = por %p522, %p523
      %p525 = scmp.ne.s32.totalorder %s516, %s517
      %p526 = scmp.eq.s32.totalorder %s39, 0
      %p527 = por %p525, %p526
      %p528 = scmp.ne.s32.totalorder %s516, %s517
      %p529 = scmp.eq.s32.totalorder %s40, 2
      %p530 = por %p528, %p529
      %p532 = scmp.ne.s32.totalorder %s517, %s531
      %p533 = scmp.eq.s32.totalorder %s40, 0
      %p534 = por %p532, %p533
      %s536 = sadd.s32 %s535, 1
      %p539 = scmp.eq.s32.totalorder %s34, 2
      %p540 = scmp.ne.s32.totalorder %s535, %s537
      %p541 = scmp.eq.s32.totalorder %s34, 0
      %p542 = por %p540, %p541
      %p543 = scmp.ne.s32.totalorder %s535, %s537
      %p544 = scmp.eq.s32.totalorder %s39, 2
      %p545 = por %p543, %p544
      %p546 = scmp.ne.s32.totalorder %s537, %s538
      %p547 = scmp.eq.s32.totalorder %s39, 0
      %p548 = por %p546, %p547
      %p549 = scmp.ne.s32.totalorder %s537, %s538
      %p550 = scmp.eq.s32.totalorder %s40, 2
      %p551 = por %p549, %p550
      %p553 = scmp.ne.s32.totalorder %s538, %s552
      %p554 = scmp.eq.s32.totalorder %s40, 0
      %p555 = por %p553, %p554
      %p556 = scmp.le.s32.totalorder 1, %s34
      %p557 = scmp.lt.s32.totalorder %s34, 4
      %p558 = pnand %p556, %p557
      %p559 = pneg %p558
      // Predicated region
      $region9: #{tpu_custom_call.1} parent=5 // pred_check
        _
      $region10: #{tpu_custom_call.1} parent=5 // pred_check_branch
        %561 = sbr.rel (%p558) target = $region12
      $region11: #{tpu_custom_call.1} parent=5 // pred_region
        %s562 = ssub.s32 %s34, 1
        // Predicated region
        $region13: #{tpu_custom_call.1} parent=11 // pred_check
          %p563 = pneg %p55
        $region14: #{tpu_custom_call.1} parent=11 // pred_check_branch
          %565 = sbr.rel (%p563) target = $region16
        $region15: #{tpu_custom_call.1} parent=11 // pred_region
          _
        $region16: #{tpu_custom_call.1} parent=11 // pred_fallthru
          _
        // Predicated region
        $region17: #{tpu_custom_call.1} parent=11 // pred_check
          %p566 = pneg %p76
        $region18: #{tpu_custom_call.1} parent=11 // pred_check_branch
          %568 = sbr.rel (%p566) target = $region20
        $region19: #{tpu_custom_call.1} parent=11 // pred_region
          %570 = vsyncadd [#allocation8], 0
          %s571 = sshll.u32 %s1, 4
          %s572 = int_to_ptr.hbm [resolvable:$true] %s571
          %s573 = sshll.u32 [#allocation7], 4
          %s574 = int_to_ptr.vmem [resolvable:$true] %s573
          %579 = dma.hbm_to_vmem [thread:$0]  %s572, 1024, %s574, [#allocation8], 64, 64, 4
        $region20: #{tpu_custom_call.1} parent=11 // pred_fallthru
          _
        // Predicated region
        $region21: #{tpu_custom_call.1} parent=11 // pred_check
          %p580 = pneg %p97
        $region22: #{tpu_custom_call.1} parent=11 // pred_check_branch
          %582 = sbr.rel (%p580) target = $region24
        $region23: #{tpu_custom_call.1} parent=11 // pred_region
          %584 = vsyncadd [#allocation11], 0
          %s586 = sshll.u32 %s2, 4
          %s587 = int_to_ptr.hbm [resolvable:$true] %s586
          %s588 = sshll.u32 [#allocation10], 4
          %s589 = int_to_ptr.vmem [resolvable:$true] %s588
          %591 = dma.hbm_to_vmem [thread:$0]  %s587, 16, %s589, [#allocation11]
        $region24: #{tpu_custom_call.1} parent=11 // pred_fallthru
          _
        // Predicated region
        $region25: #{tpu_custom_call.1} parent=11 // pred_check
          %p592 = pneg %p118
        $region26: #{tpu_custom_call.1} parent=11 // pred_check_branch
          %594 = sbr.rel (%p592) target = $region28
        $region27: #{tpu_custom_call.1} parent=11 // pred_region
          _
        $region28: #{tpu_custom_call.1} parent=11 // pred_fallthru
          _
        // Predicated region
        $region29: #{tpu_custom_call.1} parent=11 // pred_check
          %p595 = pneg %p139
        $region30: #{tpu_custom_call.1} parent=11 // pred_check_branch
          %597 = sbr.rel (%p595) target = $region32
        $region31: #{tpu_custom_call.1} parent=11 // pred_region
          _
        $region32: #{tpu_custom_call.1} parent=11 // pred_fallthru
          _
        // Predicated region
        $region33: #{tpu_custom_call.1} parent=11 // pred_check
          %p598 = pneg %p296
        $region34: #{tpu_custom_call.1} parent=11 // pred_check_branch
          %600 = sbr.rel (%p598) target = $region36
        $region35: #{tpu_custom_call.1} parent=11 // pred_region
          _
        $region36: #{tpu_custom_call.1} parent=11 // pred_fallthru
          _
        // Predicated region
        $region37: #{tpu_custom_call.1} parent=11 // pred_check
          %p601 = pneg %p317
        $region38: #{tpu_custom_call.1} parent=11 // pred_check_branch
          %603 = sbr.rel (%p601) target = $region40
        $region39: #{tpu_custom_call.1} parent=11 // pred_region
          _
        $region40: #{tpu_custom_call.1} parent=11 // pred_fallthru
          _
        // Predicated region
        $region41: #{tpu_custom_call.1} parent=11 // pred_check
          %p604 = pneg %p338
        $region42: #{tpu_custom_call.1} parent=11 // pred_check_branch
          %606 = sbr.rel (%p604) target = $region44
        $region43: #{tpu_custom_call.1} parent=11 // pred_region
          _
        $region44: #{tpu_custom_call.1} parent=11 // pred_fallthru
          _
        // Predicated region
        $region45: #{tpu_custom_call.1} parent=11 // pred_check
          %p607 = pneg %p359
        $region46: #{tpu_custom_call.1} parent=11 // pred_check_branch
          %609 = sbr.rel (%p607) target = $region48
        $region47: #{tpu_custom_call.1} parent=11 // pred_region
          _
        $region48: #{tpu_custom_call.1} parent=11 // pred_fallthru
          _
        // Predicated region
        $region49: #{tpu_custom_call.1} parent=11 // pred_check
          %p610 = pneg %p380
        $region50: #{tpu_custom_call.1} parent=11 // pred_check_branch
          %612 = sbr.rel (%p610) target = $region52
        $region51: #{tpu_custom_call.1} parent=11 // pred_region
          _
        $region52: #{tpu_custom_call.1} parent=11 // pred_fallthru
          _
        // Predicated region
        $region53: #{tpu_custom_call.1} parent=11 // pred_check
          %p613 = pneg %p401
        $region54: #{tpu_custom_call.1} parent=11 // pred_check_branch
          %615 = sbr.rel (%p613) target = $region56
        $region55: #{tpu_custom_call.1} parent=11 // pred_region
          _
        $region56: #{tpu_custom_call.1} parent=11 // pred_fallthru
          _
        // Predicated region
        $region57: #{tpu_custom_call.1} parent=11 // pred_check
          %p616 = pneg %p422
        $region58: #{tpu_custom_call.1} parent=11 // pred_check_branch
          %618 = sbr.rel (%p616) target = $region60
        $region59: #{tpu_custom_call.1} parent=11 // pred_region
          _
        $region60: #{tpu_custom_call.1} parent=11 // pred_fallthru
          _
        // Predicated region
        $region61: #{tpu_custom_call.1} parent=11 // pred_check
          %p619 = pneg %p443
        $region62: #{tpu_custom_call.1} parent=11 // pred_check_branch
          %621 = sbr.rel (%p619) target = $region64
        $region63: #{tpu_custom_call.1} parent=11 // pred_region
          _
        $region64: #{tpu_custom_call.1} parent=11 // pred_fallthru
          _
        // Predicated region
        $region65: #{tpu_custom_call.1} parent=11 // pred_check
          %p622 = pneg %p464
        $region66: #{tpu_custom_call.1} parent=11 // pred_check_branch
          %624 = sbr.rel (%p622) target = $region68
        $region67: #{tpu_custom_call.1} parent=11 // pred_region
          _
        $region68: #{tpu_custom_call.1} parent=11 // pred_fallthru
          _
        // Predicated region
        $region69: #{tpu_custom_call.1} parent=11 // pred_check
          %p625 = pneg %p485
        $region70: #{tpu_custom_call.1} parent=11 // pred_check_branch
          %627 = sbr.rel (%p625) target = $region72
        $region71: #{tpu_custom_call.1} parent=11 // pred_region
          _
        $region72: #{tpu_custom_call.1} parent=11 // pred_fallthru
          _
        // Predicated region
        $region73: #{tpu_custom_call.1} parent=11 // pred_check
          %p628 = pneg %p506
        $region74: #{tpu_custom_call.1} parent=11 // pred_check_branch
          %630 = sbr.rel (%p628) target = $region76
        $region75: #{tpu_custom_call.1} parent=11 // pred_region
          _
        $region76: #{tpu_custom_call.1} parent=11 // pred_fallthru
          _
      $region12: #{tpu_custom_call.1} parent=5 // pred_fallthru
        _
      %p631 = scmp.lt.s32.totalorder %s34, 3
      // Predicated region
      $region77: #{tpu_custom_call.1} parent=5 // pred_check
        %p632 = pneg %p631
      $region78: #{tpu_custom_call.1} parent=5 // pred_check_branch
        %634 = sbr.rel (%p632) target = $region80
      $region79: #{tpu_custom_call.1} parent=5 // pred_region
        // Predicated region
        $region81: #{tpu_custom_call.1} parent=79 // pred_check
          %p635 = pneg %p165
        $region82: #{tpu_custom_call.1} parent=79 // pred_check_branch
          %637 = sbr.rel (%p635) target = $region84
        $region83: #{tpu_custom_call.1} parent=79 // pred_region
          %s638 = ssub.s32 %s34, 1
          %p639 = scmp.gt.s32.totalorder %s638, 0
          %s640 = scalar_select %p639, %s638, 0
          %p641 = scmp.lt.s32.totalorder %s640, 1
          %s642 = scalar_select %p641, %s640, 1
          %s643 = smul.addr %s642, 16
          %s644 = smul.addr %s643, 8
          %s645 = scalar_lea.vmem %s5, %s644
          %s646 = ssub.s32 %s34, 1
          %p647 = scmp.gt.s32.totalorder %s646, 0
          %s648 = scalar_select %p647, %s646, 0
        $region84: #{tpu_custom_call.1} parent=79 // pred_fallthru
          _
        // Predicated region
        $region85: #{tpu_custom_call.1} parent=79 // pred_check
          %p649 = pneg %p191
        $region86: #{tpu_custom_call.1} parent=79 // pred_check_branch
          %651 = sbr.rel (%p649) target = $region88
        $region87: #{tpu_custom_call.1} parent=79 // pred_region
          %p652 = scmp.lt.s32.totalorder %s34, 2
          %s653 = scalar_select %p652, %s34, 2
          %s654 = scalar_lea.vmem %s6, %s653
        $region88: #{tpu_custom_call.1} parent=79 // pred_fallthru
          _
        // Predicated region
        $region89: #{tpu_custom_call.1} parent=79 // pred_check
          %p655 = pneg %p217
        $region90: #{tpu_custom_call.1} parent=79 // pred_check_branch
          %657 = sbr.rel (%p655) target = $region92
        $region91: #{tpu_custom_call.1} parent=79 // pred_region
          %s658 = sand.u32 %s34, 1
          %s659 = scalar_lea.sflag [#allocation8], %s658
          %s660 = sand.u32 %s207, 1
          %s661 = scalar_lea.vmem [#allocation12], %s660
          %663 = vsyncadd %s659, 0
          %s664 = scalar_lea.hbm %s7, %s34
          %s666 = sshll.u32 %s664, 4
          %s667 = int_to_ptr.hbm [resolvable:$true] %s666
          %s668 = sshll.u32 %s661, 4
          %s669 = int_to_ptr.vmem [resolvable:$true] %s668
          %671 = dma.hbm_to_vmem [thread:$0]  %s667, 16, %s669, %s659
        $region92: #{tpu_custom_call.1} parent=79 // pred_fallthru
          _
        // Predicated region
        $region93: #{tpu_custom_call.1} parent=79 // pred_check
          %p672 = pneg %p243
        $region94: #{tpu_custom_call.1} parent=79 // pred_check_branch
          %674 = sbr.rel (%p672) target = $region96
        $region95: #{tpu_custom_call.1} parent=79 // pred_region
          %p675 = scmp.lt.s32.totalorder %s34, 2
          %s676 = scalar_select %p675, %s34, 2
          %s677 = scalar_lea.vmem %s8, %s676
        $region96: #{tpu_custom_call.1} parent=79 // pred_fallthru
          _
        // Predicated region
        $region97: #{tpu_custom_call.1} parent=79 // pred_check
          %p678 = pneg %p269
        $region98: #{tpu_custom_call.1} parent=79 // pred_check_branch
          %680 = sbr.rel (%p678) target = $region100
        $region99: #{tpu_custom_call.1} parent=79 // pred_region
          %p681 = scmp.lt.s32.totalorder %s34, 2
          %s682 = scalar_select %p681, %s34, 2
          %s683 = scalar_lea.vmem %s9, %s682
        $region100: #{tpu_custom_call.1} parent=79 // pred_fallthru
          _
      $region80: #{tpu_custom_call.1} parent=5 // pred_fallthru
        _
      %p684 = scmp.le.s32.totalorder 1, %s34
      %p685 = scmp.lt.s32.totalorder %s34, 4
      %p686 = pnand %p684, %p685
      %p687 = pneg %p686
      // Predicated region
      $region101: #{tpu_custom_call.1} parent=5 // pred_check
        _
      $region102: #{tpu_custom_call.1} parent=5 // pred_check_branch
        %689 = sbr.rel (%p686) target = $region104
      $region103: #{tpu_custom_call.1} parent=5 // pred_region
        %s690 = ssub.s32 %s34, 1
        // Predicated region
        $region105: #{tpu_custom_call.1} parent=103 // pred_check
          %p691 = pneg %p76
        $region106: #{tpu_custom_call.1} parent=103 // pred_check_branch
          %693 = sbr.rel (%p691) target = $region108
        $region107: #{tpu_custom_call.1} parent=103 // pred_region
          %695 = dma.done [#allocation8], 1024
        $region108: #{tpu_custom_call.1} parent=103 // pred_fallthru
          _
        // Predicated region
        $region109: #{tpu_custom_call.1} parent=103 // pred_check
          %p696 = pneg %p97
        $region110: #{tpu_custom_call.1} parent=103 // pred_check_branch
          %698 = sbr.rel (%p696) target = $region112
        $region111: #{tpu_custom_call.1} parent=103 // pred_region
          %700 = dma.done [#allocation11], 16
        $region112: #{tpu_custom_call.1} parent=103 // pred_fallthru
          _
        %s701 = sand.u32 %s39, 1
        %s702 = scalar_lea.sflag [#allocation8], %s701
        %s703 = sand.u32 %s210, 1
        %s704 = scalar_lea.vmem [#allocation12], %s703
        // Predicated region
        $region113: #{tpu_custom_call.1} parent=103 // pred_check
          %p705 = pneg %p223
        $region114: #{tpu_custom_call.1} parent=103 // pred_check_branch
          %707 = sbr.rel (%p705) target = $region116
        $region115: #{tpu_custom_call.1} parent=103 // pred_region
          %709 = dma.done %s702, 16
        $region116: #{tpu_custom_call.1} parent=103 // pred_fallthru
          _
        %p710 = pneg %p55
        %p711 = pneg %p52
        %p712 = pneg %p76
        %p713 = pneg %p73
        %p714 = pneg %p97
        %p715 = pneg %p94
        %p716 = pneg %p118
        %p717 = pneg %p115
        %p718 = pneg %p139
        %p719 = pneg %p136
        %s720 = ssub.s32 %s39, 1
        %p721 = scmp.gt.s32.totalorder %s720, 0
        %s722 = scalar_select %p721, %s720, 0
        %p723 = scmp.lt.s32.totalorder %s722, 1
        %s724 = scalar_select %p723, %s722, 1
        %s725 = smul.addr %s724, 16
        %s726 = smul.addr %s725, 8
        %s727 = scalar_lea.vmem %s5, %s726
        %p728 = pneg %p171
        %p729 = pneg %p168
        %p730 = scmp.lt.s32.totalorder %s39, 2
        %s731 = scalar_select %p730, %s39, 2
        %s732 = scalar_lea.vmem %s6, %s731
        %p733 = pneg %p197
        %p734 = pneg %p194
        %s735 = sand.u32 %s39, 1
        %s736 = scalar_lea.sflag [#allocation8], %s735
        %s737 = sand.u32 %s210, 1
        %s738 = scalar_lea.vmem [#allocation12], %s737
        %p739 = pneg %p223
        %p740 = pneg %p220
        %p741 = scmp.lt.s32.totalorder %s39, 2
        %s742 = scalar_select %p741, %s39, 2
        %s743 = scalar_lea.vmem %s8, %s742
        %p744 = pneg %p249
        %p745 = pneg %p246
        %p746 = scmp.lt.s32.totalorder %s39, 2
        %s747 = scalar_select %p746, %s39, 2
        %s748 = scalar_lea.vmem %s9, %s747
        %p749 = pneg %p275
        %p750 = pneg %p272
        %p751 = pneg %p296
        %p752 = pneg %p293
        %p753 = pneg %p317
        %p754 = pneg %p314
        %p755 = pneg %p338
        %p756 = pneg %p335
        %p757 = pneg %p359
        %p758 = pneg %p356
        %p759 = pneg %p380
        %p760 = pneg %p377
        %p761 = pneg %p401
        %p762 = pneg %p398
        %p763 = pneg %p422
        %p764 = pneg %p419
        %p765 = pneg %p443
        %p766 = pneg %p440
        %p767 = pneg %p464
        %p768 = pneg %p461
        %p769 = pneg %p485
        %p770 = pneg %p482
        %p771 = pneg %p506
        %p772 = pneg %p503
        %p773 = pneg %p527
        %p774 = pneg %p524
        %p775 = pneg %p548
        %p776 = pneg %p545
        %s777 = ssub.s32 %s39, 1
        %p778 = scmp.gt.s32.totalorder %s777, 0
        %s779 = scalar_select %p778, %s777, 0
        %p780 = scmp.lt.s32.totalorder %s779, 1
        %s781 = scalar_select %p780, %s779, 1
        %s782 = smul.addr %s781, 16
        %s783 = smul.addr %s782, 8
        %s784 = scalar_lea.vmem %s5, %s783
        %s785 = ssub.s32 %s39, 1
        %p786 = scmp.gt.s32.totalorder %s785, 0
        %s787 = scalar_select %p786, %s785, 0
        %p788 = scmp.lt.s32.totalorder %s39, 2
        %s789 = scalar_select %p788, %s39, 2
        %s790 = scalar_lea.vmem %s6, %s789
        %p791 = scmp.lt.s32.totalorder %s39, 2
        %s792 = scalar_select %p791, %s39, 2
        %s793 = scalar_lea.vmem %s8, %s792
        %p794 = scmp.lt.s32.totalorder %s39, 2
        %s795 = scalar_select %p794, %s39, 2
        %s796 = scalar_lea.vmem %s9, %s795
        %p797 = scmp.eq.s32.totalorder %s39, 0
        // Predicated region
        $region117: #{tpu_custom_call.1} parent=103 // pred_check
          %p798 = pneg %p797
        $region118: #{tpu_custom_call.1} parent=103 // pred_check_branch
          %800 = sbr.rel (%p798) target = $region120
        $region119: #{tpu_custom_call.1} parent=103 // pred_region
          %v801 = vld [vmem:[%s3] sm:$0xff]
          %v802 = vld [vmem:[%s3 + $0x8] sm:$0xff]
          %v803 = vld [vmem:[%s3 + $0x10] sm:$0xff]
          %v804 = vld [vmem:[%s3 + $0x18] sm:$0xff]
          %v805 = vld [vmem:[%s3 + $0x20] sm:$0xff]
          %v806 = vld [vmem:[%s3 + $0x28] sm:$0xff]
          %v807 = vld [vmem:[%s3 + $0x30] sm:$0xff]
          %v808 = vld [vmem:[%s3 + $0x38] sm:$0xff]
          %v809 = vld [vmem:[%s3 + $0x40] sm:$0xff]
          %v810 = vld [vmem:[%s3 + $0x48] sm:$0xff]
          %v811 = vld [vmem:[%s3 + $0x50] sm:$0xff]
          %v812 = vld [vmem:[%s3 + $0x58] sm:$0xff]
          %v813 = vld [vmem:[%s3 + $0x60] sm:$0xff]
          %v814 = vld [vmem:[%s3 + $0x68] sm:$0xff]
          %v815 = vld [vmem:[%s3 + $0x70] sm:$0xff]
          %v816 = vld [vmem:[%s3 + $0x78] sm:$0xff]
          %vm817 = vcmask 15360
          %v818 = vsel %vm817, %v801, 0.0
          %819 = vadd.xlane.f32.xlu0 %v818
          %v820 = vpop.xlane.xlu0 %819
          %v821 = vsel %vm817, %v802, 0.0
          %822 = vadd.xlane.f32.xlu0 %v821
          %v823 = vpop.xlane.xlu0 %822
          %v824 = vsel %vm817, %v803, 0.0
          %825 = vadd.xlane.f32.xlu0 %v824
          %v826 = vpop.xlane.xlu0 %825
          %v827 = vsel %vm817, %v804, 0.0
          %828 = vadd.xlane.f32.xlu0 %v827
          %v829 = vpop.xlane.xlu0 %828
          %v830 = vsel %vm817, %v805, 0.0
          %831 = vadd.xlane.f32.xlu0 %v830
          %v832 = vpop.xlane.xlu0 %831
          %v833 = vsel %vm817, %v806, 0.0
          %834 = vadd.xlane.f32.xlu0 %v833
          %v835 = vpop.xlane.xlu0 %834
          %v836 = vsel %vm817, %v807, 0.0
          %837 = vadd.xlane.f32.xlu0 %v836
          %v838 = vpop.xlane.xlu0 %837
          %v839 = vsel %vm817, %v808, 0.0
          %840 = vadd.xlane.f32.xlu0 %v839
          %v841 = vpop.xlane.xlu0 %840
          %v842 = vsel %vm817, %v809, 0.0
          %843 = vadd.xlane.f32.xlu0 %v842
          %v844 = vpop.xlane.xlu0 %843
          %v845 = vsel %vm817, %v810, 0.0
          %846 = vadd.xlane.f32.xlu0 %v845
          %v847 = vpop.xlane.xlu0 %846
          %v848 = vsel %vm817, %v811, 0.0
          %849 = vadd.xlane.f32.xlu0 %v848
          %v850 = vpop.xlane.xlu0 %849
          %v851 = vsel %vm817, %v812, 0.0
          %852 = vadd.xlane.f32.xlu0 %v851
          %v853 = vpop.xlane.xlu0 %852
          %v854 = vsel %vm817, %v813, 0.0
          %855 = vadd.xlane.f32.xlu0 %v854
          %v856 = vpop.xlane.xlu0 %855
          %v857 = vsel %vm817, %v814, 0.0
          %858 = vadd.xlane.f32.xlu0 %v857
          %v859 = vpop.xlane.xlu0 %858
          %v860 = vsel %vm817, %v815, 0.0
          %861 = vadd.xlane.f32.xlu0 %v860
          %v862 = vpop.xlane.xlu0 %861
          %v863 = vsel %vm817, %v816, 0.0
          %864 = vadd.xlane.f32.xlu0 %v863
          %v865 = vpop.xlane.xlu0 %864
          %vm866 = vcmask 7168
          %867 = vst.msk [vmem:[#allocation3] sm:$0xff] %vm866, %v820
          %868 = vst.msk [vmem:[#allocation3 + $0x8] sm:$0xff] %vm866, %v823
          %869 = vst.msk [vmem:[#allocation3 + $0x10] sm:$0xff] %vm866, %v826
          %870 = vst.msk [vmem:[#allocation3 + $0x18] sm:$0xff] %vm866, %v829
          %871 = vst.msk [vmem:[#allocation3 + $0x20] sm:$0xff] %vm866, %v832
          %872 = vst.msk [vmem:[#allocation3 + $0x28] sm:$0xff] %vm866, %v835
          %873 = vst.msk [vmem:[#allocation3 + $0x30] sm:$0xff] %vm866, %v838
          %874 = vst.msk [vmem:[#allocation3 + $0x38] sm:$0xff] %vm866, %v841
          %875 = vst.msk [vmem:[#allocation3 + $0x40] sm:$0xff] %vm866, %v844
          %876 = vst.msk [vmem:[#allocation3 + $0x48] sm:$0xff] %vm866, %v847
          %877 = vst.msk [vmem:[#allocation3 + $0x50] sm:$0xff] %vm866, %v850
          %878 = vst.msk [vmem:[#allocation3 + $0x58] sm:$0xff] %vm866, %v853
          %879 = vst.msk [vmem:[#allocation3 + $0x60] sm:$0xff] %vm866, %v856
          %880 = vst.msk [vmem:[#allocation3 + $0x68] sm:$0xff] %vm866, %v859
          %881 = vst.msk [vmem:[#allocation3 + $0x70] sm:$0xff] %vm866, %v862
          %882 = vst.msk [vmem:[#allocation3 + $0x78] sm:$0xff] %vm866, %v865
          %883 = vst [vmem:[#allocation4] sm:$0xf] 0.0
          %v884 = vld [vmem:[%s0] sm:$0xff]
          %v885 = vld [vmem:[%s0 + $0x8] sm:$0xff]
          %v886 = vld [vmem:[%s0 + $0x10] sm:$0xff]
          %v887 = vld [vmem:[%s0 + $0x18] sm:$0xff]
          %v888 = vld [vmem:[%s0 + $0x20] sm:$0xff]
          %v889 = vld [vmem:[%s0 + $0x28] sm:$0xff]
          %v890 = vld [vmem:[%s0 + $0x30] sm:$0xff]
          %v891 = vld [vmem:[%s0 + $0x38] sm:$0xff]
          %v892 = vld [vmem:[%s0 + $0x40] sm:$0xff]
          %v893 = vld [vmem:[%s0 + $0x48] sm:$0xff]
          %v894 = vld [vmem:[%s0 + $0x50] sm:$0xff]
          %v895 = vld [vmem:[%s0 + $0x58] sm:$0xff]
          %v896 = vld [vmem:[%s0 + $0x60] sm:$0xff]
          %v897 = vld [vmem:[%s0 + $0x68] sm:$0xff]
          %v898 = vld [vmem:[%s0 + $0x70] sm:$0xff]
          %v899 = vld [vmem:[%s0 + $0x78] sm:$0xff]
          %v900 = vld [vmem:[%s4] sm:$0xff]
          %v901 = vld [vmem:[%s4 + $0x8] sm:$0xff]
          %v902 = vld [vmem:[%s4 + $0x10] sm:$0xff]
          %v903 = vld [vmem:[%s4 + $0x18] sm:$0xff]
          %v904 = vld [vmem:[%s4 + $0x20] sm:$0xff]
          %v905 = vld [vmem:[%s4 + $0x28] sm:$0xff]
          %v906 = vld [vmem:[%s4 + $0x30] sm:$0xff]
          %v907 = vld [vmem:[%s4 + $0x38] sm:$0xff]
          %v908 = vld [vmem:[%s4 + $0x40] sm:$0xff]
          %v909 = vld [vmem:[%s4 + $0x48] sm:$0xff]
          %v910 = vld [vmem:[%s4 + $0x50] sm:$0xff]
          %v911 = vld [vmem:[%s4 + $0x58] sm:$0xff]
          %v912 = vld [vmem:[%s4 + $0x60] sm:$0xff]
          %v913 = vld [vmem:[%s4 + $0x68] sm:$0xff]
          %v914 = vld [vmem:[%s4 + $0x70] sm:$0xff]
          %v915 = vld [vmem:[%s4 + $0x78] sm:$0xff]
          %916 = vmatpush.msra.mxu0 %v915
          %917 = vmatpush.msra.mxu0 %v914
          %918 = vmatpush.msra.mxu0 %v913
          %919 = vmatpush.msra.mxu0 %v912
          %920 = vmatpush.msra.mxu0 %v911
          %921 = vmatpush.msra.mxu0 %v910
          %922 = vmatpush.msra.mxu0 %v909
          %923 = vmatpush.msra.mxu0 %v908
          %924 = vmatpush.msra.mxu0 %v907
          %925 = vmatpush.msra.mxu0 %v906
          %926 = vmatpush.msra.mxu0 %v905
          %927 = vmatpush.msra.mxu0 %v904
          %928 = vmatpush.msra.mxu0 %v903
          %929 = vmatpush.msra.mxu0 %v902
          %930 = vmatpush.msra.mxu0 %v901
          %931 = vmatpush.msra.mxu0 %v900
          %932 = vmatmul.f32.gmra.mxu0 %v884
          %v933 = vpop.f32.mrf.mxu0
          %v934 = vadd.f32 0.0, %v933
          %935 = vmatmul.f32.gmra.mxu0 %v885
          %v936 = vpop.f32.mrf.mxu0
          %v937 = vadd.f32 0.0, %v936
          %938 = vmatmul.f32.gmra.mxu0 %v886
          %v939 = vpop.f32.mrf.mxu0
          %v940 = vadd.f32 0.0, %v939
          %941 = vmatmul.f32.gmra.mxu0 %v887
          %v942 = vpop.f32.mrf.mxu0
          %v943 = vadd.f32 0.0, %v942
          %944 = vmatmul.f32.gmra.mxu0 %v888
          %v945 = vpop.f32.mrf.mxu0
          %v946 = vadd.f32 0.0, %v945
          %947 = vmatmul.f32.gmra.mxu0 %v889
          %v948 = vpop.f32.mrf.mxu0
          %v949 = vadd.f32 0.0, %v948
          %950 = vmatmul.f32.gmra.mxu0 %v890
          %v951 = vpop.f32.mrf.mxu0
          %v952 = vadd.f32 0.0, %v951
          %953 = vmatmul.f32.gmra.mxu0 %v891
          %v954 = vpop.f32.mrf.mxu0
          %v955 = vadd.f32 0.0, %v954
          %956 = vmatmul.f32.gmra.mxu0 %v892
          %v957 = vpop.f32.mrf.mxu0
          %v958 = vadd.f32 0.0, %v957
          %959 = vmatmul.f32.gmra.mxu0 %v893
          %v960 = vpop.f32.mrf.mxu0
          %v961 = vadd.f32 0.0, %v960
          %962 = vmatmul.f32.gmra.mxu0 %v894
          %v963 = vpop.f32.mrf.mxu0
          %v964 = vadd.f32 0.0, %v963
          %965 = vmatmul.f32.gmra.mxu0 %v895
          %v966 = vpop.f32.mrf.mxu0
          %v967 = vadd.f32 0.0, %v966
          %968 = vmatmul.f32.gmra.mxu0 %v896
          %v969 = vpop.f32.mrf.mxu0
          %v970 = vadd.f32 0.0, %v969
          %971 = vmatmul.f32.gmra.mxu0 %v897
          %v972 = vpop.f32.mrf.mxu0
          %v973 = vadd.f32 0.0, %v972
          %974 = vmatmul.f32.gmra.mxu0 %v898
          %v975 = vpop.f32.mrf.mxu0
          %v976 = vadd.f32 0.0, %v975
          %977 = vmatmul.f32.gmra.mxu0 %v899
          %v978 = vpop.f32.mrf.mxu0
          %v979 = vadd.f32 0.0, %v978
          %980 = vdwg.mxu0
          %981 = vst [vmem:[#allocation5] sm:$0xff] %v934
          %982 = vst [vmem:[#allocation5 + $0x8] sm:$0xff] %v937
          %983 = vst [vmem:[#allocation5 + $0x10] sm:$0xff] %v940
          %984 = vst [vmem:[#allocation5 + $0x18] sm:$0xff] %v943
          %985 = vst [vmem:[#allocation5 + $0x20] sm:$0xff] %v946
          %986 = vst [vmem:[#allocation5 + $0x28] sm:$0xff] %v949
          %987 = vst [vmem:[#allocation5 + $0x30] sm:$0xff] %v952
          %988 = vst [vmem:[#allocation5 + $0x38] sm:$0xff] %v955
          %989 = vst [vmem:[#allocation5 + $0x40] sm:$0xff] %v958
          %990 = vst [vmem:[#allocation5 + $0x48] sm:$0xff] %v961
          %991 = vst [vmem:[#allocation5 + $0x50] sm:$0xff] %v964
          %992 = vst [vmem:[#allocation5 + $0x58] sm:$0xff] %v967
          %993 = vst [vmem:[#allocation5 + $0x60] sm:$0xff] %v970
          %994 = vst [vmem:[#allocation5 + $0x68] sm:$0xff] %v973
          %995 = vst [vmem:[#allocation5 + $0x70] sm:$0xff] %v976
          %996 = vst [vmem:[#allocation5 + $0x78] sm:$0xff] %v979
        $region120: #{tpu_custom_call.1} parent=103 // pred_fallthru
          _
        %p997 = scmp.gt.s32.totalorder %s39, 0
        // Predicated region
        $region121: #{tpu_custom_call.1} parent=103 // pred_check
          %p998 = pneg %p997
        $region122: #{tpu_custom_call.1} parent=103 // pred_check_branch
          %1000 = sbr.rel (%p998) target = $region124
        $region123: #{tpu_custom_call.1} parent=103 // pred_region
          %v1001 = vld [vmem:[#allocation2] sm:$0xff]
          %v1002 = vld [vmem:[#allocation2 + $0x8] sm:$0xff]
          %v1003 = vld [vmem:[#allocation2 + $0x10] sm:$0xff]
          %v1004 = vld [vmem:[#allocation2 + $0x18] sm:$0xff]
          %v1005 = vld [vmem:[#allocation2 + $0x20] sm:$0xff]
          %v1006 = vld [vmem:[#allocation2 + $0x28] sm:$0xff]
          %v1007 = vld [vmem:[#allocation2 + $0x30] sm:$0xff]
          %v1008 = vld [vmem:[#allocation2 + $0x38] sm:$0xff]
          %v1009 = vld [vmem:[#allocation2 + $0x40] sm:$0xff]
          %v1010 = vld [vmem:[#allocation2 + $0x48] sm:$0xff]
          %v1011 = vld [vmem:[#allocation2 + $0x50] sm:$0xff]
          %v1012 = vld [vmem:[#allocation2 + $0x58] sm:$0xff]
          %v1013 = vld [vmem:[#allocation2 + $0x60] sm:$0xff]
          %v1014 = vld [vmem:[#allocation2 + $0x68] sm:$0xff]
          %v1015 = vld [vmem:[#allocation2 + $0x70] sm:$0xff]
          %v1016 = vld [vmem:[#allocation2 + $0x78] sm:$0xff]
          %v1017 = vld [vmem:[%s784] sm:$0xff]
          %v1018 = vld [vmem:[%s784 + $0x8] sm:$0xff]
          %v1019 = vld [vmem:[%s784 + $0x10] sm:$0xff]
          %v1020 = vld [vmem:[%s784 + $0x18] sm:$0xff]
          %v1021 = vld [vmem:[%s784 + $0x20] sm:$0xff]
          %v1022 = vld [vmem:[%s784 + $0x28] sm:$0xff]
          %v1023 = vld [vmem:[%s784 + $0x30] sm:$0xff]
          %v1024 = vld [vmem:[%s784 + $0x38] sm:$0xff]
          %v1025 = vld [vmem:[%s784 + $0x40] sm:$0xff]
          %v1026 = vld [vmem:[%s784 + $0x48] sm:$0xff]
          %v1027 = vld [vmem:[%s784 + $0x50] sm:$0xff]
          %v1028 = vld [vmem:[%s784 + $0x58] sm:$0xff]
          %v1029 = vld [vmem:[%s784 + $0x60] sm:$0xff]
          %v1030 = vld [vmem:[%s784 + $0x68] sm:$0xff]
          %v1031 = vld [vmem:[%s784 + $0x70] sm:$0xff]
          %v1032 = vld [vmem:[%s784 + $0x78] sm:$0xff]
          %1033 = vmatpush.msra.mxu0 %v1032
          %1034 = vmatpush.msra.mxu0 %v1031
          %1035 = vmatpush.msra.mxu0 %v1030
          %1036 = vmatpush.msra.mxu0 %v1029
          %1037 = vmatpush.msra.mxu0 %v1028
          %1038 = vmatpush.msra.mxu0 %v1027
          %1039 = vmatpush.msra.mxu0 %v1026
          %1040 = vmatpush.msra.mxu0 %v1025
          %1041 = vmatpush.msra.mxu0 %v1024
          %1042 = vmatpush.msra.mxu0 %v1023
          %1043 = vmatpush.msra.mxu0 %v1022
          %1044 = vmatpush.msra.mxu0 %v1021
          %1045 = vmatpush.msra.mxu0 %v1020
          %1046 = vmatpush.msra.mxu0 %v1019
          %1047 = vmatpush.msra.mxu0 %v1018
          %1048 = vmatpush.msra.mxu0 %v1017
          %1049 = vmatmul.f32.gmra.mxu0 %v1001
          %v1050 = vpop.f32.mrf.mxu0
          %v1051 = vadd.f32 0.0, %v1050
          %1052 = vmatmul.f32.gmra.mxu0 %v1002
          %v1053 = vpop.f32.mrf.mxu0
          %v1054 = vadd.f32 0.0, %v1053
          %1055 = vmatmul.f32.gmra.mxu0 %v1003
          %v1056 = vpop.f32.mrf.mxu0
          %v1057 = vadd.f32 0.0, %v1056
          %1058 = vmatmul.f32.gmra.mxu0 %v1004
          %v1059 = vpop.f32.mrf.mxu0
          %v1060 = vadd.f32 0.0, %v1059
          %1061 = vmatmul.f32.gmra.mxu0 %v1005
          %v1062 = vpop.f32.mrf.mxu0
          %v1063 = vadd.f32 0.0, %v1062
          %1064 = vmatmul.f32.gmra.mxu0 %v1006
          %v1065 = vpop.f32.mrf.mxu0
          %v1066 = vadd.f32 0.0, %v1065
          %1067 = vmatmul.f32.gmra.mxu0 %v1007
          %v1068 = vpop.f32.mrf.mxu0
          %v1069 = vadd.f32 0.0, %v1068
          %1070 = vmatmul.f32.gmra.mxu0 %v1008
          %v1071 = vpop.f32.mrf.mxu0
          %v1072 = vadd.f32 0.0, %v1071
          %1073 = vmatmul.f32.gmra.mxu0 %v1009
          %v1074 = vpop.f32.mrf.mxu0
          %v1075 = vadd.f32 0.0, %v1074
          %1076 = vmatmul.f32.gmra.mxu0 %v1010
          %v1077 = vpop.f32.mrf.mxu0
          %v1078 = vadd.f32 0.0, %v1077
          %1079 = vmatmul.f32.gmra.mxu0 %v1011
          %v1080 = vpop.f32.mrf.mxu0
          %v1081 = vadd.f32 0.0, %v1080
          %1082 = vmatmul.f32.gmra.mxu0 %v1012
          %v1083 = vpop.f32.mrf.mxu0
          %v1084 = vadd.f32 0.0, %v1083
          %1085 = vmatmul.f32.gmra.mxu0 %v1013
          %v1086 = vpop.f32.mrf.mxu0
          %v1087 = vadd.f32 0.0, %v1086
          %1088 = vmatmul.f32.gmra.mxu0 %v1014
          %v1089 = vpop.f32.mrf.mxu0
          %v1090 = vadd.f32 0.0, %v1089
          %1091 = vmatmul.f32.gmra.mxu0 %v1015
          %v1092 = vpop.f32.mrf.mxu0
          %v1093 = vadd.f32 0.0, %v1092
          %1094 = vmatmul.f32.gmra.mxu0 %v1016
          %v1095 = vpop.f32.mrf.mxu0
          %v1096 = vadd.f32 0.0, %v1095
          %1097 = vdwg.mxu0
          %1098 = vst [vmem:[#allocation5] sm:$0xff] %v1051
          %1099 = vst [vmem:[#allocation5 + $0x8] sm:$0xff] %v1054
          %1100 = vst [vmem:[#allocation5 + $0x10] sm:$0xff] %v1057
          %1101 = vst [vmem:[#allocation5 + $0x18] sm:$0xff] %v1060
          %1102 = vst [vmem:[#allocation5 + $0x20] sm:$0xff] %v1063
          %1103 = vst [vmem:[#allocation5 + $0x28] sm:$0xff] %v1066
          %1104 = vst [vmem:[#allocation5 + $0x30] sm:$0xff] %v1069
          %1105 = vst [vmem:[#allocation5 + $0x38] sm:$0xff] %v1072
          %1106 = vst [vmem:[#allocation5 + $0x40] sm:$0xff] %v1075
          %1107 = vst [vmem:[#allocation5 + $0x48] sm:$0xff] %v1078
          %1108 = vst [vmem:[#allocation5 + $0x50] sm:$0xff] %v1081
          %1109 = vst [vmem:[#allocation5 + $0x58] sm:$0xff] %v1084
          %1110 = vst [vmem:[#allocation5 + $0x60] sm:$0xff] %v1087
          %1111 = vst [vmem:[#allocation5 + $0x68] sm:$0xff] %v1090
          %1112 = vst [vmem:[#allocation5 + $0x70] sm:$0xff] %v1093
          %1113 = vst [vmem:[#allocation5 + $0x78] sm:$0xff] %v1096
        $region124: #{tpu_custom_call.1} parent=103 // pred_fallthru
          _
        %v1114 = vld [vmem:[#allocation7] sm:$0xf]
        %v1115 = vld [vmem:[#allocation7 + $0x4] sm:$0xf]
        %v1116 = vld [vmem:[#allocation7 + $0x8] sm:$0xf]
        %v1117 = vld [vmem:[#allocation7 + $0xc] sm:$0xf]
        %v1118 = vld [vmem:[#allocation7 + $0x10] sm:$0xf]
        %v1119 = vld [vmem:[#allocation7 + $0x14] sm:$0xf]
        %v1120 = vld [vmem:[#allocation7 + $0x18] sm:$0xf]
        %v1121 = vld [vmem:[#allocation7 + $0x1c] sm:$0xf]
        %v1122 = vld [vmem:[#allocation7 + $0x20] sm:$0xf]
        %v1123 = vld [vmem:[#allocation7 + $0x24] sm:$0xf]
        %v1124 = vld [vmem:[#allocation7 + $0x28] sm:$0xf]
        %v1125 = vld [vmem:[#allocation7 + $0x2c] sm:$0xf]
        %v1126 = vld [vmem:[#allocation7 + $0x30] sm:$0xf]
        %v1127 = vld [vmem:[#allocation7 + $0x34] sm:$0xf]
        %v1128 = vld [vmem:[#allocation7 + $0x38] sm:$0xf]
        %v1129 = vld [vmem:[#allocation7 + $0x3c] sm:$0xf]
        %v1130 = vld [vmem:[#allocation3] sm:$0xff]
        %v1131 = vld [vmem:[#allocation3 + $0x8] sm:$0xff]
        %v1132 = vld [vmem:[#allocation3 + $0x10] sm:$0xff]
        %v1133 = vld [vmem:[#allocation3 + $0x18] sm:$0xff]
        %v1134 = vld [vmem:[#allocation3 + $0x20] sm:$0xff]
        %v1135 = vld [vmem:[#allocation3 + $0x28] sm:$0xff]
        %v1136 = vld [vmem:[#allocation3 + $0x30] sm:$0xff]
        %v1137 = vld [vmem:[#allocation3 + $0x38] sm:$0xff]
        %v1138 = vld [vmem:[#allocation3 + $0x40] sm:$0xff]
        %v1139 = vld [vmem:[#allocation3 + $0x48] sm:$0xff]
        %v1140 = vld [vmem:[#allocation3 + $0x50] sm:$0xff]
        %v1141 = vld [vmem:[#allocation3 + $0x58] sm:$0xff]
        %v1142 = vld [vmem:[#allocation3 + $0x60] sm:$0xff]
        %v1143 = vld [vmem:[#allocation3 + $0x68] sm:$0xff]
        %v1144 = vld [vmem:[#allocation3 + $0x70] sm:$0xff]
        %v1145 = vld [vmem:[#allocation3 + $0x78] sm:$0xff]
        %v1146 = vld [vmem:[#allocation5] sm:$0xff]
        %v1147 = vld [vmem:[#allocation5 + $0x8] sm:$0xff]
        %v1148 = vld [vmem:[#allocation5 + $0x10] sm:$0xff]
        %v1149 = vld [vmem:[#allocation5 + $0x18] sm:$0xff]
        %v1150 = vld [vmem:[#allocation5 + $0x20] sm:$0xff]
        %v1151 = vld [vmem:[#allocation5 + $0x28] sm:$0xff]
        %v1152 = vld [vmem:[#allocation5 + $0x30] sm:$0xff]
        %v1153 = vld [vmem:[#allocation5 + $0x38] sm:$0xff]
        %v1154 = vld [vmem:[#allocation5 + $0x40] sm:$0xff]
        %v1155 = vld [vmem:[#allocation5 + $0x48] sm:$0xff]
        %v1156 = vld [vmem:[#allocation5 + $0x50] sm:$0xff]
        %v1157 = vld [vmem:[#allocation5 + $0x58] sm:$0xff]
        %v1158 = vld [vmem:[#allocation5 + $0x60] sm:$0xff]
        %v1159 = vld [vmem:[#allocation5 + $0x68] sm:$0xff]
        %v1160 = vld [vmem:[#allocation5 + $0x70] sm:$0xff]
        %v1161 = vld [vmem:[#allocation5 + $0x78] sm:$0xff]
        %v1162 = vpack.c.bf16 %v1131, %v1130
        %v1163 = vpack.c.bf16 %v1133, %v1132
        %v1164 = vpack.c.bf16 %v1135, %v1134
        %v1165 = vpack.c.bf16 %v1137, %v1136
        %v1166 = vpack.c.bf16 %v1139, %v1138
        %v1167 = vpack.c.bf16 %v1141, %v1140
        %v1168 = vpack.c.bf16 %v1143, %v1142
        %v1169 = vpack.c.bf16 %v1145, %v1144
        %v1186 = vunpack.c.l.b16 %v1114
        %v1187 = vunpack.c.l.b16 %v1115
        %v1188 = vunpack.c.l.b16 %v1116
        %v1189 = vunpack.c.l.b16 %v1117
        %v1190 = vunpack.c.l.b16 %v1118
        %v1191 = vunpack.c.l.b16 %v1119
        %v1192 = vunpack.c.l.b16 %v1120
        %v1193 = vunpack.c.l.b16 %v1121
        %v1194 = vunpack.c.l.b16 %v1122
        %v1195 = vunpack.c.l.b16 %v1123
        %v1196 = vunpack.c.l.b16 %v1124
        %v1197 = vunpack.c.l.b16 %v1125
        %v1198 = vunpack.c.l.b16 %v1126
        %v1199 = vunpack.c.l.b16 %v1127
        %v1200 = vunpack.c.l.b16 %v1128
        %v1201 = vunpack.c.l.b16 %v1129
        %v1202 = vpack.c.b16 %v1187, %v1186
        %v1203 = vpack.c.b16 %v1189, %v1188
        %v1204 = vpack.c.b16 %v1191, %v1190
        %v1205 = vpack.c.b16 %v1193, %v1192
        %v1206 = vpack.c.b16 %v1195, %v1194
        %v1207 = vpack.c.b16 %v1197, %v1196
        %v1208 = vpack.c.b16 %v1199, %v1198
        %v1209 = vpack.c.b16 %v1201, %v1200
        %1218 = vmatpush.bf16.msra.mxu0 %v1169
        %1219 = vmatpush.bf16.msra.mxu0 %v1168
        %1220 = vmatpush.bf16.msra.mxu0 %v1167
        %1221 = vmatpush.bf16.msra.mxu0 %v1166
        %1222 = vmatpush.bf16.msra.mxu0 %v1165
        %1223 = vmatpush.bf16.msra.mxu0 %v1164
        %1224 = vmatpush.bf16.msra.mxu0 %v1163
        %1225 = vmatpush.bf16.msra.mxu0 %v1162
        %1226 = vmatmul.bf16.gmra.mxu0 %v1202
        %v1227 = vpop.f32.mrf.mxu0
        %v1228 = vadd.f32 0.0, %v1227
        %v1229 = vpop.f32.mrf.mxu0
        %v1230 = vadd.f32 0.0, %v1229
        %1231 = vmatmul.bf16.gmra.mxu0 %v1203
        %v1232 = vpop.f32.mrf.mxu0
        %v1233 = vadd.f32 0.0, %v1232
        %v1234 = vpop.f32.mrf.mxu0
        %v1235 = vadd.f32 0.0, %v1234
        %1236 = vmatmul.bf16.gmra.mxu0 %v1204
        %v1237 = vpop.f32.mrf.mxu0
        %v1238 = vadd.f32 0.0, %v1237
        %v1239 = vpop.f32.mrf.mxu0
        %v1240 = vadd.f32 0.0, %v1239
        %1241 = vmatmul.bf16.gmra.mxu0 %v1205
        %v1242 = vpop.f32.mrf.mxu0
        %v1243 = vadd.f32 0.0, %v1242
        %v1244 = vpop.f32.mrf.mxu0
        %v1245 = vadd.f32 0.0, %v1244
        %1246 = vmatmul.bf16.gmra.mxu0 %v1206
        %v1247 = vpop.f32.mrf.mxu0
        %v1248 = vadd.f32 0.0, %v1247
        %v1249 = vpop.f32.mrf.mxu0
        %v1250 = vadd.f32 0.0, %v1249
        %1251 = vmatmul.bf16.gmra.mxu0 %v1207
        %v1252 = vpop.f32.mrf.mxu0
        %v1253 = vadd.f32 0.0, %v1252
        %v1254 = vpop.f32.mrf.mxu0
        %v1255 = vadd.f32 0.0, %v1254
        %1256 = vmatmul.bf16.gmra.mxu0 %v1208
        %v1257 = vpop.f32.mrf.mxu0
        %v1258 = vadd.f32 0.0, %v1257
        %v1259 = vpop.f32.mrf.mxu0
        %v1260 = vadd.f32 0.0, %v1259
        %1261 = vmatmul.bf16.gmra.mxu0 %v1209
        %v1262 = vpop.f32.mrf.mxu0
        %v1263 = vadd.f32 0.0, %v1262
        %v1264 = vpop.f32.mrf.mxu0
        %v1265 = vadd.f32 0.0, %v1264
        %1266 = vdwg.mxu0
        %v1267 = vmul.f32 %v1130, %v1228
        %v1268 = vmul.f32 %v1131, %v1230
        %v1269 = vmul.f32 %v1132, %v1233
        %v1270 = vmul.f32 %v1133, %v1235
        %v1271 = vmul.f32 %v1134, %v1238
        %v1272 = vmul.f32 %v1135, %v1240
        %v1273 = vmul.f32 %v1136, %v1243
        %v1274 = vmul.f32 %v1137, %v1245
        %v1275 = vmul.f32 %v1138, %v1248
        %v1276 = vmul.f32 %v1139, %v1250
        %v1277 = vmul.f32 %v1140, %v1253
        %v1278 = vmul.f32 %v1141, %v1255
        %v1279 = vmul.f32 %v1142, %v1258
        %v1280 = vmul.f32 %v1143, %v1260
        %v1281 = vmul.f32 %v1144, %v1263
        %v1282 = vmul.f32 %v1145, %v1265
        %v1283 = vadd.f32 %v1267, %v1130
        %v1284 = vadd.f32 %v1268, %v1131
        %v1285 = vadd.f32 %v1269, %v1132
        %v1286 = vadd.f32 %v1270, %v1133
        %v1287 = vadd.f32 %v1271, %v1134
        %v1288 = vadd.f32 %v1272, %v1135
        %v1289 = vadd.f32 %v1273, %v1136
        %v1290 = vadd.f32 %v1274, %v1137
        %v1291 = vadd.f32 %v1275, %v1138
        %v1292 = vadd.f32 %v1276, %v1139
        %v1293 = vadd.f32 %v1277, %v1140
        %v1294 = vadd.f32 %v1278, %v1141
        %v1295 = vadd.f32 %v1279, %v1142
        %v1296 = vadd.f32 %v1280, %v1143
        %v1297 = vadd.f32 %v1281, %v1144
        %v1298 = vadd.f32 %v1282, %v1145
        %vm1299 = vcmp.gt.f32.partialorder %v1283, 0.0
        %vm1300 = vcmp.gt.f32.partialorder %v1284, 0.0
        %vm1301 = vcmp.gt.f32.partialorder %v1285, 0.0
        %vm1302 = vcmp.gt.f32.partialorder %v1286, 0.0
        %vm1303 = vcmp.gt.f32.partialorder %v1287, 0.0
        %vm1304 = vcmp.gt.f32.partialorder %v1288, 0.0
        %vm1305 = vcmp.gt.f32.partialorder %v1289, 0.0
        %vm1306 = vcmp.gt.f32.partialorder %v1290, 0.0
        %vm1307 = vcmp.gt.f32.partialorder %v1291, 0.0
        %vm1308 = vcmp.gt.f32.partialorder %v1292, 0.0
        %vm1309 = vcmp.gt.f32.partialorder %v1293, 0.0
        %vm1310 = vcmp.gt.f32.partialorder %v1294, 0.0
        %vm1311 = vcmp.gt.f32.partialorder %v1295, 0.0
        %vm1312 = vcmp.gt.f32.partialorder %v1296, 0.0
        %vm1313 = vcmp.gt.f32.partialorder %v1297, 0.0
        %vm1314 = vcmp.gt.f32.partialorder %v1298, 0.0
        %v1315 = vrsqrt.pop %v1283
        %v1316 = vmul.f32 %v1315, %v1283
        %v1317 = vmul.f32 %v1316, %v1315
        %v1318 = vmul.f32 0.5, %v1317
        %v1319 = vsub.f32 1.5, %v1318
        %v1320 = vmul.f32 %v1315, %v1319
        %vm1321 = vweird.f32 %v1283
        %vm1322 = vweird.f32 %v1315
        %vm1323 = vmor %vm1321, %vm1322
        %v1324 = vsel %vm1323, %v1315, %v1320
        %v1325 = vrsqrt.pop %v1284
        %v1326 = vmul.f32 %v1325, %v1284
        %v1327 = vmul.f32 %v1326, %v1325
        %v1328 = vmul.f32 0.5, %v1327
        %v1329 = vsub.f32 1.5, %v1328
        %v1330 = vmul.f32 %v1325, %v1329
        %vm1331 = vweird.f32 %v1284
        %vm1332 = vweird.f32 %v1325
        %vm1333 = vmor %vm1331, %vm1332
        %v1334 = vsel %vm1333, %v1325, %v1330
        %v1335 = vrsqrt.pop %v1285
        %v1336 = vmul.f32 %v1335, %v1285
        %v1337 = vmul.f32 %v1336, %v1335
        %v1338 = vmul.f32 0.5, %v1337
        %v1339 = vsub.f32 1.5, %v1338
        %v1340 = vmul.f32 %v1335, %v1339
        %vm1341 = vweird.f32 %v1285
        %vm1342 = vweird.f32 %v1335
        %vm1343 = vmor %vm1341, %vm1342
        %v1344 = vsel %vm1343, %v1335, %v1340
        %v1345 = vrsqrt.pop %v1286
        %v1346 = vmul.f32 %v1345, %v1286
        %v1347 = vmul.f32 %v1346, %v1345
        %v1348 = vmul.f32 0.5, %v1347
        %v1349 = vsub.f32 1.5, %v1348
        %v1350 = vmul.f32 %v1345, %v1349
        %vm1351 = vweird.f32 %v1286
        %vm1352 = vweird.f32 %v1345
        %vm1353 = vmor %vm1351, %vm1352
        %v1354 = vsel %vm1353, %v1345, %v1350
        %v1355 = vrsqrt.pop %v1287
        %v1356 = vmul.f32 %v1355, %v1287
        %v1357 = vmul.f32 %v1356, %v1355
        %v1358 = vmul.f32 0.5, %v1357
        %v1359 = vsub.f32 1.5, %v1358
        %v1360 = vmul.f32 %v1355, %v1359
        %vm1361 = vweird.f32 %v1287
        %vm1362 = vweird.f32 %v1355
        %vm1363 = vmor %vm1361, %vm1362
        %v1364 = vsel %vm1363, %v1355, %v1360
        %v1365 = vrsqrt.pop %v1288
        %v1366 = vmul.f32 %v1365, %v1288
        %v1367 = vmul.f32 %v1366, %v1365
        %v1368 = vmul.f32 0.5, %v1367
        %v1369 = vsub.f32 1.5, %v1368
        %v1370 = vmul.f32 %v1365, %v1369
        %vm1371 = vweird.f32 %v1288
        %vm1372 = vweird.f32 %v1365
        %vm1373 = vmor %vm1371, %vm1372
        %v1374 = vsel %vm1373, %v1365, %v1370
        %v1375 = vrsqrt.pop %v1289
        %v1376 = vmul.f32 %v1375, %v1289
        %v1377 = vmul.f32 %v1376, %v1375
        %v1378 = vmul.f32 0.5, %v1377
        %v1379 = vsub.f32 1.5, %v1378
        %v1380 = vmul.f32 %v1375, %v1379
        %vm1381 = vweird.f32 %v1289
        %vm1382 = vweird.f32 %v1375
        %vm1383 = vmor %vm1381, %vm1382
        %v1384 = vsel %vm1383, %v1375, %v1380
        %v1385 = vrsqrt.pop %v1290
        %v1386 = vmul.f32 %v1385, %v1290
        %v1387 = vmul.f32 %v1386, %v1385
        %v1388 = vmul.f32 0.5, %v1387
        %v1389 = vsub.f32 1.5, %v1388
        %v1390 = vmul.f32 %v1385, %v1389
        %vm1391 = vweird.f32 %v1290
        %vm1392 = vweird.f32 %v1385
        %vm1393 = vmor %vm1391, %vm1392
        %v1394 = vsel %vm1393, %v1385, %v1390
        %v1395 = vrsqrt.pop %v1291
        %v1396 = vmul.f32 %v1395, %v1291
        %v1397 = vmul.f32 %v1396, %v1395
        %v1398 = vmul.f32 0.5, %v1397
        %v1399 = vsub.f32 1.5, %v1398
        %v1400 = vmul.f32 %v1395, %v1399
        %vm1401 = vweird.f32 %v1291
        %vm1402 = vweird.f32 %v1395
        %vm1403 = vmor %vm1401, %vm1402
        %v1404 = vsel %vm1403, %v1395, %v1400
        %v1405 = vrsqrt.pop %v1292
        %v1406 = vmul.f32 %v1405, %v1292
        %v1407 = vmul.f32 %v1406, %v1405
        %v1408 = vmul.f32 0.5, %v1407
        %v1409 = vsub.f32 1.5, %v1408
        %v1410 = vmul.f32 %v1405, %v1409
        %vm1411 = vweird.f32 %v1292
        %vm1412 = vweird.f32 %v1405
        %vm1413 = vmor %vm1411, %vm1412
        %v1414 = vsel %vm1413, %v1405, %v1410
        %v1415 = vrsqrt.pop %v1293
        %v1416 = vmul.f32 %v1415, %v1293
        %v1417 = vmul.f32 %v1416, %v1415
        %v1418 = vmul.f32 0.5, %v1417
        %v1419 = vsub.f32 1.5, %v1418
        %v1420 = vmul.f32 %v1415, %v1419
        %vm1421 = vweird.f32 %v1293
        %vm1422 = vweird.f32 %v1415
        %vm1423 = vmor %vm1421, %vm1422
        %v1424 = vsel %vm1423, %v1415, %v1420
        %v1425 = vrsqrt.pop %v1294
        %v1426 = vmul.f32 %v1425, %v1294
        %v1427 = vmul.f32 %v1426, %v1425
        %v1428 = vmul.f32 0.5, %v1427
        %v1429 = vsub.f32 1.5, %v1428
        %v1430 = vmul.f32 %v1425, %v1429
        %vm1431 = vweird.f32 %v1294
        %vm1432 = vweird.f32 %v1425
        %vm1433 = vmor %vm1431, %vm1432
        %v1434 = vsel %vm1433, %v1425, %v1430
        %v1435 = vrsqrt.pop %v1295
        %v1436 = vmul.f32 %v1435, %v1295
        %v1437 = vmul.f32 %v1436, %v1435
        %v1438 = vmul.f32 0.5, %v1437
        %v1439 = vsub.f32 1.5, %v1438
        %v1440 = vmul.f32 %v1435, %v1439
        %vm1441 = vweird.f32 %v1295
        %vm1442 = vweird.f32 %v1435
        %vm1443 = vmor %vm1441, %vm1442
        %v1444 = vsel %vm1443, %v1435, %v1440
        %v1445 = vrsqrt.pop %v1296
        %v1446 = vmul.f32 %v1445, %v1296
        %v1447 = vmul.f32 %v1446, %v1445
        %v1448 = vmul.f32 0.5, %v1447
        %v1449 = vsub.f32 1.5, %v1448
        %v1450 = vmul.f32 %v1445, %v1449
        %vm1451 = vweird.f32 %v1296
        %vm1452 = vweird.f32 %v1445
        %vm1453 = vmor %vm1451, %vm1452
        %v1454 = vsel %vm1453, %v1445, %v1450
        %v1455 = vrsqrt.pop %v1297
        %v1456 = vmul.f32 %v1455, %v1297
        %v1457 = vmul.f32 %v1456, %v1455
        %v1458 = vmul.f32 0.5, %v1457
        %v1459 = vsub.f32 1.5, %v1458
        %v1460 = vmul.f32 %v1455, %v1459
        %vm1461 = vweird.f32 %v1297
        %vm1462 = vweird.f32 %v1455
        %vm1463 = vmor %vm1461, %vm1462
        %v1464 = vsel %vm1463, %v1455, %v1460
        %v1465 = vrsqrt.pop %v1298
        %v1466 = vmul.f32 %v1465, %v1298
        %v1467 = vmul.f32 %v1466, %v1465
        %v1468 = vmul.f32 0.5, %v1467
        %v1469 = vsub.f32 1.5, %v1468
        %v1470 = vmul.f32 %v1465, %v1469
        %vm1471 = vweird.f32 %v1298
        %vm1472 = vweird.f32 %v1465
        %vm1473 = vmor %vm1471, %vm1472
        %v1474 = vsel %vm1473, %v1465, %v1470
        %v1475 = vsel %vm1299, %v1324, 0.0
        %v1476 = vsel %vm1300, %v1334, 0.0
        %v1477 = vsel %vm1301, %v1344, 0.0
        %v1478 = vsel %vm1302, %v1354, 0.0
        %v1479 = vsel %vm1303, %v1364, 0.0
        %v1480 = vsel %vm1304, %v1374, 0.0
        %v1481 = vsel %vm1305, %v1384, 0.0
        %v1482 = vsel %vm1306, %v1394, 0.0
        %v1483 = vsel %vm1307, %v1404, 0.0
        %v1484 = vsel %vm1308, %v1414, 0.0
        %v1485 = vsel %vm1309, %v1424, 0.0
        %v1486 = vsel %vm1310, %v1434, 0.0
        %v1487 = vsel %vm1311, %v1444, 0.0
        %v1488 = vsel %vm1312, %v1454, 0.0
        %v1489 = vsel %vm1313, %v1464, 0.0
        %v1490 = vsel %vm1314, %v1474, 0.0
        %v1491 = vmul.f32 %v1130, %v1475
        %v1492 = vmul.f32 %v1131, %v1476
        %v1493 = vmul.f32 %v1132, %v1477
        %v1494 = vmul.f32 %v1133, %v1478
        %v1495 = vmul.f32 %v1134, %v1479
        %v1496 = vmul.f32 %v1135, %v1480
        %v1497 = vmul.f32 %v1136, %v1481
        %v1498 = vmul.f32 %v1137, %v1482
        %v1499 = vmul.f32 %v1138, %v1483
        %v1500 = vmul.f32 %v1139, %v1484
        %v1501 = vmul.f32 %v1140, %v1485
        %v1502 = vmul.f32 %v1141, %v1486
        %v1503 = vmul.f32 %v1142, %v1487
        %v1504 = vmul.f32 %v1143, %v1488
        %v1505 = vmul.f32 %v1144, %v1489
        %v1506 = vmul.f32 %v1145, %v1490
        %1508 = vset.pattern.permute.xlu0 0
        %1509 = vperm.xlu0 %1508, %v1491
        %v1510 = vpop.permute.xlu0 %1509
        %1513 = vset.pattern.permute.xlu0 0
        %1514 = vperm.xlu0 %1513, %v1492
        %v1515 = vpop.permute.xlu0 %1514
        %1518 = vset.pattern.permute.xlu0 0
        %1519 = vperm.xlu0 %1518, %v1493
        %v1520 = vpop.permute.xlu0 %1519
        %1523 = vset.pattern.permute.xlu0 0
        %1524 = vperm.xlu0 %1523, %v1494
        %v1525 = vpop.permute.xlu0 %1524
        %1528 = vset.pattern.permute.xlu0 0
        %1529 = vperm.xlu0 %1528, %v1495
        %v1530 = vpop.permute.xlu0 %1529
        %1533 = vset.pattern.permute.xlu0 0
        %1534 = vperm.xlu0 %1533, %v1496
        %v1535 = vpop.permute.xlu0 %1534
        %1538 = vset.pattern.permute.xlu0 0
        %1539 = vperm.xlu0 %1538, %v1497
        %v1540 = vpop.permute.xlu0 %1539
        %1543 = vset.pattern.permute.xlu0 0
        %1544 = vperm.xlu0 %1543, %v1498
        %v1545 = vpop.permute.xlu0 %1544
        %1548 = vset.pattern.permute.xlu0 0
        %1549 = vperm.xlu0 %1548, %v1499
        %v1550 = vpop.permute.xlu0 %1549
        %1553 = vset.pattern.permute.xlu0 0
        %1554 = vperm.xlu0 %1553, %v1500
        %v1555 = vpop.permute.xlu0 %1554
        %1558 = vset.pattern.permute.xlu0 0
        %1559 = vperm.xlu0 %1558, %v1501
        %v1560 = vpop.permute.xlu0 %1559
        %1563 = vset.pattern.permute.xlu0 0
        %1564 = vperm.xlu0 %1563, %v1502
        %v1565 = vpop.permute.xlu0 %1564
        %1568 = vset.pattern.permute.xlu0 0
        %1569 = vperm.xlu0 %1568, %v1503
        %v1570 = vpop.permute.xlu0 %1569
        %1573 = vset.pattern.permute.xlu0 0
        %1574 = vperm.xlu0 %1573, %v1504
        %v1575 = vpop.permute.xlu0 %1574
        %1578 = vset.pattern.permute.xlu0 0
        %1579 = vperm.xlu0 %1578, %v1505
        %v1580 = vpop.permute.xlu0 %1579
        %1583 = vset.pattern.permute.xlu0 0
        %1584 = vperm.xlu0 %1583, %v1506
        %v1585 = vpop.permute.xlu0 %1584
        %v1587 = vmul.f32 %v1510, %v1146
        %v1588 = vmul.f32 %v1515, %v1147
        %v1589 = vmul.f32 %v1520, %v1148
        %v1590 = vmul.f32 %v1525, %v1149
        %v1591 = vmul.f32 %v1530, %v1150
        %v1592 = vmul.f32 %v1535, %v1151
        %v1593 = vmul.f32 %v1540, %v1152
        %v1594 = vmul.f32 %v1545, %v1153
        %v1595 = vmul.f32 %v1550, %v1154
        %v1596 = vmul.f32 %v1555, %v1155
        %v1597 = vmul.f32 %v1560, %v1156
        %v1598 = vmul.f32 %v1565, %v1157
        %v1599 = vmul.f32 %v1570, %v1158
        %v1600 = vmul.f32 %v1575, %v1159
        %v1601 = vmul.f32 %v1580, %v1160
        %v1602 = vmul.f32 %v1585, %v1161
        %v1603 = vpack.c.bf16 %v1588, %v1587
        %v1604 = vpack.c.bf16 %v1590, %v1589
        %v1605 = vpack.c.bf16 %v1592, %v1591
        %v1606 = vpack.c.bf16 %v1594, %v1593
        %v1607 = vpack.c.bf16 %v1596, %v1595
        %v1608 = vpack.c.bf16 %v1598, %v1597
        %v1609 = vpack.c.bf16 %v1600, %v1599
        %v1610 = vpack.c.bf16 %v1602, %v1601
        %1611 = vmatpush.bf16.msra.mxu0 %v1610
        %1612 = vmatpush.bf16.msra.mxu0 %v1609
        %1613 = vmatpush.bf16.msra.mxu0 %v1608
        %1614 = vmatpush.bf16.msra.mxu0 %v1607
        %1615 = vmatpush.bf16.msra.mxu0 %v1606
        %1616 = vmatpush.bf16.msra.mxu0 %v1605
        %1617 = vmatpush.bf16.msra.mxu0 %v1604
        %1618 = vmatpush.bf16.msra.mxu0 %v1603
        %1619 = vmatmul.bf16.gmra.mxu0 %v1202
        %v1620 = vpop.f32.mrf.mxu0
        %v1621 = vadd.f32 0.0, %v1620
        %v1622 = vpop.f32.mrf.mxu0
        %v1623 = vadd.f32 0.0, %v1622
        %1624 = vmatmul.bf16.gmra.mxu0 %v1203
        %v1625 = vpop.f32.mrf.mxu0
        %v1626 = vadd.f32 0.0, %v1625
        %v1627 = vpop.f32.mrf.mxu0
        %v1628 = vadd.f32 0.0, %v1627
        %1629 = vmatmul.bf16.gmra.mxu0 %v1204
        %v1630 = vpop.f32.mrf.mxu0
        %v1631 = vadd.f32 0.0, %v1630
        %v1632 = vpop.f32.mrf.mxu0
        %v1633 = vadd.f32 0.0, %v1632
        %1634 = vmatmul.bf16.gmra.mxu0 %v1205
        %v1635 = vpop.f32.mrf.mxu0
        %v1636 = vadd.f32 0.0, %v1635
        %v1637 = vpop.f32.mrf.mxu0
        %v1638 = vadd.f32 0.0, %v1637
        %1639 = vmatmul.bf16.gmra.mxu0 %v1206
        %v1640 = vpop.f32.mrf.mxu0
        %v1641 = vadd.f32 0.0, %v1640
        %v1642 = vpop.f32.mrf.mxu0
        %v1643 = vadd.f32 0.0, %v1642
        %1644 = vmatmul.bf16.gmra.mxu0 %v1207
        %v1645 = vpop.f32.mrf.mxu0
        %v1646 = vadd.f32 0.0, %v1645
        %v1647 = vpop.f32.mrf.mxu0
        %v1648 = vadd.f32 0.0, %v1647
        %1649 = vmatmul.bf16.gmra.mxu0 %v1208
        %v1650 = vpop.f32.mrf.mxu0
        %v1651 = vadd.f32 0.0, %v1650
        %v1652 = vpop.f32.mrf.mxu0
        %v1653 = vadd.f32 0.0, %v1652
        %1654 = vmatmul.bf16.gmra.mxu0 %v1209
        %v1655 = vpop.f32.mrf.mxu0
        %v1656 = vadd.f32 0.0, %v1655
        %v1657 = vpop.f32.mrf.mxu0
        %v1658 = vadd.f32 0.0, %v1657
        %1659 = vdwg.mxu0
        %v1660 = vmul.f32 %v1510, %v1621
        %v1661 = vmul.f32 %v1515, %v1623
        %v1662 = vmul.f32 %v1520, %v1626
        %v1663 = vmul.f32 %v1525, %v1628
        %v1664 = vmul.f32 %v1530, %v1631
        %v1665 = vmul.f32 %v1535, %v1633
        %v1666 = vmul.f32 %v1540, %v1636
        %v1667 = vmul.f32 %v1545, %v1638
        %v1668 = vmul.f32 %v1550, %v1641
        %v1669 = vmul.f32 %v1555, %v1643
        %v1670 = vmul.f32 %v1560, %v1646
        %v1671 = vmul.f32 %v1565, %v1648
        %v1672 = vmul.f32 %v1570, %v1651
        %v1673 = vmul.f32 %v1575, %v1653
        %v1674 = vmul.f32 %v1580, %v1656
        %v1675 = vmul.f32 %v1585, %v1658
        %v1676 = vmul.f32 %v1491, %v1475
        %v1677 = vmul.f32 %v1492, %v1476
        %v1678 = vmul.f32 %v1493, %v1477
        %v1679 = vmul.f32 %v1494, %v1478
        %v1680 = vmul.f32 %v1495, %v1479
        %v1681 = vmul.f32 %v1496, %v1480
        %v1682 = vmul.f32 %v1497, %v1481
        %v1683 = vmul.f32 %v1498, %v1482
        %v1684 = vmul.f32 %v1499, %v1483
        %v1685 = vmul.f32 %v1500, %v1484
        %v1686 = vmul.f32 %v1501, %v1485
        %v1687 = vmul.f32 %v1502, %v1486
        %v1688 = vmul.f32 %v1503, %v1487
        %v1689 = vmul.f32 %v1504, %v1488
        %v1690 = vmul.f32 %v1505, %v1489
        %v1691 = vmul.f32 %v1506, %v1490
        %1693 = vset.pattern.permute.xlu0 0
        %1694 = vperm.xlu0 %1693, %v1676
        %v1695 = vpop.permute.xlu0 %1694
        %1698 = vset.pattern.permute.xlu0 0
        %1699 = vperm.xlu0 %1698, %v1677
        %v1700 = vpop.permute.xlu0 %1699
        %1703 = vset.pattern.permute.xlu0 0
        %1704 = vperm.xlu0 %1703, %v1678
        %v1705 = vpop.permute.xlu0 %1704
        %1708 = vset.pattern.permute.xlu0 0
        %1709 = vperm.xlu0 %1708, %v1679
        %v1710 = vpop.permute.xlu0 %1709
        %1713 = vset.pattern.permute.xlu0 0
        %1714 = vperm.xlu0 %1713, %v1680
        %v1715 = vpop.permute.xlu0 %1714
        %1718 = vset.pattern.permute.xlu0 0
        %1719 = vperm.xlu0 %1718, %v1681
        %v1720 = vpop.permute.xlu0 %1719
        %1723 = vset.pattern.permute.xlu0 0
        %1724 = vperm.xlu0 %1723, %v1682
        %v1725 = vpop.permute.xlu0 %1724
        %1728 = vset.pattern.permute.xlu0 0
        %1729 = vperm.xlu0 %1728, %v1683
        %v1730 = vpop.permute.xlu0 %1729
        %1733 = vset.pattern.permute.xlu0 0
        %1734 = vperm.xlu0 %1733, %v1684
        %v1735 = vpop.permute.xlu0 %1734
        %1738 = vset.pattern.permute.xlu0 0
        %1739 = vperm.xlu0 %1738, %v1685
        %v1740 = vpop.permute.xlu0 %1739
        %1743 = vset.pattern.permute.xlu0 0
        %1744 = vperm.xlu0 %1743, %v1686
        %v1745 = vpop.permute.xlu0 %1744
        %1748 = vset.pattern.permute.xlu0 0
        %1749 = vperm.xlu0 %1748, %v1687
        %v1750 = vpop.permute.xlu0 %1749
        %1753 = vset.pattern.permute.xlu0 0
        %1754 = vperm.xlu0 %1753, %v1688
        %v1755 = vpop.permute.xlu0 %1754
        %1758 = vset.pattern.permute.xlu0 0
        %1759 = vperm.xlu0 %1758, %v1689
        %v1760 = vpop.permute.xlu0 %1759
        %1763 = vset.pattern.permute.xlu0 0
        %1764 = vperm.xlu0 %1763, %v1690
        %v1765 = vpop.permute.xlu0 %1764
        %1768 = vset.pattern.permute.xlu0 0
        %1769 = vperm.xlu0 %1768, %v1691
        %v1770 = vpop.permute.xlu0 %1769
        %v1772 = vmul.f32 %v1695, %v1146
        %v1773 = vmul.f32 %v1700, %v1147
        %v1774 = vmul.f32 %v1705, %v1148
        %v1775 = vmul.f32 %v1710, %v1149
        %v1776 = vmul.f32 %v1715, %v1150
        %v1777 = vmul.f32 %v1720, %v1151
        %v1778 = vmul.f32 %v1725, %v1152
        %v1779 = vmul.f32 %v1730, %v1153
        %v1780 = vmul.f32 %v1735, %v1154
        %v1781 = vmul.f32 %v1740, %v1155
        %v1782 = vmul.f32 %v1745, %v1156
        %v1783 = vmul.f32 %v1750, %v1157
        %v1784 = vmul.f32 %v1755, %v1158
        %v1785 = vmul.f32 %v1760, %v1159
        %v1786 = vmul.f32 %v1765, %v1160
        %v1787 = vmul.f32 %v1770, %v1161
        %v1788 = vadd.f32 %v1660, %v1772
        %v1789 = vadd.f32 %v1661, %v1773
        %v1790 = vadd.f32 %v1662, %v1774
        %v1791 = vadd.f32 %v1663, %v1775
        %v1792 = vadd.f32 %v1664, %v1776
        %v1793 = vadd.f32 %v1665, %v1777
        %v1794 = vadd.f32 %v1666, %v1778
        %v1795 = vadd.f32 %v1667, %v1779
        %v1796 = vadd.f32 %v1668, %v1780
        %v1797 = vadd.f32 %v1669, %v1781
        %v1798 = vadd.f32 %v1670, %v1782
        %v1799 = vadd.f32 %v1671, %v1783
        %v1800 = vadd.f32 %v1672, %v1784
        %v1801 = vadd.f32 %v1673, %v1785
        %v1802 = vadd.f32 %v1674, %v1786
        %v1803 = vadd.f32 %v1675, %v1787
        %v1804 = vld [vmem:[%s790] sm:$0x1]
        %v1806 = vperm.slane %v1804, 0
        %v1808 = vadd.f32 %v1788, %v1806
        %v1809 = vadd.f32 %v1789, %v1806
        %v1810 = vadd.f32 %v1790, %v1806
        %v1811 = vadd.f32 %v1791, %v1806
        %v1812 = vadd.f32 %v1792, %v1806
        %v1813 = vadd.f32 %v1793, %v1806
        %v1814 = vadd.f32 %v1794, %v1806
        %v1815 = vadd.f32 %v1795, %v1806
        %v1816 = vadd.f32 %v1796, %v1806
        %v1817 = vadd.f32 %v1797, %v1806
        %v1818 = vadd.f32 %v1798, %v1806
        %v1819 = vadd.f32 %v1799, %v1806
        %v1820 = vadd.f32 %v1800, %v1806
        %v1821 = vadd.f32 %v1801, %v1806
        %v1822 = vadd.f32 %v1802, %v1806
        %v1823 = vadd.f32 %v1803, %v1806
        %v1824 = vmax.f32 %v1808, 0.0
        %v1825 = vmax.f32 %v1809, 0.0
        %v1826 = vmax.f32 %v1810, 0.0
        %v1827 = vmax.f32 %v1811, 0.0
        %v1828 = vmax.f32 %v1812, 0.0
        %v1829 = vmax.f32 %v1813, 0.0
        %v1830 = vmax.f32 %v1814, 0.0
        %v1831 = vmax.f32 %v1815, 0.0
        %v1832 = vmax.f32 %v1816, 0.0
        %v1833 = vmax.f32 %v1817, 0.0
        %v1834 = vmax.f32 %v1818, 0.0
        %v1835 = vmax.f32 %v1819, 0.0
        %v1836 = vmax.f32 %v1820, 0.0
        %v1837 = vmax.f32 %v1821, 0.0
        %v1838 = vmax.f32 %v1822, 0.0
        %v1839 = vmax.f32 %v1823, 0.0
        %1841 = vset.pattern.permute.xlu0 0
        %1842 = vperm.xlu0 %1841, %v1130
        %v1843 = vpop.permute.xlu0 %1842
        %1846 = vset.pattern.permute.xlu0 0
        %1847 = vperm.xlu0 %1846, %v1131
        %v1848 = vpop.permute.xlu0 %1847
        %1851 = vset.pattern.permute.xlu0 0
        %1852 = vperm.xlu0 %1851, %v1132
        %v1853 = vpop.permute.xlu0 %1852
        %1856 = vset.pattern.permute.xlu0 0
        %1857 = vperm.xlu0 %1856, %v1133
        %v1858 = vpop.permute.xlu0 %1857
        %1861 = vset.pattern.permute.xlu0 0
        %1862 = vperm.xlu0 %1861, %v1134
        %v1863 = vpop.permute.xlu0 %1862
        %1866 = vset.pattern.permute.xlu0 0
        %1867 = vperm.xlu0 %1866, %v1135
        %v1868 = vpop.permute.xlu0 %1867
        %1871 = vset.pattern.permute.xlu0 0
        %1872 = vperm.xlu0 %1871, %v1136
        %v1873 = vpop.permute.xlu0 %1872
        %1876 = vset.pattern.permute.xlu0 0
        %1877 = vperm.xlu0 %1876, %v1137
        %v1878 = vpop.permute.xlu0 %1877
        %1881 = vset.pattern.permute.xlu0 0
        %1882 = vperm.xlu0 %1881, %v1138
        %v1883 = vpop.permute.xlu0 %1882
        %1886 = vset.pattern.permute.xlu0 0
        %1887 = vperm.xlu0 %1886, %v1139
        %v1888 = vpop.permute.xlu0 %1887
        %1891 = vset.pattern.permute.xlu0 0
        %1892 = vperm.xlu0 %1891, %v1140
        %v1893 = vpop.permute.xlu0 %1892
        %1896 = vset.pattern.permute.xlu0 0
        %1897 = vperm.xlu0 %1896, %v1141
        %v1898 = vpop.permute.xlu0 %1897
        %1901 = vset.pattern.permute.xlu0 0
        %1902 = vperm.xlu0 %1901, %v1142
        %v1903 = vpop.permute.xlu0 %1902
        %1906 = vset.pattern.permute.xlu0 0
        %1907 = vperm.xlu0 %1906, %v1143
        %v1908 = vpop.permute.xlu0 %1907
        %1911 = vset.pattern.permute.xlu0 0
        %1912 = vperm.xlu0 %1911, %v1144
        %v1913 = vpop.permute.xlu0 %1912
        %1916 = vset.pattern.permute.xlu0 0
        %1917 = vperm.xlu0 %1916, %v1145
        %v1918 = vpop.permute.xlu0 %1917
        %v1920 = vmul.f32 %v1824, %v1843
        %v1921 = vmul.f32 %v1825, %v1848
        %v1922 = vmul.f32 %v1826, %v1853
        %v1923 = vmul.f32 %v1827, %v1858
        %v1924 = vmul.f32 %v1828, %v1863
        %v1925 = vmul.f32 %v1829, %v1868
        %v1926 = vmul.f32 %v1830, %v1873
        %v1927 = vmul.f32 %v1831, %v1878
        %v1928 = vmul.f32 %v1832, %v1883
        %v1929 = vmul.f32 %v1833, %v1888
        %v1930 = vmul.f32 %v1834, %v1893
        %v1931 = vmul.f32 %v1835, %v1898
        %v1932 = vmul.f32 %v1836, %v1903
        %v1933 = vmul.f32 %v1837, %v1908
        %v1934 = vmul.f32 %v1838, %v1913
        %v1935 = vmul.f32 %v1839, %v1918
        %v1936 = vpack.c.bf16 %v1921, %v1920
        %v1937 = vpack.c.bf16 %v1923, %v1922
        %v1938 = vpack.c.bf16 %v1925, %v1924
        %v1939 = vpack.c.bf16 %v1927, %v1926
        %v1940 = vpack.c.bf16 %v1929, %v1928
        %v1941 = vpack.c.bf16 %v1931, %v1930
        %v1942 = vpack.c.bf16 %v1933, %v1932
        %v1943 = vpack.c.bf16 %v1935, %v1934
        %1944 = vmatpush.bf16.msra.mxu0 %v1943
        %1945 = vmatpush.bf16.msra.mxu0 %v1942
        %1946 = vmatpush.bf16.msra.mxu0 %v1941
        %1947 = vmatpush.bf16.msra.mxu0 %v1940
        %1948 = vmatpush.bf16.msra.mxu0 %v1939
        %1949 = vmatpush.bf16.msra.mxu0 %v1938
        %1950 = vmatpush.bf16.msra.mxu0 %v1937
        %1951 = vmatpush.bf16.msra.mxu0 %v1936
        %1952 = vmatmul.bf16.gmra.mxu0 %v1202
        %v1953 = vpop.f32.mrf.mxu0
        %v1954 = vadd.f32 0.0, %v1953
        %v1955 = vpop.f32.mrf.mxu0
        %v1956 = vadd.f32 0.0, %v1955
        %1957 = vmatmul.bf16.gmra.mxu0 %v1203
        %v1958 = vpop.f32.mrf.mxu0
        %v1959 = vadd.f32 0.0, %v1958
        %v1960 = vpop.f32.mrf.mxu0
        %v1961 = vadd.f32 0.0, %v1960
        %1962 = vmatmul.bf16.gmra.mxu0 %v1204
        %v1963 = vpop.f32.mrf.mxu0
        %v1964 = vadd.f32 0.0, %v1963
        %v1965 = vpop.f32.mrf.mxu0
        %v1966 = vadd.f32 0.0, %v1965
        %1967 = vmatmul.bf16.gmra.mxu0 %v1205
        %v1968 = vpop.f32.mrf.mxu0
        %v1969 = vadd.f32 0.0, %v1968
        %v1970 = vpop.f32.mrf.mxu0
        %v1971 = vadd.f32 0.0, %v1970
        %1972 = vmatmul.bf16.gmra.mxu0 %v1206
        %v1973 = vpop.f32.mrf.mxu0
        %v1974 = vadd.f32 0.0, %v1973
        %v1975 = vpop.f32.mrf.mxu0
        %v1976 = vadd.f32 0.0, %v1975
        %1977 = vmatmul.bf16.gmra.mxu0 %v1207
        %v1978 = vpop.f32.mrf.mxu0
        %v1979 = vadd.f32 0.0, %v1978
        %v1980 = vpop.f32.mrf.mxu0
        %v1981 = vadd.f32 0.0, %v1980
        %1982 = vmatmul.bf16.gmra.mxu0 %v1208
        %v1983 = vpop.f32.mrf.mxu0
        %v1984 = vadd.f32 0.0, %v1983
        %v1985 = vpop.f32.mrf.mxu0
        %v1986 = vadd.f32 0.0, %v1985
        %1987 = vmatmul.bf16.gmra.mxu0 %v1209
        %v1988 = vpop.f32.mrf.mxu0
        %v1989 = vadd.f32 0.0, %v1988
        %v1990 = vpop.f32.mrf.mxu0
        %v1991 = vadd.f32 0.0, %v1990
        %1992 = vdwg.mxu0
        %v1993 = vld [vmem:[%s704] sm:$0x1]
        %v1995 = vperm.slane %v1993, 0
        %v1997 = vmul.f32 %v1954, %v1995
        %v1998 = vmul.f32 %v1956, %v1995
        %v1999 = vmul.f32 %v1959, %v1995
        %v2000 = vmul.f32 %v1961, %v1995
        %v2001 = vmul.f32 %v1964, %v1995
        %v2002 = vmul.f32 %v1966, %v1995
        %v2003 = vmul.f32 %v1969, %v1995
        %v2004 = vmul.f32 %v1971, %v1995
        %v2005 = vmul.f32 %v1974, %v1995
        %v2006 = vmul.f32 %v1976, %v1995
        %v2007 = vmul.f32 %v1979, %v1995
        %v2008 = vmul.f32 %v1981, %v1995
        %v2009 = vmul.f32 %v1984, %v1995
        %v2010 = vmul.f32 %v1986, %v1995
        %v2011 = vmul.f32 %v1989, %v1995
        %v2012 = vmul.f32 %v1991, %v1995
        %v2013 = vld [vmem:[%s793] sm:$0x1]
        %v2015 = vperm.slane %v2013, 0
        %v2017 = vmul.f32 %v1920, %v2015
        %v2018 = vmul.f32 %v1921, %v2015
        %v2019 = vmul.f32 %v1922, %v2015
        %v2020 = vmul.f32 %v1923, %v2015
        %v2021 = vmul.f32 %v1924, %v2015
        %v2022 = vmul.f32 %v1925, %v2015
        %v2023 = vmul.f32 %v1926, %v2015
        %v2024 = vmul.f32 %v1927, %v2015
        %v2025 = vmul.f32 %v1928, %v2015
        %v2026 = vmul.f32 %v1929, %v2015
        %v2027 = vmul.f32 %v1930, %v2015
        %v2028 = vmul.f32 %v1931, %v2015
        %v2029 = vmul.f32 %v1932, %v2015
        %v2030 = vmul.f32 %v1933, %v2015
        %v2031 = vmul.f32 %v1934, %v2015
        %v2032 = vmul.f32 %v1935, %v2015
        %v2033 = vadd.f32 %v1997, %v2017
        %v2034 = vadd.f32 %v1998, %v2018
        %v2035 = vadd.f32 %v1999, %v2019
        %v2036 = vadd.f32 %v2000, %v2020
        %v2037 = vadd.f32 %v2001, %v2021
        %v2038 = vadd.f32 %v2002, %v2022
        %v2039 = vadd.f32 %v2003, %v2023
        %v2040 = vadd.f32 %v2004, %v2024
        %v2041 = vadd.f32 %v2005, %v2025
        %v2042 = vadd.f32 %v2006, %v2026
        %v2043 = vadd.f32 %v2007, %v2027
        %v2044 = vadd.f32 %v2008, %v2028
        %v2045 = vadd.f32 %v2009, %v2029
        %v2046 = vadd.f32 %v2010, %v2030
        %v2047 = vadd.f32 %v2011, %v2031
        %v2048 = vadd.f32 %v2012, %v2032
        %2049 = vadd.xlane.f32.xlu0 %v2033
        %v2050 = vpop.xlane.xlu0 %2049
        %2051 = vadd.xlane.f32.xlu0 %v2034
        %v2052 = vpop.xlane.xlu0 %2051
        %2053 = vadd.xlane.f32.xlu0 %v2035
        %v2054 = vpop.xlane.xlu0 %2053
        %2055 = vadd.xlane.f32.xlu0 %v2036
        %v2056 = vpop.xlane.xlu0 %2055
        %2057 = vadd.xlane.f32.xlu0 %v2037
        %v2058 = vpop.xlane.xlu0 %2057
        %2059 = vadd.xlane.f32.xlu0 %v2038
        %v2060 = vpop.xlane.xlu0 %2059
        %2061 = vadd.xlane.f32.xlu0 %v2039
        %v2062 = vpop.xlane.xlu0 %2061
        %2063 = vadd.xlane.f32.xlu0 %v2040
        %v2064 = vpop.xlane.xlu0 %2063
        %2065 = vadd.xlane.f32.xlu0 %v2041
        %v2066 = vpop.xlane.xlu0 %2065
        %2067 = vadd.xlane.f32.xlu0 %v2042
        %v2068 = vpop.xlane.xlu0 %2067
        %2069 = vadd.xlane.f32.xlu0 %v2043
        %v2070 = vpop.xlane.xlu0 %2069
        %2071 = vadd.xlane.f32.xlu0 %v2044
        %v2072 = vpop.xlane.xlu0 %2071
        %2073 = vadd.xlane.f32.xlu0 %v2045
        %v2074 = vpop.xlane.xlu0 %2073
        %2075 = vadd.xlane.f32.xlu0 %v2046
        %v2076 = vpop.xlane.xlu0 %2075
        %2077 = vadd.xlane.f32.xlu0 %v2047
        %v2078 = vpop.xlane.xlu0 %2077
        %2079 = vadd.xlane.f32.xlu0 %v2048
        %v2080 = vpop.xlane.xlu0 %2079
        %v2081 = vld [vmem:[%s796] sm:$0x1]
        %v2083 = vperm.slane %v2081, 0
        %v2085 = vadd.f32 %v2050, %v2083
        %v2086 = vadd.f32 %v2052, %v2083
        %v2087 = vadd.f32 %v2054, %v2083
        %v2088 = vadd.f32 %v2056, %v2083
        %v2089 = vadd.f32 %v2058, %v2083
        %v2090 = vadd.f32 %v2060, %v2083
        %v2091 = vadd.f32 %v2062, %v2083
        %v2092 = vadd.f32 %v2064, %v2083
        %v2093 = vadd.f32 %v2066, %v2083
        %v2094 = vadd.f32 %v2068, %v2083
        %v2095 = vadd.f32 %v2070, %v2083
        %v2096 = vadd.f32 %v2072, %v2083
        %v2097 = vadd.f32 %v2074, %v2083
        %v2098 = vadd.f32 %v2076, %v2083
        %v2099 = vadd.f32 %v2078, %v2083
        %v2100 = vadd.f32 %v2080, %v2083
        %v2101 = vlaneseq
        %v2102 = vshrl.u32 %v2101, 7
        %v2103 = vadd.s32 %v2102, 8
        %v2104 = vadd.s32 %v2102, 16
        %v2105 = vadd.s32 %v2102, 24
        %v2106 = vadd.s32 %v2102, 32
        %v2107 = vadd.s32 %v2102, 40
        %v2108 = vadd.s32 %v2102, 48
        %v2109 = vadd.s32 %v2102, 56
        %v2110 = vadd.s32 %v2102, 64
        %v2111 = vadd.s32 %v2102, 72
        %v2112 = vadd.s32 %v2102, 80
        %v2113 = vadd.s32 %v2102, 88
        %v2114 = vadd.s32 %v2102, 96
        %v2115 = vadd.s32 %v2102, 104
        %v2116 = vadd.s32 %v2102, 112
        %v2117 = vadd.s32 %v2102, 120
        %v2118 = vlaneseq
        %v2119 = vand.u32 %v2118, 127
        %vm2120 = vcmp.eq.s32.totalorder %v2102, %v2119
        %vm2121 = vcmp.eq.s32.totalorder %v2103, %v2119
        %vm2122 = vcmp.eq.s32.totalorder %v2104, %v2119
        %vm2123 = vcmp.eq.s32.totalorder %v2105, %v2119
        %vm2124 = vcmp.eq.s32.totalorder %v2106, %v2119
        %vm2125 = vcmp.eq.s32.totalorder %v2107, %v2119
        %vm2126 = vcmp.eq.s32.totalorder %v2108, %v2119
        %vm2127 = vcmp.eq.s32.totalorder %v2109, %v2119
        %vm2128 = vcmp.eq.s32.totalorder %v2110, %v2119
        %vm2129 = vcmp.eq.s32.totalorder %v2111, %v2119
        %vm2130 = vcmp.eq.s32.totalorder %v2112, %v2119
        %vm2131 = vcmp.eq.s32.totalorder %v2113, %v2119
        %vm2132 = vcmp.eq.s32.totalorder %v2114, %v2119
        %vm2133 = vcmp.eq.s32.totalorder %v2115, %v2119
        %vm2134 = vcmp.eq.s32.totalorder %v2116, %v2119
        %vm2135 = vcmp.eq.s32.totalorder %v2117, %v2119
        %2137 = vset.pattern.permute.xlu0 0
        %2138 = vperm.xlu0 %2137, %v2085
        %v2139 = vpop.permute.xlu0 %2138
        %2142 = vset.pattern.permute.xlu0 0
        %2143 = vperm.xlu0 %2142, %v2086
        %v2144 = vpop.permute.xlu0 %2143
        %2147 = vset.pattern.permute.xlu0 0
        %2148 = vperm.xlu0 %2147, %v2087
        %v2149 = vpop.permute.xlu0 %2148
        %2152 = vset.pattern.permute.xlu0 0
        %2153 = vperm.xlu0 %2152, %v2088
        %v2154 = vpop.permute.xlu0 %2153
        %2157 = vset.pattern.permute.xlu0 0
        %2158 = vperm.xlu0 %2157, %v2089
        %v2159 = vpop.permute.xlu0 %2158
        %2162 = vset.pattern.permute.xlu0 0
        %2163 = vperm.xlu0 %2162, %v2090
        %v2164 = vpop.permute.xlu0 %2163
        %2167 = vset.pattern.permute.xlu0 0
        %2168 = vperm.xlu0 %2167, %v2091
        %v2169 = vpop.permute.xlu0 %2168
        %2172 = vset.pattern.permute.xlu0 0
        %2173 = vperm.xlu0 %2172, %v2092
        %v2174 = vpop.permute.xlu0 %2173
        %2177 = vset.pattern.permute.xlu0 0
        %2178 = vperm.xlu0 %2177, %v2093
        %v2179 = vpop.permute.xlu0 %2178
        %2182 = vset.pattern.permute.xlu0 0
        %2183 = vperm.xlu0 %2182, %v2094
        %v2184 = vpop.permute.xlu0 %2183
        %2187 = vset.pattern.permute.xlu0 0
        %2188 = vperm.xlu0 %2187, %v2095
        %v2189 = vpop.permute.xlu0 %2188
        %2192 = vset.pattern.permute.xlu0 0
        %2193 = vperm.xlu0 %2192, %v2096
        %v2194 = vpop.permute.xlu0 %2193
        %2197 = vset.pattern.permute.xlu0 0
        %2198 = vperm.xlu0 %2197, %v2097
        %v2199 = vpop.permute.xlu0 %2198
        %2202 = vset.pattern.permute.xlu0 0
        %2203 = vperm.xlu0 %2202, %v2098
        %v2204 = vpop.permute.xlu0 %2203
        %2207 = vset.pattern.permute.xlu0 0
        %2208 = vperm.xlu0 %2207, %v2099
        %v2209 = vpop.permute.xlu0 %2208
        %2212 = vset.pattern.permute.xlu0 0
        %2213 = vperm.xlu0 %2212, %v2100
        %v2214 = vpop.permute.xlu0 %2213
        %v2216 = vsel %vm2120, %v2139, 0.0
        %v2217 = vsel %vm2121, %v2144, 0.0
        %v2218 = vsel %vm2122, %v2149, 0.0
        %v2219 = vsel %vm2123, %v2154, 0.0
        %v2220 = vsel %vm2124, %v2159, 0.0
        %v2221 = vsel %vm2125, %v2164, 0.0
        %v2222 = vsel %vm2126, %v2169, 0.0
        %v2223 = vsel %vm2127, %v2174, 0.0
        %v2224 = vsel %vm2128, %v2179, 0.0
        %v2225 = vsel %vm2129, %v2184, 0.0
        %v2226 = vsel %vm2130, %v2189, 0.0
        %v2227 = vsel %vm2131, %v2194, 0.0
        %v2228 = vsel %vm2132, %v2199, 0.0
        %v2229 = vsel %vm2133, %v2204, 0.0
        %v2230 = vsel %vm2134, %v2209, 0.0
        %v2231 = vsel %vm2135, %v2214, 0.0
        %v2232 = vadd.f32 %v2216, %v2217
        %v2233 = vadd.f32 %v2232, %v2218
        %v2234 = vadd.f32 %v2233, %v2219
        %v2235 = vadd.f32 %v2234, %v2220
        %v2236 = vadd.f32 %v2235, %v2221
        %v2237 = vadd.f32 %v2236, %v2222
        %v2238 = vadd.f32 %v2237, %v2223
        %v2239 = vadd.f32 %v2238, %v2224
        %v2240 = vadd.f32 %v2239, %v2225
        %v2241 = vadd.f32 %v2240, %v2226
        %v2242 = vadd.f32 %v2241, %v2227
        %v2243 = vadd.f32 %v2242, %v2228
        %v2244 = vadd.f32 %v2243, %v2229
        %v2245 = vadd.f32 %v2244, %v2230
        %v2246 = vadd.f32 %v2245, %v2231
        %v2247 = vrot.slane %v2246, 4
        %v2248 = vadd.f32 %v2246, %v2247
        %v2249 = vrot.slane %v2248, 2
        %v2250 = vadd.f32 %v2248, %v2249
        %v2251 = vrot.slane %v2250, 1
        %v2252 = vadd.f32 %v2250, %v2251
        %vm2253 = vcmp.gt.f32.partialorder %v2252, %v2139
        %vm2254 = vcmp.gt.f32.partialorder %v2252, %v2144
        %vm2255 = vcmp.gt.f32.partialorder %v2252, %v2149
        %vm2256 = vcmp.gt.f32.partialorder %v2252, %v2154
        %vm2257 = vcmp.gt.f32.partialorder %v2252, %v2159
        %vm2258 = vcmp.gt.f32.partialorder %v2252, %v2164
        %vm2259 = vcmp.gt.f32.partialorder %v2252, %v2169
        %vm2260 = vcmp.gt.f32.partialorder %v2252, %v2174
        %vm2261 = vcmp.gt.f32.partialorder %v2252, %v2179
        %vm2262 = vcmp.gt.f32.partialorder %v2252, %v2184
        %vm2263 = vcmp.gt.f32.partialorder %v2252, %v2189
        %vm2264 = vcmp.gt.f32.partialorder %v2252, %v2194
        %vm2265 = vcmp.gt.f32.partialorder %v2252, %v2199
        %vm2266 = vcmp.gt.f32.partialorder %v2252, %v2204
        %vm2267 = vcmp.gt.f32.partialorder %v2252, %v2209
        %vm2268 = vcmp.gt.f32.partialorder %v2252, %v2214
        %vm2269 = vcmp.eq.f32.partialorder %v2252, %v2139
        %vm2270 = vcmp.eq.f32.partialorder %v2252, %v2144
        %vm2271 = vcmp.eq.f32.partialorder %v2252, %v2149
        %vm2272 = vcmp.eq.f32.partialorder %v2252, %v2154
        %vm2273 = vcmp.eq.f32.partialorder %v2252, %v2159
        %vm2274 = vcmp.eq.f32.partialorder %v2252, %v2164
        %vm2275 = vcmp.eq.f32.partialorder %v2252, %v2169
        %vm2276 = vcmp.eq.f32.partialorder %v2252, %v2174
        %vm2277 = vcmp.eq.f32.partialorder %v2252, %v2179
        %vm2278 = vcmp.eq.f32.partialorder %v2252, %v2184
        %vm2279 = vcmp.eq.f32.partialorder %v2252, %v2189
        %vm2280 = vcmp.eq.f32.partialorder %v2252, %v2194
        %vm2281 = vcmp.eq.f32.partialorder %v2252, %v2199
        %vm2282 = vcmp.eq.f32.partialorder %v2252, %v2204
        %vm2283 = vcmp.eq.f32.partialorder %v2252, %v2209
        %vm2284 = vcmp.eq.f32.partialorder %v2252, %v2214
        %vm2285 = vcmp.lt.s32.totalorder %v2119, %v2102
        %vm2286 = vcmp.lt.s32.totalorder %v2119, %v2103
        %vm2287 = vcmp.lt.s32.totalorder %v2119, %v2104
        %vm2288 = vcmp.lt.s32.totalorder %v2119, %v2105
        %vm2289 = vcmp.lt.s32.totalorder %v2119, %v2106
        %vm2290 = vcmp.lt.s32.totalorder %v2119, %v2107
        %vm2291 = vcmp.lt.s32.totalorder %v2119, %v2108
        %vm2292 = vcmp.lt.s32.totalorder %v2119, %v2109
        %vm2293 = vcmp.lt.s32.totalorder %v2119, %v2110
        %vm2294 = vcmp.lt.s32.totalorder %v2119, %v2111
        %vm2295 = vcmp.lt.s32.totalorder %v2119, %v2112
        %vm2296 = vcmp.lt.s32.totalorder %v2119, %v2113
        %vm2297 = vcmp.lt.s32.totalorder %v2119, %v2114
        %vm2298 = vcmp.lt.s32.totalorder %v2119, %v2115
        %vm2299 = vcmp.lt.s32.totalorder %v2119, %v2116
        %vm2300 = vcmp.lt.s32.totalorder %v2119, %v2117
        %vm2301 = vmand %vm2269, %vm2285
        %vm2302 = vmand %vm2270, %vm2286
        %vm2303 = vmand %vm2271, %vm2287
        %vm2304 = vmand %vm2272, %vm2288
        %vm2305 = vmand %vm2273, %vm2289
        %vm2306 = vmand %vm2274, %vm2290
        %vm2307 = vmand %vm2275, %vm2291
        %vm2308 = vmand %vm2276, %vm2292
        %vm2309 = vmand %vm2277, %vm2293
        %vm2310 = vmand %vm2278, %vm2294
        %vm2311 = vmand %vm2279, %vm2295
        %vm2312 = vmand %vm2280, %vm2296
        %vm2313 = vmand %vm2281, %vm2297
        %vm2314 = vmand %vm2282, %vm2298
        %vm2315 = vmand %vm2283, %vm2299
        %vm2316 = vmand %vm2284, %vm2300
        %vm2317 = vmor %vm2253, %vm2301
        %vm2318 = vmor %vm2254, %vm2302
        %vm2319 = vmor %vm2255, %vm2303
        %vm2320 = vmor %vm2256, %vm2304
        %vm2321 = vmor %vm2257, %vm2305
        %vm2322 = vmor %vm2258, %vm2306
        %vm2323 = vmor %vm2259, %vm2307
        %vm2324 = vmor %vm2260, %vm2308
        %vm2325 = vmor %vm2261, %vm2309
        %vm2326 = vmor %vm2262, %vm2310
        %vm2327 = vmor %vm2263, %vm2311
        %vm2328 = vmor %vm2264, %vm2312
        %vm2329 = vmor %vm2265, %vm2313
        %vm2330 = vmor %vm2266, %vm2314
        %vm2331 = vmor %vm2267, %vm2315
        %vm2332 = vmor %vm2268, %vm2316
        %v2333 = vsel %vm2317, 1, 0
        %v2334 = vsel %vm2318, 1, 0
        %v2335 = vsel %vm2319, 1, 0
        %v2336 = vsel %vm2320, 1, 0
        %v2337 = vsel %vm2321, 1, 0
        %v2338 = vsel %vm2322, 1, 0
        %v2339 = vsel %vm2323, 1, 0
        %v2340 = vsel %vm2324, 1, 0
        %v2341 = vsel %vm2325, 1, 0
        %v2342 = vsel %vm2326, 1, 0
        %v2343 = vsel %vm2327, 1, 0
        %v2344 = vsel %vm2328, 1, 0
        %v2345 = vsel %vm2329, 1, 0
        %v2346 = vsel %vm2330, 1, 0
        %v2347 = vsel %vm2331, 1, 0
        %v2348 = vsel %vm2332, 1, 0
        %v2349 = vcvt.s32.f32 %v2333
        %v2350 = vcvt.s32.f32 %v2334
        %v2351 = vcvt.s32.f32 %v2335
        %v2352 = vcvt.s32.f32 %v2336
        %v2353 = vcvt.s32.f32 %v2337
        %v2354 = vcvt.s32.f32 %v2338
        %v2355 = vcvt.s32.f32 %v2339
        %v2356 = vcvt.s32.f32 %v2340
        %v2357 = vcvt.s32.f32 %v2341
        %v2358 = vcvt.s32.f32 %v2342
        %v2359 = vcvt.s32.f32 %v2343
        %v2360 = vcvt.s32.f32 %v2344
        %v2361 = vcvt.s32.f32 %v2345
        %v2362 = vcvt.s32.f32 %v2346
        %v2363 = vcvt.s32.f32 %v2347
        %v2364 = vcvt.s32.f32 %v2348
        %v2365 = vpack.c.bf16 %v2350, %v2349
        %v2366 = vpack.c.bf16 %v2352, %v2351
        %v2367 = vpack.c.bf16 %v2354, %v2353
        %v2368 = vpack.c.bf16 %v2356, %v2355
        %v2369 = vpack.c.bf16 %v2358, %v2357
        %v2370 = vpack.c.bf16 %v2360, %v2359
        %v2371 = vpack.c.bf16 %v2362, %v2361
        %v2372 = vpack.c.bf16 %v2364, %v2363
        %v2373 = vld [vmem:[%s3] sm:$0xff]
        %v2374 = vld [vmem:[%s3 + $0x8] sm:$0xff]
        %v2375 = vld [vmem:[%s3 + $0x10] sm:$0xff]
        %v2376 = vld [vmem:[%s3 + $0x18] sm:$0xff]
        %v2377 = vld [vmem:[%s3 + $0x20] sm:$0xff]
        %v2378 = vld [vmem:[%s3 + $0x28] sm:$0xff]
        %v2379 = vld [vmem:[%s3 + $0x30] sm:$0xff]
        %v2380 = vld [vmem:[%s3 + $0x38] sm:$0xff]
        %v2381 = vld [vmem:[%s3 + $0x40] sm:$0xff]
        %v2382 = vld [vmem:[%s3 + $0x48] sm:$0xff]
        %v2383 = vld [vmem:[%s3 + $0x50] sm:$0xff]
        %v2384 = vld [vmem:[%s3 + $0x58] sm:$0xff]
        %v2385 = vld [vmem:[%s3 + $0x60] sm:$0xff]
        %v2386 = vld [vmem:[%s3 + $0x68] sm:$0xff]
        %v2387 = vld [vmem:[%s3 + $0x70] sm:$0xff]
        %v2388 = vld [vmem:[%s3 + $0x78] sm:$0xff]
        %v2389 = vmul.f32 %v2373, %v1843
        %v2390 = vmul.f32 %v2374, %v1848
        %v2391 = vmul.f32 %v2375, %v1853
        %v2392 = vmul.f32 %v2376, %v1858
        %v2393 = vmul.f32 %v2377, %v1863
        %v2394 = vmul.f32 %v2378, %v1868
        %v2395 = vmul.f32 %v2379, %v1873
        %v2396 = vmul.f32 %v2380, %v1878
        %v2397 = vmul.f32 %v2381, %v1883
        %v2398 = vmul.f32 %v2382, %v1888
        %v2399 = vmul.f32 %v2383, %v1893
        %v2400 = vmul.f32 %v2384, %v1898
        %v2401 = vmul.f32 %v2385, %v1903
        %v2402 = vmul.f32 %v2386, %v1908
        %v2403 = vmul.f32 %v2387, %v1913
        %v2404 = vmul.f32 %v2388, %v1918
        %v2405 = vpack.c.bf16 %v2390, %v2389
        %v2406 = vpack.c.bf16 %v2392, %v2391
        %v2407 = vpack.c.bf16 %v2394, %v2393
        %v2408 = vpack.c.bf16 %v2396, %v2395
        %v2409 = vpack.c.bf16 %v2398, %v2397
        %v2410 = vpack.c.bf16 %v2400, %v2399
        %v2411 = vpack.c.bf16 %v2402, %v2401
        %v2412 = vpack.c.bf16 %v2404, %v2403
        %2413 = vmatpush.bf16.msra.mxu0 %v2412
        %2414 = vmatpush.bf16.msra.mxu0 %v2411
        %2415 = vmatpush.bf16.msra.mxu0 %v2410
        %2416 = vmatpush.bf16.msra.mxu0 %v2409
        %2417 = vmatpush.bf16.msra.mxu0 %v2408
        %2418 = vmatpush.bf16.msra.mxu0 %v2407
        %2419 = vmatpush.bf16.msra.mxu0 %v2406
        %2420 = vmatpush.bf16.msra.mxu0 %v2405
        %2421 = vmatmul.bf16.gmra.mxu0 %v2365
        %v2422 = vpop.f32.mrf.mxu0
        %v2423 = vadd.f32 0.0, %v2422
        %v2424 = vpop.f32.mrf.mxu0
        %v2425 = vadd.f32 0.0, %v2424
        %2426 = vmatmul.bf16.gmra.mxu0 %v2366
        %v2427 = vpop.f32.mrf.mxu0
        %v2428 = vadd.f32 0.0, %v2427
        %v2429 = vpop.f32.mrf.mxu0
        %v2430 = vadd.f32 0.0, %v2429
        %2431 = vmatmul.bf16.gmra.mxu0 %v2367
        %v2432 = vpop.f32.mrf.mxu0
        %v2433 = vadd.f32 0.0, %v2432
        %v2434 = vpop.f32.mrf.mxu0
        %v2435 = vadd.f32 0.0, %v2434
        %2436 = vmatmul.bf16.gmra.mxu0 %v2368
        %v2437 = vpop.f32.mrf.mxu0
        %v2438 = vadd.f32 0.0, %v2437
        %v2439 = vpop.f32.mrf.mxu0
        %v2440 = vadd.f32 0.0, %v2439
        %2441 = vmatmul.bf16.gmra.mxu0 %v2369
        %v2442 = vpop.f32.mrf.mxu0
        %v2443 = vadd.f32 0.0, %v2442
        %v2444 = vpop.f32.mrf.mxu0
        %v2445 = vadd.f32 0.0, %v2444
        %2446 = vmatmul.bf16.gmra.mxu0 %v2370
        %v2447 = vpop.f32.mrf.mxu0
        %v2448 = vadd.f32 0.0, %v2447
        %v2449 = vpop.f32.mrf.mxu0
        %v2450 = vadd.f32 0.0, %v2449
        %2451 = vmatmul.bf16.gmra.mxu0 %v2371
        %v2452 = vpop.f32.mrf.mxu0
        %v2453 = vadd.f32 0.0, %v2452
        %v2454 = vpop.f32.mrf.mxu0
        %v2455 = vadd.f32 0.0, %v2454
        %2456 = vmatmul.bf16.gmra.mxu0 %v2372
        %v2457 = vpop.f32.mrf.mxu0
        %v2458 = vadd.f32 0.0, %v2457
        %v2459 = vpop.f32.mrf.mxu0
        %v2460 = vadd.f32 0.0, %v2459
        %2461 = vdwg.mxu0
        %v2462 = vmul.f32 %v2373, %v2423
        %v2463 = vmul.f32 %v2374, %v2425
        %v2464 = vmul.f32 %v2375, %v2428
        %v2465 = vmul.f32 %v2376, %v2430
        %v2466 = vmul.f32 %v2377, %v2433
        %v2467 = vmul.f32 %v2378, %v2435
        %v2468 = vmul.f32 %v2379, %v2438
        %v2469 = vmul.f32 %v2380, %v2440
        %v2470 = vmul.f32 %v2381, %v2443
        %v2471 = vmul.f32 %v2382, %v2445
        %v2472 = vmul.f32 %v2383, %v2448
        %v2473 = vmul.f32 %v2384, %v2450
        %v2474 = vmul.f32 %v2385, %v2453
        %v2475 = vmul.f32 %v2386, %v2455
        %v2476 = vmul.f32 %v2387, %v2458
        %v2477 = vmul.f32 %v2388, %v2460
        %vm2478 = vcmask 15360
        %v2479 = vsel %vm2478, %v2462, 0.0
        %2480 = vadd.xlane.f32.xlu0 %v2479
        %v2481 = vpop.xlane.xlu0 %2480
        %v2482 = vsel %vm2478, %v2463, 0.0
        %2483 = vadd.xlane.f32.xlu0 %v2482
        %v2484 = vpop.xlane.xlu0 %2483
        %v2485 = vsel %vm2478, %v2464, 0.0
        %2486 = vadd.xlane.f32.xlu0 %v2485
        %v2487 = vpop.xlane.xlu0 %2486
        %v2488 = vsel %vm2478, %v2465, 0.0
        %2489 = vadd.xlane.f32.xlu0 %v2488
        %v2490 = vpop.xlane.xlu0 %2489
        %v2491 = vsel %vm2478, %v2466, 0.0
        %2492 = vadd.xlane.f32.xlu0 %v2491
        %v2493 = vpop.xlane.xlu0 %2492
        %v2494 = vsel %vm2478, %v2467, 0.0
        %2495 = vadd.xlane.f32.xlu0 %v2494
        %v2496 = vpop.xlane.xlu0 %2495
        %v2497 = vsel %vm2478, %v2468, 0.0
        %2498 = vadd.xlane.f32.xlu0 %v2497
        %v2499 = vpop.xlane.xlu0 %2498
        %v2500 = vsel %vm2478, %v2469, 0.0
        %2501 = vadd.xlane.f32.xlu0 %v2500
        %v2502 = vpop.xlane.xlu0 %2501
        %v2503 = vsel %vm2478, %v2470, 0.0
        %2504 = vadd.xlane.f32.xlu0 %v2503
        %v2505 = vpop.xlane.xlu0 %2504
        %v2506 = vsel %vm2478, %v2471, 0.0
        %2507 = vadd.xlane.f32.xlu0 %v2506
        %v2508 = vpop.xlane.xlu0 %2507
        %v2509 = vsel %vm2478, %v2472, 0.0
        %2510 = vadd.xlane.f32.xlu0 %v2509
        %v2511 = vpop.xlane.xlu0 %2510
        %v2512 = vsel %vm2478, %v2473, 0.0
        %2513 = vadd.xlane.f32.xlu0 %v2512
        %v2514 = vpop.xlane.xlu0 %2513
        %v2515 = vsel %vm2478, %v2474, 0.0
        %2516 = vadd.xlane.f32.xlu0 %v2515
        %v2517 = vpop.xlane.xlu0 %2516
        %v2518 = vsel %vm2478, %v2475, 0.0
        %2519 = vadd.xlane.f32.xlu0 %v2518
        %v2520 = vpop.xlane.xlu0 %2519
        %v2521 = vsel %vm2478, %v2476, 0.0
        %2522 = vadd.xlane.f32.xlu0 %v2521
        %v2523 = vpop.xlane.xlu0 %2522
        %v2524 = vsel %vm2478, %v2477, 0.0
        %2525 = vadd.xlane.f32.xlu0 %v2524
        %v2526 = vpop.xlane.xlu0 %2525
        %v2527 = vsel %vm2478, %v2389, 0.0
        %v2528 = vsel %vm2478, %v2390, 0.0
        %v2529 = vadd.f32 %v2527, %v2528
        %v2530 = vsel %vm2478, %v2391, 0.0
        %v2531 = vadd.f32 %v2529, %v2530
        %v2532 = vsel %vm2478, %v2392, 0.0
        %v2533 = vadd.f32 %v2531, %v2532
        %v2534 = vsel %vm2478, %v2393, 0.0
        %v2535 = vadd.f32 %v2533, %v2534
        %v2536 = vsel %vm2478, %v2394, 0.0
        %v2537 = vadd.f32 %v2535, %v2536
        %v2538 = vsel %vm2478, %v2395, 0.0
        %v2539 = vadd.f32 %v2537, %v2538
        %v2540 = vsel %vm2478, %v2396, 0.0
        %v2541 = vadd.f32 %v2539, %v2540
        %v2542 = vsel %vm2478, %v2397, 0.0
        %v2543 = vadd.f32 %v2541, %v2542
        %v2544 = vsel %vm2478, %v2398, 0.0
        %v2545 = vadd.f32 %v2543, %v2544
        %v2546 = vsel %vm2478, %v2399, 0.0
        %v2547 = vadd.f32 %v2545, %v2546
        %v2548 = vsel %vm2478, %v2400, 0.0
        %v2549 = vadd.f32 %v2547, %v2548
        %v2550 = vsel %vm2478, %v2401, 0.0
        %v2551 = vadd.f32 %v2549, %v2550
        %v2552 = vsel %vm2478, %v2402, 0.0
        %v2553 = vadd.f32 %v2551, %v2552
        %v2554 = vsel %vm2478, %v2403, 0.0
        %v2555 = vadd.f32 %v2553, %v2554
        %v2556 = vsel %vm2478, %v2404, 0.0
        %v2557 = vadd.f32 %v2555, %v2556
        %v2558 = vrot.slane %v2557, 4
        %v2559 = vadd.f32 %v2557, %v2558
        %v2560 = vrot.slane %v2559, 2
        %v2561 = vadd.f32 %v2559, %v2560
        %v2562 = vrot.slane %v2561, 1
        %v2563 = vadd.f32 %v2561, %v2562
        %v2564 = vmul.f32 %v2373, %v2563
        %v2565 = vmul.f32 %v2374, %v2563
        %v2566 = vmul.f32 %v2375, %v2563
        %v2567 = vmul.f32 %v2376, %v2563
        %v2568 = vmul.f32 %v2377, %v2563
        %v2569 = vmul.f32 %v2378, %v2563
        %v2570 = vmul.f32 %v2379, %v2563
        %v2571 = vmul.f32 %v2380, %v2563
        %v2572 = vmul.f32 %v2381, %v2563
        %v2573 = vmul.f32 %v2382, %v2563
        %v2574 = vmul.f32 %v2383, %v2563
        %v2575 = vmul.f32 %v2384, %v2563
        %v2576 = vmul.f32 %v2385, %v2563
        %v2577 = vmul.f32 %v2386, %v2563
        %v2578 = vmul.f32 %v2387, %v2563
        %v2579 = vmul.f32 %v2388, %v2563
        %v2580 = vsel %vm2478, %v2564, 0.0
        %2581 = vadd.xlane.f32.xlu0 %v2580
        %v2582 = vpop.xlane.xlu0 %2581
        %v2583 = vsel %vm2478, %v2565, 0.0
        %2584 = vadd.xlane.f32.xlu0 %v2583
        %v2585 = vpop.xlane.xlu0 %2584
        %v2586 = vsel %vm2478, %v2566, 0.0
        %2587 = vadd.xlane.f32.xlu0 %v2586
        %v2588 = vpop.xlane.xlu0 %2587
        %v2589 = vsel %vm2478, %v2567, 0.0
        %2590 = vadd.xlane.f32.xlu0 %v2589
        %v2591 = vpop.xlane.xlu0 %2590
        %v2592 = vsel %vm2478, %v2568, 0.0
        %2593 = vadd.xlane.f32.xlu0 %v2592
        %v2594 = vpop.xlane.xlu0 %2593
        %v2595 = vsel %vm2478, %v2569, 0.0
        %2596 = vadd.xlane.f32.xlu0 %v2595
        %v2597 = vpop.xlane.xlu0 %2596
        %v2598 = vsel %vm2478, %v2570, 0.0
        %2599 = vadd.xlane.f32.xlu0 %v2598
        %v2600 = vpop.xlane.xlu0 %2599
        %v2601 = vsel %vm2478, %v2571, 0.0
        %2602 = vadd.xlane.f32.xlu0 %v2601
        %v2603 = vpop.xlane.xlu0 %2602
        %v2604 = vsel %vm2478, %v2572, 0.0
        %2605 = vadd.xlane.f32.xlu0 %v2604
        %v2606 = vpop.xlane.xlu0 %2605
        %v2607 = vsel %vm2478, %v2573, 0.0
        %2608 = vadd.xlane.f32.xlu0 %v2607
        %v2609 = vpop.xlane.xlu0 %2608
        %v2610 = vsel %vm2478, %v2574, 0.0
        %2611 = vadd.xlane.f32.xlu0 %v2610
        %v2612 = vpop.xlane.xlu0 %2611
        %v2613 = vsel %vm2478, %v2575, 0.0
        %2614 = vadd.xlane.f32.xlu0 %v2613
        %v2615 = vpop.xlane.xlu0 %2614
        %v2616 = vsel %vm2478, %v2576, 0.0
        %2617 = vadd.xlane.f32.xlu0 %v2616
        %v2618 = vpop.xlane.xlu0 %2617
        %v2619 = vsel %vm2478, %v2577, 0.0
        %2620 = vadd.xlane.f32.xlu0 %v2619
        %v2621 = vpop.xlane.xlu0 %2620
        %v2622 = vsel %vm2478, %v2578, 0.0
        %2623 = vadd.xlane.f32.xlu0 %v2622
        %v2624 = vpop.xlane.xlu0 %2623
        %v2625 = vsel %vm2478, %v2579, 0.0
        %2626 = vadd.xlane.f32.xlu0 %v2625
        %v2627 = vpop.xlane.xlu0 %2626
        %v2628 = vmul.f32 %v2582, 0.5
        %v2629 = vmul.f32 %v2585, 0.5
        %v2630 = vmul.f32 %v2588, 0.5
        %v2631 = vmul.f32 %v2591, 0.5
        %v2632 = vmul.f32 %v2594, 0.5
        %v2633 = vmul.f32 %v2597, 0.5
        %v2634 = vmul.f32 %v2600, 0.5
        %v2635 = vmul.f32 %v2603, 0.5
        %v2636 = vmul.f32 %v2606, 0.5
        %v2637 = vmul.f32 %v2609, 0.5
        %v2638 = vmul.f32 %v2612, 0.5
        %v2639 = vmul.f32 %v2615, 0.5
        %v2640 = vmul.f32 %v2618, 0.5
        %v2641 = vmul.f32 %v2621, 0.5
        %v2642 = vmul.f32 %v2624, 0.5
        %v2643 = vmul.f32 %v2627, 0.5
        %v2644 = vceil.f32 %v2628
        %v2645 = vceil.f32 %v2629
        %v2646 = vceil.f32 %v2630
        %v2647 = vceil.f32 %v2631
        %v2648 = vceil.f32 %v2632
        %v2649 = vceil.f32 %v2633
        %v2650 = vceil.f32 %v2634
        %v2651 = vceil.f32 %v2635
        %v2652 = vceil.f32 %v2636
        %v2653 = vceil.f32 %v2637
        %v2654 = vceil.f32 %v2638
        %v2655 = vceil.f32 %v2639
        %v2656 = vceil.f32 %v2640
        %v2657 = vceil.f32 %v2641
        %v2658 = vceil.f32 %v2642
        %v2659 = vceil.f32 %v2643
        %vm2660 = vcmp.lt.f32.partialorder %v2481, %v2644
        %vm2661 = vcmp.lt.f32.partialorder %v2484, %v2645
        %vm2662 = vcmp.lt.f32.partialorder %v2487, %v2646
        %vm2663 = vcmp.lt.f32.partialorder %v2490, %v2647
        %vm2664 = vcmp.lt.f32.partialorder %v2493, %v2648
        %vm2665 = vcmp.lt.f32.partialorder %v2496, %v2649
        %vm2666 = vcmp.lt.f32.partialorder %v2499, %v2650
        %vm2667 = vcmp.lt.f32.partialorder %v2502, %v2651
        %vm2668 = vcmp.lt.f32.partialorder %v2505, %v2652
        %vm2669 = vcmp.lt.f32.partialorder %v2508, %v2653
        %vm2670 = vcmp.lt.f32.partialorder %v2511, %v2654
        %vm2671 = vcmp.lt.f32.partialorder %v2514, %v2655
        %vm2672 = vcmp.lt.f32.partialorder %v2517, %v2656
        %vm2673 = vcmp.lt.f32.partialorder %v2520, %v2657
        %vm2674 = vcmp.lt.f32.partialorder %v2523, %v2658
        %vm2675 = vcmp.lt.f32.partialorder %v2526, %v2659
        %vm2676 = vcmp.gt.f32.partialorder %v1130, 0.0
        %vm2677 = vcmp.gt.f32.partialorder %v1131, 0.0
        %vm2678 = vcmp.gt.f32.partialorder %v1132, 0.0
        %vm2679 = vcmp.gt.f32.partialorder %v1133, 0.0
        %vm2680 = vcmp.gt.f32.partialorder %v1134, 0.0
        %vm2681 = vcmp.gt.f32.partialorder %v1135, 0.0
        %vm2682 = vcmp.gt.f32.partialorder %v1136, 0.0
        %vm2683 = vcmp.gt.f32.partialorder %v1137, 0.0
        %vm2684 = vcmp.gt.f32.partialorder %v1138, 0.0
        %vm2685 = vcmp.gt.f32.partialorder %v1139, 0.0
        %vm2686 = vcmp.gt.f32.partialorder %v1140, 0.0
        %vm2687 = vcmp.gt.f32.partialorder %v1141, 0.0
        %vm2688 = vcmp.gt.f32.partialorder %v1142, 0.0
        %vm2689 = vcmp.gt.f32.partialorder %v1143, 0.0
        %vm2690 = vcmp.gt.f32.partialorder %v1144, 0.0
        %vm2691 = vcmp.gt.f32.partialorder %v1145, 0.0
        %vm2692 = vmand %vm2660, %vm2676
        %vm2693 = vmand %vm2661, %vm2677
        %vm2694 = vmand %vm2662, %vm2678
        %vm2695 = vmand %vm2663, %vm2679
        %vm2696 = vmand %vm2664, %vm2680
        %vm2697 = vmand %vm2665, %vm2681
        %vm2698 = vmand %vm2666, %vm2682
        %vm2699 = vmand %vm2667, %vm2683
        %vm2700 = vmand %vm2668, %vm2684
        %vm2701 = vmand %vm2669, %vm2685
        %vm2702 = vmand %vm2670, %vm2686
        %vm2703 = vmand %vm2671, %vm2687
        %vm2704 = vmand %vm2672, %vm2688
        %vm2705 = vmand %vm2673, %vm2689
        %vm2706 = vmand %vm2674, %vm2690
        %vm2707 = vmand %vm2675, %vm2691
        %v2708 = vsel %vm2692, 1.0, 0.0
        %v2709 = vsel %vm2693, 1.0, 0.0
        %v2710 = vsel %vm2694, 1.0, 0.0
        %v2711 = vsel %vm2695, 1.0, 0.0
        %v2712 = vsel %vm2696, 1.0, 0.0
        %v2713 = vsel %vm2697, 1.0, 0.0
        %v2714 = vsel %vm2698, 1.0, 0.0
        %v2715 = vsel %vm2699, 1.0, 0.0
        %v2716 = vsel %vm2700, 1.0, 0.0
        %v2717 = vsel %vm2701, 1.0, 0.0
        %v2718 = vsel %vm2702, 1.0, 0.0
        %v2719 = vsel %vm2703, 1.0, 0.0
        %v2720 = vsel %vm2704, 1.0, 0.0
        %v2721 = vsel %vm2705, 1.0, 0.0
        %v2722 = vsel %vm2706, 1.0, 0.0
        %v2723 = vsel %vm2707, 1.0, 0.0
        %v2724 = vtanh.pop %v2085
        %v2725 = vtanh.pop %v2086
        %v2726 = vtanh.pop %v2087
        %v2727 = vtanh.pop %v2088
        %v2728 = vtanh.pop %v2089
        %v2729 = vtanh.pop %v2090
        %v2730 = vtanh.pop %v2091
        %v2731 = vtanh.pop %v2092
        %v2732 = vtanh.pop %v2093
        %v2733 = vtanh.pop %v2094
        %v2734 = vtanh.pop %v2095
        %v2735 = vtanh.pop %v2096
        %v2736 = vtanh.pop %v2097
        %v2737 = vtanh.pop %v2098
        %v2738 = vtanh.pop %v2099
        %v2739 = vtanh.pop %v2100
        %2741 = vset.pattern.permute.xlu0 0
        %2742 = vperm.xlu0 %2741, %v2724
        %v2743 = vpop.permute.xlu0 %2742
        %2746 = vset.pattern.permute.xlu0 0
        %2747 = vperm.xlu0 %2746, %v2725
        %v2748 = vpop.permute.xlu0 %2747
        %2751 = vset.pattern.permute.xlu0 0
        %2752 = vperm.xlu0 %2751, %v2726
        %v2753 = vpop.permute.xlu0 %2752
        %2756 = vset.pattern.permute.xlu0 0
        %2757 = vperm.xlu0 %2756, %v2727
        %v2758 = vpop.permute.xlu0 %2757
        %2761 = vset.pattern.permute.xlu0 0
        %2762 = vperm.xlu0 %2761, %v2728
        %v2763 = vpop.permute.xlu0 %2762
        %2766 = vset.pattern.permute.xlu0 0
        %2767 = vperm.xlu0 %2766, %v2729
        %v2768 = vpop.permute.xlu0 %2767
        %2771 = vset.pattern.permute.xlu0 0
        %2772 = vperm.xlu0 %2771, %v2730
        %v2773 = vpop.permute.xlu0 %2772
        %2776 = vset.pattern.permute.xlu0 0
        %2777 = vperm.xlu0 %2776, %v2731
        %v2778 = vpop.permute.xlu0 %2777
        %2781 = vset.pattern.permute.xlu0 0
        %2782 = vperm.xlu0 %2781, %v2732
        %v2783 = vpop.permute.xlu0 %2782
        %2786 = vset.pattern.permute.xlu0 0
        %2787 = vperm.xlu0 %2786, %v2733
        %v2788 = vpop.permute.xlu0 %2787
        %2791 = vset.pattern.permute.xlu0 0
        %2792 = vperm.xlu0 %2791, %v2734
        %v2793 = vpop.permute.xlu0 %2792
        %2796 = vset.pattern.permute.xlu0 0
        %2797 = vperm.xlu0 %2796, %v2735
        %v2798 = vpop.permute.xlu0 %2797
        %2801 = vset.pattern.permute.xlu0 0
        %2802 = vperm.xlu0 %2801, %v2736
        %v2803 = vpop.permute.xlu0 %2802
        %2806 = vset.pattern.permute.xlu0 0
        %2807 = vperm.xlu0 %2806, %v2737
        %v2808 = vpop.permute.xlu0 %2807
        %2811 = vset.pattern.permute.xlu0 0
        %2812 = vperm.xlu0 %2811, %v2738
        %v2813 = vpop.permute.xlu0 %2812
        %2816 = vset.pattern.permute.xlu0 0
        %2817 = vperm.xlu0 %2816, %v2739
        %v2818 = vpop.permute.xlu0 %2817
        %v2820 = vmul.f32 %v1920, %v2743
        %v2821 = vmul.f32 %v1921, %v2748
        %v2822 = vmul.f32 %v1922, %v2753
        %v2823 = vmul.f32 %v1923, %v2758
        %v2824 = vmul.f32 %v1924, %v2763
        %v2825 = vmul.f32 %v1925, %v2768
        %v2826 = vmul.f32 %v1926, %v2773
        %v2827 = vmul.f32 %v1927, %v2778
        %v2828 = vmul.f32 %v1928, %v2783
        %v2829 = vmul.f32 %v1929, %v2788
        %v2830 = vmul.f32 %v1930, %v2793
        %v2831 = vmul.f32 %v1931, %v2798
        %v2832 = vmul.f32 %v1932, %v2803
        %v2833 = vmul.f32 %v1933, %v2808
        %v2834 = vmul.f32 %v1934, %v2813
        %v2835 = vmul.f32 %v1935, %v2818
        %2837 = vset.pattern.permute.xlu0 0
        %2838 = vperm.xlu0 %2837, %v2708
        %v2839 = vpop.permute.xlu0 %2838
        %2842 = vset.pattern.permute.xlu0 0
        %2843 = vperm.xlu0 %2842, %v2709
        %v2844 = vpop.permute.xlu0 %2843
        %2847 = vset.pattern.permute.xlu0 0
        %2848 = vperm.xlu0 %2847, %v2710
        %v2849 = vpop.permute.xlu0 %2848
        %2852 = vset.pattern.permute.xlu0 0
        %2853 = vperm.xlu0 %2852, %v2711
        %v2854 = vpop.permute.xlu0 %2853
        %2857 = vset.pattern.permute.xlu0 0
        %2858 = vperm.xlu0 %2857, %v2712
        %v2859 = vpop.permute.xlu0 %2858
        %2862 = vset.pattern.permute.xlu0 0
        %2863 = vperm.xlu0 %2862, %v2713
        %v2864 = vpop.permute.xlu0 %2863
        %2867 = vset.pattern.permute.xlu0 0
        %2868 = vperm.xlu0 %2867, %v2714
        %v2869 = vpop.permute.xlu0 %2868
        %2872 = vset.pattern.permute.xlu0 0
        %2873 = vperm.xlu0 %2872, %v2715
        %v2874 = vpop.permute.xlu0 %2873
        %2877 = vset.pattern.permute.xlu0 0
        %2878 = vperm.xlu0 %2877, %v2716
        %v2879 = vpop.permute.xlu0 %2878
        %2882 = vset.pattern.permute.xlu0 0
        %2883 = vperm.xlu0 %2882, %v2717
        %v2884 = vpop.permute.xlu0 %2883
        %2887 = vset.pattern.permute.xlu0 0
        %2888 = vperm.xlu0 %2887, %v2718
        %v2889 = vpop.permute.xlu0 %2888
        %2892 = vset.pattern.permute.xlu0 0
        %2893 = vperm.xlu0 %2892, %v2719
        %v2894 = vpop.permute.xlu0 %2893
        %2897 = vset.pattern.permute.xlu0 0
        %2898 = vperm.xlu0 %2897, %v2720
        %v2899 = vpop.permute.xlu0 %2898
        %2902 = vset.pattern.permute.xlu0 0
        %2903 = vperm.xlu0 %2902, %v2721
        %v2904 = vpop.permute.xlu0 %2903
        %2907 = vset.pattern.permute.xlu0 0
        %2908 = vperm.xlu0 %2907, %v2722
        %v2909 = vpop.permute.xlu0 %2908
        %2912 = vset.pattern.permute.xlu0 0
        %2913 = vperm.xlu0 %2912, %v2723
        %v2914 = vpop.permute.xlu0 %2913
        %v2916 = vmul.f32 %v2820, %v2839
        %v2917 = vmul.f32 %v2821, %v2844
        %v2918 = vmul.f32 %v2822, %v2849
        %v2919 = vmul.f32 %v2823, %v2854
        %v2920 = vmul.f32 %v2824, %v2859
        %v2921 = vmul.f32 %v2825, %v2864
        %v2922 = vmul.f32 %v2826, %v2869
        %v2923 = vmul.f32 %v2827, %v2874
        %v2924 = vmul.f32 %v2828, %v2879
        %v2925 = vmul.f32 %v2829, %v2884
        %v2926 = vmul.f32 %v2830, %v2889
        %v2927 = vmul.f32 %v2831, %v2894
        %v2928 = vmul.f32 %v2832, %v2899
        %v2929 = vmul.f32 %v2833, %v2904
        %v2930 = vmul.f32 %v2834, %v2909
        %v2931 = vmul.f32 %v2835, %v2914
        %vm2932 = vcmask 7168
        %2933 = vst.msk [vmem:[#allocation3] sm:$0xff] %vm2932, %v2708
        %2934 = vst.msk [vmem:[#allocation3 + $0x8] sm:$0xff] %vm2932, %v2709
        %2935 = vst.msk [vmem:[#allocation3 + $0x10] sm:$0xff] %vm2932, %v2710
        %2936 = vst.msk [vmem:[#allocation3 + $0x18] sm:$0xff] %vm2932, %v2711
        %2937 = vst.msk [vmem:[#allocation3 + $0x20] sm:$0xff] %vm2932, %v2712
        %2938 = vst.msk [vmem:[#allocation3 + $0x28] sm:$0xff] %vm2932, %v2713
        %2939 = vst.msk [vmem:[#allocation3 + $0x30] sm:$0xff] %vm2932, %v2714
        %2940 = vst.msk [vmem:[#allocation3 + $0x38] sm:$0xff] %vm2932, %v2715
        %2941 = vst.msk [vmem:[#allocation3 + $0x40] sm:$0xff] %vm2932, %v2716
        %2942 = vst.msk [vmem:[#allocation3 + $0x48] sm:$0xff] %vm2932, %v2717
        %2943 = vst.msk [vmem:[#allocation3 + $0x50] sm:$0xff] %vm2932, %v2718
        %2944 = vst.msk [vmem:[#allocation3 + $0x58] sm:$0xff] %vm2932, %v2719
        %2945 = vst.msk [vmem:[#allocation3 + $0x60] sm:$0xff] %vm2932, %v2720
        %2946 = vst.msk [vmem:[#allocation3 + $0x68] sm:$0xff] %vm2932, %v2721
        %2947 = vst.msk [vmem:[#allocation3 + $0x70] sm:$0xff] %vm2932, %v2722
        %2948 = vst.msk [vmem:[#allocation3 + $0x78] sm:$0xff] %vm2932, %v2723
        %2949 = vst [vmem:[#allocation2] sm:$0xff] %v2916
        %2950 = vst [vmem:[#allocation2 + $0x8] sm:$0xff] %v2917
        %2951 = vst [vmem:[#allocation2 + $0x10] sm:$0xff] %v2918
        %2952 = vst [vmem:[#allocation2 + $0x18] sm:$0xff] %v2919
        %2953 = vst [vmem:[#allocation2 + $0x20] sm:$0xff] %v2920
        %2954 = vst [vmem:[#allocation2 + $0x28] sm:$0xff] %v2921
        %2955 = vst [vmem:[#allocation2 + $0x30] sm:$0xff] %v2922
        %2956 = vst [vmem:[#allocation2 + $0x38] sm:$0xff] %v2923
        %2957 = vst [vmem:[#allocation2 + $0x40] sm:$0xff] %v2924
        %2958 = vst [vmem:[#allocation2 + $0x48] sm:$0xff] %v2925
        %2959 = vst [vmem:[#allocation2 + $0x50] sm:$0xff] %v2926
        %2960 = vst [vmem:[#allocation2 + $0x58] sm:$0xff] %v2927
        %2961 = vst [vmem:[#allocation2 + $0x60] sm:$0xff] %v2928
        %2962 = vst [vmem:[#allocation2 + $0x68] sm:$0xff] %v2929
        %2963 = vst [vmem:[#allocation2 + $0x70] sm:$0xff] %v2930
        %2964 = vst [vmem:[#allocation2 + $0x78] sm:$0xff] %v2931
        %v2965 = vld [vmem:[#allocation10] sm:$0x1]
        %v2966 = vpack.c.bf16 %v2917, %v2916
        %v2967 = vpack.c.bf16 %v2919, %v2918
        %v2968 = vpack.c.bf16 %v2921, %v2920
        %v2969 = vpack.c.bf16 %v2923, %v2922
        %v2970 = vpack.c.bf16 %v2925, %v2924
        %v2971 = vpack.c.bf16 %v2927, %v2926
        %v2972 = vpack.c.bf16 %v2929, %v2928
        %v2973 = vpack.c.bf16 %v2931, %v2930
        %2974 = vmatpush.bf16.msra.mxu0 %v2973
        %2975 = vmatpush.bf16.msra.mxu0 %v2972
        %2976 = vmatpush.bf16.msra.mxu0 %v2971
        %2977 = vmatpush.bf16.msra.mxu0 %v2970
        %2978 = vmatpush.bf16.msra.mxu0 %v2969
        %2979 = vmatpush.bf16.msra.mxu0 %v2968
        %2980 = vmatpush.bf16.msra.mxu0 %v2967
        %2981 = vmatpush.bf16.msra.mxu0 %v2966
        %2982 = vmatmul.bf16.gmra.mxu0 %v2965
        %v2983 = vpop.f32.mrf.mxu0
        %v2984 = vadd.f32 0.0, %v2983
        %v2985 = vpop.f32.mrf.mxu0
        %2986 = vdwg.mxu0
        %v2987 = vmul.f32 %v2373, %v2708
        %v2988 = vmul.f32 %v2374, %v2709
        %v2989 = vmul.f32 %v2375, %v2710
        %v2990 = vmul.f32 %v2376, %v2711
        %v2991 = vmul.f32 %v2377, %v2712
        %v2992 = vmul.f32 %v2378, %v2713
        %v2993 = vmul.f32 %v2379, %v2714
        %v2994 = vmul.f32 %v2380, %v2715
        %v2995 = vmul.f32 %v2381, %v2716
        %v2996 = vmul.f32 %v2382, %v2717
        %v2997 = vmul.f32 %v2383, %v2718
        %v2998 = vmul.f32 %v2384, %v2719
        %v2999 = vmul.f32 %v2385, %v2720
        %v3000 = vmul.f32 %v2386, %v2721
        %v3001 = vmul.f32 %v2387, %v2722
        %v3002 = vmul.f32 %v2388, %v2723
        %vm3003 = vcmp.gt.f32.partialorder %v2987, 0.0
        %vm3004 = vcmp.gt.f32.partialorder %v2988, 0.0
        %vm3005 = vcmp.gt.f32.partialorder %v2989, 0.0
        %vm3006 = vcmp.gt.f32.partialorder %v2990, 0.0
        %vm3007 = vcmp.gt.f32.partialorder %v2991, 0.0
        %vm3008 = vcmp.gt.f32.partialorder %v2992, 0.0
        %vm3009 = vcmp.gt.f32.partialorder %v2993, 0.0
        %vm3010 = vcmp.gt.f32.partialorder %v2994, 0.0
        %vm3011 = vcmp.gt.f32.partialorder %v2995, 0.0
        %vm3012 = vcmp.gt.f32.partialorder %v2996, 0.0
        %vm3013 = vcmp.gt.f32.partialorder %v2997, 0.0
        %vm3014 = vcmp.gt.f32.partialorder %v2998, 0.0
        %vm3015 = vcmp.gt.f32.partialorder %v2999, 0.0
        %vm3016 = vcmp.gt.f32.partialorder %v3000, 0.0
        %vm3017 = vcmp.gt.f32.partialorder %v3001, 0.0
        %vm3018 = vcmp.gt.f32.partialorder %v3002, 0.0
        %v3019 = vsel %vm3003, 1, 0
        %v3020 = vsel %vm3004, 1, 0
        %v3021 = vsel %vm3005, 1, 0
        %v3022 = vsel %vm3006, 1, 0
        %v3023 = vsel %vm3007, 1, 0
        %v3024 = vsel %vm3008, 1, 0
        %v3025 = vsel %vm3009, 1, 0
        %v3026 = vsel %vm3010, 1, 0
        %v3027 = vsel %vm3011, 1, 0
        %v3028 = vsel %vm3012, 1, 0
        %v3029 = vsel %vm3013, 1, 0
        %v3030 = vsel %vm3014, 1, 0
        %v3031 = vsel %vm3015, 1, 0
        %v3032 = vsel %vm3016, 1, 0
        %v3033 = vsel %vm3017, 1, 0
        %v3034 = vsel %vm3018, 1, 0
        %3035 = vset.pattern.permute.xlu0 0
        %3036 = vperm.xlu0 %3035, %v3019
        %v3037 = vpop.permute.xlu0 %3036
        %3038 = vset.pattern.permute.xlu0 0
        %3039 = vperm.xlu0 %3038, %v3020
        %v3040 = vpop.permute.xlu0 %3039
        %3041 = vset.pattern.permute.xlu0 0
        %3042 = vperm.xlu0 %3041, %v3021
        %v3043 = vpop.permute.xlu0 %3042
        %3044 = vset.pattern.permute.xlu0 0
        %3045 = vperm.xlu0 %3044, %v3022
        %v3046 = vpop.permute.xlu0 %3045
        %3047 = vset.pattern.permute.xlu0 0
        %3048 = vperm.xlu0 %3047, %v3023
        %v3049 = vpop.permute.xlu0 %3048
        %3050 = vset.pattern.permute.xlu0 0
        %3051 = vperm.xlu0 %3050, %v3024
        %v3052 = vpop.permute.xlu0 %3051
        %3053 = vset.pattern.permute.xlu0 0
        %3054 = vperm.xlu0 %3053, %v3025
        %v3055 = vpop.permute.xlu0 %3054
        %3056 = vset.pattern.permute.xlu0 0
        %3057 = vperm.xlu0 %3056, %v3026
        %v3058 = vpop.permute.xlu0 %3057
        %3059 = vset.pattern.permute.xlu0 0
        %3060 = vperm.xlu0 %3059, %v3027
        %v3061 = vpop.permute.xlu0 %3060
        %3062 = vset.pattern.permute.xlu0 0
        %3063 = vperm.xlu0 %3062, %v3028
        %v3064 = vpop.permute.xlu0 %3063
        %3065 = vset.pattern.permute.xlu0 0
        %3066 = vperm.xlu0 %3065, %v3029
        %v3067 = vpop.permute.xlu0 %3066
        %3068 = vset.pattern.permute.xlu0 0
        %3069 = vperm.xlu0 %3068, %v3030
        %v3070 = vpop.permute.xlu0 %3069
        %3071 = vset.pattern.permute.xlu0 0
        %3072 = vperm.xlu0 %3071, %v3031
        %v3073 = vpop.permute.xlu0 %3072
        %3074 = vset.pattern.permute.xlu0 0
        %3075 = vperm.xlu0 %3074, %v3032
        %v3076 = vpop.permute.xlu0 %3075
        %3077 = vset.pattern.permute.xlu0 0
        %3078 = vperm.xlu0 %3077, %v3033
        %v3079 = vpop.permute.xlu0 %3078
        %3080 = vset.pattern.permute.xlu0 0
        %3081 = vperm.xlu0 %3080, %v3034
        %v3082 = vpop.permute.xlu0 %3081
        %vm3083 = vcmp.eq.s32.totalorder %v3037, 1
        %vm3084 = vcmp.eq.s32.totalorder %v3040, 1
        %vm3085 = vcmp.eq.s32.totalorder %v3043, 1
        %vm3086 = vcmp.eq.s32.totalorder %v3046, 1
        %vm3087 = vcmp.eq.s32.totalorder %v3049, 1
        %vm3088 = vcmp.eq.s32.totalorder %v3052, 1
        %vm3089 = vcmp.eq.s32.totalorder %v3055, 1
        %vm3090 = vcmp.eq.s32.totalorder %v3058, 1
        %vm3091 = vcmp.eq.s32.totalorder %v3061, 1
        %vm3092 = vcmp.eq.s32.totalorder %v3064, 1
        %vm3093 = vcmp.eq.s32.totalorder %v3067, 1
        %vm3094 = vcmp.eq.s32.totalorder %v3070, 1
        %vm3095 = vcmp.eq.s32.totalorder %v3073, 1
        %vm3096 = vcmp.eq.s32.totalorder %v3076, 1
        %vm3097 = vcmp.eq.s32.totalorder %v3079, 1
        %vm3098 = vcmp.eq.s32.totalorder %v3082, 1
        %v3099 = vsel %vm3083, %v2916, -1e+30
        %v3100 = vsel %vm3084, %v2917, -1e+30
        %v3101 = vsel %vm3085, %v2918, -1e+30
        %v3102 = vsel %vm3086, %v2919, -1e+30
        %v3103 = vsel %vm3087, %v2920, -1e+30
        %v3104 = vsel %vm3088, %v2921, -1e+30
        %v3105 = vsel %vm3089, %v2922, -1e+30
        %v3106 = vsel %vm3090, %v2923, -1e+30
        %v3107 = vsel %vm3091, %v2924, -1e+30
        %v3108 = vsel %vm3092, %v2925, -1e+30
        %v3109 = vsel %vm3093, %v2926, -1e+30
        %v3110 = vsel %vm3094, %v2927, -1e+30
        %v3111 = vsel %vm3095, %v2928, -1e+30
        %v3112 = vsel %vm3096, %v2929, -1e+30
        %v3113 = vsel %vm3097, %v2930, -1e+30
        %v3114 = vsel %vm3098, %v2931, -1e+30
        %v3115 = vmax.f32 %v3099, %v3103
        %v3116 = vmax.f32 %v3100, %v3104
        %v3117 = vmax.f32 %v3101, %v3105
        %v3118 = vmax.f32 %v3102, %v3106
        %v3119 = vmax.f32 %v3115, %v3107
        %v3120 = vmax.f32 %v3116, %v3108
        %v3121 = vmax.f32 %v3117, %v3109
        %v3122 = vmax.f32 %v3118, %v3110
        %v3123 = vmax.f32 %v3119, %v3111
        %v3124 = vmax.f32 %v3120, %v3112
        %v3125 = vmax.f32 %v3121, %v3113
        %v3126 = vmax.f32 %v3122, %v3114
        %v3127 = vmax.f32 %v3123, %v3124
        %v3128 = vmax.f32 %v3125, %v3126
        %v3129 = vmax.f32 %v3127, %v3128
        %v3130 = vrot.slane %v3129, 4
        %v3131 = vmax.f32 %v3129, %v3130
        %v3132 = vrot.slane %v3131, 2
        %v3133 = vmax.f32 %v3131, %v3132
        %v3134 = vrot.slane %v3133, 1
        %v3135 = vmax.f32 %v3133, %v3134
        %v3136 = vsel %vm2932, %v2987, 0.0
        %v3137 = vsel %vm2932, %v2988, 0.0
        %v3138 = vadd.f32 %v3136, %v3137
        %v3139 = vsel %vm2932, %v2989, 0.0
        %v3140 = vadd.f32 %v3138, %v3139
        %v3141 = vsel %vm2932, %v2990, 0.0
        %v3142 = vadd.f32 %v3140, %v3141
        %v3143 = vsel %vm2932, %v2991, 0.0
        %v3144 = vadd.f32 %v3142, %v3143
        %v3145 = vsel %vm2932, %v2992, 0.0
        %v3146 = vadd.f32 %v3144, %v3145
        %v3147 = vsel %vm2932, %v2993, 0.0
        %v3148 = vadd.f32 %v3146, %v3147
        %v3149 = vsel %vm2932, %v2994, 0.0
        %v3150 = vadd.f32 %v3148, %v3149
        %v3151 = vsel %vm2932, %v2995, 0.0
        %v3152 = vadd.f32 %v3150, %v3151
        %v3153 = vsel %vm2932, %v2996, 0.0
        %v3154 = vadd.f32 %v3152, %v3153
        %v3155 = vsel %vm2932, %v2997, 0.0
        %v3156 = vadd.f32 %v3154, %v3155
        %v3157 = vsel %vm2932, %v2998, 0.0
        %v3158 = vadd.f32 %v3156, %v3157
        %v3159 = vsel %vm2932, %v2999, 0.0
        %v3160 = vadd.f32 %v3158, %v3159
        %v3161 = vsel %vm2932, %v3000, 0.0
        %v3162 = vadd.f32 %v3160, %v3161
        %v3163 = vsel %vm2932, %v3001, 0.0
        %v3164 = vadd.f32 %v3162, %v3163
        %v3165 = vsel %vm2932, %v3002, 0.0
        %v3166 = vadd.f32 %v3164, %v3165
        %v3167 = vrot.slane %v3166, 4
        %v3168 = vadd.f32 %v3166, %v3167
        %v3169 = vrot.slane %v3168, 2
        %v3170 = vadd.f32 %v3168, %v3169
        %v3171 = vrot.slane %v3170, 1
        %v3172 = vadd.f32 %v3170, %v3171
        %vm3173 = vcmp.gt.f32.partialorder %v3172, 0.0
        %v3174 = vsel %vm3173, 1, 0
        %3175 = vset.pattern.permute.xlu0 0
        %3176 = vperm.xlu0 %3175, %v3174
        %v3177 = vpop.permute.xlu0 %3176
        %vm3178 = vcmp.eq.s32.totalorder %v3177, 1
        %v3179 = vsel %vm3178, %v3135, 0.0
        %vm3180 = vcmp.eq.s32.totalorder %v2102, 0
        %v3181 = vsel %vm3180, 1, 0
        %vm3182 = vcmp.eq.s32.totalorder %v3181, 1
        %v3183 = vsel %vm3182, %v3179, 0.0
        %v3184 = vadd.f32 %v3183, 0.0
        %3185 = vrot.lane.b32.xlu0 %v2708, 1
        %v3186 = vpop.permute.xlu0 %3185
        %3187 = vrot.lane.b32.xlu0 %v2709, 1
        %v3188 = vpop.permute.xlu0 %3187
        %3189 = vrot.lane.b32.xlu0 %v2710, 1
        %v3190 = vpop.permute.xlu0 %3189
        %3191 = vrot.lane.b32.xlu0 %v2711, 1
        %v3192 = vpop.permute.xlu0 %3191
        %3193 = vrot.lane.b32.xlu0 %v2712, 1
        %v3194 = vpop.permute.xlu0 %3193
        %3195 = vrot.lane.b32.xlu0 %v2713, 1
        %v3196 = vpop.permute.xlu0 %3195
        %3197 = vrot.lane.b32.xlu0 %v2714, 1
        %v3198 = vpop.permute.xlu0 %3197
        %3199 = vrot.lane.b32.xlu0 %v2715, 1
        %v3200 = vpop.permute.xlu0 %3199
        %3201 = vrot.lane.b32.xlu0 %v2716, 1
        %v3202 = vpop.permute.xlu0 %3201
        %3203 = vrot.lane.b32.xlu0 %v2717, 1
        %v3204 = vpop.permute.xlu0 %3203
        %3205 = vrot.lane.b32.xlu0 %v2718, 1
        %v3206 = vpop.permute.xlu0 %3205
        %3207 = vrot.lane.b32.xlu0 %v2719, 1
        %v3208 = vpop.permute.xlu0 %3207
        %3209 = vrot.lane.b32.xlu0 %v2720, 1
        %v3210 = vpop.permute.xlu0 %3209
        %3211 = vrot.lane.b32.xlu0 %v2721, 1
        %v3212 = vpop.permute.xlu0 %3211
        %3213 = vrot.lane.b32.xlu0 %v2722, 1
        %v3214 = vpop.permute.xlu0 %3213
        %3215 = vrot.lane.b32.xlu0 %v2723, 1
        %v3216 = vpop.permute.xlu0 %3215
        %v3233 = vmul.f32 %v2373, %v3186
        %v3234 = vmul.f32 %v2374, %v3188
        %v3235 = vmul.f32 %v2375, %v3190
        %v3236 = vmul.f32 %v2376, %v3192
        %v3237 = vmul.f32 %v2377, %v3194
        %v3238 = vmul.f32 %v2378, %v3196
        %v3239 = vmul.f32 %v2379, %v3198
        %v3240 = vmul.f32 %v2380, %v3200
        %v3241 = vmul.f32 %v2381, %v3202
        %v3242 = vmul.f32 %v2382, %v3204
        %v3243 = vmul.f32 %v2383, %v3206
        %v3244 = vmul.f32 %v2384, %v3208
        %v3245 = vmul.f32 %v2385, %v3210
        %v3246 = vmul.f32 %v2386, %v3212
        %v3247 = vmul.f32 %v2387, %v3214
        %v3248 = vmul.f32 %v2388, %v3216
        %vm3249 = vcmp.gt.f32.partialorder %v3233, 0.0
        %vm3250 = vcmp.gt.f32.partialorder %v3234, 0.0
        %vm3251 = vcmp.gt.f32.partialorder %v3235, 0.0
        %vm3252 = vcmp.gt.f32.partialorder %v3236, 0.0
        %vm3253 = vcmp.gt.f32.partialorder %v3237, 0.0
        %vm3254 = vcmp.gt.f32.partialorder %v3238, 0.0
        %vm3255 = vcmp.gt.f32.partialorder %v3239, 0.0
        %vm3256 = vcmp.gt.f32.partialorder %v3240, 0.0
        %vm3257 = vcmp.gt.f32.partialorder %v3241, 0.0
        %vm3258 = vcmp.gt.f32.partialorder %v3242, 0.0
        %vm3259 = vcmp.gt.f32.partialorder %v3243, 0.0
        %vm3260 = vcmp.gt.f32.partialorder %v3244, 0.0
        %vm3261 = vcmp.gt.f32.partialorder %v3245, 0.0
        %vm3262 = vcmp.gt.f32.partialorder %v3246, 0.0
        %vm3263 = vcmp.gt.f32.partialorder %v3247, 0.0
        %vm3264 = vcmp.gt.f32.partialorder %v3248, 0.0
        %v3265 = vsel %vm3249, 1, 0
        %v3266 = vsel %vm3250, 1, 0
        %v3267 = vsel %vm3251, 1, 0
        %v3268 = vsel %vm3252, 1, 0
        %v3269 = vsel %vm3253, 1, 0
        %v3270 = vsel %vm3254, 1, 0
        %v3271 = vsel %vm3255, 1, 0
        %v3272 = vsel %vm3256, 1, 0
        %v3273 = vsel %vm3257, 1, 0
        %v3274 = vsel %vm3258, 1, 0
        %v3275 = vsel %vm3259, 1, 0
        %v3276 = vsel %vm3260, 1, 0
        %v3277 = vsel %vm3261, 1, 0
        %v3278 = vsel %vm3262, 1, 0
        %v3279 = vsel %vm3263, 1, 0
        %v3280 = vsel %vm3264, 1, 0
        %3281 = vset.pattern.permute.xlu0 1
        %3282 = vperm.xlu0 %3281, %v3265
        %v3283 = vpop.permute.xlu0 %3282
        %3284 = vset.pattern.permute.xlu0 1
        %3285 = vperm.xlu0 %3284, %v3266
        %v3286 = vpop.permute.xlu0 %3285
        %3287 = vset.pattern.permute.xlu0 1
        %3288 = vperm.xlu0 %3287, %v3267
        %v3289 = vpop.permute.xlu0 %3288
        %3290 = vset.pattern.permute.xlu0 1
        %3291 = vperm.xlu0 %3290, %v3268
        %v3292 = vpop.permute.xlu0 %3291
        %3293 = vset.pattern.permute.xlu0 1
        %3294 = vperm.xlu0 %3293, %v3269
        %v3295 = vpop.permute.xlu0 %3294
        %3296 = vset.pattern.permute.xlu0 1
        %3297 = vperm.xlu0 %3296, %v3270
        %v3298 = vpop.permute.xlu0 %3297
        %3299 = vset.pattern.permute.xlu0 1
        %3300 = vperm.xlu0 %3299, %v3271
        %v3301 = vpop.permute.xlu0 %3300
        %3302 = vset.pattern.permute.xlu0 1
        %3303 = vperm.xlu0 %3302, %v3272
        %v3304 = vpop.permute.xlu0 %3303
        %3305 = vset.pattern.permute.xlu0 1
        %3306 = vperm.xlu0 %3305, %v3273
        %v3307 = vpop.permute.xlu0 %3306
        %3308 = vset.pattern.permute.xlu0 1
        %3309 = vperm.xlu0 %3308, %v3274
        %v3310 = vpop.permute.xlu0 %3309
        %3311 = vset.pattern.permute.xlu0 1
        %3312 = vperm.xlu0 %3311, %v3275
        %v3313 = vpop.permute.xlu0 %3312
        %3314 = vset.pattern.permute.xlu0 1
        %3315 = vperm.xlu0 %3314, %v3276
        %v3316 = vpop.permute.xlu0 %3315
        %3317 = vset.pattern.permute.xlu0 1
        %3318 = vperm.xlu0 %3317, %v3277
        %v3319 = vpop.permute.xlu0 %3318
        %3320 = vset.pattern.permute.xlu0 1
        %3321 = vperm.xlu0 %3320, %v3278
        %v3322 = vpop.permute.xlu0 %3321
        %3323 = vset.pattern.permute.xlu0 1
        %3324 = vperm.xlu0 %3323, %v3279
        %v3325 = vpop.permute.xlu0 %3324
        %3326 = vset.pattern.permute.xlu0 1
        %3327 = vperm.xlu0 %3326, %v3280
        %v3328 = vpop.permute.xlu0 %3327
        %vm3329 = vcmp.eq.s32.totalorder %v3283, 1
        %vm3330 = vcmp.eq.s32.totalorder %v3286, 1
        %vm3331 = vcmp.eq.s32.totalorder %v3289, 1
        %vm3332 = vcmp.eq.s32.totalorder %v3292, 1
        %vm3333 = vcmp.eq.s32.totalorder %v3295, 1
        %vm3334 = vcmp.eq.s32.totalorder %v3298, 1
        %vm3335 = vcmp.eq.s32.totalorder %v3301, 1
        %vm3336 = vcmp.eq.s32.totalorder %v3304, 1
        %vm3337 = vcmp.eq.s32.totalorder %v3307, 1
        %vm3338 = vcmp.eq.s32.totalorder %v3310, 1
        %vm3339 = vcmp.eq.s32.totalorder %v3313, 1
        %vm3340 = vcmp.eq.s32.totalorder %v3316, 1
        %vm3341 = vcmp.eq.s32.totalorder %v3319, 1
        %vm3342 = vcmp.eq.s32.totalorder %v3322, 1
        %vm3343 = vcmp.eq.s32.totalorder %v3325, 1
        %vm3344 = vcmp.eq.s32.totalorder %v3328, 1
        %v3345 = vsel %vm3329, %v2916, -1e+30
        %v3346 = vsel %vm3330, %v2917, -1e+30
        %v3347 = vsel %vm3331, %v2918, -1e+30
        %v3348 = vsel %vm3332, %v2919, -1e+30
        %v3349 = vsel %vm3333, %v2920, -1e+30
        %v3350 = vsel %vm3334, %v2921, -1e+30
        %v3351 = vsel %vm3335, %v2922, -1e+30
        %v3352 = vsel %vm3336, %v2923, -1e+30
        %v3353 = vsel %vm3337, %v2924, -1e+30
        %v3354 = vsel %vm3338, %v2925, -1e+30
        %v3355 = vsel %vm3339, %v2926, -1e+30
        %v3356 = vsel %vm3340, %v2927, -1e+30
        %v3357 = vsel %vm3341, %v2928, -1e+30
        %v3358 = vsel %vm3342, %v2929, -1e+30
        %v3359 = vsel %vm3343, %v2930, -1e+30
        %v3360 = vsel %vm3344, %v2931, -1e+30
        %v3361 = vmax.f32 %v3345, %v3349
        %v3362 = vmax.f32 %v3346, %v3350
        %v3363 = vmax.f32 %v3347, %v3351
        %v3364 = vmax.f32 %v3348, %v3352
        %v3365 = vmax.f32 %v3361, %v3353
        %v3366 = vmax.f32 %v3362, %v3354
        %v3367 = vmax.f32 %v3363, %v3355
        %v3368 = vmax.f32 %v3364, %v3356
        %v3369 = vmax.f32 %v3365, %v3357
        %v3370 = vmax.f32 %v3366, %v3358
        %v3371 = vmax.f32 %v3367, %v3359
        %v3372 = vmax.f32 %v3368, %v3360
        %v3373 = vmax.f32 %v3369, %v3370
        %v3374 = vmax.f32 %v3371, %v3372
        %v3375 = vmax.f32 %v3373, %v3374
        %v3376 = vrot.slane %v3375, 4
        %v3377 = vmax.f32 %v3375, %v3376
        %v3378 = vrot.slane %v3377, 2
        %v3379 = vmax.f32 %v3377, %v3378
        %v3380 = vrot.slane %v3379, 1
        %v3381 = vmax.f32 %v3379, %v3380
        %vm3382 = vcmask 15368
        %v3383 = vsel %vm3382, %v3233, 0.0
        %v3384 = vsel %vm3382, %v3234, 0.0
        %v3385 = vadd.f32 %v3383, %v3384
        %v3386 = vsel %vm3382, %v3235, 0.0
        %v3387 = vadd.f32 %v3385, %v3386
        %v3388 = vsel %vm3382, %v3236, 0.0
        %v3389 = vadd.f32 %v3387, %v3388
        %v3390 = vsel %vm3382, %v3237, 0.0
        %v3391 = vadd.f32 %v3389, %v3390
        %v3392 = vsel %vm3382, %v3238, 0.0
        %v3393 = vadd.f32 %v3391, %v3392
        %v3394 = vsel %vm3382, %v3239, 0.0
        %v3395 = vadd.f32 %v3393, %v3394
        %v3396 = vsel %vm3382, %v3240, 0.0
        %v3397 = vadd.f32 %v3395, %v3396
        %v3398 = vsel %vm3382, %v3241, 0.0
        %v3399 = vadd.f32 %v3397, %v3398
        %v3400 = vsel %vm3382, %v3242, 0.0
        %v3401 = vadd.f32 %v3399, %v3400
        %v3402 = vsel %vm3382, %v3243, 0.0
        %v3403 = vadd.f32 %v3401, %v3402
        %v3404 = vsel %vm3382, %v3244, 0.0
        %v3405 = vadd.f32 %v3403, %v3404
        %v3406 = vsel %vm3382, %v3245, 0.0
        %v3407 = vadd.f32 %v3405, %v3406
        %v3408 = vsel %vm3382, %v3246, 0.0
        %v3409 = vadd.f32 %v3407, %v3408
        %v3410 = vsel %vm3382, %v3247, 0.0
        %v3411 = vadd.f32 %v3409, %v3410
        %v3412 = vsel %vm3382, %v3248, 0.0
        %v3413 = vadd.f32 %v3411, %v3412
        %v3414 = vrot.slane %v3413, 4
        %v3415 = vadd.f32 %v3413, %v3414
        %v3416 = vrot.slane %v3415, 2
        %v3417 = vadd.f32 %v3415, %v3416
        %v3418 = vrot.slane %v3417, 1
        %v3419 = vadd.f32 %v3417, %v3418
        %vm3420 = vcmp.gt.f32.partialorder %v3419, 0.0
        %v3421 = vsel %vm3420, 1, 0
        %3422 = vset.pattern.permute.xlu0 1
        %3423 = vperm.xlu0 %3422, %v3421
        %v3424 = vpop.permute.xlu0 %3423
        %vm3425 = vcmp.eq.s32.totalorder %v3424, 1
        %v3426 = vsel %vm3425, %v3381, 0.0
        %vm3427 = vcmp.eq.s32.totalorder %v2102, 1
        %v3428 = vsel %vm3427, 1, 0
        %vm3429 = vcmp.eq.s32.totalorder %v3428, 1
        %v3430 = vsel %vm3429, %v3426, 0.0
        %v3431 = vadd.f32 %v3184, %v3430
        %v3432 = vld [vmem:[#allocation4] sm:$0x3]
        %v3433 = vadd.f32 %v3432, %v3431
        %3434 = vst [vmem:[#allocation4] sm:$0x3] %v3433
        %v3435 = vld [vmem:[#allocation4 + $0x2] sm:$0x3]
        %v3436 = vadd.f32 %v3435, %v2984
        %3437 = vst [vmem:[#allocation4 + $0x2] sm:$0x3] %v3436
        %p3438 = scmp.eq.s32.totalorder %s39, 2
        // Predicated region
        $region125: #{tpu_custom_call.1} parent=103 // pred_check
          %p3439 = pneg %p3438
        $region126: #{tpu_custom_call.1} parent=103 // pred_check_branch
          %3441 = sbr.rel (%p3439) target = $region128
        $region127: #{tpu_custom_call.1} parent=103 // pred_region
          %v3442 = vld [vmem:[#allocation4] sm:$0xf]
          %v3443 = vld [vmem:[%s10] sm:$0xff]
          %v3444 = vld [vmem:[%s10 + $0x8] sm:$0xff]
          %v3445 = vld [vmem:[%s10 + $0x10] sm:$0xff]
          %v3446 = vld [vmem:[%s10 + $0x18] sm:$0xff]
          %v3447 = vld [vmem:[%s10 + $0x20] sm:$0xff]
          %v3448 = vld [vmem:[%s10 + $0x28] sm:$0xff]
          %v3449 = vld [vmem:[%s10 + $0x30] sm:$0xff]
          %v3450 = vld [vmem:[%s10 + $0x38] sm:$0xff]
          %v3451 = vld [vmem:[%s10 + $0x40] sm:$0xff]
          %v3452 = vld [vmem:[%s10 + $0x48] sm:$0xff]
          %v3453 = vld [vmem:[%s10 + $0x50] sm:$0xff]
          %v3454 = vld [vmem:[%s10 + $0x58] sm:$0xff]
          %v3455 = vld [vmem:[%s10 + $0x60] sm:$0xff]
          %v3456 = vld [vmem:[%s10 + $0x68] sm:$0xff]
          %v3457 = vld [vmem:[%s10 + $0x70] sm:$0xff]
          %v3458 = vld [vmem:[%s10 + $0x78] sm:$0xff]
          %v3459 = vld [vmem:[%s10 + $0x80] sm:$0xff]
          %v3460 = vld [vmem:[%s10 + $0x88] sm:$0xff]
          %v3461 = vld [vmem:[%s10 + $0x90] sm:$0xff]
          %v3462 = vld [vmem:[%s10 + $0x98] sm:$0xff]
          %v3463 = vld [vmem:[%s10 + $0xa0] sm:$0xff]
          %v3464 = vld [vmem:[%s10 + $0xa8] sm:$0xff]
          %v3465 = vld [vmem:[%s10 + $0xb0] sm:$0xff]
          %v3466 = vld [vmem:[%s10 + $0xb8] sm:$0xff]
          %v3467 = vld [vmem:[%s10 + $0xc0] sm:$0xff]
          %v3468 = vld [vmem:[%s10 + $0xc8] sm:$0xff]
          %v3469 = vld [vmem:[%s10 + $0xd0] sm:$0xff]
          %v3470 = vld [vmem:[%s10 + $0xd8] sm:$0xff]
          %v3471 = vld [vmem:[%s10 + $0xe0] sm:$0xff]
          %v3472 = vld [vmem:[%s10 + $0xe8] sm:$0xff]
          %v3473 = vld [vmem:[%s10 + $0xf0] sm:$0xff]
          %v3474 = vld [vmem:[%s10 + $0xf8] sm:$0xff]
          %v3475 = vld [vmem:[%s11] sm:$0x1]
          %v3477 = vperm.slane %v3475, 0
          %3480 = vst [vmem:[#allocation1] ss:$4 sm:$0xff] %v3442
          %v3481 = vld.sshfl [vmem:[#allocation1] sm:$0xff pattern:$0x73625140]
          %v3482 = vld.sshfl [vmem:[#allocation1 + $0x8] sm:$0xff pattern:$0x73625140]
          %3485 = vmatpush.msra.mxu0 %v3458
          %3486 = vmatpush.msra.mxu0 %v3457
          %3487 = vmatpush.msra.mxu0 %v3456
          %3488 = vmatpush.msra.mxu0 %v3455
          %3489 = vmatpush.msra.mxu0 %v3454
          %3490 = vmatpush.msra.mxu0 %v3453
          %3491 = vmatpush.msra.mxu0 %v3452
          %3492 = vmatpush.msra.mxu0 %v3451
          %3493 = vmatpush.msra.mxu0 %v3450
          %3494 = vmatpush.msra.mxu0 %v3449
          %3495 = vmatpush.msra.mxu0 %v3448
          %3496 = vmatpush.msra.mxu0 %v3447
          %3497 = vmatpush.msra.mxu0 %v3446
          %3498 = vmatpush.msra.mxu0 %v3445
          %3499 = vmatpush.msra.mxu0 %v3444
          %3500 = vmatpush.msra.mxu0 %v3443
          %3501 = vmatmul.f32.gmra.mxu0 %v3481
          %v3502 = vpop.f32.mrf.mxu0
          %v3503 = vadd.f32 %v3477, %v3502
          %3504 = vdwg.mxu0
          %3505 = vmatpush.msra.mxu0 %v3474
          %3506 = vmatpush.msra.mxu0 %v3473
          %3507 = vmatpush.msra.mxu0 %v3472
          %3508 = vmatpush.msra.mxu0 %v3471
          %3509 = vmatpush.msra.mxu0 %v3470
          %3510 = vmatpush.msra.mxu0 %v3469
          %3511 = vmatpush.msra.mxu0 %v3468
          %3512 = vmatpush.msra.mxu0 %v3467
          %3513 = vmatpush.msra.mxu0 %v3466
          %3514 = vmatpush.msra.mxu0 %v3465
          %3515 = vmatpush.msra.mxu0 %v3464
          %3516 = vmatpush.msra.mxu0 %v3463
          %3517 = vmatpush.msra.mxu0 %v3462
          %3518 = vmatpush.msra.mxu0 %v3461
          %3519 = vmatpush.msra.mxu0 %v3460
          %3520 = vmatpush.msra.mxu0 %v3459
          %3521 = vmatmul.f32.gmra.mxu0 %v3482
          %v3522 = vpop.f32.mrf.mxu0
          %v3523 = vadd.f32 %v3503, %v3522
          %3524 = vdwg.mxu0
          %v3525 = vld [vmem:[%s12] sm:$0xff]
          %v3526 = vld [vmem:[%s12 + $0x8] sm:$0xff]
          %v3527 = vld [vmem:[%s12 + $0x10] sm:$0xff]
          %v3528 = vld [vmem:[%s12 + $0x18] sm:$0xff]
          %v3529 = vld [vmem:[%s12 + $0x20] sm:$0xff]
          %v3530 = vld [vmem:[%s12 + $0x28] sm:$0xff]
          %v3531 = vld [vmem:[%s12 + $0x30] sm:$0xff]
          %v3532 = vld [vmem:[%s12 + $0x38] sm:$0xff]
          %v3533 = vld [vmem:[%s13] sm:$0x1]
          %v3535 = vperm.slane %v3533, 0
          %vm3537 = vcmask 523264
          %v3539 = vsel %vm3537, %v3523, 0
          %3541 = vmatpush.msra.mxu0 0.0
          %3542 = vmatpush.msra.mxu0 0.0
          %3543 = vmatpush.msra.mxu0 0.0
          %3544 = vmatpush.msra.mxu0 0.0
          %3545 = vmatpush.msra.mxu0 0.0
          %3546 = vmatpush.msra.mxu0 0.0
          %3547 = vmatpush.msra.mxu0 0.0
          %3548 = vmatpush.msra.mxu0 0.0
          %3549 = vmatpush.msra.mxu0 %v3532
          %3550 = vmatpush.msra.mxu0 %v3531
          %3551 = vmatpush.msra.mxu0 %v3530
          %3552 = vmatpush.msra.mxu0 %v3529
          %3553 = vmatpush.msra.mxu0 %v3528
          %3554 = vmatpush.msra.mxu0 %v3527
          %3555 = vmatpush.msra.mxu0 %v3526
          %3556 = vmatpush.msra.mxu0 %v3525
          %3557 = vmatmul.f32.gmra.mxu0 %v3539
          %v3558 = vpop.f32.mrf.mxu0
          %v3559 = vadd.f32 %v3535, %v3558
          %3560 = vdwg.mxu0
          %vm3561 = vcmp.gt.f32.partialorder %v3559, 0.0
          %v3562 = vmul.f32 %v3559, 1.442695
          %v3563 = vpow.pop %v3562
          %v3564 = vsub.f32 %v3563, 1.0
          %v3565 = vsel %vm3561, %v3559, %v3564
          %v3566 = vld [vmem:[%s14] sm:$0xff]
          %v3567 = vld [vmem:[%s14 + $0x8] sm:$0xff]
          %v3568 = vld [vmem:[%s14 + $0x10] sm:$0xff]
          %v3569 = vld [vmem:[%s14 + $0x18] sm:$0xff]
          %v3570 = vld [vmem:[%s15] sm:$0x1]
          %v3572 = vperm.slane %v3570, 0
          %vm3574 = vcmask 261120
          %v3576 = vsel %vm3574, %v3565, 0
          %3578 = vmatpush.msra.mxu0 0.0
          %3579 = vmatpush.msra.mxu0 0.0
          %3580 = vmatpush.msra.mxu0 0.0
          %3581 = vmatpush.msra.mxu0 0.0
          %3582 = vmatpush.msra.mxu0 0.0
          %3583 = vmatpush.msra.mxu0 0.0
          %3584 = vmatpush.msra.mxu0 0.0
          %3585 = vmatpush.msra.mxu0 0.0
          %3586 = vmatpush.msra.mxu0 0.0
          %3587 = vmatpush.msra.mxu0 0.0
          %3588 = vmatpush.msra.mxu0 0.0
          %3589 = vmatpush.msra.mxu0 0.0
          %3590 = vmatpush.msra.mxu0 %v3569
          %3591 = vmatpush.msra.mxu0 %v3568
          %3592 = vmatpush.msra.mxu0 %v3567
          %3593 = vmatpush.msra.mxu0 %v3566
          %3594 = vmatmul.f32.gmra.mxu0 %v3576
          %v3595 = vpop.f32.mrf.mxu0
          %v3596 = vadd.f32 %v3572, %v3595
          %3597 = vdwg.mxu0
          %vm3598 = vcmp.gt.f32.partialorder %v3596, 0.0
          %v3599 = vmul.f32 %v3596, 1.442695
          %v3600 = vpow.pop %v3599
          %v3601 = vsub.f32 %v3600, 1.0
          %v3602 = vsel %vm3598, %v3596, %v3601
          %v3603 = vld [vmem:[%s16] sm:$0xff]
          %v3604 = vld [vmem:[%s16 + $0x8] sm:$0xff]
          %v3605 = vld [vmem:[%s17] sm:$0x1]
          %v3607 = vperm.slane %v3605, 0
          %vm3609 = vcmask 130048
          %v3611 = vsel %vm3609, %v3602, 0
          %3613 = vmatpush.msra.mxu0 0.0
          %3614 = vmatpush.msra.mxu0 0.0
          %3615 = vmatpush.msra.mxu0 0.0
          %3616 = vmatpush.msra.mxu0 0.0
          %3617 = vmatpush.msra.mxu0 0.0
          %3618 = vmatpush.msra.mxu0 0.0
          %3619 = vmatpush.msra.mxu0 0.0
          %3620 = vmatpush.msra.mxu0 0.0
          %3621 = vmatpush.msra.mxu0 0.0
          %3622 = vmatpush.msra.mxu0 0.0
          %3623 = vmatpush.msra.mxu0 0.0
          %3624 = vmatpush.msra.mxu0 0.0
          %3625 = vmatpush.msra.mxu0 0.0
          %3626 = vmatpush.msra.mxu0 0.0
          %3627 = vmatpush.msra.mxu0 %v3604
          %3628 = vmatpush.msra.mxu0 %v3603
          %3629 = vmatmul.f32.gmra.mxu0 %v3611
          %v3630 = vpop.f32.mrf.mxu0
          %v3631 = vadd.f32 %v3607, %v3630
          %3632 = vdwg.mxu0
          %vm3633 = vcmp.gt.f32.partialorder %v3631, 0.0
          %v3634 = vmul.f32 %v3631, 1.442695
          %v3635 = vpow.pop %v3634
          %v3636 = vsub.f32 %v3635, 1.0
          %v3637 = vsel %vm3633, %v3631, %v3636
          %v3638 = vld [vmem:[%s18] sm:$0xff]
          %v3639 = vld [vmem:[#allocation6] sm:$0x1]
          %v3641 = vperm.slane %v3639, 0
          %vm3643 = vcmask 64512
          %v3645 = vsel %vm3643, %v3637, 0
          %3647 = vmatpush.msra.mxu0 0.0
          %3648 = vmatpush.msra.mxu0 0.0
          %3649 = vmatpush.msra.mxu0 0.0
          %3650 = vmatpush.msra.mxu0 0.0
          %3651 = vmatpush.msra.mxu0 0.0
          %3652 = vmatpush.msra.mxu0 0.0
          %3653 = vmatpush.msra.mxu0 0.0
          %3654 = vmatpush.msra.mxu0 0.0
          %3655 = vmatpush.msra.mxu0 0.0
          %3656 = vmatpush.msra.mxu0 0.0
          %3657 = vmatpush.msra.mxu0 0.0
          %3658 = vmatpush.msra.mxu0 0.0
          %3659 = vmatpush.msra.mxu0 0.0
          %3660 = vmatpush.msra.mxu0 0.0
          %3661 = vmatpush.msra.mxu0 0.0
          %3662 = vmatpush.msra.mxu0 %v3638
          %3663 = vmatmul.f32.gmra.mxu0 %v3645
          %v3664 = vpop.f32.mrf.mxu0
          %v3665 = vadd.f32 %v3641, %v3664
          %3666 = vdwg.mxu0
          %vm3667 = vcmask 1024
          %3668 = vst.msk [vmem:[%s21] sm:$0x3] %vm3667, %v3665
          %v3669 = vld [vmem:[%s20] sm:$0x3]
          %v3670 = vsub.f32 %v3665, %v3669
          %v3671 = vmul.f32 %v3670, %v3670
          %v3672 = vadd.f32 %v3671, 0.0
          %v3673 = vsel %vm3667, %v3672, 0.0
          %v3674 = vrot.slane %v3673, 4
          %v3675 = vadd.f32 %v3673, %v3674
          %v3676 = vrot.slane %v3675, 2
          %v3677 = vadd.f32 %v3675, %v3676
          %v3678 = vrot.slane %v3677, 1
          %v3679 = vadd.f32 %v3677, %v3678
          %v3680 = vrcp.pop 2.0
          %v3681 = vmul.f32 2.0, %v3680
          %v3682 = vsub.f32 1.0, %v3681
          %v3683 = vmul.f32 %v3680, %v3682
          %v3684 = vadd.f32 %v3680, %v3683
          %vm3685 = vweird.f32 %v3680
          %v3686 = vsel %vm3685, %v3680, %v3684
          %v3687 = vmul.f32 %v3679, %v3686
          %vm3688 = vcmask 0
          %3689 = vst.msk [vmem:[#allocation13] sm:$0x1] %vm3688, %v3687
        $region128: #{tpu_custom_call.1} parent=103 // pred_fallthru
          _
        // Predicated region
        $region129: #{tpu_custom_call.1} parent=103 // pred_check
          %p3690 = pneg %p524
        $region130: #{tpu_custom_call.1} parent=103 // pred_check_branch
          %3692 = sbr.rel (%p3690) target = $region132
        $region131: #{tpu_custom_call.1} parent=103 // pred_region
          _
        $region132: #{tpu_custom_call.1} parent=103 // pred_fallthru
          _
        // Predicated region
        $region133: #{tpu_custom_call.1} parent=103 // pred_check
          %p3693 = pneg %p545
        $region134: #{tpu_custom_call.1} parent=103 // pred_check_branch
          %3695 = sbr.rel (%p3693) target = $region136
        $region135: #{tpu_custom_call.1} parent=103 // pred_region
          %3697 = vsyncadd [#allocation9], 0
          %s3699 = sshll.u32 [#allocation13], 4
          %s3700 = int_to_ptr.vmem [resolvable:$true] %s3699
          %s3701 = sshll.u32 %s22, 4
          %s3702 = int_to_ptr.hbm [resolvable:$true] %s3701
          %3704 = dma.vmem_to_hbm [thread:$0]  %s3700, 16, %s3702, [#allocation9]
        $region136: #{tpu_custom_call.1} parent=103 // pred_fallthru
          _
        // Predicated region
        $region137: #{tpu_custom_call.1} parent=103 // pred_check
          %p3705 = pneg %p524
        $region138: #{tpu_custom_call.1} parent=103 // pred_check_branch
          %3707 = sbr.rel (%p3705) target = $region140
        $region139: #{tpu_custom_call.1} parent=103 // pred_region
          _
        $region140: #{tpu_custom_call.1} parent=103 // pred_fallthru
          _
        // Predicated region
        $region141: #{tpu_custom_call.1} parent=103 // pred_check
          %p3708 = pneg %p545
        $region142: #{tpu_custom_call.1} parent=103 // pred_check_branch
          %3710 = sbr.rel (%p3708) target = $region144
        $region143: #{tpu_custom_call.1} parent=103 // pred_region
          %3712 = dma.done [#allocation9], 16
        $region144: #{tpu_custom_call.1} parent=103 // pred_fallthru
          _
      $region104: #{tpu_custom_call.1} parent=5 // pred_fallthru
        _
      %p3713 = scmp.le.s32.totalorder 2, %s34
      // Predicated region
      $region145: #{tpu_custom_call.1} parent=5 // pred_check
        %p3714 = pneg %p3713
      $region146: #{tpu_custom_call.1} parent=5 // pred_check_branch
        %3716 = sbr.rel (%p3714) target = $region148
      $region147: #{tpu_custom_call.1} parent=5 // pred_region
        %s3717 = ssub.s32 %s34, 2
      $region148: #{tpu_custom_call.1} parent=5 // pred_fallthru
        _
    $region6: #{tpu_custom_call.1} parent=1 // loop_footer
      %s38 = sadd.s32 1, %s34
    $region7: #{tpu_custom_call.1} parent=1 // loop_footer_branch
      %33 = sbr.rel target = $region3
    $region8: #{tpu_custom_call.1} parent=1 // loop_exit
      _
    %3718 = vsyncpa [#allocation8], 1
    %s3719 = scalar_lea.sflag [#allocation8], 1
    %3720 = vsyncpa %s3719, 1
    %3721 = vsyncpa [#allocation11], 1
    %3722 = vsyncpa [#allocation9], 1
    %s3723 = scalar_lea.sflag [#allocation9], 1
    %3724 = vsyncpa %s3723, 1

</llo_original>
